<compile_context>
chip_gen: v7x
topology: tpu7x:2x2x1
jax: 0.10.0
libtpu: 0.0.40
codegen_flags: <defaults>
</compile_context>

<pallas_src>
import functools
import random

import jax
import jax.numpy as jnp
from jax.experimental import pallas as pl
from jax.experimental.pallas import tpu as pltpu


_VMEM = functools.partial(pl.BlockSpec, memory_space=pltpu.MemorySpace.VMEM)
_SMEM = functools.partial(pl.BlockSpec, memory_space=pltpu.MemorySpace.SMEM)

_LANE = 128
_SUBLANE = 8


# ----------------------------- Pallas kernels -----------------------------

def _gru_step(gx, gh, h, Hp):
    """PyTorch GRUCell gate math (gate order r, z, n), stacked-gate layout.

    gx, gh: [Bp, 3Hp] (input / hidden gate pre-activations), h: [Bp, Hp].
    """
    r = jax.nn.sigmoid(gx[:, :Hp] + gh[:, :Hp])
    z = jax.nn.sigmoid(gx[:, Hp:2 * Hp] + gh[:, Hp:2 * Hp])
    n = jnp.tanh(gx[:, 2 * Hp:] + r * gh[:, 2 * Hp:])
    return (1.0 - z) * n + z * h


def _encoder_kernel(emb_ref,
                    wih_f_ref, whh_f_ref, bih_f_ref, bhh_f_ref,
                    wih_b_ref, whh_b_ref, bih_b_ref, bhh_b_ref,
                    fc_wf_ref, fc_wb_ref, fc_b_ref,
                    enc_f_ref, enc_b_ref, s_ref,
                    gix_f_ref, gix_b_ref):
    """Bidirectional GRU over src + fc producing the initial decoder state."""
    T, Bp, Ep = emb_ref.shape
    Hp = whh_f_ref.shape[0]

    # Input-side gate terms for ALL timesteps / both directions: two big
    # matmuls up front (off the recurrent critical path), stored to scratch.
    emb2d = emb_ref[...].reshape(T * Bp, Ep)
    gix_f_ref[...] = (
        jnp.dot(emb2d, wih_f_ref[...], preferred_element_type=jnp.float32)
        + bih_f_ref[...]).reshape(T, Bp, 3 * Hp)
    gix_b_ref[...] = (
        jnp.dot(emb2d, wih_b_ref[...], preferred_element_type=jnp.float32)
        + bih_b_ref[...]).reshape(T, Bp, 3 * Hp)

    h_f = jnp.zeros((Bp, Hp), jnp.float32)
    h_b = jnp.zeros((Bp, Hp), jnp.float32)

    # Static unroll (small T); both directions interleaved so the two serial
    # recurrent chains overlap.  TODO(synk): lax.fori_loop for long sources.
    for t in range(T):
        # forward direction
        gh_f = (jnp.dot(h_f, whh_f_ref[...], preferred_element_type=jnp.float32)
                + bhh_f_ref[...])
        h_f = _gru_step(gix_f_ref[t], gh_f, h_f, Hp)
        enc_f_ref[t] = h_f

        # backward direction (walks the reversed sequence)
        tb = T - 1 - t
        gh_b = (jnp.dot(h_b, whh_b_ref[...], preferred_element_type=jnp.float32)
                + bhh_b_ref[...])
        h_b = _gru_step(gix_b_ref[tb], gh_b, h_b, Hp)
        enc_b_ref[tb] = h_b

    s_ref[...] = jnp.tanh(
        jnp.dot(h_f, fc_wf_ref[...], preferred_element_type=jnp.float32)
        + jnp.dot(h_b, fc_wb_ref[...], preferred_element_type=jnp.float32)
        + fc_b_ref[...])


def _decoder_kernel(tf_ref,                    # SMEM int32 coin flips
                    trg_ref,                   # [L, Bp, 1] int32 targets
                    enc_f_ref, enc_b_ref,      # [T, Bp, Hp] encoder outputs
                    s0_ref,                    # [Bp, Ddp] initial state
                    emb_w_ref,                 # [Vp, Ep] decoder embedding
                    wef_ref, web_ref, attn_b_ref, v_ref,      # attention
                    ws_all_ref, bs_all_ref,                   # s_old @ [Ws|Whh]
                    we_all_ref, wcf_all_ref, wcb_all_ref, becv_ref,  # fused in
                    fws_ref,                                  # s_new -> logits
                    out_ref,                   # [L, Bp, Vp]
                    ep_ref,                    # scratch [T, Bp, Ddp]
                    curoh_ref,                 # scratch [Bp, Vp]
                    *, v_true):
    """Entire decoder loop fused: attention + GRU + fc_out + argmax/TF."""
    L, Bp, Vp = out_ref.shape
    T = enc_f_ref.shape[0]
    Ddp = s0_ref.shape[-1]

    # Step-invariant attention projection of the encoder outputs (bias folded
    # in here, added exactly once), computed ONCE and kept in VMEM scratch.
    encf2d = enc_f_ref[...].reshape(T * Bp, -1)
    encb2d = enc_b_ref[...].reshape(T * Bp, -1)
    ep_ref[...] = (
        jnp.dot(encf2d, wef_ref[...], preferred_element_type=jnp.float32)
        + jnp.dot(encb2d, web_ref[...], preferred_element_type=jnp.float32)
        + attn_b_ref[...]).reshape(T, Bp, Ddp)

    iota_i = jax.lax.broadcasted_iota(jnp.int32, (Bp, Vp), 1)
    iota_f = iota_i.astype(jnp.float32)
    lane_valid = iota_i < v_true

    out_ref[0] = jnp.zeros((Bp, Vp), jnp.float32)           # outputs[0] = 0
    curoh_ref[...] = (iota_i == trg_ref[0]).astype(jnp.float32)
    s = s0_ref[...]

    # Static unroll over decoder steps (trg_len is small).
    # TODO(synk): lax.fori_loop(..., unroll=k) for long target sequences.
    for t in range(1, L):
        emb = jnp.dot(curoh_ref[...], emb_w_ref[...],
                      preferred_element_type=jnp.float32)           # [Bp, Ep]

        # s_old feeds both the attention projection and the recurrent gates:
        # one fused matmul, sliced.
        sa = (jnp.dot(s, ws_all_ref[...], preferred_element_type=jnp.float32)
              + bs_all_ref[...])                                    # [Bp, 4Ddp]
        sp = sa[:, :Ddp]
        gh = sa[:, Ddp:]

        # ---- Bahdanau attention (enc projection precomputed) ----
        e = jnp.tanh(ep_ref[...] + sp[None, :, :])                  # [T,Bp,Ddp]
        sc = jnp.sum(e * v_ref[...], axis=-1, keepdims=True)        # [T,Bp,1]
        sc = sc - jnp.max(sc, axis=0, keepdims=True)
        pexp = jnp.exp(sc)
        a = pexp / jnp.sum(pexp, axis=0, keepdims=True)             # [T,Bp,1]
        c_f = jnp.sum(a * enc_f_ref[...], axis=0)                   # [Bp,Hp]
        c_b = jnp.sum(a * enc_b_ref[...], axis=0)                   # [Bp,Hp]

        # ---- fused (emb, c_f, c_b) matmuls: GRU gates | fc_out partials ----
        pre = (jnp.dot(emb, we_all_ref[...], preferred_element_type=jnp.float32)
               + jnp.dot(c_f, wcf_all_ref[...], preferred_element_type=jnp.float32)
               + jnp.dot(c_b, wcb_all_ref[...], preferred_element_type=jnp.float32)
               + becv_ref[...])                                     # [Bp,3Ddp+Vp]
        gi = pre[:, :3 * Ddp]
        logits0 = pre[:, 3 * Ddp:]

        s = _gru_step(gi, gh, s, Ddp)                               # [Bp,Ddp]

        pred = logits0 + jnp.dot(s, fws_ref[...],
                                 preferred_element_type=jnp.float32)  # [Bp,Vp]
        out_ref[t] = pred

        # ---- next decoder input: teacher forcing vs greedy argmax ----
        if t < L - 1:
            tf = tf_ref[t - 1]

            @pl.when(tf != 0)
            def _():
                curoh_ref[...] = (iota_i == trg_ref[t]).astype(jnp.float32)

            @pl.when(tf == 0)
            def _():
                pm = jnp.where(lane_valid, pred, -jnp.inf)
                m = jnp.max(pm, axis=1, keepdims=True)
                cand = jnp.where(pm == m, iota_f, float(Vp))
                amin = jnp.min(cand, axis=1, keepdims=True)   # first max index
                curoh_ref[...] = (iota_f == amin).astype(jnp.float32)


# ----------------------------- Pallas wrappers -----------------------------

def _encoder_call(emb, pp):
    T, Bp, _ = emb.shape
    Hp = pp["enc_whh_f"].shape[0]
    Ddp = pp["fc_wf"].shape[-1]
    return pl.pallas_call(
        _encoder_kernel,
        out_shape=(jax.ShapeDtypeStruct((T, Bp, Hp), jnp.float32),
                   jax.ShapeDtypeStruct((T, Bp, Hp), jnp.float32),
                   jax.ShapeDtypeStruct((Bp, Ddp), jnp.float32)),
        in_specs=[_VMEM()] * 12,
        out_specs=(_VMEM(), _VMEM(), _VMEM()),
        scratch_shapes=[pltpu.VMEM((T, Bp, 3 * Hp), jnp.float32),
                        pltpu.VMEM((T, Bp, 3 * Hp), jnp.float32)],
        compiler_params=pltpu.CompilerParams(vmem_limit_bytes=32 << 20),
    )(emb,
      pp["enc_wih_f"], pp["enc_whh_f"], pp["enc_bih_f"], pp["enc_bhh_f"],
      pp["enc_wih_b"], pp["enc_whh_b"], pp["enc_bih_b"], pp["enc_bhh_b"],
      pp["fc_wf"], pp["fc_wb"], pp["fc_b"])


def _decoder_call(tf_flags, trg_p, enc_f, enc_b, s0, pp, out_dim):
    L = trg_p.shape[0]
    T, Bp, _ = enc_f.shape
    Ddp = s0.shape[-1]
    Vp = pp["emb_dec"].shape[0]
    kernel = functools.partial(_decoder_kernel, v_true=out_dim)
    return pl.pallas_call(
        kernel,
        out_shape=jax.ShapeDtypeStruct((L, Bp, Vp), jnp.float32),
        in_specs=[_SMEM()] + [_VMEM()] * 16,
        out_specs=_VMEM(),
        scratch_shapes=[pltpu.VMEM((T, Bp, Ddp), jnp.float32),
                        pltpu.VMEM((Bp, Vp), jnp.float32)],
        compiler_params=pltpu.CompilerParams(vmem_limit_bytes=32 << 20),
    )(tf_flags, trg_p, enc_f, enc_b, s0,
      pp["emb_dec"],
      pp["attn_wef"], pp["attn_web"], pp["attn_b"], pp["attn_v"],
      pp["dec_ws_all"], pp["dec_bs_all"],
      pp["dec_we_all"], pp["dec_wcf_all"], pp["dec_wcb_all"], pp["dec_becv"],
      pp["fco_ws"])


# ----------------------------- parameters -----------------------------

def _uniform(key, shape, scale=0.1):
    return jax.random.uniform(key, shape, jnp.float32, -scale, scale)


def init_params(key, input_dim, output_dim, emb_dim, enc_hid, dec_hid):
    """Raw parameters in PyTorch layout (weights [out, in], fused GRU gates)."""
    ks = iter(jax.random.split(key, 24))
    p = {}
    p["emb_enc"] = _uniform(next(ks), (input_dim, emb_dim))
    for d in ("f", "b"):
        p[f"enc_wih_{d}"] = _uniform(next(ks), (3 * enc_hid, emb_dim))
        p[f"enc_whh_{d}"] = _uniform(next(ks), (3 * enc_hid, enc_hid))
        p[f"enc_bih_{d}"] = _uniform(next(ks), (3 * enc_hid,))
        p[f"enc_bhh_{d}"] = _uniform(next(ks), (3 * enc_hid,))
    p["fc_w"] = _uniform(next(ks), (dec_hid, 2 * enc_hid))
    p["fc_b"] = _uniform(next(ks), (dec_hid,))
    p["attn_w"] = _uniform(next(ks), (dec_hid, dec_hid + 2 * enc_hid))
    p["attn_b"] = _uniform(next(ks), (dec_hid,))
    p["v_w"] = _uniform(next(ks), (dec_hid,))
    p["emb_dec"] = _uniform(next(ks), (output_dim, emb_dim))
    p["dec_wih"] = _uniform(next(ks), (3 * dec_hid, emb_dim + 2 * enc_hid))
    p["dec_whh"] = _uniform(next(ks), (3 * dec_hid, dec_hid))
    p["dec_bih"] = _uniform(next(ks), (3 * dec_hid,))
    p["dec_bhh"] = _uniform(next(ks), (3 * dec_hid,))
    p["fco_w"] = _uniform(next(ks), (output_dim, dec_hid + 2 * enc_hid + emb_dim))
    p["fco_b"] = _uniform(next(ks), (output_dim,))
    return p


def _ceil_to(x, m):
    return (x + m - 1) // m * m


def _pad2(x, rows, cols):
    return jnp.pad(x, ((0, rows - x.shape[0]), (0, cols - x.shape[1])))


def prepare_params(p, emb_dim, enc_hid, dec_hid, output_dim):
    """One-time layout prep: transpose, gate-stack, 128-lane pad, concat-split
    and shared-operand weight fusion.  Zero padding keeps padded hidden lanes
    exactly zero through the GRU recurrences, so results are unchanged."""
    E, H, Dd, V = emb_dim, enc_hid, dec_hid, output_dim
    Ep, Hp, Ddp, Vp = (_ceil_to(d, _LANE) for d in (E, H, Dd, V))

    def gru_w(w, in_dim, hid, in_p, hid_p):
        # PyTorch fused [3*hid, in] (gate order r,z,n) -> stacked [in_p, 3*hid_p]
        cols = [_pad2(w[g * hid:(g + 1) * hid, :].T, in_p, hid_p)
                for g in range(3)]
        return jnp.concatenate(cols, axis=1)

    def gru_b(b, hid, hid_p):
        cols = [_pad2(b[g * hid:(g + 1) * hid][None, :], 1, hid_p)
                for g in range(3)]
        return jnp.concatenate(cols, axis=1)

    pp = {}
    pp["emb_enc"] = jnp.pad(p["emb_enc"], ((0, 0), (0, Ep - E)))
    pp["emb_dec"] = _pad2(p["emb_dec"], Vp, Ep)

    for d in ("f", "b"):
        pp[f"enc_wih_{d}"] = gru_w(p[f"enc_wih_{d}"], E, H, Ep, Hp)
        pp[f"enc_whh_{d}"] = gru_w(p[f"enc_whh_{d}"], H, H, Hp, Hp)
        pp[f"enc_bih_{d}"] = gru_b(p[f"enc_bih_{d}"], H, Hp)
        pp[f"enc_bhh_{d}"] = gru_b(p[f"enc_bhh_{d}"], H, Hp)

    # encoder fc over cat(h_fwd, h_bwd): pre-split halves, no in-kernel concat
    pp["fc_wf"] = _pad2(p["fc_w"][:, :H].T, Hp, Ddp)
    pp["fc_wb"] = _pad2(p["fc_w"][:, H:].T, Hp, Ddp)
    pp["fc_b"] = _pad2(p["fc_b"][None, :], 1, Ddp)

    # attention Linear over cat(s, enc_fwd, enc_bwd): split enc halves
    pp["attn_wef"] = _pad2(p["attn_w"][:, Dd:Dd + H].T, Hp, Ddp)
    pp["attn_web"] = _pad2(p["attn_w"][:, Dd + H:].T, Hp, Ddp)
    pp["attn_b"] = _pad2(p["attn_b"][None, :], 1, Ddp)
    pp["attn_v"] = _pad2(p["v_w"][None, :], 1, Ddp)[None]          # [1,1,Ddp]

    # s_old feeds the attention projection AND the recurrent GRU gates
    ws_t = _pad2(p["attn_w"][:, :Dd].T, Ddp, Ddp)                  # [Ddp,Ddp]
    whh = gru_w(p["dec_whh"], Dd, Dd, Ddp, Ddp)                    # [Ddp,3Ddp]
    pp["dec_ws_all"] = jnp.concatenate([ws_t, whh], axis=1)        # [Ddp,4Ddp]
    pp["dec_bs_all"] = jnp.concatenate(
        [jnp.zeros((1, Ddp), jnp.float32), gru_b(p["dec_bhh"], Dd, Ddp)],
        axis=1)                                                    # [1,4Ddp]

    # decoder GRU input over cat(emb, c_f, c_b) fused with the fc_out weights
    # that consume the same operands (fc_out over cat(s, c_f, c_b, emb)).
    wih = p["dec_wih"]                                             # [3Dd, E+2H]
    fco = p["fco_w"]                                               # [V, Dd+2H+E]
    wie = gru_w(wih[:, :E], E, Dd, Ep, Ddp)
    wicf = gru_w(wih[:, E:E + H], H, Dd, Hp, Ddp)
    wicb = gru_w(wih[:, E + H:], H, Dd, Hp, Ddp)
    fwe = _pad2(fco[:, Dd + 2 * H:].T, Ep, Vp)
    fwcf = _pad2(fco[:, Dd:Dd + H].T, Hp, Vp)
    fwcb = _pad2(fco[:, Dd + H:Dd + 2 * H].T, Hp, Vp)
    pp["dec_we_all"] = jnp.concatenate([wie, fwe], axis=1)         # [Ep,3Ddp+Vp]
    pp["dec_wcf_all"] = jnp.concatenate([wicf, fwcf], axis=1)
    pp["dec_wcb_all"] = jnp.concatenate([wicb, fwcb], axis=1)
    pp["dec_becv"] = jnp.concatenate(
        [gru_b(p["dec_bih"], Dd, Ddp), _pad2(p["fco_b"][None, :], 1, Vp)],
        axis=1)                                                    # [1,3Ddp+Vp]

    pp["fco_ws"] = _pad2(fco[:, :Dd].T, Ddp, Vp)                   # [Ddp,Vp]
    # TODO(synk): cast MXU-operand weights to bf16 on v6e/v7x for ~2x matmul
    #             throughput and half the weight footprint.
    return jax.tree_util.tree_map(lambda a: jnp.asarray(a, jnp.float32), pp)


def make_teacher_forcing_flags(trg_len, teacher_forcing_ratio, seed):
    """Reproduce the original host-side random.random() coin flips."""
    random.seed(seed)
    flags = [1 if random.random() < teacher_forcing_ratio else 0
             for _ in range(1, trg_len)]
    if not flags:
        flags = [0]
    return jnp.asarray(flags, dtype=jnp.int32)


def _round_up(x, m):
    return (x + m - 1) // m * m


# ----------------------------- forward -----------------------------

@functools.partial(jax.jit, static_argnames=("out_dim",))
def seq2seq_forward(src, trg, tf_flags, pp, *, out_dim):
    # src: [Tsrc, B] int32, trg: [L, B] int32
    T, B = src.shape
    L = trg.shape[0]
    Bp = _round_up(B, _SUBLANE)               # pad batch to full sublanes
    pad_b = Bp - B

    emb = jnp.take(pp["emb_enc"], src, axis=0)                 # [T, B, Ep]
    emb = jnp.pad(emb, ((0, 0), (0, pad_b), (0, 0)))           # [T, Bp, Ep]

    enc_f, enc_b, s0 = _encoder_call(emb, pp)

    trg_p = jnp.pad(trg, ((0, 0), (0, pad_b)))[:, :, None].astype(jnp.int32)

    outs = _decoder_call(tf_flags, trg_p, enc_f, enc_b, s0, pp, out_dim)
    return outs[:, :B, :out_dim]                               # [L, B, V]


# ----------------------------- main -----------------------------

if __name__ == "__main__":
    INPUT_DIM = 32     # src vocab
    OUTPUT_DIM = 32    # trg vocab
    EMB_DIM = 32
    ENC_HID = 32
    DEC_HID = 32
    SRC_LEN = 6
    TRG_LEN = 5
    BATCH = 4

    key = jax.random.PRNGKey(0)
    k_params, k_src, k_trg = jax.random.split(key, 3)
    raw = init_params(k_params, INPUT_DIM, OUTPUT_DIM, EMB_DIM, ENC_HID, DEC_HID)
    params = prepare_params(raw, EMB_DIM, ENC_HID, DEC_HID, OUTPUT_DIM)

    src = jax.random.randint(k_src, (SRC_LEN, BATCH), 0, INPUT_DIM,
                             dtype=jnp.int32)
    trg = jax.random.randint(k_trg, (TRG_LEN, BATCH), 0, OUTPUT_DIM,
                             dtype=jnp.int32)
    tf_flags = make_teacher_forcing_flags(TRG_LEN, 0.2, seed=0)

    out = seq2seq_forward(src, trg, tf_flags, params, out_dim=OUTPUT_DIM)
    out = jax.block_until_ready(out)
    assert out.shape == (TRG_LEN, BATCH, OUTPUT_DIM)
    assert out.dtype == jnp.float32
    print("KERNEL_OK")
</pallas_src>

<mosaic_0001>
module attributes {stable_mosaic.version = 11 : i64} {
  func.func @_encoder_kernel(%arg0: memref<6x8x128xf32, #tpu.memory_space<vmem>>, %arg1: memref<128x384xf32, #tpu.memory_space<vmem>>, %arg2: memref<128x384xf32, #tpu.memory_space<vmem>>, %arg3: memref<1x384xf32, #tpu.memory_space<vmem>>, %arg4: memref<1x384xf32, #tpu.memory_space<vmem>>, %arg5: memref<128x384xf32, #tpu.memory_space<vmem>>, %arg6: memref<128x384xf32, #tpu.memory_space<vmem>>, %arg7: memref<1x384xf32, #tpu.memory_space<vmem>>, %arg8: memref<1x384xf32, #tpu.memory_space<vmem>>, %arg9: memref<128x128xf32, #tpu.memory_space<vmem>>, %arg10: memref<128x128xf32, #tpu.memory_space<vmem>>, %arg11: memref<1x128xf32, #tpu.memory_space<vmem>>, %arg12: memref<6x8x128xf32, #tpu.memory_space<vmem>>, %arg13: memref<6x8x128xf32, #tpu.memory_space<vmem>>, %arg14: memref<8x128xf32, #tpu.memory_space<vmem>>, %arg15: memref<6x8x384xf32, #tpu.memory_space<vmem>>, %arg16: memref<6x8x384xf32, #tpu.memory_space<vmem>>) attributes {dimension_semantics = [], scalar_prefetch = 0 : i64, scratch_operands = 2 : i64, tpu.core_type = #tpu.core_type<tc>} {
    %c0 = arith.constant 0 : index
    %c0_0 = arith.constant 0 : index
    %c0_1 = arith.constant 0 : index
    %0 = vector.load %arg0[%c0, %c0_0, %c0_1] : memref<6x8x128xf32, #tpu.memory_space<vmem>>, vector<6x8x128xf32>
    %1 = vector.shape_cast %0 : vector<6x8x128xf32> to vector<48x128xf32>
    %c0_2 = arith.constant 0 : index
    %c0_3 = arith.constant 0 : index
    %2 = vector.load %arg1[%c0_2, %c0_3] : memref<128x384xf32, #tpu.memory_space<vmem>>, vector<128x384xf32>
    %cst = arith.constant dense<0.000000e+00> : vector<48x384xf32>
    %3 = tpu.matmul %1, %2, %cst {dimension_numbers = #tpu.dot_dimension_numbers<[1], [0], [0], [1], [0, 0, 1, 1], [], []>} : vector<48x128xf32>, vector<128x384xf32>, vector<48x384xf32> -> vector<48x384xf32>
    %c0_4 = arith.constant 0 : index
    %c0_5 = arith.constant 0 : index
    %4 = vector.load %arg3[%c0_4, %c0_5] : memref<1x384xf32, #tpu.memory_space<vmem>>, vector<1x384xf32>
    %5 = vector.broadcast %4 : vector<1x384xf32> to vector<48x384xf32>
    %6 = arith.addf %3, %5 : vector<48x384xf32>
    %7 = vector.shape_cast %6 : vector<48x384xf32> to vector<6x8x384xf32>
    %c0_6 = arith.constant 0 : index
    %c0_7 = arith.constant 0 : index
    %c0_8 = arith.constant 0 : index
    %8 = vector.load %arg15[%c0_6, %c0_7, %c0_8] : memref<6x8x384xf32, #tpu.memory_space<vmem>>, vector<6x8x384xf32>
    tpu.vector_store %arg15[%c0_6, %c0_7, %c0_8], %7 {strides = array<i32>} : memref<6x8x384xf32, #tpu.memory_space<vmem>>, vector<6x8x384xf32>,
    %c0_9 = arith.constant 0 : index
    %c0_10 = arith.constant 0 : index
    %9 = vector.load %arg5[%c0_9, %c0_10] : memref<128x384xf32, #tpu.memory_space<vmem>>, vector<128x384xf32>
    %cst_11 = arith.constant dense<0.000000e+00> : vector<48x384xf32>
    %10 = tpu.matmul %1, %9, %cst_11 {dimension_numbers = #tpu.dot_dimension_numbers<[1], [0], [0], [1], [0, 0, 1, 1], [], []>} : vector<48x128xf32>, vector<128x384xf32>, vector<48x384xf32> -> vector<48x384xf32>
    %c0_12 = arith.constant 0 : index
    %c0_13 = arith.constant 0 : index
    %11 = vector.load %arg7[%c0_12, %c0_13] : memref<1x384xf32, #tpu.memory_space<vmem>>, vector<1x384xf32>
    %12 = vector.broadcast %11 : vector<1x384xf32> to vector<48x384xf32>
    %13 = arith.addf %10, %12 : vector<48x384xf32>
    %14 = vector.shape_cast %13 : vector<48x384xf32> to vector<6x8x384xf32>
    %c0_14 = arith.constant 0 : index
    %c0_15 = arith.constant 0 : index
    %c0_16 = arith.constant 0 : index
    %15 = vector.load %arg16[%c0_14, %c0_15, %c0_16] : memref<6x8x384xf32, #tpu.memory_space<vmem>>, vector<6x8x384xf32>
    tpu.vector_store %arg16[%c0_14, %c0_15, %c0_16], %14 {strides = array<i32>} : memref<6x8x384xf32, #tpu.memory_space<vmem>>, vector<6x8x384xf32>,
    %cst_17 = arith.constant 0.000000e+00 : f32
    %16 = vector.broadcast %cst_17 : f32 to vector<8x128xf32>
    %cst_18 = arith.constant 0.000000e+00 : f32
    %17 = vector.broadcast %cst_18 : f32 to vector<8x128xf32>
    %c0_19 = arith.constant 0 : index
    %c0_20 = arith.constant 0 : index
    %18 = vector.load %arg2[%c0_19, %c0_20] : memref<128x384xf32, #tpu.memory_space<vmem>>, vector<128x384xf32>
    %cst_21 = arith.constant dense<0.000000e+00> : vector<8x384xf32>
    %19 = tpu.matmul %16, %18, %cst_21 {dimension_numbers = #tpu.dot_dimension_numbers<[1], [0], [0], [1], [0, 0, 1, 1], [], []>} : vector<8x128xf32>, vector<128x384xf32>, vector<8x384xf32> -> vector<8x384xf32>
    %c0_22 = arith.constant 0 : index
    %c0_23 = arith.constant 0 : index
    %20 = vector.load %arg4[%c0_22, %c0_23] : memref<1x384xf32, #tpu.memory_space<vmem>>, vector<1x384xf32>
    %21 = vector.broadcast %20 : vector<1x384xf32> to vector<8x384xf32>
    %22 = arith.addf %19, %21 : vector<8x384xf32>
    %c0_24 = arith.constant 0 : index
    %c0_25 = arith.constant 0 : index
    %c0_26 = arith.constant 0 : index
    %23 = vector.load %arg15[%c0_24, %c0_25, %c0_26] : memref<6x8x384xf32, #tpu.memory_space<vmem>>, vector<1x8x384xf32>
    %24 = vector.shape_cast %23 : vector<1x8x384xf32> to vector<8x384xf32>
    %25 = vector.extract_strided_slice %24 {offsets = [0, 0], sizes = [8, 128], strides = [1, 1]} : vector<8x384xf32> to vector<8x128xf32>
    %26 = vector.extract_strided_slice %22 {offsets = [0, 0], sizes = [8, 128], strides = [1, 1]} : vector<8x384xf32> to vector<8x128xf32>
    %27 = arith.addf %25, %26 : vector<8x128xf32>
    %28 = arith.negf %27 : vector<8x128xf32>
    %29 = math.exp %28 : vector<8x128xf32>
    %cst_27 = arith.constant 1.000000e+00 : f32
    %30 = vector.broadcast %cst_27 : f32 to vector<8x128xf32>
    %31 = arith.addf %30, %29 : vector<8x128xf32>
    %32 = arith.divf %30, %31 : vector<8x128xf32>
    %33 = vector.extract_strided_slice %24 {offsets = [0, 128], sizes = [8, 128], strides = [1, 1]} : vector<8x384xf32> to vector<8x128xf32>
    %34 = vector.extract_strided_slice %22 {offsets = [0, 128], sizes = [8, 128], strides = [1, 1]} : vector<8x384xf32> to vector<8x128xf32>
    %35 = arith.addf %33, %34 : vector<8x128xf32>
    %36 = arith.negf %35 : vector<8x128xf32>
    %37 = math.exp %36 : vector<8x128xf32>
    %cst_28 = arith.constant 1.000000e+00 : f32
    %38 = vector.broadcast %cst_28 : f32 to vector<8x128xf32>
    %39 = arith.addf %38, %37 : vector<8x128xf32>
    %40 = arith.divf %38, %39 : vector<8x128xf32>
    %41 = vector.extract_strided_slice %24 {offsets = [0, 256], sizes = [8, 128], strides = [1, 1]} : vector<8x384xf32> to vector<8x128xf32>
    %42 = vector.extract_strided_slice %22 {offsets = [0, 256], sizes = [8, 128], strides = [1, 1]} : vector<8x384xf32> to vector<8x128xf32>
    %43 = arith.mulf %32, %42 : vector<8x128xf32>
    %44 = arith.addf %41, %43 : vector<8x128xf32>
    %45 = math.tanh %44 : vector<8x128xf32>
    %cst_29 = arith.constant 1.000000e+00 : f32
    %46 = vector.broadcast %cst_29 : f32 to vector<8x128xf32>
    %47 = arith.subf %46, %40 : vector<8x128xf32>
    %48 = arith.mulf %47, %45 : vector<8x128xf32>
    %49 = arith.mulf %40, %16 : vector<8x128xf32>
    %50 = arith.addf %48, %49 : vector<8x128xf32>
    %c0_30 = arith.constant 0 : index
    %c0_31 = arith.constant 0 : index
    %c0_32 = arith.constant 0 : index
    %51 = vector.load %arg12[%c0_30, %c0_31, %c0_32] : memref<6x8x128xf32, #tpu.memory_space<vmem>>, vector<1x8x128xf32>
    %52 = vector.shape_cast %51 : vector<1x8x128xf32> to vector<8x128xf32>
    %53 = vector.shape_cast %50 : vector<8x128xf32> to vector<1x8x128xf32>
    tpu.vector_store %arg12[%c0_30, %c0_31, %c0_32], %53 {strides = array<i32>} : memref<6x8x128xf32, #tpu.memory_space<vmem>>, vector<1x8x128xf32>,
    %c0_33 = arith.constant 0 : index
    %c0_34 = arith.constant 0 : index
    %54 = vector.load %arg6[%c0_33, %c0_34] : memref<128x384xf32, #tpu.memory_space<vmem>>, vector<128x384xf32>
    %cst_35 = arith.constant dense<0.000000e+00> : vector<8x384xf32>
    %55 = tpu.matmul %17, %54, %cst_35 {dimension_numbers = #tpu.dot_dimension_numbers<[1], [0], [0], [1], [0, 0, 1, 1], [], []>} : vector<8x128xf32>, vector<128x384xf32>, vector<8x384xf32> -> vector<8x384xf32>
    %c0_36 = arith.constant 0 : index
    %c0_37 = arith.constant 0 : index
    %56 = vector.load %arg8[%c0_36, %c0_37] : memref<1x384xf32, #tpu.memory_space<vmem>>, vector<1x384xf32>
    %57 = vector.broadcast %56 : vector<1x384xf32> to vector<8x384xf32>
    %58 = arith.addf %55, %57 : vector<8x384xf32>
    %c5 = arith.constant 5 : index
    %c0_38 = arith.constant 0 : index
    %c0_39 = arith.constant 0 : index
    %59 = vector.load %arg16[%c5, %c0_38, %c0_39] : memref<6x8x384xf32, #tpu.memory_space<vmem>>, vector<1x8x384xf32>
    %60 = vector.shape_cast %59 : vector<1x8x384xf32> to vector<8x384xf32>
    %61 = vector.extract_strided_slice %60 {offsets = [0, 0], sizes = [8, 128], strides = [1, 1]} : vector<8x384xf32> to vector<8x128xf32>
    %62 = vector.extract_strided_slice %58 {offsets = [0, 0], sizes = [8, 128], strides = [1, 1]} : vector<8x384xf32> to vector<8x128xf32>
    %63 = arith.addf %61, %62 : vector<8x128xf32>
    %64 = arith.negf %63 : vector<8x128xf32>
    %65 = math.exp %64 : vector<8x128xf32>
    %cst_40 = arith.constant 1.000000e+00 : f32
    %66 = vector.broadcast %cst_40 : f32 to vector<8x128xf32>
    %67 = arith.addf %66, %65 : vector<8x128xf32>
    %68 = arith.divf %66, %67 : vector<8x128xf32>
    %69 = vector.extract_strided_slice %60 {offsets = [0, 128], sizes = [8, 128], strides = [1, 1]} : vector<8x384xf32> to vector<8x128xf32>
    %70 = vector.extract_strided_slice %58 {offsets = [0, 128], sizes = [8, 128], strides = [1, 1]} : vector<8x384xf32> to vector<8x128xf32>
    %71 = arith.addf %69, %70 : vector<8x128xf32>
    %72 = arith.negf %71 : vector<8x128xf32>
    %73 = math.exp %72 : vector<8x128xf32>
    %cst_41 = arith.constant 1.000000e+00 : f32
    %74 = vector.broadcast %cst_41 : f32 to vector<8x128xf32>
    %75 = arith.addf %74, %73 : vector<8x128xf32>
    %76 = arith.divf %74, %75 : vector<8x128xf32>
    %77 = vector.extract_strided_slice %60 {offsets = [0, 256], sizes = [8, 128], strides = [1, 1]} : vector<8x384xf32> to vector<8x128xf32>
    %78 = vector.extract_strided_slice %58 {offsets = [0, 256], sizes = [8, 128], strides = [1, 1]} : vector<8x384xf32> to vector<8x128xf32>
    %79 = arith.mulf %68, %78 : vector<8x128xf32>
    %80 = arith.addf %77, %79 : vector<8x128xf32>
    %81 = math.tanh %80 : vector<8x128xf32>
    %cst_42 = arith.constant 1.000000e+00 : f32
    %82 = vector.broadcast %cst_42 : f32 to vector<8x128xf32>
    %83 = arith.subf %82, %76 : vector<8x128xf32>
    %84 = arith.mulf %83, %81 : vector<8x128xf32>
    %85 = arith.mulf %76, %17 : vector<8x128xf32>
    %86 = arith.addf %84, %85 : vector<8x128xf32>
    %c5_43 = arith.constant 5 : index
    %c0_44 = arith.constant 0 : index
    %c0_45 = arith.constant 0 : index
    %87 = vector.load %arg13[%c5_43, %c0_44, %c0_45] : memref<6x8x128xf32, #tpu.memory_space<vmem>>, vector<1x8x128xf32>
    %88 = vector.shape_cast %87 : vector<1x8x128xf32> to vector<8x128xf32>
    %89 = vector.shape_cast %86 : vector<8x128xf32> to vector<1x8x128xf32>
    tpu.vector_store %arg13[%c5_43, %c0_44, %c0_45], %89 {strides = array<i32>} : memref<6x8x128xf32, #tpu.memory_space<vmem>>, vector<1x8x128xf32>,
    %c0_46 = arith.constant 0 : index
    %c0_47 = arith.constant 0 : index
    %90 = vector.load %arg2[%c0_46, %c0_47] : memref<128x384xf32, #tpu.memory_space<vmem>>, vector<128x384xf32>
    %cst_48 = arith.constant dense<0.000000e+00> : vector<8x384xf32>
    %91 = tpu.matmul %50, %90, %cst_48 {dimension_numbers = #tpu.dot_dimension_numbers<[1], [0], [0], [1], [0, 0, 1, 1], [], []>} : vector<8x128xf32>, vector<128x384xf32>, vector<8x384xf32> -> vector<8x384xf32>
    %c0_49 = arith.constant 0 : index
    %c0_50 = arith.constant 0 : index
    %92 = vector.load %arg4[%c0_49, %c0_50] : memref<1x384xf32, #tpu.memory_space<vmem>>, vector<1x384xf32>
    %93 = vector.broadcast %92 : vector<1x384xf32> to vector<8x384xf32>
    %94 = arith.addf %91, %93 : vector<8x384xf32>
    %c1 = arith.constant 1 : index
    %c0_51 = arith.constant 0 : index
    %c0_52 = arith.constant 0 : index
    %95 = vector.load %arg15[%c1, %c0_51, %c0_52] : memref<6x8x384xf32, #tpu.memory_space<vmem>>, vector<1x8x384xf32>
    %96 = vector.shape_cast %95 : vector<1x8x384xf32> to vector<8x384xf32>
    %97 = vector.extract_strided_slice %96 {offsets = [0, 0], sizes = [8, 128], strides = [1, 1]} : vector<8x384xf32> to vector<8x128xf32>
    %98 = vector.extract_strided_slice %94 {offsets = [0, 0], sizes = [8, 128], strides = [1, 1]} : vector<8x384xf32> to vector<8x128xf32>
    %99 = arith.addf %97, %98 : vector<8x128xf32>
    %100 = arith.negf %99 : vector<8x128xf32>
    %101 = math.exp %100 : vector<8x128xf32>
    %cst_53 = arith.constant 1.000000e+00 : f32
    %102 = vector.broadcast %cst_53 : f32 to vector<8x128xf32>
    %103 = arith.addf %102, %101 : vector<8x128xf32>
    %104 = arith.divf %102, %103 : vector<8x128xf32>
    %105 = vector.extract_strided_slice %96 {offsets = [0, 128], sizes = [8, 128], strides = [1, 1]} : vector<8x384xf32> to vector<8x128xf32>
    %106 = vector.extract_strided_slice %94 {offsets = [0, 128], sizes = [8, 128], strides = [1, 1]} : vector<8x384xf32> to vector<8x128xf32>
    %107 = arith.addf %105, %106 : vector<8x128xf32>
    %108 = arith.negf %107 : vector<8x128xf32>
    %109 = math.exp %108 : vector<8x128xf32>
    %cst_54 = arith.constant 1.000000e+00 : f32
    %110 = vector.broadcast %cst_54 : f32 to vector<8x128xf32>
    %111 = arith.addf %110, %109 : vector<8x128xf32>
    %112 = arith.divf %110, %111 : vector<8x128xf32>
    %113 = vector.extract_strided_slice %96 {offsets = [0, 256], sizes = [8, 128], strides = [1, 1]} : vector<8x384xf32> to vector<8x128xf32>
    %114 = vector.extract_strided_slice %94 {offsets = [0, 256], sizes = [8, 128], strides = [1, 1]} : vector<8x384xf32> to vector<8x128xf32>
    %115 = arith.mulf %104, %114 : vector<8x128xf32>
    %116 = arith.addf %113, %115 : vector<8x128xf32>
    %117 = math.tanh %116 : vector<8x128xf32>
    %cst_55 = arith.constant 1.000000e+00 : f32
    %118 = vector.broadcast %cst_55 : f32 to vector<8x128xf32>
    %119 = arith.subf %118, %112 : vector<8x128xf32>
    %120 = arith.mulf %119, %117 : vector<8x128xf32>
    %121 = arith.mulf %112, %50 : vector<8x128xf32>
    %122 = arith.addf %120, %121 : vector<8x128xf32>
    %c1_56 = arith.constant 1 : index
    %c0_57 = arith.constant 0 : index
    %c0_58 = arith.constant 0 : index
    %123 = vector.load %arg12[%c1_56, %c0_57, %c0_58] : memref<6x8x128xf32, #tpu.memory_space<vmem>>, vector<1x8x128xf32>
    %124 = vector.shape_cast %123 : vector<1x8x128xf32> to vector<8x128xf32>
    %125 = vector.shape_cast %122 : vector<8x128xf32> to vector<1x8x128xf32>
    tpu.vector_store %arg12[%c1_56, %c0_57, %c0_58], %125 {strides = array<i32>} : memref<6x8x128xf32, #tpu.memory_space<vmem>>, vector<1x8x128xf32>,
    %c0_59 = arith.constant 0 : index
    %c0_60 = arith.constant 0 : index
    %126 = vector.load %arg6[%c0_59, %c0_60] : memref<128x384xf32, #tpu.memory_space<vmem>>, vector<128x384xf32>
    %cst_61 = arith.constant dense<0.000000e+00> : vector<8x384xf32>
    %127 = tpu.matmul %86, %126, %cst_61 {dimension_numbers = #tpu.dot_dimension_numbers<[1], [0], [0], [1], [0, 0, 1, 1], [], []>} : vector<8x128xf32>, vector<128x384xf32>, vector<8x384xf32> -> vector<8x384xf32>
    %c0_62 = arith.constant 0 : index
    %c0_63 = arith.constant 0 : index
    %128 = vector.load %arg8[%c0_62, %c0_63] : memref<1x384xf32, #tpu.memory_space<vmem>>, vector<1x384xf32>
    %129 = vector.broadcast %128 : vector<1x384xf32> to vector<8x384xf32>
    %130 = arith.addf %127, %129 : vector<8x384xf32>
    %c4 = arith.constant 4 : index
    %c0_64 = arith.constant 0 : index
    %c0_65 = arith.constant 0 : index
    %131 = vector.load %arg16[%c4, %c0_64, %c0_65] : memref<6x8x384xf32, #tpu.memory_space<vmem>>, vector<1x8x384xf32>
    %132 = vector.shape_cast %131 : vector<1x8x384xf32> to vector<8x384xf32>
    %133 = vector.extract_strided_slice %132 {offsets = [0, 0], sizes = [8, 128], strides = [1, 1]} : vector<8x384xf32> to vector<8x128xf32>
    %134 = vector.extract_strided_slice %130 {offsets = [0, 0], sizes = [8, 128], strides = [1, 1]} : vector<8x384xf32> to vector<8x128xf32>
    %135 = arith.addf %133, %134 : vector<8x128xf32>
    %136 = arith.negf %135 : vector<8x128xf32>
    %137 = math.exp %136 : vector<8x128xf32>
    %cst_66 = arith.constant 1.000000e+00 : f32
    %138 = vector.broadcast %cst_66 : f32 to vector<8x128xf32>
    %139 = arith.addf %138, %137 : vector<8x128xf32>
    %140 = arith.divf %138, %139 : vector<8x128xf32>
    %141 = vector.extract_strided_slice %132 {offsets = [0, 128], sizes = [8, 128], strides = [1, 1]} : vector<8x384xf32> to vector<8x128xf32>
    %142 = vector.extract_strided_slice %130 {offsets = [0, 128], sizes = [8, 128], strides = [1, 1]} : vector<8x384xf32> to vector<8x128xf32>
    %143 = arith.addf %141, %142 : vector<8x128xf32>
    %144 = arith.negf %143 : vector<8x128xf32>
    %145 = math.exp %144 : vector<8x128xf32>
    %cst_67 = arith.constant 1.000000e+00 : f32
    %146 = vector.broadcast %cst_67 : f32 to vector<8x128xf32>
    %147 = arith.addf %146, %145 : vector<8x128xf32>
    %148 = arith.divf %146, %147 : vector<8x128xf32>
    %149 = vector.extract_strided_slice %132 {offsets = [0, 256], sizes = [8, 128], strides = [1, 1]} : vector<8x384xf32> to vector<8x128xf32>
    %150 = vector.extract_strided_slice %130 {offsets = [0, 256], sizes = [8, 128], strides = [1, 1]} : vector<8x384xf32> to vector<8x128xf32>
    %151 = arith.mulf %140, %150 : vector<8x128xf32>
    %152 = arith.addf %149, %151 : vector<8x128xf32>
    %153 = math.tanh %152 : vector<8x128xf32>
    %cst_68 = arith.constant 1.000000e+00 : f32
    %154 = vector.broadcast %cst_68 : f32 to vector<8x128xf32>
    %155 = arith.subf %154, %148 : vector<8x128xf32>
    %156 = arith.mulf %155, %153 : vector<8x128xf32>
    %157 = arith.mulf %148, %86 : vector<8x128xf32>
    %158 = arith.addf %156, %157 : vector<8x128xf32>
    %c4_69 = arith.constant 4 : index
    %c0_70 = arith.constant 0 : index
    %c0_71 = arith.constant 0 : index
    %159 = vector.load %arg13[%c4_69, %c0_70, %c0_71] : memref<6x8x128xf32, #tpu.memory_space<vmem>>, vector<1x8x128xf32>
    %160 = vector.shape_cast %159 : vector<1x8x128xf32> to vector<8x128xf32>
    %161 = vector.shape_cast %158 : vector<8x128xf32> to vector<1x8x128xf32>
    tpu.vector_store %arg13[%c4_69, %c0_70, %c0_71], %161 {strides = array<i32>} : memref<6x8x128xf32, #tpu.memory_space<vmem>>, vector<1x8x128xf32>,
    %c0_72 = arith.constant 0 : index
    %c0_73 = arith.constant 0 : index
    %162 = vector.load %arg2[%c0_72, %c0_73] : memref<128x384xf32, #tpu.memory_space<vmem>>, vector<128x384xf32>
    %cst_74 = arith.constant dense<0.000000e+00> : vector<8x384xf32>
    %163 = tpu.matmul %122, %162, %cst_74 {dimension_numbers = #tpu.dot_dimension_numbers<[1], [0], [0], [1], [0, 0, 1, 1], [], []>} : vector<8x128xf32>, vector<128x384xf32>, vector<8x384xf32> -> vector<8x384xf32>
    %c0_75 = arith.constant 0 : index
    %c0_76 = arith.constant 0 : index
    %164 = vector.load %arg4[%c0_75, %c0_76] : memref<1x384xf32, #tpu.memory_space<vmem>>, vector<1x384xf32>
    %165 = vector.broadcast %164 : vector<1x384xf32> to vector<8x384xf32>
    %166 = arith.addf %163, %165 : vector<8x384xf32>
    %c2 = arith.constant 2 : index
    %c0_77 = arith.constant 0 : index
    %c0_78 = arith.constant 0 : index
    %167 = vector.load %arg15[%c2, %c0_77, %c0_78] : memref<6x8x384xf32, #tpu.memory_space<vmem>>, vector<1x8x384xf32>
    %168 = vector.shape_cast %167 : vector<1x8x384xf32> to vector<8x384xf32>
    %169 = vector.extract_strided_slice %168 {offsets = [0, 0], sizes = [8, 128], strides = [1, 1]} : vector<8x384xf32> to vector<8x128xf32>
    %170 = vector.extract_strided_slice %166 {offsets = [0, 0], sizes = [8, 128], strides = [1, 1]} : vector<8x384xf32> to vector<8x128xf32>
    %171 = arith.addf %169, %170 : vector<8x128xf32>
    %172 = arith.negf %171 : vector<8x128xf32>
    %173 = math.exp %172 : vector<8x128xf32>
    %cst_79 = arith.constant 1.000000e+00 : f32
    %174 = vector.broadcast %cst_79 : f32 to vector<8x128xf32>
    %175 = arith.addf %174, %173 : vector<8x128xf32>
    %176 = arith.divf %174, %175 : vector<8x128xf32>
    %177 = vector.extract_strided_slice %168 {offsets = [0, 128], sizes = [8, 128], strides = [1, 1]} : vector<8x384xf32> to vector<8x128xf32>
    %178 = vector.extract_strided_slice %166 {offsets = [0, 128], sizes = [8, 128], strides = [1, 1]} : vector<8x384xf32> to vector<8x128xf32>
    %179 = arith.addf %177, %178 : vector<8x128xf32>
    %180 = arith.negf %179 : vector<8x128xf32>
    %181 = math.exp %180 : vector<8x128xf32>
    %cst_80 = arith.constant 1.000000e+00 : f32
    %182 = vector.broadcast %cst_80 : f32 to vector<8x128xf32>
    %183 = arith.addf %182, %181 : vector<8x128xf32>
    %184 = arith.divf %182, %183 : vector<8x128xf32>
    %185 = vector.extract_strided_slice %168 {offsets = [0, 256], sizes = [8, 128], strides = [1, 1]} : vector<8x384xf32> to vector<8x128xf32>
    %186 = vector.extract_strided_slice %166 {offsets = [0, 256], sizes = [8, 128], strides = [1, 1]} : vector<8x384xf32> to vector<8x128xf32>
    %187 = arith.mulf %176, %186 : vector<8x128xf32>
    %188 = arith.addf %185, %187 : vector<8x128xf32>
    %189 = math.tanh %188 : vector<8x128xf32>
    %cst_81 = arith.constant 1.000000e+00 : f32
    %190 = vector.broadcast %cst_81 : f32 to vector<8x128xf32>
    %191 = arith.subf %190, %184 : vector<8x128xf32>
    %192 = arith.mulf %191, %189 : vector<8x128xf32>
    %193 = arith.mulf %184, %122 : vector<8x128xf32>
    %194 = arith.addf %192, %193 : vector<8x128xf32>
    %c2_82 = arith.constant 2 : index
    %c0_83 = arith.constant 0 : index
    %c0_84 = arith.constant 0 : index
    %195 = vector.load %arg12[%c2_82, %c0_83, %c0_84] : memref<6x8x128xf32, #tpu.memory_space<vmem>>, vector<1x8x128xf32>
    %196 = vector.shape_cast %195 : vector<1x8x128xf32> to vector<8x128xf32>
    %197 = vector.shape_cast %194 : vector<8x128xf32> to vector<1x8x128xf32>
    tpu.vector_store %arg12[%c2_82, %c0_83, %c0_84], %197 {strides = array<i32>} : memref<6x8x128xf32, #tpu.memory_space<vmem>>, vector<1x8x128xf32>,
    %c0_85 = arith.constant 0 : index
    %c0_86 = arith.constant 0 : index
    %198 = vector.load %arg6[%c0_85, %c0_86] : memref<128x384xf32, #tpu.memory_space<vmem>>, vector<128x384xf32>
    %cst_87 = arith.constant dense<0.000000e+00> : vector<8x384xf32>
    %199 = tpu.matmul %158, %198, %cst_87 {dimension_numbers = #tpu.dot_dimension_numbers<[1], [0], [0], [1], [0, 0, 1, 1], [], []>} : vector<8x128xf32>, vector<128x384xf32>, vector<8x384xf32> -> vector<8x384xf32>
    %c0_88 = arith.constant 0 : index
    %c0_89 = arith.constant 0 : index
    %200 = vector.load %arg8[%c0_88, %c0_89] : memref<1x384xf32, #tpu.memory_space<vmem>>, vector<1x384xf32>
    %201 = vector.broadcast %200 : vector<1x384xf32> to vector<8x384xf32>
    %202 = arith.addf %199, %201 : vector<8x384xf32>
    %c3 = arith.constant 3 : index
    %c0_90 = arith.constant 0 : index
    %c0_91 = arith.constant 0 : index
    %203 = vector.load %arg16[%c3, %c0_90, %c0_91] : memref<6x8x384xf32, #tpu.memory_space<vmem>>, vector<1x8x384xf32>
    %204 = vector.shape_cast %203 : vector<1x8x384xf32> to vector<8x384xf32>
    %205 = vector.extract_strided_slice %204 {offsets = [0, 0], sizes = [8, 128], strides = [1, 1]} : vector<8x384xf32> to vector<8x128xf32>
    %206 = vector.extract_strided_slice %202 {offsets = [0, 0], sizes = [8, 128], strides = [1, 1]} : vector<8x384xf32> to vector<8x128xf32>
    %207 = arith.addf %205, %206 : vector<8x128xf32>
    %208 = arith.negf %207 : vector<8x128xf32>
    %209 = math.exp %208 : vector<8x128xf32>
    %cst_92 = arith.constant 1.000000e+00 : f32
    %210 = vector.broadcast %cst_92 : f32 to vector<8x128xf32>
    %211 = arith.addf %210, %209 : vector<8x128xf32>
    %212 = arith.divf %210, %211 : vector<8x128xf32>
    %213 = vector.extract_strided_slice %204 {offsets = [0, 128], sizes = [8, 128], strides = [1, 1]} : vector<8x384xf32> to vector<8x128xf32>
    %214 = vector.extract_strided_slice %202 {offsets = [0, 128], sizes = [8, 128], strides = [1, 1]} : vector<8x384xf32> to vector<8x128xf32>
    %215 = arith.addf %213, %214 : vector<8x128xf32>
    %216 = arith.negf %215 : vector<8x128xf32>
    %217 = math.exp %216 : vector<8x128xf32>
    %cst_93 = arith.constant 1.000000e+00 : f32
    %218 = vector.broadcast %cst_93 : f32 to vector<8x128xf32>
    %219 = arith.addf %218, %217 : vector<8x128xf32>
    %220 = arith.divf %218, %219 : vector<8x128xf32>
    %221 = vector.extract_strided_slice %204 {offsets = [0, 256], sizes = [8, 128], strides = [1, 1]} : vector<8x384xf32> to vector<8x128xf32>
    %222 = vector.extract_strided_slice %202 {offsets = [0, 256], sizes = [8, 128], strides = [1, 1]} : vector<8x384xf32> to vector<8x128xf32>
    %223 = arith.mulf %212, %222 : vector<8x128xf32>
    %224 = arith.addf %221, %223 : vector<8x128xf32>
    %225 = math.tanh %224 : vector<8x128xf32>
    %cst_94 = arith.constant 1.000000e+00 : f32
    %226 = vector.broadcast %cst_94 : f32 to vector<8x128xf32>
    %227 = arith.subf %226, %220 : vector<8x128xf32>
    %228 = arith.mulf %227, %225 : vector<8x128xf32>
    %229 = arith.mulf %220, %158 : vector<8x128xf32>
    %230 = arith.addf %228, %229 : vector<8x128xf32>
    %c3_95 = arith.constant 3 : index
    %c0_96 = arith.constant 0 : index
    %c0_97 = arith.constant 0 : index
    %231 = vector.load %arg13[%c3_95, %c0_96, %c0_97] : memref<6x8x128xf32, #tpu.memory_space<vmem>>, vector<1x8x128xf32>
    %232 = vector.shape_cast %231 : vector<1x8x128xf32> to vector<8x128xf32>
    %233 = vector.shape_cast %230 : vector<8x128xf32> to vector<1x8x128xf32>
    tpu.vector_store %arg13[%c3_95, %c0_96, %c0_97], %233 {strides = array<i32>} : memref<6x8x128xf32, #tpu.memory_space<vmem>>, vector<1x8x128xf32>,
    %c0_98 = arith.constant 0 : index
    %c0_99 = arith.constant 0 : index
    %234 = vector.load %arg2[%c0_98, %c0_99] : memref<128x384xf32, #tpu.memory_space<vmem>>, vector<128x384xf32>
    %cst_100 = arith.constant dense<0.000000e+00> : vector<8x384xf32>
    %235 = tpu.matmul %194, %234, %cst_100 {dimension_numbers = #tpu.dot_dimension_numbers<[1], [0], [0], [1], [0, 0, 1, 1], [], []>} : vector<8x128xf32>, vector<128x384xf32>, vector<8x384xf32> -> vector<8x384xf32>
    %c0_101 = arith.constant 0 : index
    %c0_102 = arith.constant 0 : index
    %236 = vector.load %arg4[%c0_101, %c0_102] : memref<1x384xf32, #tpu.memory_space<vmem>>, vector<1x384xf32>
    %237 = vector.broadcast %236 : vector<1x384xf32> to vector<8x384xf32>
    %238 = arith.addf %235, %237 : vector<8x384xf32>
    %c3_103 = arith.constant 3 : index
    %c0_104 = arith.constant 0 : index
    %c0_105 = arith.constant 0 : index
    %239 = vector.load %arg15[%c3_103, %c0_104, %c0_105] : memref<6x8x384xf32, #tpu.memory_space<vmem>>, vector<1x8x384xf32>
    %240 = vector.shape_cast %239 : vector<1x8x384xf32> to vector<8x384xf32>
    %241 = vector.extract_strided_slice %240 {offsets = [0, 0], sizes = [8, 128], strides = [1, 1]} : vector<8x384xf32> to vector<8x128xf32>
    %242 = vector.extract_strided_slice %238 {offsets = [0, 0], sizes = [8, 128], strides = [1, 1]} : vector<8x384xf32> to vector<8x128xf32>
    %243 = arith.addf %241, %242 : vector<8x128xf32>
    %244 = arith.negf %243 : vector<8x128xf32>
    %245 = math.exp %244 : vector<8x128xf32>
    %cst_106 = arith.constant 1.000000e+00 : f32
    %246 = vector.broadcast %cst_106 : f32 to vector<8x128xf32>
    %247 = arith.addf %246, %245 : vector<8x128xf32>
    %248 = arith.divf %246, %247 : vector<8x128xf32>
    %249 = vector.extract_strided_slice %240 {offsets = [0, 128], sizes = [8, 128], strides = [1, 1]} : vector<8x384xf32> to vector<8x128xf32>
    %250 = vector.extract_strided_slice %238 {offsets = [0, 128], sizes = [8, 128], strides = [1, 1]} : vector<8x384xf32> to vector<8x128xf32>
    %251 = arith.addf %249, %250 : vector<8x128xf32>
    %252 = arith.negf %251 : vector<8x128xf32>
    %253 = math.exp %252 : vector<8x128xf32>
    %cst_107 = arith.constant 1.000000e+00 : f32
    %254 = vector.broadcast %cst_107 : f32 to vector<8x128xf32>
    %255 = arith.addf %254, %253 : vector<8x128xf32>
    %256 = arith.divf %254, %255 : vector<8x128xf32>
    %257 = vector.extract_strided_slice %240 {offsets = [0, 256], sizes = [8, 128], strides = [1, 1]} : vector<8x384xf32> to vector<8x128xf32>
    %258 = vector.extract_strided_slice %238 {offsets = [0, 256], sizes = [8, 128], strides = [1, 1]} : vector<8x384xf32> to vector<8x128xf32>
    %259 = arith.mulf %248, %258 : vector<8x128xf32>
    %260 = arith.addf %257, %259 : vector<8x128xf32>
    %261 = math.tanh %260 : vector<8x128xf32>
    %cst_108 = arith.constant 1.000000e+00 : f32
    %262 = vector.broadcast %cst_108 : f32 to vector<8x128xf32>
    %263 = arith.subf %262, %256 : vector<8x128xf32>
    %264 = arith.mulf %263, %261 : vector<8x128xf32>
    %265 = arith.mulf %256, %194 : vector<8x128xf32>
    %266 = arith.addf %264, %265 : vector<8x128xf32>
    %c3_109 = arith.constant 3 : index
    %c0_110 = arith.constant 0 : index
    %c0_111 = arith.constant 0 : index
    %267 = vector.load %arg12[%c3_109, %c0_110, %c0_111] : memref<6x8x128xf32, #tpu.memory_space<vmem>>, vector<1x8x128xf32>
    %268 = vector.shape_cast %267 : vector<1x8x128xf32> to vector<8x128xf32>
    %269 = vector.shape_cast %266 : vector<8x128xf32> to vector<1x8x128xf32>
    tpu.vector_store %arg12[%c3_109, %c0_110, %c0_111], %269 {strides = array<i32>} : memref<6x8x128xf32, #tpu.memory_space<vmem>>, vector<1x8x128xf32>,
    %c0_112 = arith.constant 0 : index
    %c0_113 = arith.constant 0 : index
    %270 = vector.load %arg6[%c0_112, %c0_113] : memref<128x384xf32, #tpu.memory_space<vmem>>, vector<128x384xf32>
    %cst_114 = arith.constant dense<0.000000e+00> : vector<8x384xf32>
    %271 = tpu.matmul %230, %270, %cst_114 {dimension_numbers = #tpu.dot_dimension_numbers<[1], [0], [0], [1], [0, 0, 1, 1], [], []>} : vector<8x128xf32>, vector<128x384xf32>, vector<8x384xf32> -> vector<8x384xf32>
    %c0_115 = arith.constant 0 : index
    %c0_116 = arith.constant 0 : index
    %272 = vector.load %arg8[%c0_115, %c0_116] : memref<1x384xf32, #tpu.memory_space<vmem>>, vector<1x384xf32>
    %273 = vector.broadcast %272 : vector<1x384xf32> to vector<8x384xf32>
    %274 = arith.addf %271, %273 : vector<8x384xf32>
    %c2_117 = arith.constant 2 : index
    %c0_118 = arith.constant 0 : index
    %c0_119 = arith.constant 0 : index
    %275 = vector.load %arg16[%c2_117, %c0_118, %c0_119] : memref<6x8x384xf32, #tpu.memory_space<vmem>>, vector<1x8x384xf32>
    %276 = vector.shape_cast %275 : vector<1x8x384xf32> to vector<8x384xf32>
    %277 = vector.extract_strided_slice %276 {offsets = [0, 0], sizes = [8, 128], strides = [1, 1]} : vector<8x384xf32> to vector<8x128xf32>
    %278 = vector.extract_strided_slice %274 {offsets = [0, 0], sizes = [8, 128], strides = [1, 1]} : vector<8x384xf32> to vector<8x128xf32>
    %279 = arith.addf %277, %278 : vector<8x128xf32>
    %280 = arith.negf %279 : vector<8x128xf32>
    %281 = math.exp %280 : vector<8x128xf32>
    %cst_120 = arith.constant 1.000000e+00 : f32
    %282 = vector.broadcast %cst_120 : f32 to vector<8x128xf32>
    %283 = arith.addf %282, %281 : vector<8x128xf32>
    %284 = arith.divf %282, %283 : vector<8x128xf32>
    %285 = vector.extract_strided_slice %276 {offsets = [0, 128], sizes = [8, 128], strides = [1, 1]} : vector<8x384xf32> to vector<8x128xf32>
    %286 = vector.extract_strided_slice %274 {offsets = [0, 128], sizes = [8, 128], strides = [1, 1]} : vector<8x384xf32> to vector<8x128xf32>
    %287 = arith.addf %285, %286 : vector<8x128xf32>
    %288 = arith.negf %287 : vector<8x128xf32>
    %289 = math.exp %288 : vector<8x128xf32>
    %cst_121 = arith.constant 1.000000e+00 : f32
    %290 = vector.broadcast %cst_121 : f32 to vector<8x128xf32>
    %291 = arith.addf %290, %289 : vector<8x128xf32>
    %292 = arith.divf %290, %291 : vector<8x128xf32>
    %293 = vector.extract_strided_slice %276 {offsets = [0, 256], sizes = [8, 128], strides = [1, 1]} : vector<8x384xf32> to vector<8x128xf32>
    %294 = vector.extract_strided_slice %274 {offsets = [0, 256], sizes = [8, 128], strides = [1, 1]} : vector<8x384xf32> to vector<8x128xf32>
    %295 = arith.mulf %284, %294 : vector<8x128xf32>
    %296 = arith.addf %293, %295 : vector<8x128xf32>
    %297 = math.tanh %296 : vector<8x128xf32>
    %cst_122 = arith.constant 1.000000e+00 : f32
    %298 = vector.broadcast %cst_122 : f32 to vector<8x128xf32>
    %299 = arith.subf %298, %292 : vector<8x128xf32>
    %300 = arith.mulf %299, %297 : vector<8x128xf32>
    %301 = arith.mulf %292, %230 : vector<8x128xf32>
    %302 = arith.addf %300, %301 : vector<8x128xf32>
    %c2_123 = arith.constant 2 : index
    %c0_124 = arith.constant 0 : index
    %c0_125 = arith.constant 0 : index
    %303 = vector.load %arg13[%c2_123, %c0_124, %c0_125] : memref<6x8x128xf32, #tpu.memory_space<vmem>>, vector<1x8x128xf32>
    %304 = vector.shape_cast %303 : vector<1x8x128xf32> to vector<8x128xf32>
    %305 = vector.shape_cast %302 : vector<8x128xf32> to vector<1x8x128xf32>
    tpu.vector_store %arg13[%c2_123, %c0_124, %c0_125], %305 {strides = array<i32>} : memref<6x8x128xf32, #tpu.memory_space<vmem>>, vector<1x8x128xf32>,
    %c0_126 = arith.constant 0 : index
    %c0_127 = arith.constant 0 : index
    %306 = vector.load %arg2[%c0_126, %c0_127] : memref<128x384xf32, #tpu.memory_space<vmem>>, vector<128x384xf32>
    %cst_128 = arith.constant dense<0.000000e+00> : vector<8x384xf32>
    %307 = tpu.matmul %266, %306, %cst_128 {dimension_numbers = #tpu.dot_dimension_numbers<[1], [0], [0], [1], [0, 0, 1, 1], [], []>} : vector<8x128xf32>, vector<128x384xf32>, vector<8x384xf32> -> vector<8x384xf32>
    %c0_129 = arith.constant 0 : index
    %c0_130 = arith.constant 0 : index
    %308 = vector.load %arg4[%c0_129, %c0_130] : memref<1x384xf32, #tpu.memory_space<vmem>>, vector<1x384xf32>
    %309 = vector.broadcast %308 : vector<1x384xf32> to vector<8x384xf32>
    %310 = arith.addf %307, %309 : vector<8x384xf32>
    %c4_131 = arith.constant 4 : index
    %c0_132 = arith.constant 0 : index
    %c0_133 = arith.constant 0 : index
    %311 = vector.load %arg15[%c4_131, %c0_132, %c0_133] : memref<6x8x384xf32, #tpu.memory_space<vmem>>, vector<1x8x384xf32>
    %312 = vector.shape_cast %311 : vector<1x8x384xf32> to vector<8x384xf32>
    %313 = vector.extract_strided_slice %312 {offsets = [0, 0], sizes = [8, 128], strides = [1, 1]} : vector<8x384xf32> to vector<8x128xf32>
    %314 = vector.extract_strided_slice %310 {offsets = [0, 0], sizes = [8, 128], strides = [1, 1]} : vector<8x384xf32> to vector<8x128xf32>
    %315 = arith.addf %313, %314 : vector<8x128xf32>
    %316 = arith.negf %315 : vector<8x128xf32>
    %317 = math.exp %316 : vector<8x128xf32>
    %cst_134 = arith.constant 1.000000e+00 : f32
    %318 = vector.broadcast %cst_134 : f32 to vector<8x128xf32>
    %319 = arith.addf %318, %317 : vector<8x128xf32>
    %320 = arith.divf %318, %319 : vector<8x128xf32>
    %321 = vector.extract_strided_slice %312 {offsets = [0, 128], sizes = [8, 128], strides = [1, 1]} : vector<8x384xf32> to vector<8x128xf32>
    %322 = vector.extract_strided_slice %310 {offsets = [0, 128], sizes = [8, 128], strides = [1, 1]} : vector<8x384xf32> to vector<8x128xf32>
    %323 = arith.addf %321, %322 : vector<8x128xf32>
    %324 = arith.negf %323 : vector<8x128xf32>
    %325 = math.exp %324 : vector<8x128xf32>
    %cst_135 = arith.constant 1.000000e+00 : f32
    %326 = vector.broadcast %cst_135 : f32 to vector<8x128xf32>
    %327 = arith.addf %326, %325 : vector<8x128xf32>
    %328 = arith.divf %326, %327 : vector<8x128xf32>
    %329 = vector.extract_strided_slice %312 {offsets = [0, 256], sizes = [8, 128], strides = [1, 1]} : vector<8x384xf32> to vector<8x128xf32>
    %330 = vector.extract_strided_slice %310 {offsets = [0, 256], sizes = [8, 128], strides = [1, 1]} : vector<8x384xf32> to vector<8x128xf32>
    %331 = arith.mulf %320, %330 : vector<8x128xf32>
    %332 = arith.addf %329, %331 : vector<8x128xf32>
    %333 = math.tanh %332 : vector<8x128xf32>
    %cst_136 = arith.constant 1.000000e+00 : f32
    %334 = vector.broadcast %cst_136 : f32 to vector<8x128xf32>
    %335 = arith.subf %334, %328 : vector<8x128xf32>
    %336 = arith.mulf %335, %333 : vector<8x128xf32>
    %337 = arith.mulf %328, %266 : vector<8x128xf32>
    %338 = arith.addf %336, %337 : vector<8x128xf32>
    %c4_137 = arith.constant 4 : index
    %c0_138 = arith.constant 0 : index
    %c0_139 = arith.constant 0 : index
    %339 = vector.load %arg12[%c4_137, %c0_138, %c0_139] : memref<6x8x128xf32, #tpu.memory_space<vmem>>, vector<1x8x128xf32>
    %340 = vector.shape_cast %339 : vector<1x8x128xf32> to vector<8x128xf32>
    %341 = vector.shape_cast %338 : vector<8x128xf32> to vector<1x8x128xf32>
    tpu.vector_store %arg12[%c4_137, %c0_138, %c0_139], %341 {strides = array<i32>} : memref<6x8x128xf32, #tpu.memory_space<vmem>>, vector<1x8x128xf32>,
    %c0_140 = arith.constant 0 : index
    %c0_141 = arith.constant 0 : index
    %342 = vector.load %arg6[%c0_140, %c0_141] : memref<128x384xf32, #tpu.memory_space<vmem>>, vector<128x384xf32>
    %cst_142 = arith.constant dense<0.000000e+00> : vector<8x384xf32>
    %343 = tpu.matmul %302, %342, %cst_142 {dimension_numbers = #tpu.dot_dimension_numbers<[1], [0], [0], [1], [0, 0, 1, 1], [], []>} : vector<8x128xf32>, vector<128x384xf32>, vector<8x384xf32> -> vector<8x384xf32>
    %c0_143 = arith.constant 0 : index
    %c0_144 = arith.constant 0 : index
    %344 = vector.load %arg8[%c0_143, %c0_144] : memref<1x384xf32, #tpu.memory_space<vmem>>, vector<1x384xf32>
    %345 = vector.broadcast %344 : vector<1x384xf32> to vector<8x384xf32>
    %346 = arith.addf %343, %345 : vector<8x384xf32>
    %c1_145 = arith.constant 1 : index
    %c0_146 = arith.constant 0 : index
    %c0_147 = arith.constant 0 : index
    %347 = vector.load %arg16[%c1_145, %c0_146, %c0_147] : memref<6x8x384xf32, #tpu.memory_space<vmem>>, vector<1x8x384xf32>
    %348 = vector.shape_cast %347 : vector<1x8x384xf32> to vector<8x384xf32>
    %349 = vector.extract_strided_slice %348 {offsets = [0, 0], sizes = [8, 128], strides = [1, 1]} : vector<8x384xf32> to vector<8x128xf32>
    %350 = vector.extract_strided_slice %346 {offsets = [0, 0], sizes = [8, 128], strides = [1, 1]} : vector<8x384xf32> to vector<8x128xf32>
    %351 = arith.addf %349, %350 : vector<8x128xf32>
    %352 = arith.negf %351 : vector<8x128xf32>
    %353 = math.exp %352 : vector<8x128xf32>
    %cst_148 = arith.constant 1.000000e+00 : f32
    %354 = vector.broadcast %cst_148 : f32 to vector<8x128xf32>
    %355 = arith.addf %354, %353 : vector<8x128xf32>
    %356 = arith.divf %354, %355 : vector<8x128xf32>
    %357 = vector.extract_strided_slice %348 {offsets = [0, 128], sizes = [8, 128], strides = [1, 1]} : vector<8x384xf32> to vector<8x128xf32>
    %358 = vector.extract_strided_slice %346 {offsets = [0, 128], sizes = [8, 128], strides = [1, 1]} : vector<8x384xf32> to vector<8x128xf32>
    %359 = arith.addf %357, %358 : vector<8x128xf32>
    %360 = arith.negf %359 : vector<8x128xf32>
    %361 = math.exp %360 : vector<8x128xf32>
    %cst_149 = arith.constant 1.000000e+00 : f32
    %362 = vector.broadcast %cst_149 : f32 to vector<8x128xf32>
    %363 = arith.addf %362, %361 : vector<8x128xf32>
    %364 = arith.divf %362, %363 : vector<8x128xf32>
    %365 = vector.extract_strided_slice %348 {offsets = [0, 256], sizes = [8, 128], strides = [1, 1]} : vector<8x384xf32> to vector<8x128xf32>
    %366 = vector.extract_strided_slice %346 {offsets = [0, 256], sizes = [8, 128], strides = [1, 1]} : vector<8x384xf32> to vector<8x128xf32>
    %367 = arith.mulf %356, %366 : vector<8x128xf32>
    %368 = arith.addf %365, %367 : vector<8x128xf32>
    %369 = math.tanh %368 : vector<8x128xf32>
    %cst_150 = arith.constant 1.000000e+00 : f32
    %370 = vector.broadcast %cst_150 : f32 to vector<8x128xf32>
    %371 = arith.subf %370, %364 : vector<8x128xf32>
    %372 = arith.mulf %371, %369 : vector<8x128xf32>
    %373 = arith.mulf %364, %302 : vector<8x128xf32>
    %374 = arith.addf %372, %373 : vector<8x128xf32>
    %c1_151 = arith.constant 1 : index
    %c0_152 = arith.constant 0 : index
    %c0_153 = arith.constant 0 : index
    %375 = vector.load %arg13[%c1_151, %c0_152, %c0_153] : memref<6x8x128xf32, #tpu.memory_space<vmem>>, vector<1x8x128xf32>
    %376 = vector.shape_cast %375 : vector<1x8x128xf32> to vector<8x128xf32>
    %377 = vector.shape_cast %374 : vector<8x128xf32> to vector<1x8x128xf32>
    tpu.vector_store %arg13[%c1_151, %c0_152, %c0_153], %377 {strides = array<i32>} : memref<6x8x128xf32, #tpu.memory_space<vmem>>, vector<1x8x128xf32>,
    %c0_154 = arith.constant 0 : index
    %c0_155 = arith.constant 0 : index
    %378 = vector.load %arg2[%c0_154, %c0_155] : memref<128x384xf32, #tpu.memory_space<vmem>>, vector<128x384xf32>
    %cst_156 = arith.constant dense<0.000000e+00> : vector<8x384xf32>
    %379 = tpu.matmul %338, %378, %cst_156 {dimension_numbers = #tpu.dot_dimension_numbers<[1], [0], [0], [1], [0, 0, 1, 1], [], []>} : vector<8x128xf32>, vector<128x384xf32>, vector<8x384xf32> -> vector<8x384xf32>
    %c0_157 = arith.constant 0 : index
    %c0_158 = arith.constant 0 : index
    %380 = vector.load %arg4[%c0_157, %c0_158] : memref<1x384xf32, #tpu.memory_space<vmem>>, vector<1x384xf32>
    %381 = vector.broadcast %380 : vector<1x384xf32> to vector<8x384xf32>
    %382 = arith.addf %379, %381 : vector<8x384xf32>
    %c5_159 = arith.constant 5 : index
    %c0_160 = arith.constant 0 : index
    %c0_161 = arith.constant 0 : index
    %383 = vector.load %arg15[%c5_159, %c0_160, %c0_161] : memref<6x8x384xf32, #tpu.memory_space<vmem>>, vector<1x8x384xf32>
    %384 = vector.shape_cast %383 : vector<1x8x384xf32> to vector<8x384xf32>
    %385 = vector.extract_strided_slice %384 {offsets = [0, 0], sizes = [8, 128], strides = [1, 1]} : vector<8x384xf32> to vector<8x128xf32>
    %386 = vector.extract_strided_slice %382 {offsets = [0, 0], sizes = [8, 128], strides = [1, 1]} : vector<8x384xf32> to vector<8x128xf32>
    %387 = arith.addf %385, %386 : vector<8x128xf32>
    %388 = arith.negf %387 : vector<8x128xf32>
    %389 = math.exp %388 : vector<8x128xf32>
    %cst_162 = arith.constant 1.000000e+00 : f32
    %390 = vector.broadcast %cst_162 : f32 to vector<8x128xf32>
    %391 = arith.addf %390, %389 : vector<8x128xf32>
    %392 = arith.divf %390, %391 : vector<8x128xf32>
    %393 = vector.extract_strided_slice %384 {offsets = [0, 128], sizes = [8, 128], strides = [1, 1]} : vector<8x384xf32> to vector<8x128xf32>
    %394 = vector.extract_strided_slice %382 {offsets = [0, 128], sizes = [8, 128], strides = [1, 1]} : vector<8x384xf32> to vector<8x128xf32>
    %395 = arith.addf %393, %394 : vector<8x128xf32>
    %396 = arith.negf %395 : vector<8x128xf32>
    %397 = math.exp %396 : vector<8x128xf32>
    %cst_163 = arith.constant 1.000000e+00 : f32
    %398 = vector.broadcast %cst_163 : f32 to vector<8x128xf32>
    %399 = arith.addf %398, %397 : vector<8x128xf32>
    %400 = arith.divf %398, %399 : vector<8x128xf32>
    %401 = vector.extract_strided_slice %384 {offsets = [0, 256], sizes = [8, 128], strides = [1, 1]} : vector<8x384xf32> to vector<8x128xf32>
    %402 = vector.extract_strided_slice %382 {offsets = [0, 256], sizes = [8, 128], strides = [1, 1]} : vector<8x384xf32> to vector<8x128xf32>
    %403 = arith.mulf %392, %402 : vector<8x128xf32>
    %404 = arith.addf %401, %403 : vector<8x128xf32>
    %405 = math.tanh %404 : vector<8x128xf32>
    %cst_164 = arith.constant 1.000000e+00 : f32
    %406 = vector.broadcast %cst_164 : f32 to vector<8x128xf32>
    %407 = arith.subf %406, %400 : vector<8x128xf32>
    %408 = arith.mulf %407, %405 : vector<8x128xf32>
    %409 = arith.mulf %400, %338 : vector<8x128xf32>
    %410 = arith.addf %408, %409 : vector<8x128xf32>
    %c5_165 = arith.constant 5 : index
    %c0_166 = arith.constant 0 : index
    %c0_167 = arith.constant 0 : index
    %411 = vector.load %arg12[%c5_165, %c0_166, %c0_167] : memref<6x8x128xf32, #tpu.memory_space<vmem>>, vector<1x8x128xf32>
    %412 = vector.shape_cast %411 : vector<1x8x128xf32> to vector<8x128xf32>
    %413 = vector.shape_cast %410 : vector<8x128xf32> to vector<1x8x128xf32>
    tpu.vector_store %arg12[%c5_165, %c0_166, %c0_167], %413 {strides = array<i32>} : memref<6x8x128xf32, #tpu.memory_space<vmem>>, vector<1x8x128xf32>,
    %c0_168 = arith.constant 0 : index
    %c0_169 = arith.constant 0 : index
    %414 = vector.load %arg6[%c0_168, %c0_169] : memref<128x384xf32, #tpu.memory_space<vmem>>, vector<128x384xf32>
    %cst_170 = arith.constant dense<0.000000e+00> : vector<8x384xf32>
    %415 = tpu.matmul %374, %414, %cst_170 {dimension_numbers = #tpu.dot_dimension_numbers<[1], [0], [0], [1], [0, 0, 1, 1], [], []>} : vector<8x128xf32>, vector<128x384xf32>, vector<8x384xf32> -> vector<8x384xf32>
    %c0_171 = arith.constant 0 : index
    %c0_172 = arith.constant 0 : index
    %416 = vector.load %arg8[%c0_171, %c0_172] : memref<1x384xf32, #tpu.memory_space<vmem>>, vector<1x384xf32>
    %417 = vector.broadcast %416 : vector<1x384xf32> to vector<8x384xf32>
    %418 = arith.addf %415, %417 : vector<8x384xf32>
    %c0_173 = arith.constant 0 : index
    %c0_174 = arith.constant 0 : index
    %c0_175 = arith.constant 0 : index
    %419 = vector.load %arg16[%c0_173, %c0_174, %c0_175] : memref<6x8x384xf32, #tpu.memory_space<vmem>>, vector<1x8x384xf32>
    %420 = vector.shape_cast %419 : vector<1x8x384xf32> to vector<8x384xf32>
    %421 = vector.extract_strided_slice %420 {offsets = [0, 0], sizes = [8, 128], strides = [1, 1]} : vector<8x384xf32> to vector<8x128xf32>
    %422 = vector.extract_strided_slice %418 {offsets = [0, 0], sizes = [8, 128], strides = [1, 1]} : vector<8x384xf32> to vector<8x128xf32>
    %423 = arith.addf %421, %422 : vector<8x128xf32>
    %424 = arith.negf %423 : vector<8x128xf32>
    %425 = math.exp %424 : vector<8x128xf32>
    %cst_176 = arith.constant 1.000000e+00 : f32
    %426 = vector.broadcast %cst_176 : f32 to vector<8x128xf32>
    %427 = arith.addf %426, %425 : vector<8x128xf32>
    %428 = arith.divf %426, %427 : vector<8x128xf32>
    %429 = vector.extract_strided_slice %420 {offsets = [0, 128], sizes = [8, 128], strides = [1, 1]} : vector<8x384xf32> to vector<8x128xf32>
    %430 = vector.extract_strided_slice %418 {offsets = [0, 128], sizes = [8, 128], strides = [1, 1]} : vector<8x384xf32> to vector<8x128xf32>
    %431 = arith.addf %429, %430 : vector<8x128xf32>
    %432 = arith.negf %431 : vector<8x128xf32>
    %433 = math.exp %432 : vector<8x128xf32>
    %cst_177 = arith.constant 1.000000e+00 : f32
    %434 = vector.broadcast %cst_177 : f32 to vector<8x128xf32>
    %435 = arith.addf %434, %433 : vector<8x128xf32>
    %436 = arith.divf %434, %435 : vector<8x128xf32>
    %437 = vector.extract_strided_slice %420 {offsets = [0, 256], sizes = [8, 128], strides = [1, 1]} : vector<8x384xf32> to vector<8x128xf32>
    %438 = vector.extract_strided_slice %418 {offsets = [0, 256], sizes = [8, 128], strides = [1, 1]} : vector<8x384xf32> to vector<8x128xf32>
    %439 = arith.mulf %428, %438 : vector<8x128xf32>
    %440 = arith.addf %437, %439 : vector<8x128xf32>
    %441 = math.tanh %440 : vector<8x128xf32>
    %cst_178 = arith.constant 1.000000e+00 : f32
    %442 = vector.broadcast %cst_178 : f32 to vector<8x128xf32>
    %443 = arith.subf %442, %436 : vector<8x128xf32>
    %444 = arith.mulf %443, %441 : vector<8x128xf32>
    %445 = arith.mulf %436, %374 : vector<8x128xf32>
    %446 = arith.addf %444, %445 : vector<8x128xf32>
    %c0_179 = arith.constant 0 : index
    %c0_180 = arith.constant 0 : index
    %c0_181 = arith.constant 0 : index
    %447 = vector.load %arg13[%c0_179, %c0_180, %c0_181] : memref<6x8x128xf32, #tpu.memory_space<vmem>>, vector<1x8x128xf32>
    %448 = vector.shape_cast %447 : vector<1x8x128xf32> to vector<8x128xf32>
    %449 = vector.shape_cast %446 : vector<8x128xf32> to vector<1x8x128xf32>
    tpu.vector_store %arg13[%c0_179, %c0_180, %c0_181], %449 {strides = array<i32>} : memref<6x8x128xf32, #tpu.memory_space<vmem>>, vector<1x8x128xf32>,
    %c0_182 = arith.constant 0 : index
    %c0_183 = arith.constant 0 : index
    %450 = vector.load %arg9[%c0_182, %c0_183] : memref<128x128xf32, #tpu.memory_space<vmem>>, vector<128x128xf32>
    %cst_184 = arith.constant dense<0.000000e+00> : vector<8x128xf32>
    %451 = tpu.matmul %410, %450, %cst_184 {dimension_numbers = #tpu.dot_dimension_numbers<[1], [0], [0], [1], [0, 0, 1, 1], [], []>} : vector<8x128xf32>, vector<128x128xf32>, vector<8x128xf32> -> vector<8x128xf32>
    %c0_185 = arith.constant 0 : index
    %c0_186 = arith.constant 0 : index
    %452 = vector.load %arg10[%c0_185, %c0_186] : memref<128x128xf32, #tpu.memory_space<vmem>>, vector<128x128xf32>
    %cst_187 = arith.constant dense<0.000000e+00> : vector<8x128xf32>
    %453 = tpu.matmul %446, %452, %cst_187 {dimension_numbers = #tpu.dot_dimension_numbers<[1], [0], [0], [1], [0, 0, 1, 1], [], []>} : vector<8x128xf32>, vector<128x128xf32>, vector<8x128xf32> -> vector<8x128xf32>
    %454 = arith.addf %451, %453 : vector<8x128xf32>
    %c0_188 = arith.constant 0 : index
    %c0_189 = arith.constant 0 : index
    %455 = vector.load %arg11[%c0_188, %c0_189] : memref<1x128xf32, #tpu.memory_space<vmem>>, vector<1x128xf32>
    %456 = vector.broadcast %455 : vector<1x128xf32> to vector<8x128xf32>
    %457 = arith.addf %454, %456 : vector<8x128xf32>
    %458 = math.tanh %457 : vector<8x128xf32>
    %c0_190 = arith.constant 0 : index
    %c0_191 = arith.constant 0 : index
    %459 = vector.load %arg14[%c0_190, %c0_191] : memref<8x128xf32, #tpu.memory_space<vmem>>, vector<8x128xf32>
    tpu.vector_store %arg14[%c0_190, %c0_191], %458 {strides = array<i32>} : memref<8x128xf32, #tpu.memory_space<vmem>>, vector<8x128xf32>,
    return
  }
}

module attributes {stable_mosaic.version = 11 : i64} {
  func.func @_decoder_kernel(%arg0: memref<4xi32, #tpu.memory_space<smem>>, %arg1: memref<5x8x1xi32, #tpu.memory_space<vmem>>, %arg2: memref<6x8x128xf32, #tpu.memory_space<vmem>>, %arg3: memref<6x8x128xf32, #tpu.memory_space<vmem>>, %arg4: memref<8x128xf32, #tpu.memory_space<vmem>>, %arg5: memref<128x128xf32, #tpu.memory_space<vmem>>, %arg6: memref<128x128xf32, #tpu.memory_space<vmem>>, %arg7: memref<128x128xf32, #tpu.memory_space<vmem>>, %arg8: memref<1x128xf32, #tpu.memory_space<vmem>>, %arg9: memref<1x1x128xf32, #tpu.memory_space<vmem>>, %arg10: memref<128x512xf32, #tpu.memory_space<vmem>>, %arg11: memref<1x512xf32, #tpu.memory_space<vmem>>, %arg12: memref<128x512xf32, #tpu.memory_space<vmem>>, %arg13: memref<128x512xf32, #tpu.memory_space<vmem>>, %arg14: memref<128x512xf32, #tpu.memory_space<vmem>>, %arg15: memref<1x512xf32, #tpu.memory_space<vmem>>, %arg16: memref<128x128xf32, #tpu.memory_space<vmem>>, %arg17: memref<5x8x128xf32, #tpu.memory_space<vmem>>, %arg18: memref<6x8x128xf32, #tpu.memory_space<vmem>>, %arg19: memref<8x128xf32, #tpu.memory_space<vmem>>) attributes {dimension_semantics = [], scalar_prefetch = 0 : i64, scratch_operands = 2 : i64, tpu.core_type = #tpu.core_type<tc>} {
    %c0 = arith.constant 0 : index
    %c0_0 = arith.constant 0 : index
    %c0_1 = arith.constant 0 : index
    %0 = vector.load %arg2[%c0, %c0_0, %c0_1] : memref<6x8x128xf32, #tpu.memory_space<vmem>>, vector<6x8x128xf32>
    %1 = vector.shape_cast %0 : vector<6x8x128xf32> to vector<48x128xf32>
    %c0_2 = arith.constant 0 : index
    %c0_3 = arith.constant 0 : index
    %c0_4 = arith.constant 0 : index
    %2 = vector.load %arg3[%c0_2, %c0_3, %c0_4] : memref<6x8x128xf32, #tpu.memory_space<vmem>>, vector<6x8x128xf32>
    %3 = vector.shape_cast %2 : vector<6x8x128xf32> to vector<48x128xf32>
    %c0_5 = arith.constant 0 : index
    %c0_6 = arith.constant 0 : index
    %4 = vector.load %arg6[%c0_5, %c0_6] : memref<128x128xf32, #tpu.memory_space<vmem>>, vector<128x128xf32>
    %cst = arith.constant dense<0.000000e+00> : vector<48x128xf32>
    %5 = tpu.matmul %1, %4, %cst {dimension_numbers = #tpu.dot_dimension_numbers<[1], [0], [0], [1], [0, 0, 1, 1], [], []>} : vector<48x128xf32>, vector<128x128xf32>, vector<48x128xf32> -> vector<48x128xf32>
    %c0_7 = arith.constant 0 : index
    %c0_8 = arith.constant 0 : index
    %6 = vector.load %arg7[%c0_7, %c0_8] : memref<128x128xf32, #tpu.memory_space<vmem>>, vector<128x128xf32>
    %cst_9 = arith.constant dense<0.000000e+00> : vector<48x128xf32>
    %7 = tpu.matmul %3, %6, %cst_9 {dimension_numbers = #tpu.dot_dimension_numbers<[1], [0], [0], [1], [0, 0, 1, 1], [], []>} : vector<48x128xf32>, vector<128x128xf32>, vector<48x128xf32> -> vector<48x128xf32>
    %8 = arith.addf %5, %7 : vector<48x128xf32>
    %c0_10 = arith.constant 0 : index
    %c0_11 = arith.constant 0 : index
    %9 = vector.load %arg8[%c0_10, %c0_11] : memref<1x128xf32, #tpu.memory_space<vmem>>, vector<1x128xf32>
    %10 = vector.broadcast %9 : vector<1x128xf32> to vector<48x128xf32>
    %11 = arith.addf %8, %10 : vector<48x128xf32>
    %12 = vector.shape_cast %11 : vector<48x128xf32> to vector<6x8x128xf32>
    %c0_12 = arith.constant 0 : index
    %c0_13 = arith.constant 0 : index
    %c0_14 = arith.constant 0 : index
    %13 = vector.load %arg18[%c0_12, %c0_13, %c0_14] : memref<6x8x128xf32, #tpu.memory_space<vmem>>, vector<6x8x128xf32>
    tpu.vector_store %arg18[%c0_12, %c0_13, %c0_14], %12 {strides = array<i32>} : memref<6x8x128xf32, #tpu.memory_space<vmem>>, vector<6x8x128xf32>,
    %14 = tpu.iota {dimensions = array<i32: 1>} : vector<8x128xi32>
    %15 = arith.sitofp %14 : vector<8x128xi32> to vector<8x128xf32>
    %c32_i32 = arith.constant 32 : i32
    %16 = vector.broadcast %c32_i32 : i32 to vector<8x128xi32>
    %17 = arith.cmpi slt, %14, %16 : vector<8x128xi32>
    %cst_15 = arith.constant 0.000000e+00 : f32
    %18 = vector.broadcast %cst_15 : f32 to vector<8x128xf32>
    %c0_16 = arith.constant 0 : index
    %c0_17 = arith.constant 0 : index
    %c0_18 = arith.constant 0 : index
    %19 = vector.load %arg17[%c0_16, %c0_17, %c0_18] : memref<5x8x128xf32, #tpu.memory_space<vmem>>, vector<1x8x128xf32>
    %20 = vector.shape_cast %19 : vector<1x8x128xf32> to vector<8x128xf32>
    %21 = vector.shape_cast %18 : vector<8x128xf32> to vector<1x8x128xf32>
    tpu.vector_store %arg17[%c0_16, %c0_17, %c0_18], %21 {strides = array<i32>} : memref<5x8x128xf32, #tpu.memory_space<vmem>>, vector<1x8x128xf32>,
    %c0_19 = arith.constant 0 : index
    %c0_20 = arith.constant 0 : index
    %c0_21 = arith.constant 0 : index
    %22 = vector.load %arg1[%c0_19, %c0_20, %c0_21] : memref<5x8x1xi32, #tpu.memory_space<vmem>>, vector<1x8x1xi32>
    %23 = vector.shape_cast %22 : vector<1x8x1xi32> to vector<8x1xi32>
    %24 = vector.broadcast %23 : vector<8x1xi32> to vector<8x128xi32>
    %25 = arith.cmpi eq, %14, %24 : vector<8x128xi32>
    %26 = arith.extui %25 : vector<8x128xi1> to vector<8x128xi32>
    %27 = arith.sitofp %26 : vector<8x128xi32> to vector<8x128xf32>
    %c0_22 = arith.constant 0 : index
    %c0_23 = arith.constant 0 : index
    %28 = vector.load %arg19[%c0_22, %c0_23] : memref<8x128xf32, #tpu.memory_space<vmem>>, vector<8x128xf32>
    tpu.vector_store %arg19[%c0_22, %c0_23], %27 {strides = array<i32>} : memref<8x128xf32, #tpu.memory_space<vmem>>, vector<8x128xf32>,
    %c0_24 = arith.constant 0 : index
    %c0_25 = arith.constant 0 : index
    %29 = vector.load %arg4[%c0_24, %c0_25] : memref<8x128xf32, #tpu.memory_space<vmem>>, vector<8x128xf32>
    %c0_26 = arith.constant 0 : index
    %c0_27 = arith.constant 0 : index
    %30 = vector.load %arg19[%c0_26, %c0_27] : memref<8x128xf32, #tpu.memory_space<vmem>>, vector<8x128xf32>
    %c0_28 = arith.constant 0 : index
    %c0_29 = arith.constant 0 : index
    %31 = vector.load %arg5[%c0_28, %c0_29] : memref<128x128xf32, #tpu.memory_space<vmem>>, vector<128x128xf32>
    %cst_30 = arith.constant dense<0.000000e+00> : vector<8x128xf32>
    %32 = tpu.matmul %30, %31, %cst_30 {dimension_numbers = #tpu.dot_dimension_numbers<[1], [0], [0], [1], [0, 0, 1, 1], [], []>} : vector<8x128xf32>, vector<128x128xf32>, vector<8x128xf32> -> vector<8x128xf32>
    %c0_31 = arith.constant 0 : index
    %c0_32 = arith.constant 0 : index
    %33 = vector.load %arg10[%c0_31, %c0_32] : memref<128x512xf32, #tpu.memory_space<vmem>>, vector<128x512xf32>
    %cst_33 = arith.constant dense<0.000000e+00> : vector<8x512xf32>
    %34 = tpu.matmul %29, %33, %cst_33 {dimension_numbers = #tpu.dot_dimension_numbers<[1], [0], [0], [1], [0, 0, 1, 1], [], []>} : vector<8x128xf32>, vector<128x512xf32>, vector<8x512xf32> -> vector<8x512xf32>
    %c0_34 = arith.constant 0 : index
    %c0_35 = arith.constant 0 : index
    %35 = vector.load %arg11[%c0_34, %c0_35] : memref<1x512xf32, #tpu.memory_space<vmem>>, vector<1x512xf32>
    %36 = vector.broadcast %35 : vector<1x512xf32> to vector<8x512xf32>
    %37 = arith.addf %34, %36 : vector<8x512xf32>
    %38 = vector.extract_strided_slice %37 {offsets = [0, 0], sizes = [8, 128], strides = [1, 1]} : vector<8x512xf32> to vector<8x128xf32>
    %39 = vector.extract_strided_slice %37 {offsets = [0, 128], sizes = [8, 384], strides = [1, 1]} : vector<8x512xf32> to vector<8x384xf32>
    %c0_36 = arith.constant 0 : index
    %c0_37 = arith.constant 0 : index
    %c0_38 = arith.constant 0 : index
    %40 = vector.load %arg18[%c0_36, %c0_37, %c0_38] : memref<6x8x128xf32, #tpu.memory_space<vmem>>, vector<6x8x128xf32>
    %41 = vector.shape_cast %38 : vector<8x128xf32> to vector<1x8x128xf32>
    %42 = vector.broadcast %41 : vector<1x8x128xf32> to vector<6x8x128xf32>
    %43 = arith.addf %40, %42 : vector<6x8x128xf32>
    %44 = math.tanh %43 : vector<6x8x128xf32>
    %c0_39 = arith.constant 0 : index
    %c0_40 = arith.constant 0 : index
    %c0_41 = arith.constant 0 : index
    %45 = vector.load %arg9[%c0_39, %c0_40, %c0_41] : memref<1x1x128xf32, #tpu.memory_space<vmem>>, vector<1x1x128xf32>
    %46 = vector.broadcast %45 : vector<1x1x128xf32> to vector<6x8x128xf32>
    %47 = arith.mulf %44, %46 : vector<6x8x128xf32>
    %cst_42 = arith.constant dense<0.000000e+00> : vector<6x8xf32>
    %48 = vector.multi_reduction <add>, %47, %cst_42 [2] : vector<6x8x128xf32> to vector<6x8xf32>
    %49 = vector.shape_cast %48 : vector<6x8xf32> to vector<6x8x1xf32>
    %cst_43 = arith.constant dense<0xFF800000> : vector<8x1xf32>
    %50 = vector.multi_reduction <maximumf>, %49, %cst_43 [0] : vector<6x8x1xf32> to vector<8x1xf32>
    %51 = vector.shape_cast %50 : vector<8x1xf32> to vector<1x8x1xf32>
    %52 = vector.broadcast %51 : vector<1x8x1xf32> to vector<6x8x1xf32>
    %53 = arith.subf %49, %52 : vector<6x8x1xf32>
    %54 = math.exp %53 : vector<6x8x1xf32>
    %cst_44 = arith.constant dense<0.000000e+00> : vector<8x1xf32>
    %55 = vector.multi_reduction <add>, %54, %cst_44 [0] : vector<6x8x1xf32> to vector<8x1xf32>
    %56 = vector.shape_cast %55 : vector<8x1xf32> to vector<1x8x1xf32>
    %57 = vector.broadcast %56 : vector<1x8x1xf32> to vector<6x8x1xf32>
    %58 = arith.divf %54, %57 : vector<6x8x1xf32>
    %c0_45 = arith.constant 0 : index
    %c0_46 = arith.constant 0 : index
    %c0_47 = arith.constant 0 : index
    %59 = vector.load %arg2[%c0_45, %c0_46, %c0_47] : memref<6x8x128xf32, #tpu.memory_space<vmem>>, vector<6x8x128xf32>
    %60 = vector.broadcast %58 : vector<6x8x1xf32> to vector<6x8x128xf32>
    %61 = arith.mulf %60, %59 : vector<6x8x128xf32>
    %cst_48 = arith.constant dense<0.000000e+00> : vector<8x128xf32>
    %62 = vector.multi_reduction <add>, %61, %cst_48 [0] : vector<6x8x128xf32> to vector<8x128xf32>
    %c0_49 = arith.constant 0 : index
    %c0_50 = arith.constant 0 : index
    %c0_51 = arith.constant 0 : index
    %63 = vector.load %arg3[%c0_49, %c0_50, %c0_51] : memref<6x8x128xf32, #tpu.memory_space<vmem>>, vector<6x8x128xf32>
    %64 = vector.broadcast %58 : vector<6x8x1xf32> to vector<6x8x128xf32>
    %65 = arith.mulf %64, %63 : vector<6x8x128xf32>
    %cst_52 = arith.constant dense<0.000000e+00> : vector<8x128xf32>
    %66 = vector.multi_reduction <add>, %65, %cst_52 [0] : vector<6x8x128xf32> to vector<8x128xf32>
    %c0_53 = arith.constant 0 : index
    %c0_54 = arith.constant 0 : index
    %67 = vector.load %arg12[%c0_53, %c0_54] : memref<128x512xf32, #tpu.memory_space<vmem>>, vector<128x512xf32>
    %cst_55 = arith.constant dense<0.000000e+00> : vector<8x512xf32>
    %68 = tpu.matmul %32, %67, %cst_55 {dimension_numbers = #tpu.dot_dimension_numbers<[1], [0], [0], [1], [0, 0, 1, 1], [], []>} : vector<8x128xf32>, vector<128x512xf32>, vector<8x512xf32> -> vector<8x512xf32>
    %c0_56 = arith.constant 0 : index
    %c0_57 = arith.constant 0 : index
    %69 = vector.load %arg13[%c0_56, %c0_57] : memref<128x512xf32, #tpu.memory_space<vmem>>, vector<128x512xf32>
    %cst_58 = arith.constant dense<0.000000e+00> : vector<8x512xf32>
    %70 = tpu.matmul %62, %69, %cst_58 {dimension_numbers = #tpu.dot_dimension_numbers<[1], [0], [0], [1], [0, 0, 1, 1], [], []>} : vector<8x128xf32>, vector<128x512xf32>, vector<8x512xf32> -> vector<8x512xf32>
    %71 = arith.addf %68, %70 : vector<8x512xf32>
    %c0_59 = arith.constant 0 : index
    %c0_60 = arith.constant 0 : index
    %72 = vector.load %arg14[%c0_59, %c0_60] : memref<128x512xf32, #tpu.memory_space<vmem>>, vector<128x512xf32>
    %cst_61 = arith.constant dense<0.000000e+00> : vector<8x512xf32>
    %73 = tpu.matmul %66, %72, %cst_61 {dimension_numbers = #tpu.dot_dimension_numbers<[1], [0], [0], [1], [0, 0, 1, 1], [], []>} : vector<8x128xf32>, vector<128x512xf32>, vector<8x512xf32> -> vector<8x512xf32>
    %74 = arith.addf %71, %73 : vector<8x512xf32>
    %c0_62 = arith.constant 0 : index
    %c0_63 = arith.constant 0 : index
    %75 = vector.load %arg15[%c0_62, %c0_63] : memref<1x512xf32, #tpu.memory_space<vmem>>, vector<1x512xf32>
    %76 = vector.broadcast %75 : vector<1x512xf32> to vector<8x512xf32>
    %77 = arith.addf %74, %76 : vector<8x512xf32>
    %78 = vector.extract_strided_slice %77 {offsets = [0, 0], sizes = [8, 384], strides = [1, 1]} : vector<8x512xf32> to vector<8x384xf32>
    %79 = vector.extract_strided_slice %77 {offsets = [0, 384], sizes = [8, 128], strides = [1, 1]} : vector<8x512xf32> to vector<8x128xf32>
    %80 = vector.extract_strided_slice %78 {offsets = [0, 0], sizes = [8, 128], strides = [1, 1]} : vector<8x384xf32> to vector<8x128xf32>
    %81 = vector.extract_strided_slice %39 {offsets = [0, 0], sizes = [8, 128], strides = [1, 1]} : vector<8x384xf32> to vector<8x128xf32>
    %82 = arith.addf %80, %81 : vector<8x128xf32>
    %83 = arith.negf %82 : vector<8x128xf32>
    %84 = math.exp %83 : vector<8x128xf32>
    %cst_64 = arith.constant 1.000000e+00 : f32
    %85 = vector.broadcast %cst_64 : f32 to vector<8x128xf32>
    %86 = arith.addf %85, %84 : vector<8x128xf32>
    %87 = arith.divf %85, %86 : vector<8x128xf32>
    %88 = vector.extract_strided_slice %78 {offsets = [0, 128], sizes = [8, 128], strides = [1, 1]} : vector<8x384xf32> to vector<8x128xf32>
    %89 = vector.extract_strided_slice %39 {offsets = [0, 128], sizes = [8, 128], strides = [1, 1]} : vector<8x384xf32> to vector<8x128xf32>
    %90 = arith.addf %88, %89 : vector<8x128xf32>
    %91 = arith.negf %90 : vector<8x128xf32>
    %92 = math.exp %91 : vector<8x128xf32>
    %cst_65 = arith.constant 1.000000e+00 : f32
    %93 = vector.broadcast %cst_65 : f32 to vector<8x128xf32>
    %94 = arith.addf %93, %92 : vector<8x128xf32>
    %95 = arith.divf %93, %94 : vector<8x128xf32>
    %96 = vector.extract_strided_slice %78 {offsets = [0, 256], sizes = [8, 128], strides = [1, 1]} : vector<8x384xf32> to vector<8x128xf32>
    %97 = vector.extract_strided_slice %39 {offsets = [0, 256], sizes = [8, 128], strides = [1, 1]} : vector<8x384xf32> to vector<8x128xf32>
    %98 = arith.mulf %87, %97 : vector<8x128xf32>
    %99 = arith.addf %96, %98 : vector<8x128xf32>
    %100 = math.tanh %99 : vector<8x128xf32>
    %cst_66 = arith.constant 1.000000e+00 : f32
    %101 = vector.broadcast %cst_66 : f32 to vector<8x128xf32>
    %102 = arith.subf %101, %95 : vector<8x128xf32>
    %103 = arith.mulf %102, %100 : vector<8x128xf32>
    %104 = arith.mulf %95, %29 : vector<8x128xf32>
    %105 = arith.addf %103, %104 : vector<8x128xf32>
    %c0_67 = arith.constant 0 : index
    %c0_68 = arith.constant 0 : index
    %106 = vector.load %arg16[%c0_67, %c0_68] : memref<128x128xf32, #tpu.memory_space<vmem>>, vector<128x128xf32>
    %cst_69 = arith.constant dense<0.000000e+00> : vector<8x128xf32>
    %107 = tpu.matmul %105, %106, %cst_69 {dimension_numbers = #tpu.dot_dimension_numbers<[1], [0], [0], [1], [0, 0, 1, 1], [], []>} : vector<8x128xf32>, vector<128x128xf32>, vector<8x128xf32> -> vector<8x128xf32>
    %108 = arith.addf %79, %107 : vector<8x128xf32>
    %c1 = arith.constant 1 : index
    %c0_70 = arith.constant 0 : index
    %c0_71 = arith.constant 0 : index
    %109 = vector.load %arg17[%c1, %c0_70, %c0_71] : memref<5x8x128xf32, #tpu.memory_space<vmem>>, vector<1x8x128xf32>
    %110 = vector.shape_cast %109 : vector<1x8x128xf32> to vector<8x128xf32>
    %111 = vector.shape_cast %108 : vector<8x128xf32> to vector<1x8x128xf32>
    tpu.vector_store %arg17[%c1, %c0_70, %c0_71], %111 {strides = array<i32>} : memref<5x8x128xf32, #tpu.memory_space<vmem>>, vector<1x8x128xf32>,
    %c0_72 = arith.constant 0 : index
    %112 = memref.load %arg0[%c0_72] : memref<4xi32, #tpu.memory_space<smem>>
    %c0_i32 = arith.constant 0 : i32
    %113 = arith.cmpi ne, %112, %c0_i32 : i32
    %114 = arith.extui %113 : i1 to i32
    %c0_i32_73 = arith.constant 0 : i32
    %115 = arith.cmpi ne, %114, %c0_i32_73 : i32
    scf.if %115 {
      %c1_224 = arith.constant 1 : index
      %c0_225 = arith.constant 0 : index
      %c0_226 = arith.constant 0 : index
      %379 = vector.load %arg1[%c1_224, %c0_225, %c0_226] : memref<5x8x1xi32, #tpu.memory_space<vmem>>, vector<1x8x1xi32>
      %380 = vector.shape_cast %379 : vector<1x8x1xi32> to vector<8x1xi32>
      %381 = vector.broadcast %380 : vector<8x1xi32> to vector<8x128xi32>
      %382 = arith.cmpi eq, %14, %381 : vector<8x128xi32>
      %383 = arith.extui %382 : vector<8x128xi1> to vector<8x128xi32>
      %384 = arith.sitofp %383 : vector<8x128xi32> to vector<8x128xf32>
      %c0_227 = arith.constant 0 : index
      %c0_228 = arith.constant 0 : index
      %385 = vector.load %arg19[%c0_227, %c0_228] : memref<8x128xf32, #tpu.memory_space<vmem>>, vector<8x128xf32>
      tpu.vector_store %arg19[%c0_227, %c0_228], %384 {strides = array<i32>} : memref<8x128xf32, #tpu.memory_space<vmem>>, vector<8x128xf32>,
    } else {
    }
    %c0_i32_74 = arith.constant 0 : i32
    %116 = arith.cmpi eq, %112, %c0_i32_74 : i32
    %117 = arith.extui %116 : i1 to i32
    %c0_i32_75 = arith.constant 0 : i32
    %118 = arith.cmpi ne, %117, %c0_i32_75 : i32
    scf.if %118 {
      %cst_224 = arith.constant 0xFF800000 : f32
      %379 = vector.broadcast %cst_224 : f32 to vector<8x128xf32>
      %380 = arith.select %17, %108, %379 : vector<8x128xi1>, vector<8x128xf32>
      %cst_225 = arith.constant dense<0xFF800000> : vector<8xf32>
      %381 = vector.multi_reduction <maximumf>, %380, %cst_225 [1] : vector<8x128xf32> to vector<8xf32>
      %382 = vector.shape_cast %381 : vector<8xf32> to vector<8x1xf32>
      %383 = vector.broadcast %382 : vector<8x1xf32> to vector<8x128xf32>
      %384 = arith.cmpf oeq, %380, %383 : vector<8x128xf32>
      %cst_226 = arith.constant 1.280000e+02 : f32
      %385 = vector.broadcast %cst_226 : f32 to vector<8x128xf32>
      %386 = arith.select %384, %15, %385 : vector<8x128xi1>, vector<8x128xf32>
      %cst_227 = arith.constant dense<0x7F800000> : vector<8xf32>
      %387 = vector.multi_reduction <minimumf>, %386, %cst_227 [1] : vector<8x128xf32> to vector<8xf32>
      %388 = vector.shape_cast %387 : vector<8xf32> to vector<8x1xf32>
      %389 = vector.broadcast %388 : vector<8x1xf32> to vector<8x128xf32>
      %390 = arith.cmpf oeq, %15, %389 : vector<8x128xf32>
      %391 = arith.extui %390 : vector<8x128xi1> to vector<8x128xi32>
      %392 = arith.sitofp %391 : vector<8x128xi32> to vector<8x128xf32>
      %c0_228 = arith.constant 0 : index
      %c0_229 = arith.constant 0 : index
      %393 = vector.load %arg19[%c0_228, %c0_229] : memref<8x128xf32, #tpu.memory_space<vmem>>, vector<8x128xf32>
      tpu.vector_store %arg19[%c0_228, %c0_229], %392 {strides = array<i32>} : memref<8x128xf32, #tpu.memory_space<vmem>>, vector<8x128xf32>,
    } else {
    }
    %c0_76 = arith.constant 0 : index
    %c0_77 = arith.constant 0 : index
    %119 = vector.load %arg19[%c0_76, %c0_77] : memref<8x128xf32, #tpu.memory_space<vmem>>, vector<8x128xf32>
    %c0_78 = arith.constant 0 : index
    %c0_79 = arith.constant 0 : index
    %120 = vector.load %arg5[%c0_78, %c0_79] : memref<128x128xf32, #tpu.memory_space<vmem>>, vector<128x128xf32>
    %cst_80 = arith.constant dense<0.000000e+00> : vector<8x128xf32>
    %121 = tpu.matmul %119, %120, %cst_80 {dimension_numbers = #tpu.dot_dimension_numbers<[1], [0], [0], [1], [0, 0, 1, 1], [], []>} : vector<8x128xf32>, vector<128x128xf32>, vector<8x128xf32> -> vector<8x128xf32>
    %c0_81 = arith.constant 0 : index
    %c0_82 = arith.constant 0 : index
    %122 = vector.load %arg10[%c0_81, %c0_82] : memref<128x512xf32, #tpu.memory_space<vmem>>, vector<128x512xf32>
    %cst_83 = arith.constant dense<0.000000e+00> : vector<8x512xf32>
    %123 = tpu.matmul %105, %122, %cst_83 {dimension_numbers = #tpu.dot_dimension_numbers<[1], [0], [0], [1], [0, 0, 1, 1], [], []>} : vector<8x128xf32>, vector<128x512xf32>, vector<8x512xf32> -> vector<8x512xf32>
    %c0_84 = arith.constant 0 : index
    %c0_85 = arith.constant 0 : index
    %124 = vector.load %arg11[%c0_84, %c0_85] : memref<1x512xf32, #tpu.memory_space<vmem>>, vector<1x512xf32>
    %125 = vector.broadcast %124 : vector<1x512xf32> to vector<8x512xf32>
    %126 = arith.addf %123, %125 : vector<8x512xf32>
    %127 = vector.extract_strided_slice %126 {offsets = [0, 0], sizes = [8, 128], strides = [1, 1]} : vector<8x512xf32> to vector<8x128xf32>
    %128 = vector.extract_strided_slice %126 {offsets = [0, 128], sizes = [8, 384], strides = [1, 1]} : vector<8x512xf32> to vector<8x384xf32>
    %c0_86 = arith.constant 0 : index
    %c0_87 = arith.constant 0 : index
    %c0_88 = arith.constant 0 : index
    %129 = vector.load %arg18[%c0_86, %c0_87, %c0_88] : memref<6x8x128xf32, #tpu.memory_space<vmem>>, vector<6x8x128xf32>
    %130 = vector.shape_cast %127 : vector<8x128xf32> to vector<1x8x128xf32>
    %131 = vector.broadcast %130 : vector<1x8x128xf32> to vector<6x8x128xf32>
    %132 = arith.addf %129, %131 : vector<6x8x128xf32>
    %133 = math.tanh %132 : vector<6x8x128xf32>
    %c0_89 = arith.constant 0 : index
    %c0_90 = arith.constant 0 : index
    %c0_91 = arith.constant 0 : index
    %134 = vector.load %arg9[%c0_89, %c0_90, %c0_91] : memref<1x1x128xf32, #tpu.memory_space<vmem>>, vector<1x1x128xf32>
    %135 = vector.broadcast %134 : vector<1x1x128xf32> to vector<6x8x128xf32>
    %136 = arith.mulf %133, %135 : vector<6x8x128xf32>
    %cst_92 = arith.constant dense<0.000000e+00> : vector<6x8xf32>
    %137 = vector.multi_reduction <add>, %136, %cst_92 [2] : vector<6x8x128xf32> to vector<6x8xf32>
    %138 = vector.shape_cast %137 : vector<6x8xf32> to vector<6x8x1xf32>
    %cst_93 = arith.constant dense<0xFF800000> : vector<8x1xf32>
    %139 = vector.multi_reduction <maximumf>, %138, %cst_93 [0] : vector<6x8x1xf32> to vector<8x1xf32>
    %140 = vector.shape_cast %139 : vector<8x1xf32> to vector<1x8x1xf32>
    %141 = vector.broadcast %140 : vector<1x8x1xf32> to vector<6x8x1xf32>
    %142 = arith.subf %138, %141 : vector<6x8x1xf32>
    %143 = math.exp %142 : vector<6x8x1xf32>
    %cst_94 = arith.constant dense<0.000000e+00> : vector<8x1xf32>
    %144 = vector.multi_reduction <add>, %143, %cst_94 [0] : vector<6x8x1xf32> to vector<8x1xf32>
    %145 = vector.shape_cast %144 : vector<8x1xf32> to vector<1x8x1xf32>
    %146 = vector.broadcast %145 : vector<1x8x1xf32> to vector<6x8x1xf32>
    %147 = arith.divf %143, %146 : vector<6x8x1xf32>
    %c0_95 = arith.constant 0 : index
    %c0_96 = arith.constant 0 : index
    %c0_97 = arith.constant 0 : index
    %148 = vector.load %arg2[%c0_95, %c0_96, %c0_97] : memref<6x8x128xf32, #tpu.memory_space<vmem>>, vector<6x8x128xf32>
    %149 = vector.broadcast %147 : vector<6x8x1xf32> to vector<6x8x128xf32>
    %150 = arith.mulf %149, %148 : vector<6x8x128xf32>
    %cst_98 = arith.constant dense<0.000000e+00> : vector<8x128xf32>
    %151 = vector.multi_reduction <add>, %150, %cst_98 [0] : vector<6x8x128xf32> to vector<8x128xf32>
    %c0_99 = arith.constant 0 : index
    %c0_100 = arith.constant 0 : index
    %c0_101 = arith.constant 0 : index
    %152 = vector.load %arg3[%c0_99, %c0_100, %c0_101] : memref<6x8x128xf32, #tpu.memory_space<vmem>>, vector<6x8x128xf32>
    %153 = vector.broadcast %147 : vector<6x8x1xf32> to vector<6x8x128xf32>
    %154 = arith.mulf %153, %152 : vector<6x8x128xf32>
    %cst_102 = arith.constant dense<0.000000e+00> : vector<8x128xf32>
    %155 = vector.multi_reduction <add>, %154, %cst_102 [0] : vector<6x8x128xf32> to vector<8x128xf32>
    %c0_103 = arith.constant 0 : index
    %c0_104 = arith.constant 0 : index
    %156 = vector.load %arg12[%c0_103, %c0_104] : memref<128x512xf32, #tpu.memory_space<vmem>>, vector<128x512xf32>
    %cst_105 = arith.constant dense<0.000000e+00> : vector<8x512xf32>
    %157 = tpu.matmul %121, %156, %cst_105 {dimension_numbers = #tpu.dot_dimension_numbers<[1], [0], [0], [1], [0, 0, 1, 1], [], []>} : vector<8x128xf32>, vector<128x512xf32>, vector<8x512xf32> -> vector<8x512xf32>
    %c0_106 = arith.constant 0 : index
    %c0_107 = arith.constant 0 : index
    %158 = vector.load %arg13[%c0_106, %c0_107] : memref<128x512xf32, #tpu.memory_space<vmem>>, vector<128x512xf32>
    %cst_108 = arith.constant dense<0.000000e+00> : vector<8x512xf32>
    %159 = tpu.matmul %151, %158, %cst_108 {dimension_numbers = #tpu.dot_dimension_numbers<[1], [0], [0], [1], [0, 0, 1, 1], [], []>} : vector<8x128xf32>, vector<128x512xf32>, vector<8x512xf32> -> vector<8x512xf32>
    %160 = arith.addf %157, %159 : vector<8x512xf32>
    %c0_109 = arith.constant 0 : index
    %c0_110 = arith.constant 0 : index
    %161 = vector.load %arg14[%c0_109, %c0_110] : memref<128x512xf32, #tpu.memory_space<vmem>>, vector<128x512xf32>
    %cst_111 = arith.constant dense<0.000000e+00> : vector<8x512xf32>
    %162 = tpu.matmul %155, %161, %cst_111 {dimension_numbers = #tpu.dot_dimension_numbers<[1], [0], [0], [1], [0, 0, 1, 1], [], []>} : vector<8x128xf32>, vector<128x512xf32>, vector<8x512xf32> -> vector<8x512xf32>
    %163 = arith.addf %160, %162 : vector<8x512xf32>
    %c0_112 = arith.constant 0 : index
    %c0_113 = arith.constant 0 : index
    %164 = vector.load %arg15[%c0_112, %c0_113] : memref<1x512xf32, #tpu.memory_space<vmem>>, vector<1x512xf32>
    %165 = vector.broadcast %164 : vector<1x512xf32> to vector<8x512xf32>
    %166 = arith.addf %163, %165 : vector<8x512xf32>
    %167 = vector.extract_strided_slice %166 {offsets = [0, 0], sizes = [8, 384], strides = [1, 1]} : vector<8x512xf32> to vector<8x384xf32>
    %168 = vector.extract_strided_slice %166 {offsets = [0, 384], sizes = [8, 128], strides = [1, 1]} : vector<8x512xf32> to vector<8x128xf32>
    %169 = vector.extract_strided_slice %167 {offsets = [0, 0], sizes = [8, 128], strides = [1, 1]} : vector<8x384xf32> to vector<8x128xf32>
    %170 = vector.extract_strided_slice %128 {offsets = [0, 0], sizes = [8, 128], strides = [1, 1]} : vector<8x384xf32> to vector<8x128xf32>
    %171 = arith.addf %169, %170 : vector<8x128xf32>
    %172 = arith.negf %171 : vector<8x128xf32>
    %173 = math.exp %172 : vector<8x128xf32>
    %cst_114 = arith.constant 1.000000e+00 : f32
    %174 = vector.broadcast %cst_114 : f32 to vector<8x128xf32>
    %175 = arith.addf %174, %173 : vector<8x128xf32>
    %176 = arith.divf %174, %175 : vector<8x128xf32>
    %177 = vector.extract_strided_slice %167 {offsets = [0, 128], sizes = [8, 128], strides = [1, 1]} : vector<8x384xf32> to vector<8x128xf32>
    %178 = vector.extract_strided_slice %128 {offsets = [0, 128], sizes = [8, 128], strides = [1, 1]} : vector<8x384xf32> to vector<8x128xf32>
    %179 = arith.addf %177, %178 : vector<8x128xf32>
    %180 = arith.negf %179 : vector<8x128xf32>
    %181 = math.exp %180 : vector<8x128xf32>
    %cst_115 = arith.constant 1.000000e+00 : f32
    %182 = vector.broadcast %cst_115 : f32 to vector<8x128xf32>
    %183 = arith.addf %182, %181 : vector<8x128xf32>
    %184 = arith.divf %182, %183 : vector<8x128xf32>
    %185 = vector.extract_strided_slice %167 {offsets = [0, 256], sizes = [8, 128], strides = [1, 1]} : vector<8x384xf32> to vector<8x128xf32>
    %186 = vector.extract_strided_slice %128 {offsets = [0, 256], sizes = [8, 128], strides = [1, 1]} : vector<8x384xf32> to vector<8x128xf32>
    %187 = arith.mulf %176, %186 : vector<8x128xf32>
    %188 = arith.addf %185, %187 : vector<8x128xf32>
    %189 = math.tanh %188 : vector<8x128xf32>
    %cst_116 = arith.constant 1.000000e+00 : f32
    %190 = vector.broadcast %cst_116 : f32 to vector<8x128xf32>
    %191 = arith.subf %190, %184 : vector<8x128xf32>
    %192 = arith.mulf %191, %189 : vector<8x128xf32>
    %193 = arith.mulf %184, %105 : vector<8x128xf32>
    %194 = arith.addf %192, %193 : vector<8x128xf32>
    %c0_117 = arith.constant 0 : index
    %c0_118 = arith.constant 0 : index
    %195 = vector.load %arg16[%c0_117, %c0_118] : memref<128x128xf32, #tpu.memory_space<vmem>>, vector<128x128xf32>
    %cst_119 = arith.constant dense<0.000000e+00> : vector<8x128xf32>
    %196 = tpu.matmul %194, %195, %cst_119 {dimension_numbers = #tpu.dot_dimension_numbers<[1], [0], [0], [1], [0, 0, 1, 1], [], []>} : vector<8x128xf32>, vector<128x128xf32>, vector<8x128xf32> -> vector<8x128xf32>
    %197 = arith.addf %168, %196 : vector<8x128xf32>
    %c2 = arith.constant 2 : index
    %c0_120 = arith.constant 0 : index
    %c0_121 = arith.constant 0 : index
    %198 = vector.load %arg17[%c2, %c0_120, %c0_121] : memref<5x8x128xf32, #tpu.memory_space<vmem>>, vector<1x8x128xf32>
    %199 = vector.shape_cast %198 : vector<1x8x128xf32> to vector<8x128xf32>
    %200 = vector.shape_cast %197 : vector<8x128xf32> to vector<1x8x128xf32>
    tpu.vector_store %arg17[%c2, %c0_120, %c0_121], %200 {strides = array<i32>} : memref<5x8x128xf32, #tpu.memory_space<vmem>>, vector<1x8x128xf32>,
    %c1_122 = arith.constant 1 : index
    %201 = memref.load %arg0[%c1_122] : memref<4xi32, #tpu.memory_space<smem>>
    %c0_i32_123 = arith.constant 0 : i32
    %202 = arith.cmpi ne, %201, %c0_i32_123 : i32
    %203 = arith.extui %202 : i1 to i32
    %c0_i32_124 = arith.constant 0 : i32
    %204 = arith.cmpi ne, %203, %c0_i32_124 : i32
    scf.if %204 {
      %c2_224 = arith.constant 2 : index
      %c0_225 = arith.constant 0 : index
      %c0_226 = arith.constant 0 : index
      %379 = vector.load %arg1[%c2_224, %c0_225, %c0_226] : memref<5x8x1xi32, #tpu.memory_space<vmem>>, vector<1x8x1xi32>
      %380 = vector.shape_cast %379 : vector<1x8x1xi32> to vector<8x1xi32>
      %381 = vector.broadcast %380 : vector<8x1xi32> to vector<8x128xi32>
      %382 = arith.cmpi eq, %14, %381 : vector<8x128xi32>
      %383 = arith.extui %382 : vector<8x128xi1> to vector<8x128xi32>
      %384 = arith.sitofp %383 : vector<8x128xi32> to vector<8x128xf32>
      %c0_227 = arith.constant 0 : index
      %c0_228 = arith.constant 0 : index
      %385 = vector.load %arg19[%c0_227, %c0_228] : memref<8x128xf32, #tpu.memory_space<vmem>>, vector<8x128xf32>
      tpu.vector_store %arg19[%c0_227, %c0_228], %384 {strides = array<i32>} : memref<8x128xf32, #tpu.memory_space<vmem>>, vector<8x128xf32>,
    } else {
    }
    %c0_i32_125 = arith.constant 0 : i32
    %205 = arith.cmpi eq, %201, %c0_i32_125 : i32
    %206 = arith.extui %205 : i1 to i32
    %c0_i32_126 = arith.constant 0 : i32
    %207 = arith.cmpi ne, %206, %c0_i32_126 : i32
    scf.if %207 {
      %cst_224 = arith.constant 0xFF800000 : f32
      %379 = vector.broadcast %cst_224 : f32 to vector<8x128xf32>
      %380 = arith.select %17, %197, %379 : vector<8x128xi1>, vector<8x128xf32>
      %cst_225 = arith.constant dense<0xFF800000> : vector<8xf32>
      %381 = vector.multi_reduction <maximumf>, %380, %cst_225 [1] : vector<8x128xf32> to vector<8xf32>
      %382 = vector.shape_cast %381 : vector<8xf32> to vector<8x1xf32>
      %383 = vector.broadcast %382 : vector<8x1xf32> to vector<8x128xf32>
      %384 = arith.cmpf oeq, %380, %383 : vector<8x128xf32>
      %cst_226 = arith.constant 1.280000e+02 : f32
      %385 = vector.broadcast %cst_226 : f32 to vector<8x128xf32>
      %386 = arith.select %384, %15, %385 : vector<8x128xi1>, vector<8x128xf32>
      %cst_227 = arith.constant dense<0x7F800000> : vector<8xf32>
      %387 = vector.multi_reduction <minimumf>, %386, %cst_227 [1] : vector<8x128xf32> to vector<8xf32>
      %388 = vector.shape_cast %387 : vector<8xf32> to vector<8x1xf32>
      %389 = vector.broadcast %388 : vector<8x1xf32> to vector<8x128xf32>
      %390 = arith.cmpf oeq, %15, %389 : vector<8x128xf32>
      %391 = arith.extui %390 : vector<8x128xi1> to vector<8x128xi32>
      %392 = arith.sitofp %391 : vector<8x128xi32> to vector<8x128xf32>
      %c0_228 = arith.constant 0 : index
      %c0_229 = arith.constant 0 : index
      %393 = vector.load %arg19[%c0_228, %c0_229] : memref<8x128xf32, #tpu.memory_space<vmem>>, vector<8x128xf32>
      tpu.vector_store %arg19[%c0_228, %c0_229], %392 {strides = array<i32>} : memref<8x128xf32, #tpu.memory_space<vmem>>, vector<8x128xf32>,
    } else {
    }
    %c0_127 = arith.constant 0 : index
    %c0_128 = arith.constant 0 : index
    %208 = vector.load %arg19[%c0_127, %c0_128] : memref<8x128xf32, #tpu.memory_space<vmem>>, vector<8x128xf32>
    %c0_129 = arith.constant 0 : index
    %c0_130 = arith.constant 0 : index
    %209 = vector.load %arg5[%c0_129, %c0_130] : memref<128x128xf32, #tpu.memory_space<vmem>>, vector<128x128xf32>
    %cst_131 = arith.constant dense<0.000000e+00> : vector<8x128xf32>
    %210 = tpu.matmul %208, %209, %cst_131 {dimension_numbers = #tpu.dot_dimension_numbers<[1], [0], [0], [1], [0, 0, 1, 1], [], []>} : vector<8x128xf32>, vector<128x128xf32>, vector<8x128xf32> -> vector<8x128xf32>
    %c0_132 = arith.constant 0 : index
    %c0_133 = arith.constant 0 : index
    %211 = vector.load %arg10[%c0_132, %c0_133] : memref<128x512xf32, #tpu.memory_space<vmem>>, vector<128x512xf32>
    %cst_134 = arith.constant dense<0.000000e+00> : vector<8x512xf32>
    %212 = tpu.matmul %194, %211, %cst_134 {dimension_numbers = #tpu.dot_dimension_numbers<[1], [0], [0], [1], [0, 0, 1, 1], [], []>} : vector<8x128xf32>, vector<128x512xf32>, vector<8x512xf32> -> vector<8x512xf32>
    %c0_135 = arith.constant 0 : index
    %c0_136 = arith.constant 0 : index
    %213 = vector.load %arg11[%c0_135, %c0_136] : memref<1x512xf32, #tpu.memory_space<vmem>>, vector<1x512xf32>
    %214 = vector.broadcast %213 : vector<1x512xf32> to vector<8x512xf32>
    %215 = arith.addf %212, %214 : vector<8x512xf32>
    %216 = vector.extract_strided_slice %215 {offsets = [0, 0], sizes = [8, 128], strides = [1, 1]} : vector<8x512xf32> to vector<8x128xf32>
    %217 = vector.extract_strided_slice %215 {offsets = [0, 128], sizes = [8, 384], strides = [1, 1]} : vector<8x512xf32> to vector<8x384xf32>
    %c0_137 = arith.constant 0 : index
    %c0_138 = arith.constant 0 : index
    %c0_139 = arith.constant 0 : index
    %218 = vector.load %arg18[%c0_137, %c0_138, %c0_139] : memref<6x8x128xf32, #tpu.memory_space<vmem>>, vector<6x8x128xf32>
    %219 = vector.shape_cast %216 : vector<8x128xf32> to vector<1x8x128xf32>
    %220 = vector.broadcast %219 : vector<1x8x128xf32> to vector<6x8x128xf32>
    %221 = arith.addf %218, %220 : vector<6x8x128xf32>
    %222 = math.tanh %221 : vector<6x8x128xf32>
    %c0_140 = arith.constant 0 : index
    %c0_141 = arith.constant 0 : index
    %c0_142 = arith.constant 0 : index
    %223 = vector.load %arg9[%c0_140, %c0_141, %c0_142] : memref<1x1x128xf32, #tpu.memory_space<vmem>>, vector<1x1x128xf32>
    %224 = vector.broadcast %223 : vector<1x1x128xf32> to vector<6x8x128xf32>
    %225 = arith.mulf %222, %224 : vector<6x8x128xf32>
    %cst_143 = arith.constant dense<0.000000e+00> : vector<6x8xf32>
    %226 = vector.multi_reduction <add>, %225, %cst_143 [2] : vector<6x8x128xf32> to vector<6x8xf32>
    %227 = vector.shape_cast %226 : vector<6x8xf32> to vector<6x8x1xf32>
    %cst_144 = arith.constant dense<0xFF800000> : vector<8x1xf32>
    %228 = vector.multi_reduction <maximumf>, %227, %cst_144 [0] : vector<6x8x1xf32> to vector<8x1xf32>
    %229 = vector.shape_cast %228 : vector<8x1xf32> to vector<1x8x1xf32>
    %230 = vector.broadcast %229 : vector<1x8x1xf32> to vector<6x8x1xf32>
    %231 = arith.subf %227, %230 : vector<6x8x1xf32>
    %232 = math.exp %231 : vector<6x8x1xf32>
    %cst_145 = arith.constant dense<0.000000e+00> : vector<8x1xf32>
    %233 = vector.multi_reduction <add>, %232, %cst_145 [0] : vector<6x8x1xf32> to vector<8x1xf32>
    %234 = vector.shape_cast %233 : vector<8x1xf32> to vector<1x8x1xf32>
    %235 = vector.broadcast %234 : vector<1x8x1xf32> to vector<6x8x1xf32>
    %236 = arith.divf %232, %235 : vector<6x8x1xf32>
    %c0_146 = arith.constant 0 : index
    %c0_147 = arith.constant 0 : index
    %c0_148 = arith.constant 0 : index
    %237 = vector.load %arg2[%c0_146, %c0_147, %c0_148] : memref<6x8x128xf32, #tpu.memory_space<vmem>>, vector<6x8x128xf32>
    %238 = vector.broadcast %236 : vector<6x8x1xf32> to vector<6x8x128xf32>
    %239 = arith.mulf %238, %237 : vector<6x8x128xf32>
    %cst_149 = arith.constant dense<0.000000e+00> : vector<8x128xf32>
    %240 = vector.multi_reduction <add>, %239, %cst_149 [0] : vector<6x8x128xf32> to vector<8x128xf32>
    %c0_150 = arith.constant 0 : index
    %c0_151 = arith.constant 0 : index
    %c0_152 = arith.constant 0 : index
    %241 = vector.load %arg3[%c0_150, %c0_151, %c0_152] : memref<6x8x128xf32, #tpu.memory_space<vmem>>, vector<6x8x128xf32>
    %242 = vector.broadcast %236 : vector<6x8x1xf32> to vector<6x8x128xf32>
    %243 = arith.mulf %242, %241 : vector<6x8x128xf32>
    %cst_153 = arith.constant dense<0.000000e+00> : vector<8x128xf32>
    %244 = vector.multi_reduction <add>, %243, %cst_153 [0] : vector<6x8x128xf32> to vector<8x128xf32>
    %c0_154 = arith.constant 0 : index
    %c0_155 = arith.constant 0 : index
    %245 = vector.load %arg12[%c0_154, %c0_155] : memref<128x512xf32, #tpu.memory_space<vmem>>, vector<128x512xf32>
    %cst_156 = arith.constant dense<0.000000e+00> : vector<8x512xf32>
    %246 = tpu.matmul %210, %245, %cst_156 {dimension_numbers = #tpu.dot_dimension_numbers<[1], [0], [0], [1], [0, 0, 1, 1], [], []>} : vector<8x128xf32>, vector<128x512xf32>, vector<8x512xf32> -> vector<8x512xf32>
    %c0_157 = arith.constant 0 : index
    %c0_158 = arith.constant 0 : index
    %247 = vector.load %arg13[%c0_157, %c0_158] : memref<128x512xf32, #tpu.memory_space<vmem>>, vector<128x512xf32>
    %cst_159 = arith.constant dense<0.000000e+00> : vector<8x512xf32>
    %248 = tpu.matmul %240, %247, %cst_159 {dimension_numbers = #tpu.dot_dimension_numbers<[1], [0], [0], [1], [0, 0, 1, 1], [], []>} : vector<8x128xf32>, vector<128x512xf32>, vector<8x512xf32> -> vector<8x512xf32>
    %249 = arith.addf %246, %248 : vector<8x512xf32>
    %c0_160 = arith.constant 0 : index
    %c0_161 = arith.constant 0 : index
    %250 = vector.load %arg14[%c0_160, %c0_161] : memref<128x512xf32, #tpu.memory_space<vmem>>, vector<128x512xf32>
    %cst_162 = arith.constant dense<0.000000e+00> : vector<8x512xf32>
    %251 = tpu.matmul %244, %250, %cst_162 {dimension_numbers = #tpu.dot_dimension_numbers<[1], [0], [0], [1], [0, 0, 1, 1], [], []>} : vector<8x128xf32>, vector<128x512xf32>, vector<8x512xf32> -> vector<8x512xf32>
    %252 = arith.addf %249, %251 : vector<8x512xf32>
    %c0_163 = arith.constant 0 : index
    %c0_164 = arith.constant 0 : index
    %253 = vector.load %arg15[%c0_163, %c0_164] : memref<1x512xf32, #tpu.memory_space<vmem>>, vector<1x512xf32>
    %254 = vector.broadcast %253 : vector<1x512xf32> to vector<8x512xf32>
    %255 = arith.addf %252, %254 : vector<8x512xf32>
    %256 = vector.extract_strided_slice %255 {offsets = [0, 0], sizes = [8, 384], strides = [1, 1]} : vector<8x512xf32> to vector<8x384xf32>
    %257 = vector.extract_strided_slice %255 {offsets = [0, 384], sizes = [8, 128], strides = [1, 1]} : vector<8x512xf32> to vector<8x128xf32>
    %258 = vector.extract_strided_slice %256 {offsets = [0, 0], sizes = [8, 128], strides = [1, 1]} : vector<8x384xf32> to vector<8x128xf32>
    %259 = vector.extract_strided_slice %217 {offsets = [0, 0], sizes = [8, 128], strides = [1, 1]} : vector<8x384xf32> to vector<8x128xf32>
    %260 = arith.addf %258, %259 : vector<8x128xf32>
    %261 = arith.negf %260 : vector<8x128xf32>
    %262 = math.exp %261 : vector<8x128xf32>
    %cst_165 = arith.constant 1.000000e+00 : f32
    %263 = vector.broadcast %cst_165 : f32 to vector<8x128xf32>
    %264 = arith.addf %263, %262 : vector<8x128xf32>
    %265 = arith.divf %263, %264 : vector<8x128xf32>
    %266 = vector.extract_strided_slice %256 {offsets = [0, 128], sizes = [8, 128], strides = [1, 1]} : vector<8x384xf32> to vector<8x128xf32>
    %267 = vector.extract_strided_slice %217 {offsets = [0, 128], sizes = [8, 128], strides = [1, 1]} : vector<8x384xf32> to vector<8x128xf32>
    %268 = arith.addf %266, %267 : vector<8x128xf32>
    %269 = arith.negf %268 : vector<8x128xf32>
    %270 = math.exp %269 : vector<8x128xf32>
    %cst_166 = arith.constant 1.000000e+00 : f32
    %271 = vector.broadcast %cst_166 : f32 to vector<8x128xf32>
    %272 = arith.addf %271, %270 : vector<8x128xf32>
    %273 = arith.divf %271, %272 : vector<8x128xf32>
    %274 = vector.extract_strided_slice %256 {offsets = [0, 256], sizes = [8, 128], strides = [1, 1]} : vector<8x384xf32> to vector<8x128xf32>
    %275 = vector.extract_strided_slice %217 {offsets = [0, 256], sizes = [8, 128], strides = [1, 1]} : vector<8x384xf32> to vector<8x128xf32>
    %276 = arith.mulf %265, %275 : vector<8x128xf32>
    %277 = arith.addf %274, %276 : vector<8x128xf32>
    %278 = math.tanh %277 : vector<8x128xf32>
    %cst_167 = arith.constant 1.000000e+00 : f32
    %279 = vector.broadcast %cst_167 : f32 to vector<8x128xf32>
    %280 = arith.subf %279, %273 : vector<8x128xf32>
    %281 = arith.mulf %280, %278 : vector<8x128xf32>
    %282 = arith.mulf %273, %194 : vector<8x128xf32>
    %283 = arith.addf %281, %282 : vector<8x128xf32>
    %c0_168 = arith.constant 0 : index
    %c0_169 = arith.constant 0 : index
    %284 = vector.load %arg16[%c0_168, %c0_169] : memref<128x128xf32, #tpu.memory_space<vmem>>, vector<128x128xf32>
    %cst_170 = arith.constant dense<0.000000e+00> : vector<8x128xf32>
    %285 = tpu.matmul %283, %284, %cst_170 {dimension_numbers = #tpu.dot_dimension_numbers<[1], [0], [0], [1], [0, 0, 1, 1], [], []>} : vector<8x128xf32>, vector<128x128xf32>, vector<8x128xf32> -> vector<8x128xf32>
    %286 = arith.addf %257, %285 : vector<8x128xf32>
    %c3 = arith.constant 3 : index
    %c0_171 = arith.constant 0 : index
    %c0_172 = arith.constant 0 : index
    %287 = vector.load %arg17[%c3, %c0_171, %c0_172] : memref<5x8x128xf32, #tpu.memory_space<vmem>>, vector<1x8x128xf32>
    %288 = vector.shape_cast %287 : vector<1x8x128xf32> to vector<8x128xf32>
    %289 = vector.shape_cast %286 : vector<8x128xf32> to vector<1x8x128xf32>
    tpu.vector_store %arg17[%c3, %c0_171, %c0_172], %289 {strides = array<i32>} : memref<5x8x128xf32, #tpu.memory_space<vmem>>, vector<1x8x128xf32>,
    %c2_173 = arith.constant 2 : index
    %290 = memref.load %arg0[%c2_173] : memref<4xi32, #tpu.memory_space<smem>>
    %c0_i32_174 = arith.constant 0 : i32
    %291 = arith.cmpi ne, %290, %c0_i32_174 : i32
    %292 = arith.extui %291 : i1 to i32
    %c0_i32_175 = arith.constant 0 : i32
    %293 = arith.cmpi ne, %292, %c0_i32_175 : i32
    scf.if %293 {
      %c3_224 = arith.constant 3 : index
      %c0_225 = arith.constant 0 : index
      %c0_226 = arith.constant 0 : index
      %379 = vector.load %arg1[%c3_224, %c0_225, %c0_226] : memref<5x8x1xi32, #tpu.memory_space<vmem>>, vector<1x8x1xi32>
      %380 = vector.shape_cast %379 : vector<1x8x1xi32> to vector<8x1xi32>
      %381 = vector.broadcast %380 : vector<8x1xi32> to vector<8x128xi32>
      %382 = arith.cmpi eq, %14, %381 : vector<8x128xi32>
      %383 = arith.extui %382 : vector<8x128xi1> to vector<8x128xi32>
      %384 = arith.sitofp %383 : vector<8x128xi32> to vector<8x128xf32>
      %c0_227 = arith.constant 0 : index
      %c0_228 = arith.constant 0 : index
      %385 = vector.load %arg19[%c0_227, %c0_228] : memref<8x128xf32, #tpu.memory_space<vmem>>, vector<8x128xf32>
      tpu.vector_store %arg19[%c0_227, %c0_228], %384 {strides = array<i32>} : memref<8x128xf32, #tpu.memory_space<vmem>>, vector<8x128xf32>,
    } else {
    }
    %c0_i32_176 = arith.constant 0 : i32
    %294 = arith.cmpi eq, %290, %c0_i32_176 : i32
    %295 = arith.extui %294 : i1 to i32
    %c0_i32_177 = arith.constant 0 : i32
    %296 = arith.cmpi ne, %295, %c0_i32_177 : i32
    scf.if %296 {
      %cst_224 = arith.constant 0xFF800000 : f32
      %379 = vector.broadcast %cst_224 : f32 to vector<8x128xf32>
      %380 = arith.select %17, %286, %379 : vector<8x128xi1>, vector<8x128xf32>
      %cst_225 = arith.constant dense<0xFF800000> : vector<8xf32>
      %381 = vector.multi_reduction <maximumf>, %380, %cst_225 [1] : vector<8x128xf32> to vector<8xf32>
      %382 = vector.shape_cast %381 : vector<8xf32> to vector<8x1xf32>
      %383 = vector.broadcast %382 : vector<8x1xf32> to vector<8x128xf32>
      %384 = arith.cmpf oeq, %380, %383 : vector<8x128xf32>
      %cst_226 = arith.constant 1.280000e+02 : f32
      %385 = vector.broadcast %cst_226 : f32 to vector<8x128xf32>
      %386 = arith.select %384, %15, %385 : vector<8x128xi1>, vector<8x128xf32>
      %cst_227 = arith.constant dense<0x7F800000> : vector<8xf32>
      %387 = vector.multi_reduction <minimumf>, %386, %cst_227 [1] : vector<8x128xf32> to vector<8xf32>
      %388 = vector.shape_cast %387 : vector<8xf32> to vector<8x1xf32>
      %389 = vector.broadcast %388 : vector<8x1xf32> to vector<8x128xf32>
      %390 = arith.cmpf oeq, %15, %389 : vector<8x128xf32>
      %391 = arith.extui %390 : vector<8x128xi1> to vector<8x128xi32>
      %392 = arith.sitofp %391 : vector<8x128xi32> to vector<8x128xf32>
      %c0_228 = arith.constant 0 : index
      %c0_229 = arith.constant 0 : index
      %393 = vector.load %arg19[%c0_228, %c0_229] : memref<8x128xf32, #tpu.memory_space<vmem>>, vector<8x128xf32>
      tpu.vector_store %arg19[%c0_228, %c0_229], %392 {strides = array<i32>} : memref<8x128xf32, #tpu.memory_space<vmem>>, vector<8x128xf32>,
    } else {
    }
    %c0_178 = arith.constant 0 : index
    %c0_179 = arith.constant 0 : index
    %297 = vector.load %arg19[%c0_178, %c0_179] : memref<8x128xf32, #tpu.memory_space<vmem>>, vector<8x128xf32>
    %c0_180 = arith.constant 0 : index
    %c0_181 = arith.constant 0 : index
    %298 = vector.load %arg5[%c0_180, %c0_181] : memref<128x128xf32, #tpu.memory_space<vmem>>, vector<128x128xf32>
    %cst_182 = arith.constant dense<0.000000e+00> : vector<8x128xf32>
    %299 = tpu.matmul %297, %298, %cst_182 {dimension_numbers = #tpu.dot_dimension_numbers<[1], [0], [0], [1], [0, 0, 1, 1], [], []>} : vector<8x128xf32>, vector<128x128xf32>, vector<8x128xf32> -> vector<8x128xf32>
    %c0_183 = arith.constant 0 : index
    %c0_184 = arith.constant 0 : index
    %300 = vector.load %arg10[%c0_183, %c0_184] : memref<128x512xf32, #tpu.memory_space<vmem>>, vector<128x512xf32>
    %cst_185 = arith.constant dense<0.000000e+00> : vector<8x512xf32>
    %301 = tpu.matmul %283, %300, %cst_185 {dimension_numbers = #tpu.dot_dimension_numbers<[1], [0], [0], [1], [0, 0, 1, 1], [], []>} : vector<8x128xf32>, vector<128x512xf32>, vector<8x512xf32> -> vector<8x512xf32>
    %c0_186 = arith.constant 0 : index
    %c0_187 = arith.constant 0 : index
    %302 = vector.load %arg11[%c0_186, %c0_187] : memref<1x512xf32, #tpu.memory_space<vmem>>, vector<1x512xf32>
    %303 = vector.broadcast %302 : vector<1x512xf32> to vector<8x512xf32>
    %304 = arith.addf %301, %303 : vector<8x512xf32>
    %305 = vector.extract_strided_slice %304 {offsets = [0, 0], sizes = [8, 128], strides = [1, 1]} : vector<8x512xf32> to vector<8x128xf32>
    %306 = vector.extract_strided_slice %304 {offsets = [0, 128], sizes = [8, 384], strides = [1, 1]} : vector<8x512xf32> to vector<8x384xf32>
    %c0_188 = arith.constant 0 : index
    %c0_189 = arith.constant 0 : index
    %c0_190 = arith.constant 0 : index
    %307 = vector.load %arg18[%c0_188, %c0_189, %c0_190] : memref<6x8x128xf32, #tpu.memory_space<vmem>>, vector<6x8x128xf32>
    %308 = vector.shape_cast %305 : vector<8x128xf32> to vector<1x8x128xf32>
    %309 = vector.broadcast %308 : vector<1x8x128xf32> to vector<6x8x128xf32>
    %310 = arith.addf %307, %309 : vector<6x8x128xf32>
    %311 = math.tanh %310 : vector<6x8x128xf32>
    %c0_191 = arith.constant 0 : index
    %c0_192 = arith.constant 0 : index
    %c0_193 = arith.constant 0 : index
    %312 = vector.load %arg9[%c0_191, %c0_192, %c0_193] : memref<1x1x128xf32, #tpu.memory_space<vmem>>, vector<1x1x128xf32>
    %313 = vector.broadcast %312 : vector<1x1x128xf32> to vector<6x8x128xf32>
    %314 = arith.mulf %311, %313 : vector<6x8x128xf32>
    %cst_194 = arith.constant dense<0.000000e+00> : vector<6x8xf32>
    %315 = vector.multi_reduction <add>, %314, %cst_194 [2] : vector<6x8x128xf32> to vector<6x8xf32>
    %316 = vector.shape_cast %315 : vector<6x8xf32> to vector<6x8x1xf32>
    %cst_195 = arith.constant dense<0xFF800000> : vector<8x1xf32>
    %317 = vector.multi_reduction <maximumf>, %316, %cst_195 [0] : vector<6x8x1xf32> to vector<8x1xf32>
    %318 = vector.shape_cast %317 : vector<8x1xf32> to vector<1x8x1xf32>
    %319 = vector.broadcast %318 : vector<1x8x1xf32> to vector<6x8x1xf32>
    %320 = arith.subf %316, %319 : vector<6x8x1xf32>
    %321 = math.exp %320 : vector<6x8x1xf32>
    %cst_196 = arith.constant dense<0.000000e+00> : vector<8x1xf32>
    %322 = vector.multi_reduction <add>, %321, %cst_196 [0] : vector<6x8x1xf32> to vector<8x1xf32>
    %323 = vector.shape_cast %322 : vector<8x1xf32> to vector<1x8x1xf32>
    %324 = vector.broadcast %323 : vector<1x8x1xf32> to vector<6x8x1xf32>
    %325 = arith.divf %321, %324 : vector<6x8x1xf32>
    %c0_197 = arith.constant 0 : index
    %c0_198 = arith.constant 0 : index
    %c0_199 = arith.constant 0 : index
    %326 = vector.load %arg2[%c0_197, %c0_198, %c0_199] : memref<6x8x128xf32, #tpu.memory_space<vmem>>, vector<6x8x128xf32>
    %327 = vector.broadcast %325 : vector<6x8x1xf32> to vector<6x8x128xf32>
    %328 = arith.mulf %327, %326 : vector<6x8x128xf32>
    %cst_200 = arith.constant dense<0.000000e+00> : vector<8x128xf32>
    %329 = vector.multi_reduction <add>, %328, %cst_200 [0] : vector<6x8x128xf32> to vector<8x128xf32>
    %c0_201 = arith.constant 0 : index
    %c0_202 = arith.constant 0 : index
    %c0_203 = arith.constant 0 : index
    %330 = vector.load %arg3[%c0_201, %c0_202, %c0_203] : memref<6x8x128xf32, #tpu.memory_space<vmem>>, vector<6x8x128xf32>
    %331 = vector.broadcast %325 : vector<6x8x1xf32> to vector<6x8x128xf32>
    %332 = arith.mulf %331, %330 : vector<6x8x128xf32>
    %cst_204 = arith.constant dense<0.000000e+00> : vector<8x128xf32>
    %333 = vector.multi_reduction <add>, %332, %cst_204 [0] : vector<6x8x128xf32> to vector<8x128xf32>
    %c0_205 = arith.constant 0 : index
    %c0_206 = arith.constant 0 : index
    %334 = vector.load %arg12[%c0_205, %c0_206] : memref<128x512xf32, #tpu.memory_space<vmem>>, vector<128x512xf32>
    %cst_207 = arith.constant dense<0.000000e+00> : vector<8x512xf32>
    %335 = tpu.matmul %299, %334, %cst_207 {dimension_numbers = #tpu.dot_dimension_numbers<[1], [0], [0], [1], [0, 0, 1, 1], [], []>} : vector<8x128xf32>, vector<128x512xf32>, vector<8x512xf32> -> vector<8x512xf32>
    %c0_208 = arith.constant 0 : index
    %c0_209 = arith.constant 0 : index
    %336 = vector.load %arg13[%c0_208, %c0_209] : memref<128x512xf32, #tpu.memory_space<vmem>>, vector<128x512xf32>
    %cst_210 = arith.constant dense<0.000000e+00> : vector<8x512xf32>
    %337 = tpu.matmul %329, %336, %cst_210 {dimension_numbers = #tpu.dot_dimension_numbers<[1], [0], [0], [1], [0, 0, 1, 1], [], []>} : vector<8x128xf32>, vector<128x512xf32>, vector<8x512xf32> -> vector<8x512xf32>
    %338 = arith.addf %335, %337 : vector<8x512xf32>
    %c0_211 = arith.constant 0 : index
    %c0_212 = arith.constant 0 : index
    %339 = vector.load %arg14[%c0_211, %c0_212] : memref<128x512xf32, #tpu.memory_space<vmem>>, vector<128x512xf32>
    %cst_213 = arith.constant dense<0.000000e+00> : vector<8x512xf32>
    %340 = tpu.matmul %333, %339, %cst_213 {dimension_numbers = #tpu.dot_dimension_numbers<[1], [0], [0], [1], [0, 0, 1, 1], [], []>} : vector<8x128xf32>, vector<128x512xf32>, vector<8x512xf32> -> vector<8x512xf32>
    %341 = arith.addf %338, %340 : vector<8x512xf32>
    %c0_214 = arith.constant 0 : index
    %c0_215 = arith.constant 0 : index
    %342 = vector.load %arg15[%c0_214, %c0_215] : memref<1x512xf32, #tpu.memory_space<vmem>>, vector<1x512xf32>
    %343 = vector.broadcast %342 : vector<1x512xf32> to vector<8x512xf32>
    %344 = arith.addf %341, %343 : vector<8x512xf32>
    %345 = vector.extract_strided_slice %344 {offsets = [0, 0], sizes = [8, 384], strides = [1, 1]} : vector<8x512xf32> to vector<8x384xf32>
    %346 = vector.extract_strided_slice %344 {offsets = [0, 384], sizes = [8, 128], strides = [1, 1]} : vector<8x512xf32> to vector<8x128xf32>
    %347 = vector.extract_strided_slice %345 {offsets = [0, 0], sizes = [8, 128], strides = [1, 1]} : vector<8x384xf32> to vector<8x128xf32>
    %348 = vector.extract_strided_slice %306 {offsets = [0, 0], sizes = [8, 128], strides = [1, 1]} : vector<8x384xf32> to vector<8x128xf32>
    %349 = arith.addf %347, %348 : vector<8x128xf32>
    %350 = arith.negf %349 : vector<8x128xf32>
    %351 = math.exp %350 : vector<8x128xf32>
    %cst_216 = arith.constant 1.000000e+00 : f32
    %352 = vector.broadcast %cst_216 : f32 to vector<8x128xf32>
    %353 = arith.addf %352, %351 : vector<8x128xf32>
    %354 = arith.divf %352, %353 : vector<8x128xf32>
    %355 = vector.extract_strided_slice %345 {offsets = [0, 128], sizes = [8, 128], strides = [1, 1]} : vector<8x384xf32> to vector<8x128xf32>
    %356 = vector.extract_strided_slice %306 {offsets = [0, 128], sizes = [8, 128], strides = [1, 1]} : vector<8x384xf32> to vector<8x128xf32>
    %357 = arith.addf %355, %356 : vector<8x128xf32>
    %358 = arith.negf %357 : vector<8x128xf32>
    %359 = math.exp %358 : vector<8x128xf32>
    %cst_217 = arith.constant 1.000000e+00 : f32
    %360 = vector.broadcast %cst_217 : f32 to vector<8x128xf32>
    %361 = arith.addf %360, %359 : vector<8x128xf32>
    %362 = arith.divf %360, %361 : vector<8x128xf32>
    %363 = vector.extract_strided_slice %345 {offsets = [0, 256], sizes = [8, 128], strides = [1, 1]} : vector<8x384xf32> to vector<8x128xf32>
    %364 = vector.extract_strided_slice %306 {offsets = [0, 256], sizes = [8, 128], strides = [1, 1]} : vector<8x384xf32> to vector<8x128xf32>
    %365 = arith.mulf %354, %364 : vector<8x128xf32>
    %366 = arith.addf %363, %365 : vector<8x128xf32>
    %367 = math.tanh %366 : vector<8x128xf32>
    %cst_218 = arith.constant 1.000000e+00 : f32
    %368 = vector.broadcast %cst_218 : f32 to vector<8x128xf32>
    %369 = arith.subf %368, %362 : vector<8x128xf32>
    %370 = arith.mulf %369, %367 : vector<8x128xf32>
    %371 = arith.mulf %362, %283 : vector<8x128xf32>
    %372 = arith.addf %370, %371 : vector<8x128xf32>
    %c0_219 = arith.constant 0 : index
    %c0_220 = arith.constant 0 : index
    %373 = vector.load %arg16[%c0_219, %c0_220] : memref<128x128xf32, #tpu.memory_space<vmem>>, vector<128x128xf32>
    %cst_221 = arith.constant dense<0.000000e+00> : vector<8x128xf32>
    %374 = tpu.matmul %372, %373, %cst_221 {dimension_numbers = #tpu.dot_dimension_numbers<[1], [0], [0], [1], [0, 0, 1, 1], [], []>} : vector<8x128xf32>, vector<128x128xf32>, vector<8x128xf32> -> vector<8x128xf32>
    %375 = arith.addf %346, %374 : vector<8x128xf32>
    %c4 = arith.constant 4 : index
    %c0_222 = arith.constant 0 : index
    %c0_223 = arith.constant 0 : index
    %376 = vector.load %arg17[%c4, %c0_222, %c0_223] : memref<5x8x128xf32, #tpu.memory_space<vmem>>, vector<1x8x128xf32>
    %377 = vector.shape_cast %376 : vector<1x8x128xf32> to vector<8x128xf32>
    %378 = vector.shape_cast %375 : vector<8x128xf32> to vector<1x8x128xf32>
    tpu.vector_store %arg17[%c4, %c0_222, %c0_223], %378 {strides = array<i32>} : memref<5x8x128xf32, #tpu.memory_space<vmem>>, vector<1x8x128xf32>,
    return
  }
}

</mosaic_0001>

<llo_original>
// kernel: seq2seq_forward.2
$region0: #{seq2seq_forward.2}
  #allocation0 [shape = 'u32[]', space=smem, size = 0x4, offset = 0x4, fixed_abs, tag = 'smem constant byte address 0x4 - core index']
  #allocation1 [shape = 'u32[144,128]{1,0:T(1,128)}', space=vmem, size = 0x12000, scoped, tag = 'internal scratch']
  #allocation2 [shape = 'f32[6,8,384]{2,1,0:T(8,128)}', space=vmem, size = 0x12000, scoped, tag = 'scratch operand']
  #allocation3 [shape = 'f32[6,8,384]{2,1,0:T(8,128)}', space=vmem, size = 0x12000, scoped, tag = 'scratch operand']
  %s0 = inlined_call_operand.vmem [shape: f32[6,8,128], index: 0, kind: input, shape index: {}]
  %s1 = inlined_call_operand.hbm [shape: f32[128,384], index: 1, kind: input, shape index: {}]
  %s2 = inlined_call_operand.hbm [shape: f32[128,384], index: 2, kind: input, shape index: {}]
  %s3 = inlined_call_operand.vmem [shape: f32[1,384], index: 3, kind: input, shape index: {}]
  %s4 = inlined_call_operand.vmem [shape: f32[1,384], index: 4, kind: input, shape index: {}]
  %s5 = inlined_call_operand.hbm [shape: f32[128,384], index: 5, kind: input, shape index: {}]
  %s6 = inlined_call_operand.hbm [shape: f32[128,384], index: 6, kind: input, shape index: {}]
  %s7 = inlined_call_operand.vmem [shape: f32[1,384], index: 7, kind: input, shape index: {}]
  %s8 = inlined_call_operand.vmem [shape: f32[1,384], index: 8, kind: input, shape index: {}]
  %s9 = inlined_call_operand.vmem [shape: f32[128,128], index: 9, kind: input, shape index: {}]
  %s10 = inlined_call_operand.vmem [shape: f32[128,128], index: 10, kind: input, shape index: {}]
  %s11 = inlined_call_operand.vmem [shape: f32[1,128], index: 11, kind: input, shape index: {}]
  %s12 = inlined_call_operand.vmem [shape: f32[6,8,128], index: 12, kind: output, shape index: {0}]
  %s13 = inlined_call_operand.vmem [shape: f32[6,8,128], index: 13, kind: output, shape index: {1}]
  %s14 = inlined_call_operand.vmem [shape: f32[8,128], index: 14, kind: output, shape index: {2}]
  %15 = xla_tuple %s12, %s13, %s14
  %s16 = sld [smem:[#allocation0]]
  $region90: #{seq2seq_forward.2} parent=0
    _
  %s18 = ssub.s32 1, %s16
  %s19 = scalar_select 0, %s18, %s16
  $region1: #{seq2seq_forward.2} parent=0
    #allocation4 [shape = 'u8[196608]{0}', space=vmem, size = 0x30000, scoped, tag = 'input window, operand 1, single buffered']
    #allocation5 [shape = 's32[1]{0}', space=sflag, size = 0x4, scoped, tag = 'scoped memory for seq2seq_forward.2']
    #allocation6 [shape = 'u8[196608]{0}', space=vmem, size = 0x30000, scoped, tag = 'input window, operand 2, single buffered']
    #allocation7 [shape = 's32[1]{0}', space=sflag, size = 0x4, scoped, tag = 'scoped memory for seq2seq_forward.2']
    #allocation8 [shape = 'u8[196608]{0}', space=vmem, size = 0x30000, scoped, tag = 'input window, operand 5, single buffered']
    #allocation9 [shape = 'u8[196608]{0}', space=vmem, size = 0x30000, scoped, tag = 'input window, operand 6, single buffered']
    #allocation10 [shape = 's32[1]{0}', space=sflag, size = 0x4, scoped, tag = 'scoped memory for seq2seq_forward.2']
    %20 = vsyncpa [#allocation5], 0
    %21 = vsyncpa [#allocation7], 0
    %22 = vsyncpa [#allocation10], 0
    // Predicated region
    $region2: #{seq2seq_forward.2} parent=1 // pred_check
      _
    $region3: #{seq2seq_forward.2} parent=1 // pred_check_branch
      %24 = sbr.rel (0) target = $region5
    $region4: #{seq2seq_forward.2} parent=1 // pred_region
      _
    $region5: #{seq2seq_forward.2} parent=1 // pred_fallthru
      _
    // Predicated region
    $region6: #{seq2seq_forward.2} parent=1 // pred_check
      _
    $region7: #{seq2seq_forward.2} parent=1 // pred_check_branch
      %26 = sbr.rel (0) target = $region9
    $region8: #{seq2seq_forward.2} parent=1 // pred_region
      %s28 = ssub.s32 6144, 6144
      %29 = vsyncadd [#allocation5], %s28
      %s30 = sshll.u32 [#allocation4], 4
      %s31 = int_to_ptr.vmem [resolvable:$true] %s30
      %36 = dma.hbm_to_vmem [thread:$0]  %s1, 6144, %s31, [#allocation5], 384, 384, 24
    $region9: #{seq2seq_forward.2} parent=1 // pred_fallthru
      _
    // Predicated region
    $region10: #{seq2seq_forward.2} parent=1 // pred_check
      _
    $region11: #{seq2seq_forward.2} parent=1 // pred_check_branch
      %38 = sbr.rel (0) target = $region13
    $region12: #{seq2seq_forward.2} parent=1 // pred_region
      %s40 = ssub.s32 6144, 6144
      %41 = vsyncadd [#allocation7], %s40
      %s42 = sshll.u32 [#allocation6], 4
      %s43 = int_to_ptr.vmem [resolvable:$true] %s42
      %48 = dma.hbm_to_vmem [thread:$0]  %s2, 6144, %s43, [#allocation7], 384, 384, 24
    $region13: #{seq2seq_forward.2} parent=1 // pred_fallthru
      _
    // Predicated region
    $region14: #{seq2seq_forward.2} parent=1 // pred_check
      _
    $region15: #{seq2seq_forward.2} parent=1 // pred_check_branch
      %50 = sbr.rel (0) target = $region17
    $region16: #{seq2seq_forward.2} parent=1 // pred_region
      _
    $region17: #{seq2seq_forward.2} parent=1 // pred_fallthru
      _
    // Predicated region
    $region18: #{seq2seq_forward.2} parent=1 // pred_check
      _
    $region19: #{seq2seq_forward.2} parent=1 // pred_check_branch
      %52 = sbr.rel (0) target = $region21
    $region20: #{seq2seq_forward.2} parent=1 // pred_region
      _
    $region21: #{seq2seq_forward.2} parent=1 // pred_fallthru
      _
    // Predicated region
    $region22: #{seq2seq_forward.2} parent=1 // pred_check
      _
    $region23: #{seq2seq_forward.2} parent=1 // pred_check_branch
      %54 = sbr.rel (0) target = $region25
    $region24: #{seq2seq_forward.2} parent=1 // pred_region
      %s56 = ssub.s32 6144, 6144
      %57 = vsyncadd [#allocation7], %s56
      %s58 = sshll.u32 [#allocation8], 4
      %s59 = int_to_ptr.vmem [resolvable:$true] %s58
      %64 = dma.hbm_to_vmem [thread:$0]  %s5, 6144, %s59, [#allocation7], 384, 384, 24
    $region25: #{seq2seq_forward.2} parent=1 // pred_fallthru
      _
    // Predicated region
    $region26: #{seq2seq_forward.2} parent=1 // pred_check
      _
    $region27: #{seq2seq_forward.2} parent=1 // pred_check_branch
      %66 = sbr.rel (0) target = $region29
    $region28: #{seq2seq_forward.2} parent=1 // pred_region
      %s68 = ssub.s32 6144, 6144
      %69 = vsyncadd [#allocation10], %s68
      %s70 = sshll.u32 [#allocation9], 4
      %s71 = int_to_ptr.vmem [resolvable:$true] %s70
      %76 = dma.hbm_to_vmem [thread:$0]  %s6, 6144, %s71, [#allocation10], 384, 384, 24
    $region29: #{seq2seq_forward.2} parent=1 // pred_fallthru
      _
    // Predicated region
    $region30: #{seq2seq_forward.2} parent=1 // pred_check
      _
    $region31: #{seq2seq_forward.2} parent=1 // pred_check_branch
      %78 = sbr.rel (0) target = $region33
    $region32: #{seq2seq_forward.2} parent=1 // pred_region
      _
    $region33: #{seq2seq_forward.2} parent=1 // pred_fallthru
      _
    // Predicated region
    $region34: #{seq2seq_forward.2} parent=1 // pred_check
      _
    $region35: #{seq2seq_forward.2} parent=1 // pred_check_branch
      %80 = sbr.rel (0) target = $region37
    $region36: #{seq2seq_forward.2} parent=1 // pred_region
      _
    $region37: #{seq2seq_forward.2} parent=1 // pred_fallthru
      _
    // Predicated region
    $region38: #{seq2seq_forward.2} parent=1 // pred_check
      _
    $region39: #{seq2seq_forward.2} parent=1 // pred_check_branch
      %82 = sbr.rel (0) target = $region41
    $region40: #{seq2seq_forward.2} parent=1 // pred_region
      _
    $region41: #{seq2seq_forward.2} parent=1 // pred_fallthru
      _
    // Predicated region
    $region42: #{seq2seq_forward.2} parent=1 // pred_check
      _
    $region43: #{seq2seq_forward.2} parent=1 // pred_check_branch
      %84 = sbr.rel (0) target = $region45
    $region44: #{seq2seq_forward.2} parent=1 // pred_region
      _
    $region45: #{seq2seq_forward.2} parent=1 // pred_fallthru
      _
    // Predicated region
    $region46: #{seq2seq_forward.2} parent=1 // pred_check
      _
    $region47: #{seq2seq_forward.2} parent=1 // pred_check_branch
      %86 = sbr.rel (0) target = $region49
    $region48: #{seq2seq_forward.2} parent=1 // pred_region
      _
    $region49: #{seq2seq_forward.2} parent=1 // pred_fallthru
      _
    // Predicated region
    $region50: #{seq2seq_forward.2} parent=1 // pred_check
      _
    $region51: #{seq2seq_forward.2} parent=1 // pred_check_branch
      %88 = sbr.rel (0) target = $region53
    $region52: #{seq2seq_forward.2} parent=1 // pred_region
      %89 = dma.done [#allocation5], 6144
    $region53: #{seq2seq_forward.2} parent=1 // pred_fallthru
      _
    // Predicated region
    $region54: #{seq2seq_forward.2} parent=1 // pred_check
      _
    $region55: #{seq2seq_forward.2} parent=1 // pred_check_branch
      %91 = sbr.rel (0) target = $region57
    $region56: #{seq2seq_forward.2} parent=1 // pred_region
      %92 = dma.done [#allocation7], 6144
    $region57: #{seq2seq_forward.2} parent=1 // pred_fallthru
      _
    // Predicated region
    $region58: #{seq2seq_forward.2} parent=1 // pred_check
      _
    $region59: #{seq2seq_forward.2} parent=1 // pred_check_branch
      %94 = sbr.rel (0) target = $region61
    $region60: #{seq2seq_forward.2} parent=1 // pred_region
      %95 = dma.done [#allocation7], 6144
    $region61: #{seq2seq_forward.2} parent=1 // pred_fallthru
      _
    // Predicated region
    $region62: #{seq2seq_forward.2} parent=1 // pred_check
      _
    $region63: #{seq2seq_forward.2} parent=1 // pred_check_branch
      %97 = sbr.rel (0) target = $region65
    $region64: #{seq2seq_forward.2} parent=1 // pred_region
      %98 = dma.done [#allocation10], 6144
    $region65: #{seq2seq_forward.2} parent=1 // pred_fallthru
      _
    %v99 = vld [vmem:[%s0] sm:$0xff]
    %v100 = vld [vmem:[%s0 + $0x8] sm:$0xff]
    %v101 = vld [vmem:[%s0 + $0x10] sm:$0xff]
    %v102 = vld [vmem:[%s0 + $0x18] sm:$0xff]
    %v103 = vld [vmem:[%s0 + $0x20] sm:$0xff]
    %v104 = vld [vmem:[%s0 + $0x28] sm:$0xff]
    %v105 = vld [vmem:[#allocation4] sm:$0xff]
    %v106 = vld [vmem:[#allocation4 + $0x8] sm:$0xff]
    %v107 = vld [vmem:[#allocation4 + $0x10] sm:$0xff]
    %v108 = vld [vmem:[#allocation4 + $0x18] sm:$0xff]
    %v109 = vld [vmem:[#allocation4 + $0x20] sm:$0xff]
    %v110 = vld [vmem:[#allocation4 + $0x28] sm:$0xff]
    %v111 = vld [vmem:[#allocation4 + $0x30] sm:$0xff]
    %v112 = vld [vmem:[#allocation4 + $0x38] sm:$0xff]
    %v113 = vld [vmem:[#allocation4 + $0x40] sm:$0xff]
    %v114 = vld [vmem:[#allocation4 + $0x48] sm:$0xff]
    %v115 = vld [vmem:[#allocation4 + $0x50] sm:$0xff]
    %v116 = vld [vmem:[#allocation4 + $0x58] sm:$0xff]
    %v117 = vld [vmem:[#allocation4 + $0x60] sm:$0xff]
    %v118 = vld [vmem:[#allocation4 + $0x68] sm:$0xff]
    %v119 = vld [vmem:[#allocation4 + $0x70] sm:$0xff]
    %v120 = vld [vmem:[#allocation4 + $0x78] sm:$0xff]
    %v121 = vld [vmem:[#allocation4 + $0x80] sm:$0xff]
    %v122 = vld [vmem:[#allocation4 + $0x88] sm:$0xff]
    %v123 = vld [vmem:[#allocation4 + $0x90] sm:$0xff]
    %v124 = vld [vmem:[#allocation4 + $0x98] sm:$0xff]
    %v125 = vld [vmem:[#allocation4 + $0xa0] sm:$0xff]
    %v126 = vld [vmem:[#allocation4 + $0xa8] sm:$0xff]
    %v127 = vld [vmem:[#allocation4 + $0xb0] sm:$0xff]
    %v128 = vld [vmem:[#allocation4 + $0xb8] sm:$0xff]
    %v129 = vld [vmem:[#allocation4 + $0xc0] sm:$0xff]
    %v130 = vld [vmem:[#allocation4 + $0xc8] sm:$0xff]
    %v131 = vld [vmem:[#allocation4 + $0xd0] sm:$0xff]
    %v132 = vld [vmem:[#allocation4 + $0xd8] sm:$0xff]
    %v133 = vld [vmem:[#allocation4 + $0xe0] sm:$0xff]
    %v134 = vld [vmem:[#allocation4 + $0xe8] sm:$0xff]
    %v135 = vld [vmem:[#allocation4 + $0xf0] sm:$0xff]
    %v136 = vld [vmem:[#allocation4 + $0xf8] sm:$0xff]
    %v137 = vld [vmem:[#allocation4 + $0x100] sm:$0xff]
    %v138 = vld [vmem:[#allocation4 + $0x108] sm:$0xff]
    %v139 = vld [vmem:[#allocation4 + $0x110] sm:$0xff]
    %v140 = vld [vmem:[#allocation4 + $0x118] sm:$0xff]
    %v141 = vld [vmem:[#allocation4 + $0x120] sm:$0xff]
    %v142 = vld [vmem:[#allocation4 + $0x128] sm:$0xff]
    %v143 = vld [vmem:[#allocation4 + $0x130] sm:$0xff]
    %v144 = vld [vmem:[#allocation4 + $0x138] sm:$0xff]
    %v145 = vld [vmem:[#allocation4 + $0x140] sm:$0xff]
    %v146 = vld [vmem:[#allocation4 + $0x148] sm:$0xff]
    %v147 = vld [vmem:[#allocation4 + $0x150] sm:$0xff]
    %v148 = vld [vmem:[#allocation4 + $0x158] sm:$0xff]
    %v149 = vld [vmem:[#allocation4 + $0x160] sm:$0xff]
    %v150 = vld [vmem:[#allocation4 + $0x168] sm:$0xff]
    %v151 = vld [vmem:[#allocation4 + $0x170] sm:$0xff]
    %v152 = vld [vmem:[#allocation4 + $0x178] sm:$0xff]
    %v153 = vld [vmem:[%s3] sm:$0x7]
    %v155 = vlaneseq
    %v156 = vshrl.u32 %v155, 7
    %v157 = vsub.s32 0, %v156
    %v158 = vrot.slane %v153, %v157
    %v159 = vlaneseq
    %v160 = vshrl.u32 %v159, 7
    %v161 = vsub.s32 1, %v160
    %v162 = vrot.slane %v153, %v161
    %v163 = vlaneseq
    %v164 = vshrl.u32 %v163, 7
    %v165 = vsub.s32 2, %v164
    %v166 = vrot.slane %v153, %v165
    %170 = vmatprep.subr.mxu0 %v106
    %171 = vmatpush1.msra.mxu0 %v105
    %172 = vmatprep.subr.mxu0 %v109
    %173 = vmatpush1.msra.mxu0 %v108
    %174 = vmatprep.subr.mxu0 %v112
    %175 = vmatpush1.msra.mxu0 %v111
    %176 = vmatprep.subr.mxu0 %v115
    %177 = vmatpush1.msra.mxu0 %v114
    %178 = vmatprep.subr.mxu0 %v118
    %179 = vmatpush1.msra.mxu0 %v117
    %180 = vmatprep.subr.mxu0 %v121
    %181 = vmatpush1.msra.mxu0 %v120
    %182 = vmatprep.subr.mxu0 %v124
    %183 = vmatpush1.msra.mxu0 %v123
    %184 = vmatprep.subr.mxu0 %v127
    %185 = vmatpush1.msra.mxu0 %v126
    %186 = vmatprep.subr.mxu0 %v130
    %187 = vmatpush1.msra.mxu0 %v129
    %188 = vmatprep.subr.mxu0 %v133
    %189 = vmatpush1.msra.mxu0 %v132
    %190 = vmatprep.subr.mxu0 %v136
    %191 = vmatpush1.msra.mxu0 %v135
    %192 = vmatprep.subr.mxu0 %v139
    %193 = vmatpush1.msra.mxu0 %v138
    %194 = vmatprep.subr.mxu0 %v142
    %195 = vmatpush1.msra.mxu0 %v141
    %196 = vmatprep.subr.mxu0 %v145
    %197 = vmatpush1.msra.mxu0 %v144
    %198 = vmatprep.subr.mxu0 %v148
    %199 = vmatpush1.msra.mxu0 %v147
    %200 = vmatprep.subr.mxu0 %v151
    %201 = vmatpush1.msra.mxu0 %v150
    %202 = vmatprep.subr.mxu0 0.0
    %203 = vmatpush1.msra.mxu0 0.0
    %204 = vmatprep.subr.mxu0 0.0
    %205 = vmatpush1.msra.mxu0 0.0
    %206 = vmatprep.subr.mxu0 0.0
    %207 = vmatpush1.msra.mxu0 0.0
    %208 = vmatprep.subr.mxu0 0.0
    %209 = vmatpush1.msra.mxu0 0.0
    %210 = vmatprep.subr.mxu0 0.0
    %211 = vmatpush1.msra.mxu0 0.0
    %212 = vmatprep.subr.mxu0 0.0
    %213 = vmatpush1.msra.mxu0 0.0
    %214 = vmatprep.subr.mxu0 0.0
    %215 = vmatpush1.msra.mxu0 0.0
    %216 = vmatprep.subr.mxu0 0.0
    %217 = vmatpush1.msra.mxu0 0.0
    %218 = vmatprep.subr.mxu0 0.0
    %219 = vmatpush1.msra.mxu0 0.0
    %220 = vmatprep.subr.mxu0 0.0
    %221 = vmatpush1.msra.mxu0 0.0
    %222 = vmatprep.subr.mxu0 0.0
    %223 = vmatpush1.msra.mxu0 0.0
    %224 = vmatprep.subr.mxu0 0.0
    %225 = vmatpush1.msra.mxu0 0.0
    %226 = vmatprep.subr.mxu0 0.0
    %227 = vmatpush1.msra.mxu0 0.0
    %228 = vmatprep.subr.mxu0 0.0
    %229 = vmatpush1.msra.mxu0 0.0
    %230 = vmatprep.subr.mxu0 0.0
    %231 = vmatpush1.msra.mxu0 0.0
    %232 = vmatprep.subr.mxu0 0.0
    %233 = vmatpush1.msra.mxu0 0.0
    %234 = vmatprep.mubr.f32.mxu0 0.0
    %235 = vmatmul.mubr.f32.gmra.mrb[0].mxu0 %v99
    %v236 = vpop.f32.mrb[0].mxu0
    %v237 = vadd.f32 %v158, %v236
    %v238 = vpop.f32.mrb[0].mxu0
    %v239 = vadd.f32 %v162, %v238
    %240 = vmatprep.mubr.f32.mxu0 0.0
    %241 = vmatmul.mubr.f32.gmra.mrb[0].mxu0 %v100
    %v242 = vpop.f32.mrb[0].mxu0
    %v243 = vadd.f32 %v158, %v242
    %v244 = vpop.f32.mrb[0].mxu0
    %v245 = vadd.f32 %v162, %v244
    %246 = vmatprep.mubr.f32.mxu0 0.0
    %247 = vmatmul.mubr.f32.gmra.mrb[0].mxu0 %v101
    %v248 = vpop.f32.mrb[0].mxu0
    %v249 = vadd.f32 %v158, %v248
    %v250 = vpop.f32.mrb[0].mxu0
    %v251 = vadd.f32 %v162, %v250
    %252 = vmatprep.mubr.f32.mxu0 0.0
    %253 = vmatmul.mubr.f32.gmra.mrb[0].mxu0 %v102
    %v254 = vpop.f32.mrb[0].mxu0
    %v255 = vadd.f32 %v158, %v254
    %v256 = vpop.f32.mrb[0].mxu0
    %v257 = vadd.f32 %v162, %v256
    %258 = vmatprep.mubr.f32.mxu0 0.0
    %259 = vmatmul.mubr.f32.gmra.mrb[0].mxu0 %v103
    %v260 = vpop.f32.mrb[0].mxu0
    %v261 = vadd.f32 %v158, %v260
    %v262 = vpop.f32.mrb[0].mxu0
    %v263 = vadd.f32 %v162, %v262
    %264 = vmatprep.mubr.f32.mxu0 0.0
    %265 = vmatmul.mubr.f32.gmra.mrb[0].mxu0 %v104
    %v266 = vpop.f32.mrb[0].mxu0
    %v267 = vadd.f32 %v158, %v266
    %v268 = vpop.f32.mrb[0].mxu0
    %v269 = vadd.f32 %v162, %v268
    %270 = vdwg.mxu0
    %271 = vmatprep.subr.mxu0 0.0
    %272 = vmatpush1.msra.mxu0 %v107
    %273 = vmatprep.subr.mxu0 0.0
    %274 = vmatpush1.msra.mxu0 %v110
    %275 = vmatprep.subr.mxu0 0.0
    %276 = vmatpush1.msra.mxu0 %v113
    %277 = vmatprep.subr.mxu0 0.0
    %278 = vmatpush1.msra.mxu0 %v116
    %279 = vmatprep.subr.mxu0 0.0
    %280 = vmatpush1.msra.mxu0 %v119
    %281 = vmatprep.subr.mxu0 0.0
    %282 = vmatpush1.msra.mxu0 %v122
    %283 = vmatprep.subr.mxu0 0.0
    %284 = vmatpush1.msra.mxu0 %v125
    %285 = vmatprep.subr.mxu0 0.0
    %286 = vmatpush1.msra.mxu0 %v128
    %287 = vmatprep.subr.mxu0 0.0
    %288 = vmatpush1.msra.mxu0 %v131
    %289 = vmatprep.subr.mxu0 0.0
    %290 = vmatpush1.msra.mxu0 %v134
    %291 = vmatprep.subr.mxu0 0.0
    %292 = vmatpush1.msra.mxu0 %v137
    %293 = vmatprep.subr.mxu0 0.0
    %294 = vmatpush1.msra.mxu0 %v140
    %295 = vmatprep.subr.mxu0 0.0
    %296 = vmatpush1.msra.mxu0 %v143
    %297 = vmatprep.subr.mxu0 0.0
    %298 = vmatpush1.msra.mxu0 %v146
    %299 = vmatprep.subr.mxu0 0.0
    %300 = vmatpush1.msra.mxu0 %v149
    %301 = vmatprep.subr.mxu0 0.0
    %302 = vmatpush1.msra.mxu0 %v152
    %303 = vmatprep.subr.mxu0 0.0
    %304 = vmatpush1.msra.mxu0 0.0
    %305 = vmatprep.subr.mxu0 0.0
    %306 = vmatpush1.msra.mxu0 0.0
    %307 = vmatprep.subr.mxu0 0.0
    %308 = vmatpush1.msra.mxu0 0.0
    %309 = vmatprep.subr.mxu0 0.0
    %310 = vmatpush1.msra.mxu0 0.0
    %311 = vmatprep.subr.mxu0 0.0
    %312 = vmatpush1.msra.mxu0 0.0
    %313 = vmatprep.subr.mxu0 0.0
    %314 = vmatpush1.msra.mxu0 0.0
    %315 = vmatprep.subr.mxu0 0.0
    %316 = vmatpush1.msra.mxu0 0.0
    %317 = vmatprep.subr.mxu0 0.0
    %318 = vmatpush1.msra.mxu0 0.0
    %319 = vmatprep.subr.mxu0 0.0
    %320 = vmatpush1.msra.mxu0 0.0
    %321 = vmatprep.subr.mxu0 0.0
    %322 = vmatpush1.msra.mxu0 0.0
    %323 = vmatprep.subr.mxu0 0.0
    %324 = vmatpush1.msra.mxu0 0.0
    %325 = vmatprep.subr.mxu0 0.0
    %326 = vmatpush1.msra.mxu0 0.0
    %327 = vmatprep.subr.mxu0 0.0
    %328 = vmatpush1.msra.mxu0 0.0
    %329 = vmatprep.subr.mxu0 0.0
    %330 = vmatpush1.msra.mxu0 0.0
    %331 = vmatprep.subr.mxu0 0.0
    %332 = vmatpush1.msra.mxu0 0.0
    %333 = vmatprep.subr.mxu0 0.0
    %334 = vmatpush1.msra.mxu0 0.0
    %335 = vmatprep.mubr.f32.mxu0 0.0
    %336 = vmatmul.mubr.f32.gmra.mrb[0].mxu0 %v99
    %v337 = vpop.f32.mrb[0].mxu0
    %v338 = vadd.f32 %v166, %v337
    %v339 = vpop.f32.mrb[0].mxu0
    %340 = vmatprep.mubr.f32.mxu0 0.0
    %341 = vmatmul.mubr.f32.gmra.mrb[0].mxu0 %v100
    %v342 = vpop.f32.mrb[0].mxu0
    %v343 = vadd.f32 %v166, %v342
    %v344 = vpop.f32.mrb[0].mxu0
    %345 = vmatprep.mubr.f32.mxu0 0.0
    %346 = vmatmul.mubr.f32.gmra.mrb[0].mxu0 %v101
    %v347 = vpop.f32.mrb[0].mxu0
    %v348 = vadd.f32 %v166, %v347
    %v349 = vpop.f32.mrb[0].mxu0
    %350 = vmatprep.mubr.f32.mxu0 0.0
    %351 = vmatmul.mubr.f32.gmra.mrb[0].mxu0 %v102
    %v352 = vpop.f32.mrb[0].mxu0
    %v353 = vadd.f32 %v166, %v352
    %v354 = vpop.f32.mrb[0].mxu0
    %355 = vmatprep.mubr.f32.mxu0 0.0
    %356 = vmatmul.mubr.f32.gmra.mrb[0].mxu0 %v103
    %v357 = vpop.f32.mrb[0].mxu0
    %v358 = vadd.f32 %v166, %v357
    %v359 = vpop.f32.mrb[0].mxu0
    %360 = vmatprep.mubr.f32.mxu0 0.0
    %361 = vmatmul.mubr.f32.gmra.mrb[0].mxu0 %v104
    %v362 = vpop.f32.mrb[0].mxu0
    %v363 = vadd.f32 %v166, %v362
    %v364 = vpop.f32.mrb[0].mxu0
    %365 = vdwg.mxu0
    %366 = vst [vmem:[#allocation2] sm:$0xff] %v237
    %367 = vst [vmem:[#allocation2 + $0x8] sm:$0xff] %v239
    %368 = vst [vmem:[#allocation2 + $0x10] sm:$0xff] %v338
    %369 = vst [vmem:[#allocation2 + $0x18] sm:$0xff] %v243
    %370 = vst [vmem:[#allocation2 + $0x20] sm:$0xff] %v245
    %371 = vst [vmem:[#allocation2 + $0x28] sm:$0xff] %v343
    %372 = vst [vmem:[#allocation2 + $0x30] sm:$0xff] %v249
    %373 = vst [vmem:[#allocation2 + $0x38] sm:$0xff] %v251
    %374 = vst [vmem:[#allocation2 + $0x40] sm:$0xff] %v348
    %375 = vst [vmem:[#allocation2 + $0x48] sm:$0xff] %v255
    %376 = vst [vmem:[#allocation2 + $0x50] sm:$0xff] %v257
    %377 = vst [vmem:[#allocation2 + $0x58] sm:$0xff] %v353
    %378 = vst [vmem:[#allocation2 + $0x60] sm:$0xff] %v261
    %379 = vst [vmem:[#allocation2 + $0x68] sm:$0xff] %v263
    %380 = vst [vmem:[#allocation2 + $0x70] sm:$0xff] %v358
    %381 = vst [vmem:[#allocation2 + $0x78] sm:$0xff] %v267
    %382 = vst [vmem:[#allocation2 + $0x80] sm:$0xff] %v269
    %383 = vst [vmem:[#allocation2 + $0x88] sm:$0xff] %v363
    %v384 = vld [vmem:[#allocation8] sm:$0xff]
    %v385 = vld [vmem:[#allocation8 + $0x8] sm:$0xff]
    %v386 = vld [vmem:[#allocation8 + $0x10] sm:$0xff]
    %v387 = vld [vmem:[#allocation8 + $0x18] sm:$0xff]
    %v388 = vld [vmem:[#allocation8 + $0x20] sm:$0xff]
    %v389 = vld [vmem:[#allocation8 + $0x28] sm:$0xff]
    %v390 = vld [vmem:[#allocation8 + $0x30] sm:$0xff]
    %v391 = vld [vmem:[#allocation8 + $0x38] sm:$0xff]
    %v392 = vld [vmem:[#allocation8 + $0x40] sm:$0xff]
    %v393 = vld [vmem:[#allocation8 + $0x48] sm:$0xff]
    %v394 = vld [vmem:[#allocation8 + $0x50] sm:$0xff]
    %v395 = vld [vmem:[#allocation8 + $0x58] sm:$0xff]
    %v396 = vld [vmem:[#allocation8 + $0x60] sm:$0xff]
    %v397 = vld [vmem:[#allocation8 + $0x68] sm:$0xff]
    %v398 = vld [vmem:[#allocation8 + $0x70] sm:$0xff]
    %v399 = vld [vmem:[#allocation8 + $0x78] sm:$0xff]
    %v400 = vld [vmem:[#allocation8 + $0x80] sm:$0xff]
    %v401 = vld [vmem:[#allocation8 + $0x88] sm:$0xff]
    %v402 = vld [vmem:[#allocation8 + $0x90] sm:$0xff]
    %v403 = vld [vmem:[#allocation8 + $0x98] sm:$0xff]
    %v404 = vld [vmem:[#allocation8 + $0xa0] sm:$0xff]
    %v405 = vld [vmem:[#allocation8 + $0xa8] sm:$0xff]
    %v406 = vld [vmem:[#allocation8 + $0xb0] sm:$0xff]
    %v407 = vld [vmem:[#allocation8 + $0xb8] sm:$0xff]
    %v408 = vld [vmem:[#allocation8 + $0xc0] sm:$0xff]
    %v409 = vld [vmem:[#allocation8 + $0xc8] sm:$0xff]
    %v410 = vld [vmem:[#allocation8 + $0xd0] sm:$0xff]
    %v411 = vld [vmem:[#allocation8 + $0xd8] sm:$0xff]
    %v412 = vld [vmem:[#allocation8 + $0xe0] sm:$0xff]
    %v413 = vld [vmem:[#allocation8 + $0xe8] sm:$0xff]
    %v414 = vld [vmem:[#allocation8 + $0xf0] sm:$0xff]
    %v415 = vld [vmem:[#allocation8 + $0xf8] sm:$0xff]
    %v416 = vld [vmem:[#allocation8 + $0x100] sm:$0xff]
    %v417 = vld [vmem:[#allocation8 + $0x108] sm:$0xff]
    %v418 = vld [vmem:[#allocation8 + $0x110] sm:$0xff]
    %v419 = vld [vmem:[#allocation8 + $0x118] sm:$0xff]
    %v420 = vld [vmem:[#allocation8 + $0x120] sm:$0xff]
    %v421 = vld [vmem:[#allocation8 + $0x128] sm:$0xff]
    %v422 = vld [vmem:[#allocation8 + $0x130] sm:$0xff]
    %v423 = vld [vmem:[#allocation8 + $0x138] sm:$0xff]
    %v424 = vld [vmem:[#allocation8 + $0x140] sm:$0xff]
    %v425 = vld [vmem:[#allocation8 + $0x148] sm:$0xff]
    %v426 = vld [vmem:[#allocation8 + $0x150] sm:$0xff]
    %v427 = vld [vmem:[#allocation8 + $0x158] sm:$0xff]
    %v428 = vld [vmem:[#allocation8 + $0x160] sm:$0xff]
    %v429 = vld [vmem:[#allocation8 + $0x168] sm:$0xff]
    %v430 = vld [vmem:[#allocation8 + $0x170] sm:$0xff]
    %v431 = vld [vmem:[#allocation8 + $0x178] sm:$0xff]
    %v432 = vld [vmem:[%s7] sm:$0x7]
    %v434 = vlaneseq
    %v435 = vshrl.u32 %v434, 7
    %v436 = vsub.s32 0, %v435
    %v437 = vrot.slane %v432, %v436
    %v438 = vlaneseq
    %v439 = vshrl.u32 %v438, 7
    %v440 = vsub.s32 1, %v439
    %v441 = vrot.slane %v432, %v440
    %v442 = vlaneseq
    %v443 = vshrl.u32 %v442, 7
    %v444 = vsub.s32 2, %v443
    %v445 = vrot.slane %v432, %v444
    %449 = vmatprep.subr.mxu0 %v385
    %450 = vmatpush1.msra.mxu0 %v384
    %451 = vmatprep.subr.mxu0 %v388
    %452 = vmatpush1.msra.mxu0 %v387
    %453 = vmatprep.subr.mxu0 %v391
    %454 = vmatpush1.msra.mxu0 %v390
    %455 = vmatprep.subr.mxu0 %v394
    %456 = vmatpush1.msra.mxu0 %v393
    %457 = vmatprep.subr.mxu0 %v397
    %458 = vmatpush1.msra.mxu0 %v396
    %459 = vmatprep.subr.mxu0 %v400
    %460 = vmatpush1.msra.mxu0 %v399
    %461 = vmatprep.subr.mxu0 %v403
    %462 = vmatpush1.msra.mxu0 %v402
    %463 = vmatprep.subr.mxu0 %v406
    %464 = vmatpush1.msra.mxu0 %v405
    %465 = vmatprep.subr.mxu0 %v409
    %466 = vmatpush1.msra.mxu0 %v408
    %467 = vmatprep.subr.mxu0 %v412
    %468 = vmatpush1.msra.mxu0 %v411
    %469 = vmatprep.subr.mxu0 %v415
    %470 = vmatpush1.msra.mxu0 %v414
    %471 = vmatprep.subr.mxu0 %v418
    %472 = vmatpush1.msra.mxu0 %v417
    %473 = vmatprep.subr.mxu0 %v421
    %474 = vmatpush1.msra.mxu0 %v420
    %475 = vmatprep.subr.mxu0 %v424
    %476 = vmatpush1.msra.mxu0 %v423
    %477 = vmatprep.subr.mxu0 %v427
    %478 = vmatpush1.msra.mxu0 %v426
    %479 = vmatprep.subr.mxu0 %v430
    %480 = vmatpush1.msra.mxu0 %v429
    %481 = vmatprep.subr.mxu0 0.0
    %482 = vmatpush1.msra.mxu0 0.0
    %483 = vmatprep.subr.mxu0 0.0
    %484 = vmatpush1.msra.mxu0 0.0
    %485 = vmatprep.subr.mxu0 0.0
    %486 = vmatpush1.msra.mxu0 0.0
    %487 = vmatprep.subr.mxu0 0.0
    %488 = vmatpush1.msra.mxu0 0.0
    %489 = vmatprep.subr.mxu0 0.0
    %490 = vmatpush1.msra.mxu0 0.0
    %491 = vmatprep.subr.mxu0 0.0
    %492 = vmatpush1.msra.mxu0 0.0
    %493 = vmatprep.subr.mxu0 0.0
    %494 = vmatpush1.msra.mxu0 0.0
    %495 = vmatprep.subr.mxu0 0.0
    %496 = vmatpush1.msra.mxu0 0.0
    %497 = vmatprep.subr.mxu0 0.0
    %498 = vmatpush1.msra.mxu0 0.0
    %499 = vmatprep.subr.mxu0 0.0
    %500 = vmatpush1.msra.mxu0 0.0
    %501 = vmatprep.subr.mxu0 0.0
    %502 = vmatpush1.msra.mxu0 0.0
    %503 = vmatprep.subr.mxu0 0.0
    %504 = vmatpush1.msra.mxu0 0.0
    %505 = vmatprep.subr.mxu0 0.0
    %506 = vmatpush1.msra.mxu0 0.0
    %507 = vmatprep.subr.mxu0 0.0
    %508 = vmatpush1.msra.mxu0 0.0
    %509 = vmatprep.subr.mxu0 0.0
    %510 = vmatpush1.msra.mxu0 0.0
    %511 = vmatprep.subr.mxu0 0.0
    %512 = vmatpush1.msra.mxu0 0.0
    %513 = vmatprep.mubr.f32.mxu0 0.0
    %514 = vmatmul.mubr.f32.gmra.mrb[0].mxu0 %v99
    %v515 = vpop.f32.mrb[0].mxu0
    %v516 = vadd.f32 %v437, %v515
    %v517 = vpop.f32.mrb[0].mxu0
    %v518 = vadd.f32 %v441, %v517
    %519 = vmatprep.mubr.f32.mxu0 0.0
    %520 = vmatmul.mubr.f32.gmra.mrb[0].mxu0 %v100
    %v521 = vpop.f32.mrb[0].mxu0
    %v522 = vadd.f32 %v437, %v521
    %v523 = vpop.f32.mrb[0].mxu0
    %v524 = vadd.f32 %v441, %v523
    %525 = vmatprep.mubr.f32.mxu0 0.0
    %526 = vmatmul.mubr.f32.gmra.mrb[0].mxu0 %v101
    %v527 = vpop.f32.mrb[0].mxu0
    %v528 = vadd.f32 %v437, %v527
    %v529 = vpop.f32.mrb[0].mxu0
    %v530 = vadd.f32 %v441, %v529
    %531 = vmatprep.mubr.f32.mxu0 0.0
    %532 = vmatmul.mubr.f32.gmra.mrb[0].mxu0 %v102
    %v533 = vpop.f32.mrb[0].mxu0
    %v534 = vadd.f32 %v437, %v533
    %v535 = vpop.f32.mrb[0].mxu0
    %v536 = vadd.f32 %v441, %v535
    %537 = vmatprep.mubr.f32.mxu0 0.0
    %538 = vmatmul.mubr.f32.gmra.mrb[0].mxu0 %v103
    %v539 = vpop.f32.mrb[0].mxu0
    %v540 = vadd.f32 %v437, %v539
    %v541 = vpop.f32.mrb[0].mxu0
    %v542 = vadd.f32 %v441, %v541
    %543 = vmatprep.mubr.f32.mxu0 0.0
    %544 = vmatmul.mubr.f32.gmra.mrb[0].mxu0 %v104
    %v545 = vpop.f32.mrb[0].mxu0
    %v546 = vadd.f32 %v437, %v545
    %v547 = vpop.f32.mrb[0].mxu0
    %v548 = vadd.f32 %v441, %v547
    %549 = vdwg.mxu0
    %550 = vmatprep.subr.mxu0 0.0
    %551 = vmatpush1.msra.mxu0 %v386
    %552 = vmatprep.subr.mxu0 0.0
    %553 = vmatpush1.msra.mxu0 %v389
    %554 = vmatprep.subr.mxu0 0.0
    %555 = vmatpush1.msra.mxu0 %v392
    %556 = vmatprep.subr.mxu0 0.0
    %557 = vmatpush1.msra.mxu0 %v395
    %558 = vmatprep.subr.mxu0 0.0
    %559 = vmatpush1.msra.mxu0 %v398
    %560 = vmatprep.subr.mxu0 0.0
    %561 = vmatpush1.msra.mxu0 %v401
    %562 = vmatprep.subr.mxu0 0.0
    %563 = vmatpush1.msra.mxu0 %v404
    %564 = vmatprep.subr.mxu0 0.0
    %565 = vmatpush1.msra.mxu0 %v407
    %566 = vmatprep.subr.mxu0 0.0
    %567 = vmatpush1.msra.mxu0 %v410
    %568 = vmatprep.subr.mxu0 0.0
    %569 = vmatpush1.msra.mxu0 %v413
    %570 = vmatprep.subr.mxu0 0.0
    %571 = vmatpush1.msra.mxu0 %v416
    %572 = vmatprep.subr.mxu0 0.0
    %573 = vmatpush1.msra.mxu0 %v419
    %574 = vmatprep.subr.mxu0 0.0
    %575 = vmatpush1.msra.mxu0 %v422
    %576 = vmatprep.subr.mxu0 0.0
    %577 = vmatpush1.msra.mxu0 %v425
    %578 = vmatprep.subr.mxu0 0.0
    %579 = vmatpush1.msra.mxu0 %v428
    %580 = vmatprep.subr.mxu0 0.0
    %581 = vmatpush1.msra.mxu0 %v431
    %582 = vmatprep.subr.mxu0 0.0
    %583 = vmatpush1.msra.mxu0 0.0
    %584 = vmatprep.subr.mxu0 0.0
    %585 = vmatpush1.msra.mxu0 0.0
    %586 = vmatprep.subr.mxu0 0.0
    %587 = vmatpush1.msra.mxu0 0.0
    %588 = vmatprep.subr.mxu0 0.0
    %589 = vmatpush1.msra.mxu0 0.0
    %590 = vmatprep.subr.mxu0 0.0
    %591 = vmatpush1.msra.mxu0 0.0
    %592 = vmatprep.subr.mxu0 0.0
    %593 = vmatpush1.msra.mxu0 0.0
    %594 = vmatprep.subr.mxu0 0.0
    %595 = vmatpush1.msra.mxu0 0.0
    %596 = vmatprep.subr.mxu0 0.0
    %597 = vmatpush1.msra.mxu0 0.0
    %598 = vmatprep.subr.mxu0 0.0
    %599 = vmatpush1.msra.mxu0 0.0
    %600 = vmatprep.subr.mxu0 0.0
    %601 = vmatpush1.msra.mxu0 0.0
    %602 = vmatprep.subr.mxu0 0.0
    %603 = vmatpush1.msra.mxu0 0.0
    %604 = vmatprep.subr.mxu0 0.0
    %605 = vmatpush1.msra.mxu0 0.0
    %606 = vmatprep.subr.mxu0 0.0
    %607 = vmatpush1.msra.mxu0 0.0
    %608 = vmatprep.subr.mxu0 0.0
    %609 = vmatpush1.msra.mxu0 0.0
    %610 = vmatprep.subr.mxu0 0.0
    %611 = vmatpush1.msra.mxu0 0.0
    %612 = vmatprep.subr.mxu0 0.0
    %613 = vmatpush1.msra.mxu0 0.0
    %614 = vmatprep.mubr.f32.mxu0 0.0
    %615 = vmatmul.mubr.f32.gmra.mrb[0].mxu0 %v99
    %v616 = vpop.f32.mrb[0].mxu0
    %v617 = vadd.f32 %v445, %v616
    %v618 = vpop.f32.mrb[0].mxu0
    %619 = vmatprep.mubr.f32.mxu0 0.0
    %620 = vmatmul.mubr.f32.gmra.mrb[0].mxu0 %v100
    %v621 = vpop.f32.mrb[0].mxu0
    %v622 = vadd.f32 %v445, %v621
    %v623 = vpop.f32.mrb[0].mxu0
    %624 = vmatprep.mubr.f32.mxu0 0.0
    %625 = vmatmul.mubr.f32.gmra.mrb[0].mxu0 %v101
    %v626 = vpop.f32.mrb[0].mxu0
    %v627 = vadd.f32 %v445, %v626
    %v628 = vpop.f32.mrb[0].mxu0
    %629 = vmatprep.mubr.f32.mxu0 0.0
    %630 = vmatmul.mubr.f32.gmra.mrb[0].mxu0 %v102
    %v631 = vpop.f32.mrb[0].mxu0
    %v632 = vadd.f32 %v445, %v631
    %v633 = vpop.f32.mrb[0].mxu0
    %634 = vmatprep.mubr.f32.mxu0 0.0
    %635 = vmatmul.mubr.f32.gmra.mrb[0].mxu0 %v103
    %v636 = vpop.f32.mrb[0].mxu0
    %v637 = vadd.f32 %v445, %v636
    %v638 = vpop.f32.mrb[0].mxu0
    %639 = vmatprep.mubr.f32.mxu0 0.0
    %640 = vmatmul.mubr.f32.gmra.mrb[0].mxu0 %v104
    %v641 = vpop.f32.mrb[0].mxu0
    %v642 = vadd.f32 %v445, %v641
    %v643 = vpop.f32.mrb[0].mxu0
    %644 = vdwg.mxu0
    %645 = vst [vmem:[#allocation3] sm:$0xff] %v516
    %646 = vst [vmem:[#allocation3 + $0x8] sm:$0xff] %v518
    %647 = vst [vmem:[#allocation3 + $0x10] sm:$0xff] %v617
    %648 = vst [vmem:[#allocation3 + $0x18] sm:$0xff] %v522
    %649 = vst [vmem:[#allocation3 + $0x20] sm:$0xff] %v524
    %650 = vst [vmem:[#allocation3 + $0x28] sm:$0xff] %v622
    %651 = vst [vmem:[#allocation3 + $0x30] sm:$0xff] %v528
    %652 = vst [vmem:[#allocation3 + $0x38] sm:$0xff] %v530
    %653 = vst [vmem:[#allocation3 + $0x40] sm:$0xff] %v627
    %654 = vst [vmem:[#allocation3 + $0x48] sm:$0xff] %v534
    %655 = vst [vmem:[#allocation3 + $0x50] sm:$0xff] %v536
    %656 = vst [vmem:[#allocation3 + $0x58] sm:$0xff] %v632
    %657 = vst [vmem:[#allocation3 + $0x60] sm:$0xff] %v540
    %658 = vst [vmem:[#allocation3 + $0x68] sm:$0xff] %v542
    %659 = vst [vmem:[#allocation3 + $0x70] sm:$0xff] %v637
    %660 = vst [vmem:[#allocation3 + $0x78] sm:$0xff] %v546
    %661 = vst [vmem:[#allocation3 + $0x80] sm:$0xff] %v548
    %662 = vst [vmem:[#allocation3 + $0x88] sm:$0xff] %v642
    %v663 = vld [vmem:[#allocation6] sm:$0xff]
    %v664 = vld [vmem:[#allocation6 + $0x8] sm:$0xff]
    %v665 = vld [vmem:[#allocation6 + $0x10] sm:$0xff]
    %v666 = vld [vmem:[#allocation6 + $0x18] sm:$0xff]
    %v667 = vld [vmem:[#allocation6 + $0x20] sm:$0xff]
    %v668 = vld [vmem:[#allocation6 + $0x28] sm:$0xff]
    %v669 = vld [vmem:[#allocation6 + $0x30] sm:$0xff]
    %v670 = vld [vmem:[#allocation6 + $0x38] sm:$0xff]
    %v671 = vld [vmem:[#allocation6 + $0x40] sm:$0xff]
    %v672 = vld [vmem:[#allocation6 + $0x48] sm:$0xff]
    %v673 = vld [vmem:[#allocation6 + $0x50] sm:$0xff]
    %v674 = vld [vmem:[#allocation6 + $0x58] sm:$0xff]
    %v675 = vld [vmem:[#allocation6 + $0x60] sm:$0xff]
    %v676 = vld [vmem:[#allocation6 + $0x68] sm:$0xff]
    %v677 = vld [vmem:[#allocation6 + $0x70] sm:$0xff]
    %v678 = vld [vmem:[#allocation6 + $0x78] sm:$0xff]
    %v679 = vld [vmem:[#allocation6 + $0x80] sm:$0xff]
    %v680 = vld [vmem:[#allocation6 + $0x88] sm:$0xff]
    %v681 = vld [vmem:[#allocation6 + $0x90] sm:$0xff]
    %v682 = vld [vmem:[#allocation6 + $0x98] sm:$0xff]
    %v683 = vld [vmem:[#allocation6 + $0xa0] sm:$0xff]
    %v684 = vld [vmem:[#allocation6 + $0xa8] sm:$0xff]
    %v685 = vld [vmem:[#allocation6 + $0xb0] sm:$0xff]
    %v686 = vld [vmem:[#allocation6 + $0xb8] sm:$0xff]
    %v687 = vld [vmem:[#allocation6 + $0xc0] sm:$0xff]
    %v688 = vld [vmem:[#allocation6 + $0xc8] sm:$0xff]
    %v689 = vld [vmem:[#allocation6 + $0xd0] sm:$0xff]
    %v690 = vld [vmem:[#allocation6 + $0xd8] sm:$0xff]
    %v691 = vld [vmem:[#allocation6 + $0xe0] sm:$0xff]
    %v692 = vld [vmem:[#allocation6 + $0xe8] sm:$0xff]
    %v693 = vld [vmem:[#allocation6 + $0xf0] sm:$0xff]
    %v694 = vld [vmem:[#allocation6 + $0xf8] sm:$0xff]
    %v695 = vld [vmem:[#allocation6 + $0x100] sm:$0xff]
    %v696 = vld [vmem:[#allocation6 + $0x108] sm:$0xff]
    %v697 = vld [vmem:[#allocation6 + $0x110] sm:$0xff]
    %v698 = vld [vmem:[#allocation6 + $0x118] sm:$0xff]
    %v699 = vld [vmem:[#allocation6 + $0x120] sm:$0xff]
    %v700 = vld [vmem:[#allocation6 + $0x128] sm:$0xff]
    %v701 = vld [vmem:[#allocation6 + $0x130] sm:$0xff]
    %v702 = vld [vmem:[#allocation6 + $0x138] sm:$0xff]
    %v703 = vld [vmem:[#allocation6 + $0x140] sm:$0xff]
    %v704 = vld [vmem:[#allocation6 + $0x148] sm:$0xff]
    %v705 = vld [vmem:[#allocation6 + $0x150] sm:$0xff]
    %v706 = vld [vmem:[#allocation6 + $0x158] sm:$0xff]
    %v707 = vld [vmem:[#allocation6 + $0x160] sm:$0xff]
    %v708 = vld [vmem:[#allocation6 + $0x168] sm:$0xff]
    %v709 = vld [vmem:[#allocation6 + $0x170] sm:$0xff]
    %v710 = vld [vmem:[#allocation6 + $0x178] sm:$0xff]
    %v711 = vld [vmem:[%s4] sm:$0x7]
    %v713 = vlaneseq
    %v714 = vshrl.u32 %v713, 7
    %v715 = vsub.s32 0, %v714
    %v716 = vrot.slane %v711, %v715
    %v717 = vlaneseq
    %v718 = vshrl.u32 %v717, 7
    %v719 = vsub.s32 1, %v718
    %v720 = vrot.slane %v711, %v719
    %v721 = vlaneseq
    %v722 = vshrl.u32 %v721, 7
    %v723 = vsub.s32 2, %v722
    %v724 = vrot.slane %v711, %v723
    %728 = vmatprep.subr.mxu0 %v664
    %729 = vmatpush1.msra.mxu0 %v663
    %730 = vmatprep.subr.mxu0 %v667
    %731 = vmatpush1.msra.mxu0 %v666
    %732 = vmatprep.subr.mxu0 %v670
    %733 = vmatpush1.msra.mxu0 %v669
    %734 = vmatprep.subr.mxu0 %v673
    %735 = vmatpush1.msra.mxu0 %v672
    %736 = vmatprep.subr.mxu0 %v676
    %737 = vmatpush1.msra.mxu0 %v675
    %738 = vmatprep.subr.mxu0 %v679
    %739 = vmatpush1.msra.mxu0 %v678
    %740 = vmatprep.subr.mxu0 %v682
    %741 = vmatpush1.msra.mxu0 %v681
    %742 = vmatprep.subr.mxu0 %v685
    %743 = vmatpush1.msra.mxu0 %v684
    %744 = vmatprep.subr.mxu0 %v688
    %745 = vmatpush1.msra.mxu0 %v687
    %746 = vmatprep.subr.mxu0 %v691
    %747 = vmatpush1.msra.mxu0 %v690
    %748 = vmatprep.subr.mxu0 %v694
    %749 = vmatpush1.msra.mxu0 %v693
    %750 = vmatprep.subr.mxu0 %v697
    %751 = vmatpush1.msra.mxu0 %v696
    %752 = vmatprep.subr.mxu0 %v700
    %753 = vmatpush1.msra.mxu0 %v699
    %754 = vmatprep.subr.mxu0 %v703
    %755 = vmatpush1.msra.mxu0 %v702
    %756 = vmatprep.subr.mxu0 %v706
    %757 = vmatpush1.msra.mxu0 %v705
    %758 = vmatprep.subr.mxu0 %v709
    %759 = vmatpush1.msra.mxu0 %v708
    %760 = vmatprep.subr.mxu0 0.0
    %761 = vmatpush1.msra.mxu0 0.0
    %762 = vmatprep.subr.mxu0 0.0
    %763 = vmatpush1.msra.mxu0 0.0
    %764 = vmatprep.subr.mxu0 0.0
    %765 = vmatpush1.msra.mxu0 0.0
    %766 = vmatprep.subr.mxu0 0.0
    %767 = vmatpush1.msra.mxu0 0.0
    %768 = vmatprep.subr.mxu0 0.0
    %769 = vmatpush1.msra.mxu0 0.0
    %770 = vmatprep.subr.mxu0 0.0
    %771 = vmatpush1.msra.mxu0 0.0
    %772 = vmatprep.subr.mxu0 0.0
    %773 = vmatpush1.msra.mxu0 0.0
    %774 = vmatprep.subr.mxu0 0.0
    %775 = vmatpush1.msra.mxu0 0.0
    %776 = vmatprep.subr.mxu0 0.0
    %777 = vmatpush1.msra.mxu0 0.0
    %778 = vmatprep.subr.mxu0 0.0
    %779 = vmatpush1.msra.mxu0 0.0
    %780 = vmatprep.subr.mxu0 0.0
    %781 = vmatpush1.msra.mxu0 0.0
    %782 = vmatprep.subr.mxu0 0.0
    %783 = vmatpush1.msra.mxu0 0.0
    %784 = vmatprep.subr.mxu0 0.0
    %785 = vmatpush1.msra.mxu0 0.0
    %786 = vmatprep.subr.mxu0 0.0
    %787 = vmatpush1.msra.mxu0 0.0
    %788 = vmatprep.subr.mxu0 0.0
    %789 = vmatpush1.msra.mxu0 0.0
    %790 = vmatprep.subr.mxu0 0.0
    %791 = vmatpush1.msra.mxu0 0.0
    %792 = vmatprep.mubr.f32.mxu0 0.0
    %793 = vmatmul.mubr.f32.gmra.mrb[0].mxu0 0.0
    %v794 = vpop.f32.mrb[0].mxu0
    %v795 = vadd.f32 %v716, %v794
    %v796 = vpop.f32.mrb[0].mxu0
    %v797 = vadd.f32 %v720, %v796
    %798 = vdwg.mxu0
    %799 = vmatprep.subr.mxu0 0.0
    %800 = vmatpush1.msra.mxu0 %v665
    %801 = vmatprep.subr.mxu0 0.0
    %802 = vmatpush1.msra.mxu0 %v668
    %803 = vmatprep.subr.mxu0 0.0
    %804 = vmatpush1.msra.mxu0 %v671
    %805 = vmatprep.subr.mxu0 0.0
    %806 = vmatpush1.msra.mxu0 %v674
    %807 = vmatprep.subr.mxu0 0.0
    %808 = vmatpush1.msra.mxu0 %v677
    %809 = vmatprep.subr.mxu0 0.0
    %810 = vmatpush1.msra.mxu0 %v680
    %811 = vmatprep.subr.mxu0 0.0
    %812 = vmatpush1.msra.mxu0 %v683
    %813 = vmatprep.subr.mxu0 0.0
    %814 = vmatpush1.msra.mxu0 %v686
    %815 = vmatprep.subr.mxu0 0.0
    %816 = vmatpush1.msra.mxu0 %v689
    %817 = vmatprep.subr.mxu0 0.0
    %818 = vmatpush1.msra.mxu0 %v692
    %819 = vmatprep.subr.mxu0 0.0
    %820 = vmatpush1.msra.mxu0 %v695
    %821 = vmatprep.subr.mxu0 0.0
    %822 = vmatpush1.msra.mxu0 %v698
    %823 = vmatprep.subr.mxu0 0.0
    %824 = vmatpush1.msra.mxu0 %v701
    %825 = vmatprep.subr.mxu0 0.0
    %826 = vmatpush1.msra.mxu0 %v704
    %827 = vmatprep.subr.mxu0 0.0
    %828 = vmatpush1.msra.mxu0 %v707
    %829 = vmatprep.subr.mxu0 0.0
    %830 = vmatpush1.msra.mxu0 %v710
    %831 = vmatprep.subr.mxu0 0.0
    %832 = vmatpush1.msra.mxu0 0.0
    %833 = vmatprep.subr.mxu0 0.0
    %834 = vmatpush1.msra.mxu0 0.0
    %835 = vmatprep.subr.mxu0 0.0
    %836 = vmatpush1.msra.mxu0 0.0
    %837 = vmatprep.subr.mxu0 0.0
    %838 = vmatpush1.msra.mxu0 0.0
    %839 = vmatprep.subr.mxu0 0.0
    %840 = vmatpush1.msra.mxu0 0.0
    %841 = vmatprep.subr.mxu0 0.0
    %842 = vmatpush1.msra.mxu0 0.0
    %843 = vmatprep.subr.mxu0 0.0
    %844 = vmatpush1.msra.mxu0 0.0
    %845 = vmatprep.subr.mxu0 0.0
    %846 = vmatpush1.msra.mxu0 0.0
    %847 = vmatprep.subr.mxu0 0.0
    %848 = vmatpush1.msra.mxu0 0.0
    %849 = vmatprep.subr.mxu0 0.0
    %850 = vmatpush1.msra.mxu0 0.0
    %851 = vmatprep.subr.mxu0 0.0
    %852 = vmatpush1.msra.mxu0 0.0
    %853 = vmatprep.subr.mxu0 0.0
    %854 = vmatpush1.msra.mxu0 0.0
    %855 = vmatprep.subr.mxu0 0.0
    %856 = vmatpush1.msra.mxu0 0.0
    %857 = vmatprep.subr.mxu0 0.0
    %858 = vmatpush1.msra.mxu0 0.0
    %859 = vmatprep.subr.mxu0 0.0
    %860 = vmatpush1.msra.mxu0 0.0
    %861 = vmatprep.subr.mxu0 0.0
    %862 = vmatpush1.msra.mxu0 0.0
    %863 = vmatprep.mubr.f32.mxu0 0.0
    %864 = vmatmul.mubr.f32.gmra.mrb[0].mxu0 0.0
    %v865 = vpop.f32.mrb[0].mxu0
    %v866 = vadd.f32 %v724, %v865
    %v867 = vpop.f32.mrb[0].mxu0
    %868 = vdwg.mxu0
    %v869 = vld [vmem:[#allocation2] sm:$0xff]
    %v870 = vld [vmem:[#allocation2 + $0x8] sm:$0xff]
    %v871 = vld [vmem:[#allocation2 + $0x10] sm:$0xff]
    %v872 = vadd.f32 %v869, %v795
    %v873 = vxor.u32 %v872, 2147483648
    %v874 = vmul.f32 %v873, 1.442695
    %v875 = vpow.pop %v874
    %v876 = vadd.f32 %v875, 1.0
    %v877 = vrcp.pop %v876
    %v878 = vmul.f32 1.0, %v877
    %v879 = vadd.f32 %v870, %v797
    %v880 = vxor.u32 %v879, 2147483648
    %v881 = vmul.f32 %v880, 1.442695
    %v882 = vpow.pop %v881
    %v883 = vadd.f32 %v882, 1.0
    %v884 = vrcp.pop %v883
    %v885 = vmul.f32 1.0, %v884
    %v886 = vmul.f32 %v878, %v866
    %v887 = vadd.f32 %v871, %v886
    %v888 = vtanh.pop %v887
    %v889 = vsub.f32 1.0, %v885
    %v890 = vmul.f32 %v889, %v888
    %v891 = vmul.f32 %v885, 0.0
    %v892 = vadd.f32 %v890, %v891
    %893 = vst [vmem:[%s12] sm:$0xff] %v892
    %v894 = vld [vmem:[#allocation9] sm:$0xff]
    %v895 = vld [vmem:[#allocation9 + $0x8] sm:$0xff]
    %v896 = vld [vmem:[#allocation9 + $0x10] sm:$0xff]
    %v897 = vld [vmem:[#allocation9 + $0x18] sm:$0xff]
    %v898 = vld [vmem:[#allocation9 + $0x20] sm:$0xff]
    %v899 = vld [vmem:[#allocation9 + $0x28] sm:$0xff]
    %v900 = vld [vmem:[#allocation9 + $0x30] sm:$0xff]
    %v901 = vld [vmem:[#allocation9 + $0x38] sm:$0xff]
    %v902 = vld [vmem:[#allocation9 + $0x40] sm:$0xff]
    %v903 = vld [vmem:[#allocation9 + $0x48] sm:$0xff]
    %v904 = vld [vmem:[#allocation9 + $0x50] sm:$0xff]
    %v905 = vld [vmem:[#allocation9 + $0x58] sm:$0xff]
    %v906 = vld [vmem:[#allocation9 + $0x60] sm:$0xff]
    %v907 = vld [vmem:[#allocation9 + $0x68] sm:$0xff]
    %v908 = vld [vmem:[#allocation9 + $0x70] sm:$0xff]
    %v909 = vld [vmem:[#allocation9 + $0x78] sm:$0xff]
    %v910 = vld [vmem:[#allocation9 + $0x80] sm:$0xff]
    %v911 = vld [vmem:[#allocation9 + $0x88] sm:$0xff]
    %v912 = vld [vmem:[#allocation9 + $0x90] sm:$0xff]
    %v913 = vld [vmem:[#allocation9 + $0x98] sm:$0xff]
    %v914 = vld [vmem:[#allocation9 + $0xa0] sm:$0xff]
    %v915 = vld [vmem:[#allocation9 + $0xa8] sm:$0xff]
    %v916 = vld [vmem:[#allocation9 + $0xb0] sm:$0xff]
    %v917 = vld [vmem:[#allocation9 + $0xb8] sm:$0xff]
    %v918 = vld [vmem:[#allocation9 + $0xc0] sm:$0xff]
    %v919 = vld [vmem:[#allocation9 + $0xc8] sm:$0xff]
    %v920 = vld [vmem:[#allocation9 + $0xd0] sm:$0xff]
    %v921 = vld [vmem:[#allocation9 + $0xd8] sm:$0xff]
    %v922 = vld [vmem:[#allocation9 + $0xe0] sm:$0xff]
    %v923 = vld [vmem:[#allocation9 + $0xe8] sm:$0xff]
    %v924 = vld [vmem:[#allocation9 + $0xf0] sm:$0xff]
    %v925 = vld [vmem:[#allocation9 + $0xf8] sm:$0xff]
    %v926 = vld [vmem:[#allocation9 + $0x100] sm:$0xff]
    %v927 = vld [vmem:[#allocation9 + $0x108] sm:$0xff]
    %v928 = vld [vmem:[#allocation9 + $0x110] sm:$0xff]
    %v929 = vld [vmem:[#allocation9 + $0x118] sm:$0xff]
    %v930 = vld [vmem:[#allocation9 + $0x120] sm:$0xff]
    %v931 = vld [vmem:[#allocation9 + $0x128] sm:$0xff]
    %v932 = vld [vmem:[#allocation9 + $0x130] sm:$0xff]
    %v933 = vld [vmem:[#allocation9 + $0x138] sm:$0xff]
    %v934 = vld [vmem:[#allocation9 + $0x140] sm:$0xff]
    %v935 = vld [vmem:[#allocation9 + $0x148] sm:$0xff]
    %v936 = vld [vmem:[#allocation9 + $0x150] sm:$0xff]
    %v937 = vld [vmem:[#allocation9 + $0x158] sm:$0xff]
    %v938 = vld [vmem:[#allocation9 + $0x160] sm:$0xff]
    %v939 = vld [vmem:[#allocation9 + $0x168] sm:$0xff]
    %v940 = vld [vmem:[#allocation9 + $0x170] sm:$0xff]
    %v941 = vld [vmem:[#allocation9 + $0x178] sm:$0xff]
    %v942 = vld [vmem:[%s8] sm:$0x7]
    %v944 = vlaneseq
    %v945 = vshrl.u32 %v944, 7
    %v946 = vsub.s32 0, %v945
    %v947 = vrot.slane %v942, %v946
    %v948 = vlaneseq
    %v949 = vshrl.u32 %v948, 7
    %v950 = vsub.s32 1, %v949
    %v951 = vrot.slane %v942, %v950
    %v952 = vlaneseq
    %v953 = vshrl.u32 %v952, 7
    %v954 = vsub.s32 2, %v953
    %v955 = vrot.slane %v942, %v954
    %959 = vmatprep.subr.mxu0 %v895
    %960 = vmatpush1.msra.mxu0 %v894
    %961 = vmatprep.subr.mxu0 %v898
    %962 = vmatpush1.msra.mxu0 %v897
    %963 = vmatprep.subr.mxu0 %v901
    %964 = vmatpush1.msra.mxu0 %v900
    %965 = vmatprep.subr.mxu0 %v904
    %966 = vmatpush1.msra.mxu0 %v903
    %967 = vmatprep.subr.mxu0 %v907
    %968 = vmatpush1.msra.mxu0 %v906
    %969 = vmatprep.subr.mxu0 %v910
    %970 = vmatpush1.msra.mxu0 %v909
    %971 = vmatprep.subr.mxu0 %v913
    %972 = vmatpush1.msra.mxu0 %v912
    %973 = vmatprep.subr.mxu0 %v916
    %974 = vmatpush1.msra.mxu0 %v915
    %975 = vmatprep.subr.mxu0 %v919
    %976 = vmatpush1.msra.mxu0 %v918
    %977 = vmatprep.subr.mxu0 %v922
    %978 = vmatpush1.msra.mxu0 %v921
    %979 = vmatprep.subr.mxu0 %v925
    %980 = vmatpush1.msra.mxu0 %v924
    %981 = vmatprep.subr.mxu0 %v928
    %982 = vmatpush1.msra.mxu0 %v927
    %983 = vmatprep.subr.mxu0 %v931
    %984 = vmatpush1.msra.mxu0 %v930
    %985 = vmatprep.subr.mxu0 %v934
    %986 = vmatpush1.msra.mxu0 %v933
    %987 = vmatprep.subr.mxu0 %v937
    %988 = vmatpush1.msra.mxu0 %v936
    %989 = vmatprep.subr.mxu0 %v940
    %990 = vmatpush1.msra.mxu0 %v939
    %991 = vmatprep.subr.mxu0 0.0
    %992 = vmatpush1.msra.mxu0 0.0
    %993 = vmatprep.subr.mxu0 0.0
    %994 = vmatpush1.msra.mxu0 0.0
    %995 = vmatprep.subr.mxu0 0.0
    %996 = vmatpush1.msra.mxu0 0.0
    %997 = vmatprep.subr.mxu0 0.0
    %998 = vmatpush1.msra.mxu0 0.0
    %999 = vmatprep.subr.mxu0 0.0
    %1000 = vmatpush1.msra.mxu0 0.0
    %1001 = vmatprep.subr.mxu0 0.0
    %1002 = vmatpush1.msra.mxu0 0.0
    %1003 = vmatprep.subr.mxu0 0.0
    %1004 = vmatpush1.msra.mxu0 0.0
    %1005 = vmatprep.subr.mxu0 0.0
    %1006 = vmatpush1.msra.mxu0 0.0
    %1007 = vmatprep.subr.mxu0 0.0
    %1008 = vmatpush1.msra.mxu0 0.0
    %1009 = vmatprep.subr.mxu0 0.0
    %1010 = vmatpush1.msra.mxu0 0.0
    %1011 = vmatprep.subr.mxu0 0.0
    %1012 = vmatpush1.msra.mxu0 0.0
    %1013 = vmatprep.subr.mxu0 0.0
    %1014 = vmatpush1.msra.mxu0 0.0
    %1015 = vmatprep.subr.mxu0 0.0
    %1016 = vmatpush1.msra.mxu0 0.0
    %1017 = vmatprep.subr.mxu0 0.0
    %1018 = vmatpush1.msra.mxu0 0.0
    %1019 = vmatprep.subr.mxu0 0.0
    %1020 = vmatpush1.msra.mxu0 0.0
    %1021 = vmatprep.subr.mxu0 0.0
    %1022 = vmatpush1.msra.mxu0 0.0
    %1023 = vmatprep.mubr.f32.mxu0 0.0
    %1024 = vmatmul.mubr.f32.gmra.mrb[0].mxu0 0.0
    %v1025 = vpop.f32.mrb[0].mxu0
    %v1026 = vadd.f32 %v947, %v1025
    %v1027 = vpop.f32.mrb[0].mxu0
    %v1028 = vadd.f32 %v951, %v1027
    %1029 = vdwg.mxu0
    %1030 = vmatprep.subr.mxu0 0.0
    %1031 = vmatpush1.msra.mxu0 %v896
    %1032 = vmatprep.subr.mxu0 0.0
    %1033 = vmatpush1.msra.mxu0 %v899
    %1034 = vmatprep.subr.mxu0 0.0
    %1035 = vmatpush1.msra.mxu0 %v902
    %1036 = vmatprep.subr.mxu0 0.0
    %1037 = vmatpush1.msra.mxu0 %v905
    %1038 = vmatprep.subr.mxu0 0.0
    %1039 = vmatpush1.msra.mxu0 %v908
    %1040 = vmatprep.subr.mxu0 0.0
    %1041 = vmatpush1.msra.mxu0 %v911
    %1042 = vmatprep.subr.mxu0 0.0
    %1043 = vmatpush1.msra.mxu0 %v914
    %1044 = vmatprep.subr.mxu0 0.0
    %1045 = vmatpush1.msra.mxu0 %v917
    %1046 = vmatprep.subr.mxu0 0.0
    %1047 = vmatpush1.msra.mxu0 %v920
    %1048 = vmatprep.subr.mxu0 0.0
    %1049 = vmatpush1.msra.mxu0 %v923
    %1050 = vmatprep.subr.mxu0 0.0
    %1051 = vmatpush1.msra.mxu0 %v926
    %1052 = vmatprep.subr.mxu0 0.0
    %1053 = vmatpush1.msra.mxu0 %v929
    %1054 = vmatprep.subr.mxu0 0.0
    %1055 = vmatpush1.msra.mxu0 %v932
    %1056 = vmatprep.subr.mxu0 0.0
    %1057 = vmatpush1.msra.mxu0 %v935
    %1058 = vmatprep.subr.mxu0 0.0
    %1059 = vmatpush1.msra.mxu0 %v938
    %1060 = vmatprep.subr.mxu0 0.0
    %1061 = vmatpush1.msra.mxu0 %v941
    %1062 = vmatprep.subr.mxu0 0.0
    %1063 = vmatpush1.msra.mxu0 0.0
    %1064 = vmatprep.subr.mxu0 0.0
    %1065 = vmatpush1.msra.mxu0 0.0
    %1066 = vmatprep.subr.mxu0 0.0
    %1067 = vmatpush1.msra.mxu0 0.0
    %1068 = vmatprep.subr.mxu0 0.0
    %1069 = vmatpush1.msra.mxu0 0.0
    %1070 = vmatprep.subr.mxu0 0.0
    %1071 = vmatpush1.msra.mxu0 0.0
    %1072 = vmatprep.subr.mxu0 0.0
    %1073 = vmatpush1.msra.mxu0 0.0
    %1074 = vmatprep.subr.mxu0 0.0
    %1075 = vmatpush1.msra.mxu0 0.0
    %1076 = vmatprep.subr.mxu0 0.0
    %1077 = vmatpush1.msra.mxu0 0.0
    %1078 = vmatprep.subr.mxu0 0.0
    %1079 = vmatpush1.msra.mxu0 0.0
    %1080 = vmatprep.subr.mxu0 0.0
    %1081 = vmatpush1.msra.mxu0 0.0
    %1082 = vmatprep.subr.mxu0 0.0
    %1083 = vmatpush1.msra.mxu0 0.0
    %1084 = vmatprep.subr.mxu0 0.0
    %1085 = vmatpush1.msra.mxu0 0.0
    %1086 = vmatprep.subr.mxu0 0.0
    %1087 = vmatpush1.msra.mxu0 0.0
    %1088 = vmatprep.subr.mxu0 0.0
    %1089 = vmatpush1.msra.mxu0 0.0
    %1090 = vmatprep.subr.mxu0 0.0
    %1091 = vmatpush1.msra.mxu0 0.0
    %1092 = vmatprep.subr.mxu0 0.0
    %1093 = vmatpush1.msra.mxu0 0.0
    %1094 = vmatprep.mubr.f32.mxu0 0.0
    %1095 = vmatmul.mubr.f32.gmra.mrb[0].mxu0 0.0
    %v1096 = vpop.f32.mrb[0].mxu0
    %v1097 = vadd.f32 %v955, %v1096
    %v1098 = vpop.f32.mrb[0].mxu0
    %1099 = vdwg.mxu0
    %s1100 = scalar_lea.vmem [#allocation3], 120
    %v1101 = vld [vmem:[%s1100] sm:$0xff]
    %v1102 = vld [vmem:[%s1100 + $0x8] sm:$0xff]
    %v1103 = vld [vmem:[%s1100 + $0x10] sm:$0xff]
    %v1104 = vadd.f32 %v1101, %v1026
    %v1105 = vxor.u32 %v1104, 2147483648
    %v1106 = vmul.f32 %v1105, 1.442695
    %v1107 = vpow.pop %v1106
    %v1108 = vadd.f32 %v1107, 1.0
    %v1109 = vrcp.pop %v1108
    %v1110 = vmul.f32 1.0, %v1109
    %v1111 = vadd.f32 %v1102, %v1028
    %v1112 = vxor.u32 %v1111, 2147483648
    %v1113 = vmul.f32 %v1112, 1.442695
    %v1114 = vpow.pop %v1113
    %v1115 = vadd.f32 %v1114, 1.0
    %v1116 = vrcp.pop %v1115
    %v1117 = vmul.f32 1.0, %v1116
    %v1118 = vmul.f32 %v1110, %v1097
    %v1119 = vadd.f32 %v1103, %v1118
    %v1120 = vtanh.pop %v1119
    %v1121 = vsub.f32 1.0, %v1117
    %v1122 = vmul.f32 %v1121, %v1120
    %v1123 = vmul.f32 %v1117, 0.0
    %v1124 = vadd.f32 %v1122, %v1123
    %s1125 = scalar_lea.vmem %s13, 40
    %1126 = vst [vmem:[%s1125] sm:$0xff] %v1124
    %v1127 = vld [vmem:[#allocation6] sm:$0xff]
    %v1128 = vld [vmem:[#allocation6 + $0x8] sm:$0xff]
    %v1129 = vld [vmem:[#allocation6 + $0x10] sm:$0xff]
    %v1130 = vld [vmem:[#allocation6 + $0x18] sm:$0xff]
    %v1131 = vld [vmem:[#allocation6 + $0x20] sm:$0xff]
    %v1132 = vld [vmem:[#allocation6 + $0x28] sm:$0xff]
    %v1133 = vld [vmem:[#allocation6 + $0x30] sm:$0xff]
    %v1134 = vld [vmem:[#allocation6 + $0x38] sm:$0xff]
    %v1135 = vld [vmem:[#allocation6 + $0x40] sm:$0xff]
    %v1136 = vld [vmem:[#allocation6 + $0x48] sm:$0xff]
    %v1137 = vld [vmem:[#allocation6 + $0x50] sm:$0xff]
    %v1138 = vld [vmem:[#allocation6 + $0x58] sm:$0xff]
    %v1139 = vld [vmem:[#allocation6 + $0x60] sm:$0xff]
    %v1140 = vld [vmem:[#allocation6 + $0x68] sm:$0xff]
    %v1141 = vld [vmem:[#allocation6 + $0x70] sm:$0xff]
    %v1142 = vld [vmem:[#allocation6 + $0x78] sm:$0xff]
    %v1143 = vld [vmem:[#allocation6 + $0x80] sm:$0xff]
    %v1144 = vld [vmem:[#allocation6 + $0x88] sm:$0xff]
    %v1145 = vld [vmem:[#allocation6 + $0x90] sm:$0xff]
    %v1146 = vld [vmem:[#allocation6 + $0x98] sm:$0xff]
    %v1147 = vld [vmem:[#allocation6 + $0xa0] sm:$0xff]
    %v1148 = vld [vmem:[#allocation6 + $0xa8] sm:$0xff]
    %v1149 = vld [vmem:[#allocation6 + $0xb0] sm:$0xff]
    %v1150 = vld [vmem:[#allocation6 + $0xb8] sm:$0xff]
    %v1151 = vld [vmem:[#allocation6 + $0xc0] sm:$0xff]
    %v1152 = vld [vmem:[#allocation6 + $0xc8] sm:$0xff]
    %v1153 = vld [vmem:[#allocation6 + $0xd0] sm:$0xff]
    %v1154 = vld [vmem:[#allocation6 + $0xd8] sm:$0xff]
    %v1155 = vld [vmem:[#allocation6 + $0xe0] sm:$0xff]
    %v1156 = vld [vmem:[#allocation6 + $0xe8] sm:$0xff]
    %v1157 = vld [vmem:[#allocation6 + $0xf0] sm:$0xff]
    %v1158 = vld [vmem:[#allocation6 + $0xf8] sm:$0xff]
    %v1159 = vld [vmem:[#allocation6 + $0x100] sm:$0xff]
    %v1160 = vld [vmem:[#allocation6 + $0x108] sm:$0xff]
    %v1161 = vld [vmem:[#allocation6 + $0x110] sm:$0xff]
    %v1162 = vld [vmem:[#allocation6 + $0x118] sm:$0xff]
    %v1163 = vld [vmem:[#allocation6 + $0x120] sm:$0xff]
    %v1164 = vld [vmem:[#allocation6 + $0x128] sm:$0xff]
    %v1165 = vld [vmem:[#allocation6 + $0x130] sm:$0xff]
    %v1166 = vld [vmem:[#allocation6 + $0x138] sm:$0xff]
    %v1167 = vld [vmem:[#allocation6 + $0x140] sm:$0xff]
    %v1168 = vld [vmem:[#allocation6 + $0x148] sm:$0xff]
    %v1169 = vld [vmem:[#allocation6 + $0x150] sm:$0xff]
    %v1170 = vld [vmem:[#allocation6 + $0x158] sm:$0xff]
    %v1171 = vld [vmem:[#allocation6 + $0x160] sm:$0xff]
    %v1172 = vld [vmem:[#allocation6 + $0x168] sm:$0xff]
    %v1173 = vld [vmem:[#allocation6 + $0x170] sm:$0xff]
    %v1174 = vld [vmem:[#allocation6 + $0x178] sm:$0xff]
    %v1175 = vld [vmem:[%s4] sm:$0x7]
    %v1177 = vlaneseq
    %v1178 = vshrl.u32 %v1177, 7
    %v1179 = vsub.s32 0, %v1178
    %v1180 = vrot.slane %v1175, %v1179
    %v1181 = vlaneseq
    %v1182 = vshrl.u32 %v1181, 7
    %v1183 = vsub.s32 1, %v1182
    %v1184 = vrot.slane %v1175, %v1183
    %v1185 = vlaneseq
    %v1186 = vshrl.u32 %v1185, 7
    %v1187 = vsub.s32 2, %v1186
    %v1188 = vrot.slane %v1175, %v1187
    %1192 = vmatprep.subr.mxu0 %v1128
    %1193 = vmatpush1.msra.mxu0 %v1127
    %1194 = vmatprep.subr.mxu0 %v1131
    %1195 = vmatpush1.msra.mxu0 %v1130
    %1196 = vmatprep.subr.mxu0 %v1134
    %1197 = vmatpush1.msra.mxu0 %v1133
    %1198 = vmatprep.subr.mxu0 %v1137
    %1199 = vmatpush1.msra.mxu0 %v1136
    %1200 = vmatprep.subr.mxu0 %v1140
    %1201 = vmatpush1.msra.mxu0 %v1139
    %1202 = vmatprep.subr.mxu0 %v1143
    %1203 = vmatpush1.msra.mxu0 %v1142
    %1204 = vmatprep.subr.mxu0 %v1146
    %1205 = vmatpush1.msra.mxu0 %v1145
    %1206 = vmatprep.subr.mxu0 %v1149
    %1207 = vmatpush1.msra.mxu0 %v1148
    %1208 = vmatprep.subr.mxu0 %v1152
    %1209 = vmatpush1.msra.mxu0 %v1151
    %1210 = vmatprep.subr.mxu0 %v1155
    %1211 = vmatpush1.msra.mxu0 %v1154
    %1212 = vmatprep.subr.mxu0 %v1158
    %1213 = vmatpush1.msra.mxu0 %v1157
    %1214 = vmatprep.subr.mxu0 %v1161
    %1215 = vmatpush1.msra.mxu0 %v1160
    %1216 = vmatprep.subr.mxu0 %v1164
    %1217 = vmatpush1.msra.mxu0 %v1163
    %1218 = vmatprep.subr.mxu0 %v1167
    %1219 = vmatpush1.msra.mxu0 %v1166
    %1220 = vmatprep.subr.mxu0 %v1170
    %1221 = vmatpush1.msra.mxu0 %v1169
    %1222 = vmatprep.subr.mxu0 %v1173
    %1223 = vmatpush1.msra.mxu0 %v1172
    %1224 = vmatprep.subr.mxu0 0.0
    %1225 = vmatpush1.msra.mxu0 0.0
    %1226 = vmatprep.subr.mxu0 0.0
    %1227 = vmatpush1.msra.mxu0 0.0
    %1228 = vmatprep.subr.mxu0 0.0
    %1229 = vmatpush1.msra.mxu0 0.0
    %1230 = vmatprep.subr.mxu0 0.0
    %1231 = vmatpush1.msra.mxu0 0.0
    %1232 = vmatprep.subr.mxu0 0.0
    %1233 = vmatpush1.msra.mxu0 0.0
    %1234 = vmatprep.subr.mxu0 0.0
    %1235 = vmatpush1.msra.mxu0 0.0
    %1236 = vmatprep.subr.mxu0 0.0
    %1237 = vmatpush1.msra.mxu0 0.0
    %1238 = vmatprep.subr.mxu0 0.0
    %1239 = vmatpush1.msra.mxu0 0.0
    %1240 = vmatprep.subr.mxu0 0.0
    %1241 = vmatpush1.msra.mxu0 0.0
    %1242 = vmatprep.subr.mxu0 0.0
    %1243 = vmatpush1.msra.mxu0 0.0
    %1244 = vmatprep.subr.mxu0 0.0
    %1245 = vmatpush1.msra.mxu0 0.0
    %1246 = vmatprep.subr.mxu0 0.0
    %1247 = vmatpush1.msra.mxu0 0.0
    %1248 = vmatprep.subr.mxu0 0.0
    %1249 = vmatpush1.msra.mxu0 0.0
    %1250 = vmatprep.subr.mxu0 0.0
    %1251 = vmatpush1.msra.mxu0 0.0
    %1252 = vmatprep.subr.mxu0 0.0
    %1253 = vmatpush1.msra.mxu0 0.0
    %1254 = vmatprep.subr.mxu0 0.0
    %1255 = vmatpush1.msra.mxu0 0.0
    %1256 = vmatprep.mubr.f32.mxu0 0.0
    %1257 = vmatmul.mubr.f32.gmra.mrb[0].mxu0 %v892
    %v1258 = vpop.f32.mrb[0].mxu0
    %v1259 = vadd.f32 %v1180, %v1258
    %v1260 = vpop.f32.mrb[0].mxu0
    %v1261 = vadd.f32 %v1184, %v1260
    %1262 = vdwg.mxu0
    %1263 = vmatprep.subr.mxu0 0.0
    %1264 = vmatpush1.msra.mxu0 %v1129
    %1265 = vmatprep.subr.mxu0 0.0
    %1266 = vmatpush1.msra.mxu0 %v1132
    %1267 = vmatprep.subr.mxu0 0.0
    %1268 = vmatpush1.msra.mxu0 %v1135
    %1269 = vmatprep.subr.mxu0 0.0
    %1270 = vmatpush1.msra.mxu0 %v1138
    %1271 = vmatprep.subr.mxu0 0.0
    %1272 = vmatpush1.msra.mxu0 %v1141
    %1273 = vmatprep.subr.mxu0 0.0
    %1274 = vmatpush1.msra.mxu0 %v1144
    %1275 = vmatprep.subr.mxu0 0.0
    %1276 = vmatpush1.msra.mxu0 %v1147
    %1277 = vmatprep.subr.mxu0 0.0
    %1278 = vmatpush1.msra.mxu0 %v1150
    %1279 = vmatprep.subr.mxu0 0.0
    %1280 = vmatpush1.msra.mxu0 %v1153
    %1281 = vmatprep.subr.mxu0 0.0
    %1282 = vmatpush1.msra.mxu0 %v1156
    %1283 = vmatprep.subr.mxu0 0.0
    %1284 = vmatpush1.msra.mxu0 %v1159
    %1285 = vmatprep.subr.mxu0 0.0
    %1286 = vmatpush1.msra.mxu0 %v1162
    %1287 = vmatprep.subr.mxu0 0.0
    %1288 = vmatpush1.msra.mxu0 %v1165
    %1289 = vmatprep.subr.mxu0 0.0
    %1290 = vmatpush1.msra.mxu0 %v1168
    %1291 = vmatprep.subr.mxu0 0.0
    %1292 = vmatpush1.msra.mxu0 %v1171
    %1293 = vmatprep.subr.mxu0 0.0
    %1294 = vmatpush1.msra.mxu0 %v1174
    %1295 = vmatprep.subr.mxu0 0.0
    %1296 = vmatpush1.msra.mxu0 0.0
    %1297 = vmatprep.subr.mxu0 0.0
    %1298 = vmatpush1.msra.mxu0 0.0
    %1299 = vmatprep.subr.mxu0 0.0
    %1300 = vmatpush1.msra.mxu0 0.0
    %1301 = vmatprep.subr.mxu0 0.0
    %1302 = vmatpush1.msra.mxu0 0.0
    %1303 = vmatprep.subr.mxu0 0.0
    %1304 = vmatpush1.msra.mxu0 0.0
    %1305 = vmatprep.subr.mxu0 0.0
    %1306 = vmatpush1.msra.mxu0 0.0
    %1307 = vmatprep.subr.mxu0 0.0
    %1308 = vmatpush1.msra.mxu0 0.0
    %1309 = vmatprep.subr.mxu0 0.0
    %1310 = vmatpush1.msra.mxu0 0.0
    %1311 = vmatprep.subr.mxu0 0.0
    %1312 = vmatpush1.msra.mxu0 0.0
    %1313 = vmatprep.subr.mxu0 0.0
    %1314 = vmatpush1.msra.mxu0 0.0
    %1315 = vmatprep.subr.mxu0 0.0
    %1316 = vmatpush1.msra.mxu0 0.0
    %1317 = vmatprep.subr.mxu0 0.0
    %1318 = vmatpush1.msra.mxu0 0.0
    %1319 = vmatprep.subr.mxu0 0.0
    %1320 = vmatpush1.msra.mxu0 0.0
    %1321 = vmatprep.subr.mxu0 0.0
    %1322 = vmatpush1.msra.mxu0 0.0
    %1323 = vmatprep.subr.mxu0 0.0
    %1324 = vmatpush1.msra.mxu0 0.0
    %1325 = vmatprep.subr.mxu0 0.0
    %1326 = vmatpush1.msra.mxu0 0.0
    %1327 = vmatprep.mubr.f32.mxu0 0.0
    %1328 = vmatmul.mubr.f32.gmra.mrb[0].mxu0 %v892
    %v1329 = vpop.f32.mrb[0].mxu0
    %v1330 = vadd.f32 %v1188, %v1329
    %v1331 = vpop.f32.mrb[0].mxu0
    %1332 = vdwg.mxu0
    %s1333 = scalar_lea.vmem [#allocation2], 24
    %v1334 = vld [vmem:[%s1333] sm:$0xff]
    %v1335 = vld [vmem:[%s1333 + $0x8] sm:$0xff]
    %v1336 = vld [vmem:[%s1333 + $0x10] sm:$0xff]
    %v1337 = vadd.f32 %v1334, %v1259
    %v1338 = vxor.u32 %v1337, 2147483648
    %v1339 = vmul.f32 %v1338, 1.442695
    %v1340 = vpow.pop %v1339
    %v1341 = vadd.f32 %v1340, 1.0
    %v1342 = vrcp.pop %v1341
    %v1343 = vmul.f32 1.0, %v1342
    %v1344 = vadd.f32 %v1335, %v1261
    %v1345 = vxor.u32 %v1344, 2147483648
    %v1346 = vmul.f32 %v1345, 1.442695
    %v1347 = vpow.pop %v1346
    %v1348 = vadd.f32 %v1347, 1.0
    %v1349 = vrcp.pop %v1348
    %v1350 = vmul.f32 1.0, %v1349
    %v1351 = vmul.f32 %v1343, %v1330
    %v1352 = vadd.f32 %v1336, %v1351
    %v1353 = vtanh.pop %v1352
    %v1354 = vsub.f32 1.0, %v1350
    %v1355 = vmul.f32 %v1354, %v1353
    %v1356 = vmul.f32 %v1350, %v892
    %v1357 = vadd.f32 %v1355, %v1356
    %s1358 = scalar_lea.vmem %s12, 8
    %1359 = vst [vmem:[%s1358] sm:$0xff] %v1357
    %v1360 = vld [vmem:[#allocation9] sm:$0xff]
    %v1361 = vld [vmem:[#allocation9 + $0x8] sm:$0xff]
    %v1362 = vld [vmem:[#allocation9 + $0x10] sm:$0xff]
    %v1363 = vld [vmem:[#allocation9 + $0x18] sm:$0xff]
    %v1364 = vld [vmem:[#allocation9 + $0x20] sm:$0xff]
    %v1365 = vld [vmem:[#allocation9 + $0x28] sm:$0xff]
    %v1366 = vld [vmem:[#allocation9 + $0x30] sm:$0xff]
    %v1367 = vld [vmem:[#allocation9 + $0x38] sm:$0xff]
    %v1368 = vld [vmem:[#allocation9 + $0x40] sm:$0xff]
    %v1369 = vld [vmem:[#allocation9 + $0x48] sm:$0xff]
    %v1370 = vld [vmem:[#allocation9 + $0x50] sm:$0xff]
    %v1371 = vld [vmem:[#allocation9 + $0x58] sm:$0xff]
    %v1372 = vld [vmem:[#allocation9 + $0x60] sm:$0xff]
    %v1373 = vld [vmem:[#allocation9 + $0x68] sm:$0xff]
    %v1374 = vld [vmem:[#allocation9 + $0x70] sm:$0xff]
    %v1375 = vld [vmem:[#allocation9 + $0x78] sm:$0xff]
    %v1376 = vld [vmem:[#allocation9 + $0x80] sm:$0xff]
    %v1377 = vld [vmem:[#allocation9 + $0x88] sm:$0xff]
    %v1378 = vld [vmem:[#allocation9 + $0x90] sm:$0xff]
    %v1379 = vld [vmem:[#allocation9 + $0x98] sm:$0xff]
    %v1380 = vld [vmem:[#allocation9 + $0xa0] sm:$0xff]
    %v1381 = vld [vmem:[#allocation9 + $0xa8] sm:$0xff]
    %v1382 = vld [vmem:[#allocation9 + $0xb0] sm:$0xff]
    %v1383 = vld [vmem:[#allocation9 + $0xb8] sm:$0xff]
    %v1384 = vld [vmem:[#allocation9 + $0xc0] sm:$0xff]
    %v1385 = vld [vmem:[#allocation9 + $0xc8] sm:$0xff]
    %v1386 = vld [vmem:[#allocation9 + $0xd0] sm:$0xff]
    %v1387 = vld [vmem:[#allocation9 + $0xd8] sm:$0xff]
    %v1388 = vld [vmem:[#allocation9 + $0xe0] sm:$0xff]
    %v1389 = vld [vmem:[#allocation9 + $0xe8] sm:$0xff]
    %v1390 = vld [vmem:[#allocation9 + $0xf0] sm:$0xff]
    %v1391 = vld [vmem:[#allocation9 + $0xf8] sm:$0xff]
    %v1392 = vld [vmem:[#allocation9 + $0x100] sm:$0xff]
    %v1393 = vld [vmem:[#allocation9 + $0x108] sm:$0xff]
    %v1394 = vld [vmem:[#allocation9 + $0x110] sm:$0xff]
    %v1395 = vld [vmem:[#allocation9 + $0x118] sm:$0xff]
    %v1396 = vld [vmem:[#allocation9 + $0x120] sm:$0xff]
    %v1397 = vld [vmem:[#allocation9 + $0x128] sm:$0xff]
    %v1398 = vld [vmem:[#allocation9 + $0x130] sm:$0xff]
    %v1399 = vld [vmem:[#allocation9 + $0x138] sm:$0xff]
    %v1400 = vld [vmem:[#allocation9 + $0x140] sm:$0xff]
    %v1401 = vld [vmem:[#allocation9 + $0x148] sm:$0xff]
    %v1402 = vld [vmem:[#allocation9 + $0x150] sm:$0xff]
    %v1403 = vld [vmem:[#allocation9 + $0x158] sm:$0xff]
    %v1404 = vld [vmem:[#allocation9 + $0x160] sm:$0xff]
    %v1405 = vld [vmem:[#allocation9 + $0x168] sm:$0xff]
    %v1406 = vld [vmem:[#allocation9 + $0x170] sm:$0xff]
    %v1407 = vld [vmem:[#allocation9 + $0x178] sm:$0xff]
    %v1408 = vld [vmem:[%s8] sm:$0x7]
    %v1410 = vlaneseq
    %v1411 = vshrl.u32 %v1410, 7
    %v1412 = vsub.s32 0, %v1411
    %v1413 = vrot.slane %v1408, %v1412
    %v1414 = vlaneseq
    %v1415 = vshrl.u32 %v1414, 7
    %v1416 = vsub.s32 1, %v1415
    %v1417 = vrot.slane %v1408, %v1416
    %v1418 = vlaneseq
    %v1419 = vshrl.u32 %v1418, 7
    %v1420 = vsub.s32 2, %v1419
    %v1421 = vrot.slane %v1408, %v1420
    %1425 = vmatprep.subr.mxu0 %v1361
    %1426 = vmatpush1.msra.mxu0 %v1360
    %1427 = vmatprep.subr.mxu0 %v1364
    %1428 = vmatpush1.msra.mxu0 %v1363
    %1429 = vmatprep.subr.mxu0 %v1367
    %1430 = vmatpush1.msra.mxu0 %v1366
    %1431 = vmatprep.subr.mxu0 %v1370
    %1432 = vmatpush1.msra.mxu0 %v1369
    %1433 = vmatprep.subr.mxu0 %v1373
    %1434 = vmatpush1.msra.mxu0 %v1372
    %1435 = vmatprep.subr.mxu0 %v1376
    %1436 = vmatpush1.msra.mxu0 %v1375
    %1437 = vmatprep.subr.mxu0 %v1379
    %1438 = vmatpush1.msra.mxu0 %v1378
    %1439 = vmatprep.subr.mxu0 %v1382
    %1440 = vmatpush1.msra.mxu0 %v1381
    %1441 = vmatprep.subr.mxu0 %v1385
    %1442 = vmatpush1.msra.mxu0 %v1384
    %1443 = vmatprep.subr.mxu0 %v1388
    %1444 = vmatpush1.msra.mxu0 %v1387
    %1445 = vmatprep.subr.mxu0 %v1391
    %1446 = vmatpush1.msra.mxu0 %v1390
    %1447 = vmatprep.subr.mxu0 %v1394
    %1448 = vmatpush1.msra.mxu0 %v1393
    %1449 = vmatprep.subr.mxu0 %v1397
    %1450 = vmatpush1.msra.mxu0 %v1396
    %1451 = vmatprep.subr.mxu0 %v1400
    %1452 = vmatpush1.msra.mxu0 %v1399
    %1453 = vmatprep.subr.mxu0 %v1403
    %1454 = vmatpush1.msra.mxu0 %v1402
    %1455 = vmatprep.subr.mxu0 %v1406
    %1456 = vmatpush1.msra.mxu0 %v1405
    %1457 = vmatprep.subr.mxu0 0.0
    %1458 = vmatpush1.msra.mxu0 0.0
    %1459 = vmatprep.subr.mxu0 0.0
    %1460 = vmatpush1.msra.mxu0 0.0
    %1461 = vmatprep.subr.mxu0 0.0
    %1462 = vmatpush1.msra.mxu0 0.0
    %1463 = vmatprep.subr.mxu0 0.0
    %1464 = vmatpush1.msra.mxu0 0.0
    %1465 = vmatprep.subr.mxu0 0.0
    %1466 = vmatpush1.msra.mxu0 0.0
    %1467 = vmatprep.subr.mxu0 0.0
    %1468 = vmatpush1.msra.mxu0 0.0
    %1469 = vmatprep.subr.mxu0 0.0
    %1470 = vmatpush1.msra.mxu0 0.0
    %1471 = vmatprep.subr.mxu0 0.0
    %1472 = vmatpush1.msra.mxu0 0.0
    %1473 = vmatprep.subr.mxu0 0.0
    %1474 = vmatpush1.msra.mxu0 0.0
    %1475 = vmatprep.subr.mxu0 0.0
    %1476 = vmatpush1.msra.mxu0 0.0
    %1477 = vmatprep.subr.mxu0 0.0
    %1478 = vmatpush1.msra.mxu0 0.0
    %1479 = vmatprep.subr.mxu0 0.0
    %1480 = vmatpush1.msra.mxu0 0.0
    %1481 = vmatprep.subr.mxu0 0.0
    %1482 = vmatpush1.msra.mxu0 0.0
    %1483 = vmatprep.subr.mxu0 0.0
    %1484 = vmatpush1.msra.mxu0 0.0
    %1485 = vmatprep.subr.mxu0 0.0
    %1486 = vmatpush1.msra.mxu0 0.0
    %1487 = vmatprep.subr.mxu0 0.0
    %1488 = vmatpush1.msra.mxu0 0.0
    %1489 = vmatprep.mubr.f32.mxu0 0.0
    %1490 = vmatmul.mubr.f32.gmra.mrb[0].mxu0 %v1124
    %v1491 = vpop.f32.mrb[0].mxu0
    %v1492 = vadd.f32 %v1413, %v1491
    %v1493 = vpop.f32.mrb[0].mxu0
    %v1494 = vadd.f32 %v1417, %v1493
    %1495 = vdwg.mxu0
    %1496 = vmatprep.subr.mxu0 0.0
    %1497 = vmatpush1.msra.mxu0 %v1362
    %1498 = vmatprep.subr.mxu0 0.0
    %1499 = vmatpush1.msra.mxu0 %v1365
    %1500 = vmatprep.subr.mxu0 0.0
    %1501 = vmatpush1.msra.mxu0 %v1368
    %1502 = vmatprep.subr.mxu0 0.0
    %1503 = vmatpush1.msra.mxu0 %v1371
    %1504 = vmatprep.subr.mxu0 0.0
    %1505 = vmatpush1.msra.mxu0 %v1374
    %1506 = vmatprep.subr.mxu0 0.0
    %1507 = vmatpush1.msra.mxu0 %v1377
    %1508 = vmatprep.subr.mxu0 0.0
    %1509 = vmatpush1.msra.mxu0 %v1380
    %1510 = vmatprep.subr.mxu0 0.0
    %1511 = vmatpush1.msra.mxu0 %v1383
    %1512 = vmatprep.subr.mxu0 0.0
    %1513 = vmatpush1.msra.mxu0 %v1386
    %1514 = vmatprep.subr.mxu0 0.0
    %1515 = vmatpush1.msra.mxu0 %v1389
    %1516 = vmatprep.subr.mxu0 0.0
    %1517 = vmatpush1.msra.mxu0 %v1392
    %1518 = vmatprep.subr.mxu0 0.0
    %1519 = vmatpush1.msra.mxu0 %v1395
    %1520 = vmatprep.subr.mxu0 0.0
    %1521 = vmatpush1.msra.mxu0 %v1398
    %1522 = vmatprep.subr.mxu0 0.0
    %1523 = vmatpush1.msra.mxu0 %v1401
    %1524 = vmatprep.subr.mxu0 0.0
    %1525 = vmatpush1.msra.mxu0 %v1404
    %1526 = vmatprep.subr.mxu0 0.0
    %1527 = vmatpush1.msra.mxu0 %v1407
    %1528 = vmatprep.subr.mxu0 0.0
    %1529 = vmatpush1.msra.mxu0 0.0
    %1530 = vmatprep.subr.mxu0 0.0
    %1531 = vmatpush1.msra.mxu0 0.0
    %1532 = vmatprep.subr.mxu0 0.0
    %1533 = vmatpush1.msra.mxu0 0.0
    %1534 = vmatprep.subr.mxu0 0.0
    %1535 = vmatpush1.msra.mxu0 0.0
    %1536 = vmatprep.subr.mxu0 0.0
    %1537 = vmatpush1.msra.mxu0 0.0
    %1538 = vmatprep.subr.mxu0 0.0
    %1539 = vmatpush1.msra.mxu0 0.0
    %1540 = vmatprep.subr.mxu0 0.0
    %1541 = vmatpush1.msra.mxu0 0.0
    %1542 = vmatprep.subr.mxu0 0.0
    %1543 = vmatpush1.msra.mxu0 0.0
    %1544 = vmatprep.subr.mxu0 0.0
    %1545 = vmatpush1.msra.mxu0 0.0
    %1546 = vmatprep.subr.mxu0 0.0
    %1547 = vmatpush1.msra.mxu0 0.0
    %1548 = vmatprep.subr.mxu0 0.0
    %1549 = vmatpush1.msra.mxu0 0.0
    %1550 = vmatprep.subr.mxu0 0.0
    %1551 = vmatpush1.msra.mxu0 0.0
    %1552 = vmatprep.subr.mxu0 0.0
    %1553 = vmatpush1.msra.mxu0 0.0
    %1554 = vmatprep.subr.mxu0 0.0
    %1555 = vmatpush1.msra.mxu0 0.0
    %1556 = vmatprep.subr.mxu0 0.0
    %1557 = vmatpush1.msra.mxu0 0.0
    %1558 = vmatprep.subr.mxu0 0.0
    %1559 = vmatpush1.msra.mxu0 0.0
    %1560 = vmatprep.mubr.f32.mxu0 0.0
    %1561 = vmatmul.mubr.f32.gmra.mrb[0].mxu0 %v1124
    %v1562 = vpop.f32.mrb[0].mxu0
    %v1563 = vadd.f32 %v1421, %v1562
    %v1564 = vpop.f32.mrb[0].mxu0
    %1565 = vdwg.mxu0
    %s1566 = scalar_lea.vmem [#allocation3], 96
    %v1567 = vld [vmem:[%s1566] sm:$0xff]
    %v1568 = vld [vmem:[%s1566 + $0x8] sm:$0xff]
    %v1569 = vld [vmem:[%s1566 + $0x10] sm:$0xff]
    %v1570 = vadd.f32 %v1567, %v1492
    %v1571 = vxor.u32 %v1570, 2147483648
    %v1572 = vmul.f32 %v1571, 1.442695
    %v1573 = vpow.pop %v1572
    %v1574 = vadd.f32 %v1573, 1.0
    %v1575 = vrcp.pop %v1574
    %v1576 = vmul.f32 1.0, %v1575
    %v1577 = vadd.f32 %v1568, %v1494
    %v1578 = vxor.u32 %v1577, 2147483648
    %v1579 = vmul.f32 %v1578, 1.442695
    %v1580 = vpow.pop %v1579
    %v1581 = vadd.f32 %v1580, 1.0
    %v1582 = vrcp.pop %v1581
    %v1583 = vmul.f32 1.0, %v1582
    %v1584 = vmul.f32 %v1576, %v1563
    %v1585 = vadd.f32 %v1569, %v1584
    %v1586 = vtanh.pop %v1585
    %v1587 = vsub.f32 1.0, %v1583
    %v1588 = vmul.f32 %v1587, %v1586
    %v1589 = vmul.f32 %v1583, %v1124
    %v1590 = vadd.f32 %v1588, %v1589
    %s1591 = scalar_lea.vmem %s13, 32
    %1592 = vst [vmem:[%s1591] sm:$0xff] %v1590
    %v1593 = vld [vmem:[#allocation6] sm:$0xff]
    %v1594 = vld [vmem:[#allocation6 + $0x8] sm:$0xff]
    %v1595 = vld [vmem:[#allocation6 + $0x10] sm:$0xff]
    %v1596 = vld [vmem:[#allocation6 + $0x18] sm:$0xff]
    %v1597 = vld [vmem:[#allocation6 + $0x20] sm:$0xff]
    %v1598 = vld [vmem:[#allocation6 + $0x28] sm:$0xff]
    %v1599 = vld [vmem:[#allocation6 + $0x30] sm:$0xff]
    %v1600 = vld [vmem:[#allocation6 + $0x38] sm:$0xff]
    %v1601 = vld [vmem:[#allocation6 + $0x40] sm:$0xff]
    %v1602 = vld [vmem:[#allocation6 + $0x48] sm:$0xff]
    %v1603 = vld [vmem:[#allocation6 + $0x50] sm:$0xff]
    %v1604 = vld [vmem:[#allocation6 + $0x58] sm:$0xff]
    %v1605 = vld [vmem:[#allocation6 + $0x60] sm:$0xff]
    %v1606 = vld [vmem:[#allocation6 + $0x68] sm:$0xff]
    %v1607 = vld [vmem:[#allocation6 + $0x70] sm:$0xff]
    %v1608 = vld [vmem:[#allocation6 + $0x78] sm:$0xff]
    %v1609 = vld [vmem:[#allocation6 + $0x80] sm:$0xff]
    %v1610 = vld [vmem:[#allocation6 + $0x88] sm:$0xff]
    %v1611 = vld [vmem:[#allocation6 + $0x90] sm:$0xff]
    %v1612 = vld [vmem:[#allocation6 + $0x98] sm:$0xff]
    %v1613 = vld [vmem:[#allocation6 + $0xa0] sm:$0xff]
    %v1614 = vld [vmem:[#allocation6 + $0xa8] sm:$0xff]
    %v1615 = vld [vmem:[#allocation6 + $0xb0] sm:$0xff]
    %v1616 = vld [vmem:[#allocation6 + $0xb8] sm:$0xff]
    %v1617 = vld [vmem:[#allocation6 + $0xc0] sm:$0xff]
    %v1618 = vld [vmem:[#allocation6 + $0xc8] sm:$0xff]
    %v1619 = vld [vmem:[#allocation6 + $0xd0] sm:$0xff]
    %v1620 = vld [vmem:[#allocation6 + $0xd8] sm:$0xff]
    %v1621 = vld [vmem:[#allocation6 + $0xe0] sm:$0xff]
    %v1622 = vld [vmem:[#allocation6 + $0xe8] sm:$0xff]
    %v1623 = vld [vmem:[#allocation6 + $0xf0] sm:$0xff]
    %v1624 = vld [vmem:[#allocation6 + $0xf8] sm:$0xff]
    %v1625 = vld [vmem:[#allocation6 + $0x100] sm:$0xff]
    %v1626 = vld [vmem:[#allocation6 + $0x108] sm:$0xff]
    %v1627 = vld [vmem:[#allocation6 + $0x110] sm:$0xff]
    %v1628 = vld [vmem:[#allocation6 + $0x118] sm:$0xff]
    %v1629 = vld [vmem:[#allocation6 + $0x120] sm:$0xff]
    %v1630 = vld [vmem:[#allocation6 + $0x128] sm:$0xff]
    %v1631 = vld [vmem:[#allocation6 + $0x130] sm:$0xff]
    %v1632 = vld [vmem:[#allocation6 + $0x138] sm:$0xff]
    %v1633 = vld [vmem:[#allocation6 + $0x140] sm:$0xff]
    %v1634 = vld [vmem:[#allocation6 + $0x148] sm:$0xff]
    %v1635 = vld [vmem:[#allocation6 + $0x150] sm:$0xff]
    %v1636 = vld [vmem:[#allocation6 + $0x158] sm:$0xff]
    %v1637 = vld [vmem:[#allocation6 + $0x160] sm:$0xff]
    %v1638 = vld [vmem:[#allocation6 + $0x168] sm:$0xff]
    %v1639 = vld [vmem:[#allocation6 + $0x170] sm:$0xff]
    %v1640 = vld [vmem:[#allocation6 + $0x178] sm:$0xff]
    %v1641 = vld [vmem:[%s4] sm:$0x7]
    %v1643 = vlaneseq
    %v1644 = vshrl.u32 %v1643, 7
    %v1645 = vsub.s32 0, %v1644
    %v1646 = vrot.slane %v1641, %v1645
    %v1647 = vlaneseq
    %v1648 = vshrl.u32 %v1647, 7
    %v1649 = vsub.s32 1, %v1648
    %v1650 = vrot.slane %v1641, %v1649
    %v1651 = vlaneseq
    %v1652 = vshrl.u32 %v1651, 7
    %v1653 = vsub.s32 2, %v1652
    %v1654 = vrot.slane %v1641, %v1653
    %1658 = vmatprep.subr.mxu0 %v1594
    %1659 = vmatpush1.msra.mxu0 %v1593
    %1660 = vmatprep.subr.mxu0 %v1597
    %1661 = vmatpush1.msra.mxu0 %v1596
    %1662 = vmatprep.subr.mxu0 %v1600
    %1663 = vmatpush1.msra.mxu0 %v1599
    %1664 = vmatprep.subr.mxu0 %v1603
    %1665 = vmatpush1.msra.mxu0 %v1602
    %1666 = vmatprep.subr.mxu0 %v1606
    %1667 = vmatpush1.msra.mxu0 %v1605
    %1668 = vmatprep.subr.mxu0 %v1609
    %1669 = vmatpush1.msra.mxu0 %v1608
    %1670 = vmatprep.subr.mxu0 %v1612
    %1671 = vmatpush1.msra.mxu0 %v1611
    %1672 = vmatprep.subr.mxu0 %v1615
    %1673 = vmatpush1.msra.mxu0 %v1614
    %1674 = vmatprep.subr.mxu0 %v1618
    %1675 = vmatpush1.msra.mxu0 %v1617
    %1676 = vmatprep.subr.mxu0 %v1621
    %1677 = vmatpush1.msra.mxu0 %v1620
    %1678 = vmatprep.subr.mxu0 %v1624
    %1679 = vmatpush1.msra.mxu0 %v1623
    %1680 = vmatprep.subr.mxu0 %v1627
    %1681 = vmatpush1.msra.mxu0 %v1626
    %1682 = vmatprep.subr.mxu0 %v1630
    %1683 = vmatpush1.msra.mxu0 %v1629
    %1684 = vmatprep.subr.mxu0 %v1633
    %1685 = vmatpush1.msra.mxu0 %v1632
    %1686 = vmatprep.subr.mxu0 %v1636
    %1687 = vmatpush1.msra.mxu0 %v1635
    %1688 = vmatprep.subr.mxu0 %v1639
    %1689 = vmatpush1.msra.mxu0 %v1638
    %1690 = vmatprep.subr.mxu0 0.0
    %1691 = vmatpush1.msra.mxu0 0.0
    %1692 = vmatprep.subr.mxu0 0.0
    %1693 = vmatpush1.msra.mxu0 0.0
    %1694 = vmatprep.subr.mxu0 0.0
    %1695 = vmatpush1.msra.mxu0 0.0
    %1696 = vmatprep.subr.mxu0 0.0
    %1697 = vmatpush1.msra.mxu0 0.0
    %1698 = vmatprep.subr.mxu0 0.0
    %1699 = vmatpush1.msra.mxu0 0.0
    %1700 = vmatprep.subr.mxu0 0.0
    %1701 = vmatpush1.msra.mxu0 0.0
    %1702 = vmatprep.subr.mxu0 0.0
    %1703 = vmatpush1.msra.mxu0 0.0
    %1704 = vmatprep.subr.mxu0 0.0
    %1705 = vmatpush1.msra.mxu0 0.0
    %1706 = vmatprep.subr.mxu0 0.0
    %1707 = vmatpush1.msra.mxu0 0.0
    %1708 = vmatprep.subr.mxu0 0.0
    %1709 = vmatpush1.msra.mxu0 0.0
    %1710 = vmatprep.subr.mxu0 0.0
    %1711 = vmatpush1.msra.mxu0 0.0
    %1712 = vmatprep.subr.mxu0 0.0
    %1713 = vmatpush1.msra.mxu0 0.0
    %1714 = vmatprep.subr.mxu0 0.0
    %1715 = vmatpush1.msra.mxu0 0.0
    %1716 = vmatprep.subr.mxu0 0.0
    %1717 = vmatpush1.msra.mxu0 0.0
    %1718 = vmatprep.subr.mxu0 0.0
    %1719 = vmatpush1.msra.mxu0 0.0
    %1720 = vmatprep.subr.mxu0 0.0
    %1721 = vmatpush1.msra.mxu0 0.0
    %1722 = vmatprep.mubr.f32.mxu0 0.0
    %1723 = vmatmul.mubr.f32.gmra.mrb[0].mxu0 %v1357
    %v1724 = vpop.f32.mrb[0].mxu0
    %v1725 = vadd.f32 %v1646, %v1724
    %v1726 = vpop.f32.mrb[0].mxu0
    %v1727 = vadd.f32 %v1650, %v1726
    %1728 = vdwg.mxu0
    %1729 = vmatprep.subr.mxu0 0.0
    %1730 = vmatpush1.msra.mxu0 %v1595
    %1731 = vmatprep.subr.mxu0 0.0
    %1732 = vmatpush1.msra.mxu0 %v1598
    %1733 = vmatprep.subr.mxu0 0.0
    %1734 = vmatpush1.msra.mxu0 %v1601
    %1735 = vmatprep.subr.mxu0 0.0
    %1736 = vmatpush1.msra.mxu0 %v1604
    %1737 = vmatprep.subr.mxu0 0.0
    %1738 = vmatpush1.msra.mxu0 %v1607
    %1739 = vmatprep.subr.mxu0 0.0
    %1740 = vmatpush1.msra.mxu0 %v1610
    %1741 = vmatprep.subr.mxu0 0.0
    %1742 = vmatpush1.msra.mxu0 %v1613
    %1743 = vmatprep.subr.mxu0 0.0
    %1744 = vmatpush1.msra.mxu0 %v1616
    %1745 = vmatprep.subr.mxu0 0.0
    %1746 = vmatpush1.msra.mxu0 %v1619
    %1747 = vmatprep.subr.mxu0 0.0
    %1748 = vmatpush1.msra.mxu0 %v1622
    %1749 = vmatprep.subr.mxu0 0.0
    %1750 = vmatpush1.msra.mxu0 %v1625
    %1751 = vmatprep.subr.mxu0 0.0
    %1752 = vmatpush1.msra.mxu0 %v1628
    %1753 = vmatprep.subr.mxu0 0.0
    %1754 = vmatpush1.msra.mxu0 %v1631
    %1755 = vmatprep.subr.mxu0 0.0
    %1756 = vmatpush1.msra.mxu0 %v1634
    %1757 = vmatprep.subr.mxu0 0.0
    %1758 = vmatpush1.msra.mxu0 %v1637
    %1759 = vmatprep.subr.mxu0 0.0
    %1760 = vmatpush1.msra.mxu0 %v1640
    %1761 = vmatprep.subr.mxu0 0.0
    %1762 = vmatpush1.msra.mxu0 0.0
    %1763 = vmatprep.subr.mxu0 0.0
    %1764 = vmatpush1.msra.mxu0 0.0
    %1765 = vmatprep.subr.mxu0 0.0
    %1766 = vmatpush1.msra.mxu0 0.0
    %1767 = vmatprep.subr.mxu0 0.0
    %1768 = vmatpush1.msra.mxu0 0.0
    %1769 = vmatprep.subr.mxu0 0.0
    %1770 = vmatpush1.msra.mxu0 0.0
    %1771 = vmatprep.subr.mxu0 0.0
    %1772 = vmatpush1.msra.mxu0 0.0
    %1773 = vmatprep.subr.mxu0 0.0
    %1774 = vmatpush1.msra.mxu0 0.0
    %1775 = vmatprep.subr.mxu0 0.0
    %1776 = vmatpush1.msra.mxu0 0.0
    %1777 = vmatprep.subr.mxu0 0.0
    %1778 = vmatpush1.msra.mxu0 0.0
    %1779 = vmatprep.subr.mxu0 0.0
    %1780 = vmatpush1.msra.mxu0 0.0
    %1781 = vmatprep.subr.mxu0 0.0
    %1782 = vmatpush1.msra.mxu0 0.0
    %1783 = vmatprep.subr.mxu0 0.0
    %1784 = vmatpush1.msra.mxu0 0.0
    %1785 = vmatprep.subr.mxu0 0.0
    %1786 = vmatpush1.msra.mxu0 0.0
    %1787 = vmatprep.subr.mxu0 0.0
    %1788 = vmatpush1.msra.mxu0 0.0
    %1789 = vmatprep.subr.mxu0 0.0
    %1790 = vmatpush1.msra.mxu0 0.0
    %1791 = vmatprep.subr.mxu0 0.0
    %1792 = vmatpush1.msra.mxu0 0.0
    %1793 = vmatprep.mubr.f32.mxu0 0.0
    %1794 = vmatmul.mubr.f32.gmra.mrb[0].mxu0 %v1357
    %v1795 = vpop.f32.mrb[0].mxu0
    %v1796 = vadd.f32 %v1654, %v1795
    %v1797 = vpop.f32.mrb[0].mxu0
    %1798 = vdwg.mxu0
    %s1799 = scalar_lea.vmem [#allocation2], 48
    %v1800 = vld [vmem:[%s1799] sm:$0xff]
    %v1801 = vld [vmem:[%s1799 + $0x8] sm:$0xff]
    %v1802 = vld [vmem:[%s1799 + $0x10] sm:$0xff]
    %v1803 = vadd.f32 %v1800, %v1725
    %v1804 = vxor.u32 %v1803, 2147483648
    %v1805 = vmul.f32 %v1804, 1.442695
    %v1806 = vpow.pop %v1805
    %v1807 = vadd.f32 %v1806, 1.0
    %v1808 = vrcp.pop %v1807
    %v1809 = vmul.f32 1.0, %v1808
    %v1810 = vadd.f32 %v1801, %v1727
    %v1811 = vxor.u32 %v1810, 2147483648
    %v1812 = vmul.f32 %v1811, 1.442695
    %v1813 = vpow.pop %v1812
    %v1814 = vadd.f32 %v1813, 1.0
    %v1815 = vrcp.pop %v1814
    %v1816 = vmul.f32 1.0, %v1815
    %v1817 = vmul.f32 %v1809, %v1796
    %v1818 = vadd.f32 %v1802, %v1817
    %v1819 = vtanh.pop %v1818
    %v1820 = vsub.f32 1.0, %v1816
    %v1821 = vmul.f32 %v1820, %v1819
    %v1822 = vmul.f32 %v1816, %v1357
    %v1823 = vadd.f32 %v1821, %v1822
    %s1824 = scalar_lea.vmem %s12, 16
    %1825 = vst [vmem:[%s1824] sm:$0xff] %v1823
    %v1826 = vld [vmem:[#allocation9] sm:$0xff]
    %v1827 = vld [vmem:[#allocation9 + $0x8] sm:$0xff]
    %v1828 = vld [vmem:[#allocation9 + $0x10] sm:$0xff]
    %v1829 = vld [vmem:[#allocation9 + $0x18] sm:$0xff]
    %v1830 = vld [vmem:[#allocation9 + $0x20] sm:$0xff]
    %v1831 = vld [vmem:[#allocation9 + $0x28] sm:$0xff]
    %v1832 = vld [vmem:[#allocation9 + $0x30] sm:$0xff]
    %v1833 = vld [vmem:[#allocation9 + $0x38] sm:$0xff]
    %v1834 = vld [vmem:[#allocation9 + $0x40] sm:$0xff]
    %v1835 = vld [vmem:[#allocation9 + $0x48] sm:$0xff]
    %v1836 = vld [vmem:[#allocation9 + $0x50] sm:$0xff]
    %v1837 = vld [vmem:[#allocation9 + $0x58] sm:$0xff]
    %v1838 = vld [vmem:[#allocation9 + $0x60] sm:$0xff]
    %v1839 = vld [vmem:[#allocation9 + $0x68] sm:$0xff]
    %v1840 = vld [vmem:[#allocation9 + $0x70] sm:$0xff]
    %v1841 = vld [vmem:[#allocation9 + $0x78] sm:$0xff]
    %v1842 = vld [vmem:[#allocation9 + $0x80] sm:$0xff]
    %v1843 = vld [vmem:[#allocation9 + $0x88] sm:$0xff]
    %v1844 = vld [vmem:[#allocation9 + $0x90] sm:$0xff]
    %v1845 = vld [vmem:[#allocation9 + $0x98] sm:$0xff]
    %v1846 = vld [vmem:[#allocation9 + $0xa0] sm:$0xff]
    %v1847 = vld [vmem:[#allocation9 + $0xa8] sm:$0xff]
    %v1848 = vld [vmem:[#allocation9 + $0xb0] sm:$0xff]
    %v1849 = vld [vmem:[#allocation9 + $0xb8] sm:$0xff]
    %v1850 = vld [vmem:[#allocation9 + $0xc0] sm:$0xff]
    %v1851 = vld [vmem:[#allocation9 + $0xc8] sm:$0xff]
    %v1852 = vld [vmem:[#allocation9 + $0xd0] sm:$0xff]
    %v1853 = vld [vmem:[#allocation9 + $0xd8] sm:$0xff]
    %v1854 = vld [vmem:[#allocation9 + $0xe0] sm:$0xff]
    %v1855 = vld [vmem:[#allocation9 + $0xe8] sm:$0xff]
    %v1856 = vld [vmem:[#allocation9 + $0xf0] sm:$0xff]
    %v1857 = vld [vmem:[#allocation9 + $0xf8] sm:$0xff]
    %v1858 = vld [vmem:[#allocation9 + $0x100] sm:$0xff]
    %v1859 = vld [vmem:[#allocation9 + $0x108] sm:$0xff]
    %v1860 = vld [vmem:[#allocation9 + $0x110] sm:$0xff]
    %v1861 = vld [vmem:[#allocation9 + $0x118] sm:$0xff]
    %v1862 = vld [vmem:[#allocation9 + $0x120] sm:$0xff]
    %v1863 = vld [vmem:[#allocation9 + $0x128] sm:$0xff]
    %v1864 = vld [vmem:[#allocation9 + $0x130] sm:$0xff]
    %v1865 = vld [vmem:[#allocation9 + $0x138] sm:$0xff]
    %v1866 = vld [vmem:[#allocation9 + $0x140] sm:$0xff]
    %v1867 = vld [vmem:[#allocation9 + $0x148] sm:$0xff]
    %v1868 = vld [vmem:[#allocation9 + $0x150] sm:$0xff]
    %v1869 = vld [vmem:[#allocation9 + $0x158] sm:$0xff]
    %v1870 = vld [vmem:[#allocation9 + $0x160] sm:$0xff]
    %v1871 = vld [vmem:[#allocation9 + $0x168] sm:$0xff]
    %v1872 = vld [vmem:[#allocation9 + $0x170] sm:$0xff]
    %v1873 = vld [vmem:[#allocation9 + $0x178] sm:$0xff]
    %v1874 = vld [vmem:[%s8] sm:$0x7]
    %v1876 = vlaneseq
    %v1877 = vshrl.u32 %v1876, 7
    %v1878 = vsub.s32 0, %v1877
    %v1879 = vrot.slane %v1874, %v1878
    %v1880 = vlaneseq
    %v1881 = vshrl.u32 %v1880, 7
    %v1882 = vsub.s32 1, %v1881
    %v1883 = vrot.slane %v1874, %v1882
    %v1884 = vlaneseq
    %v1885 = vshrl.u32 %v1884, 7
    %v1886 = vsub.s32 2, %v1885
    %v1887 = vrot.slane %v1874, %v1886
    %1891 = vmatprep.subr.mxu0 %v1827
    %1892 = vmatpush1.msra.mxu0 %v1826
    %1893 = vmatprep.subr.mxu0 %v1830
    %1894 = vmatpush1.msra.mxu0 %v1829
    %1895 = vmatprep.subr.mxu0 %v1833
    %1896 = vmatpush1.msra.mxu0 %v1832
    %1897 = vmatprep.subr.mxu0 %v1836
    %1898 = vmatpush1.msra.mxu0 %v1835
    %1899 = vmatprep.subr.mxu0 %v1839
    %1900 = vmatpush1.msra.mxu0 %v1838
    %1901 = vmatprep.subr.mxu0 %v1842
    %1902 = vmatpush1.msra.mxu0 %v1841
    %1903 = vmatprep.subr.mxu0 %v1845
    %1904 = vmatpush1.msra.mxu0 %v1844
    %1905 = vmatprep.subr.mxu0 %v1848
    %1906 = vmatpush1.msra.mxu0 %v1847
    %1907 = vmatprep.subr.mxu0 %v1851
    %1908 = vmatpush1.msra.mxu0 %v1850
    %1909 = vmatprep.subr.mxu0 %v1854
    %1910 = vmatpush1.msra.mxu0 %v1853
    %1911 = vmatprep.subr.mxu0 %v1857
    %1912 = vmatpush1.msra.mxu0 %v1856
    %1913 = vmatprep.subr.mxu0 %v1860
    %1914 = vmatpush1.msra.mxu0 %v1859
    %1915 = vmatprep.subr.mxu0 %v1863
    %1916 = vmatpush1.msra.mxu0 %v1862
    %1917 = vmatprep.subr.mxu0 %v1866
    %1918 = vmatpush1.msra.mxu0 %v1865
    %1919 = vmatprep.subr.mxu0 %v1869
    %1920 = vmatpush1.msra.mxu0 %v1868
    %1921 = vmatprep.subr.mxu0 %v1872
    %1922 = vmatpush1.msra.mxu0 %v1871
    %1923 = vmatprep.subr.mxu0 0.0
    %1924 = vmatpush1.msra.mxu0 0.0
    %1925 = vmatprep.subr.mxu0 0.0
    %1926 = vmatpush1.msra.mxu0 0.0
    %1927 = vmatprep.subr.mxu0 0.0
    %1928 = vmatpush1.msra.mxu0 0.0
    %1929 = vmatprep.subr.mxu0 0.0
    %1930 = vmatpush1.msra.mxu0 0.0
    %1931 = vmatprep.subr.mxu0 0.0
    %1932 = vmatpush1.msra.mxu0 0.0
    %1933 = vmatprep.subr.mxu0 0.0
    %1934 = vmatpush1.msra.mxu0 0.0
    %1935 = vmatprep.subr.mxu0 0.0
    %1936 = vmatpush1.msra.mxu0 0.0
    %1937 = vmatprep.subr.mxu0 0.0
    %1938 = vmatpush1.msra.mxu0 0.0
    %1939 = vmatprep.subr.mxu0 0.0
    %1940 = vmatpush1.msra.mxu0 0.0
    %1941 = vmatprep.subr.mxu0 0.0
    %1942 = vmatpush1.msra.mxu0 0.0
    %1943 = vmatprep.subr.mxu0 0.0
    %1944 = vmatpush1.msra.mxu0 0.0
    %1945 = vmatprep.subr.mxu0 0.0
    %1946 = vmatpush1.msra.mxu0 0.0
    %1947 = vmatprep.subr.mxu0 0.0
    %1948 = vmatpush1.msra.mxu0 0.0
    %1949 = vmatprep.subr.mxu0 0.0
    %1950 = vmatpush1.msra.mxu0 0.0
    %1951 = vmatprep.subr.mxu0 0.0
    %1952 = vmatpush1.msra.mxu0 0.0
    %1953 = vmatprep.subr.mxu0 0.0
    %1954 = vmatpush1.msra.mxu0 0.0
    %1955 = vmatprep.mubr.f32.mxu0 0.0
    %1956 = vmatmul.mubr.f32.gmra.mrb[0].mxu0 %v1590
    %v1957 = vpop.f32.mrb[0].mxu0
    %v1958 = vadd.f32 %v1879, %v1957
    %v1959 = vpop.f32.mrb[0].mxu0
    %v1960 = vadd.f32 %v1883, %v1959
    %1961 = vdwg.mxu0
    %1962 = vmatprep.subr.mxu0 0.0
    %1963 = vmatpush1.msra.mxu0 %v1828
    %1964 = vmatprep.subr.mxu0 0.0
    %1965 = vmatpush1.msra.mxu0 %v1831
    %1966 = vmatprep.subr.mxu0 0.0
    %1967 = vmatpush1.msra.mxu0 %v1834
    %1968 = vmatprep.subr.mxu0 0.0
    %1969 = vmatpush1.msra.mxu0 %v1837
    %1970 = vmatprep.subr.mxu0 0.0
    %1971 = vmatpush1.msra.mxu0 %v1840
    %1972 = vmatprep.subr.mxu0 0.0
    %1973 = vmatpush1.msra.mxu0 %v1843
    %1974 = vmatprep.subr.mxu0 0.0
    %1975 = vmatpush1.msra.mxu0 %v1846
    %1976 = vmatprep.subr.mxu0 0.0
    %1977 = vmatpush1.msra.mxu0 %v1849
    %1978 = vmatprep.subr.mxu0 0.0
    %1979 = vmatpush1.msra.mxu0 %v1852
    %1980 = vmatprep.subr.mxu0 0.0
    %1981 = vmatpush1.msra.mxu0 %v1855
    %1982 = vmatprep.subr.mxu0 0.0
    %1983 = vmatpush1.msra.mxu0 %v1858
    %1984 = vmatprep.subr.mxu0 0.0
    %1985 = vmatpush1.msra.mxu0 %v1861
    %1986 = vmatprep.subr.mxu0 0.0
    %1987 = vmatpush1.msra.mxu0 %v1864
    %1988 = vmatprep.subr.mxu0 0.0
    %1989 = vmatpush1.msra.mxu0 %v1867
    %1990 = vmatprep.subr.mxu0 0.0
    %1991 = vmatpush1.msra.mxu0 %v1870
    %1992 = vmatprep.subr.mxu0 0.0
    %1993 = vmatpush1.msra.mxu0 %v1873
    %1994 = vmatprep.subr.mxu0 0.0
    %1995 = vmatpush1.msra.mxu0 0.0
    %1996 = vmatprep.subr.mxu0 0.0
    %1997 = vmatpush1.msra.mxu0 0.0
    %1998 = vmatprep.subr.mxu0 0.0
    %1999 = vmatpush1.msra.mxu0 0.0
    %2000 = vmatprep.subr.mxu0 0.0
    %2001 = vmatpush1.msra.mxu0 0.0
    %2002 = vmatprep.subr.mxu0 0.0
    %2003 = vmatpush1.msra.mxu0 0.0
    %2004 = vmatprep.subr.mxu0 0.0
    %2005 = vmatpush1.msra.mxu0 0.0
    %2006 = vmatprep.subr.mxu0 0.0
    %2007 = vmatpush1.msra.mxu0 0.0
    %2008 = vmatprep.subr.mxu0 0.0
    %2009 = vmatpush1.msra.mxu0 0.0
    %2010 = vmatprep.subr.mxu0 0.0
    %2011 = vmatpush1.msra.mxu0 0.0
    %2012 = vmatprep.subr.mxu0 0.0
    %2013 = vmatpush1.msra.mxu0 0.0
    %2014 = vmatprep.subr.mxu0 0.0
    %2015 = vmatpush1.msra.mxu0 0.0
    %2016 = vmatprep.subr.mxu0 0.0
    %2017 = vmatpush1.msra.mxu0 0.0
    %2018 = vmatprep.subr.mxu0 0.0
    %2019 = vmatpush1.msra.mxu0 0.0
    %2020 = vmatprep.subr.mxu0 0.0
    %2021 = vmatpush1.msra.mxu0 0.0
    %2022 = vmatprep.subr.mxu0 0.0
    %2023 = vmatpush1.msra.mxu0 0.0
    %2024 = vmatprep.subr.mxu0 0.0
    %2025 = vmatpush1.msra.mxu0 0.0
    %2026 = vmatprep.mubr.f32.mxu0 0.0
    %2027 = vmatmul.mubr.f32.gmra.mrb[0].mxu0 %v1590
    %v2028 = vpop.f32.mrb[0].mxu0
    %v2029 = vadd.f32 %v1887, %v2028
    %v2030 = vpop.f32.mrb[0].mxu0
    %2031 = vdwg.mxu0
    %s2032 = scalar_lea.vmem [#allocation3], 72
    %v2033 = vld [vmem:[%s2032] sm:$0xff]
    %v2034 = vld [vmem:[%s2032 + $0x8] sm:$0xff]
    %v2035 = vld [vmem:[%s2032 + $0x10] sm:$0xff]
    %v2036 = vadd.f32 %v2033, %v1958
    %v2037 = vxor.u32 %v2036, 2147483648
    %v2038 = vmul.f32 %v2037, 1.442695
    %v2039 = vpow.pop %v2038
    %v2040 = vadd.f32 %v2039, 1.0
    %v2041 = vrcp.pop %v2040
    %v2042 = vmul.f32 1.0, %v2041
    %v2043 = vadd.f32 %v2034, %v1960
    %v2044 = vxor.u32 %v2043, 2147483648
    %v2045 = vmul.f32 %v2044, 1.442695
    %v2046 = vpow.pop %v2045
    %v2047 = vadd.f32 %v2046, 1.0
    %v2048 = vrcp.pop %v2047
    %v2049 = vmul.f32 1.0, %v2048
    %v2050 = vmul.f32 %v2042, %v2029
    %v2051 = vadd.f32 %v2035, %v2050
    %v2052 = vtanh.pop %v2051
    %v2053 = vsub.f32 1.0, %v2049
    %v2054 = vmul.f32 %v2053, %v2052
    %v2055 = vmul.f32 %v2049, %v1590
    %v2056 = vadd.f32 %v2054, %v2055
    %s2057 = scalar_lea.vmem %s13, 24
    %2058 = vst [vmem:[%s2057] sm:$0xff] %v2056
    %v2059 = vld [vmem:[#allocation6] sm:$0xff]
    %v2060 = vld [vmem:[#allocation6 + $0x8] sm:$0xff]
    %v2061 = vld [vmem:[#allocation6 + $0x10] sm:$0xff]
    %v2062 = vld [vmem:[#allocation6 + $0x18] sm:$0xff]
    %v2063 = vld [vmem:[#allocation6 + $0x20] sm:$0xff]
    %v2064 = vld [vmem:[#allocation6 + $0x28] sm:$0xff]
    %v2065 = vld [vmem:[#allocation6 + $0x30] sm:$0xff]
    %v2066 = vld [vmem:[#allocation6 + $0x38] sm:$0xff]
    %v2067 = vld [vmem:[#allocation6 + $0x40] sm:$0xff]
    %v2068 = vld [vmem:[#allocation6 + $0x48] sm:$0xff]
    %v2069 = vld [vmem:[#allocation6 + $0x50] sm:$0xff]
    %v2070 = vld [vmem:[#allocation6 + $0x58] sm:$0xff]
    %v2071 = vld [vmem:[#allocation6 + $0x60] sm:$0xff]
    %v2072 = vld [vmem:[#allocation6 + $0x68] sm:$0xff]
    %v2073 = vld [vmem:[#allocation6 + $0x70] sm:$0xff]
    %v2074 = vld [vmem:[#allocation6 + $0x78] sm:$0xff]
    %v2075 = vld [vmem:[#allocation6 + $0x80] sm:$0xff]
    %v2076 = vld [vmem:[#allocation6 + $0x88] sm:$0xff]
    %v2077 = vld [vmem:[#allocation6 + $0x90] sm:$0xff]
    %v2078 = vld [vmem:[#allocation6 + $0x98] sm:$0xff]
    %v2079 = vld [vmem:[#allocation6 + $0xa0] sm:$0xff]
    %v2080 = vld [vmem:[#allocation6 + $0xa8] sm:$0xff]
    %v2081 = vld [vmem:[#allocation6 + $0xb0] sm:$0xff]
    %v2082 = vld [vmem:[#allocation6 + $0xb8] sm:$0xff]
    %v2083 = vld [vmem:[#allocation6 + $0xc0] sm:$0xff]
    %v2084 = vld [vmem:[#allocation6 + $0xc8] sm:$0xff]
    %v2085 = vld [vmem:[#allocation6 + $0xd0] sm:$0xff]
    %v2086 = vld [vmem:[#allocation6 + $0xd8] sm:$0xff]
    %v2087 = vld [vmem:[#allocation6 + $0xe0] sm:$0xff]
    %v2088 = vld [vmem:[#allocation6 + $0xe8] sm:$0xff]
    %v2089 = vld [vmem:[#allocation6 + $0xf0] sm:$0xff]
    %v2090 = vld [vmem:[#allocation6 + $0xf8] sm:$0xff]
    %v2091 = vld [vmem:[#allocation6 + $0x100] sm:$0xff]
    %v2092 = vld [vmem:[#allocation6 + $0x108] sm:$0xff]
    %v2093 = vld [vmem:[#allocation6 + $0x110] sm:$0xff]
    %v2094 = vld [vmem:[#allocation6 + $0x118] sm:$0xff]
    %v2095 = vld [vmem:[#allocation6 + $0x120] sm:$0xff]
    %v2096 = vld [vmem:[#allocation6 + $0x128] sm:$0xff]
    %v2097 = vld [vmem:[#allocation6 + $0x130] sm:$0xff]
    %v2098 = vld [vmem:[#allocation6 + $0x138] sm:$0xff]
    %v2099 = vld [vmem:[#allocation6 + $0x140] sm:$0xff]
    %v2100 = vld [vmem:[#allocation6 + $0x148] sm:$0xff]
    %v2101 = vld [vmem:[#allocation6 + $0x150] sm:$0xff]
    %v2102 = vld [vmem:[#allocation6 + $0x158] sm:$0xff]
    %v2103 = vld [vmem:[#allocation6 + $0x160] sm:$0xff]
    %v2104 = vld [vmem:[#allocation6 + $0x168] sm:$0xff]
    %v2105 = vld [vmem:[#allocation6 + $0x170] sm:$0xff]
    %v2106 = vld [vmem:[#allocation6 + $0x178] sm:$0xff]
    %v2107 = vld [vmem:[%s4] sm:$0x7]
    %v2109 = vlaneseq
    %v2110 = vshrl.u32 %v2109, 7
    %v2111 = vsub.s32 0, %v2110
    %v2112 = vrot.slane %v2107, %v2111
    %v2113 = vlaneseq
    %v2114 = vshrl.u32 %v2113, 7
    %v2115 = vsub.s32 1, %v2114
    %v2116 = vrot.slane %v2107, %v2115
    %v2117 = vlaneseq
    %v2118 = vshrl.u32 %v2117, 7
    %v2119 = vsub.s32 2, %v2118
    %v2120 = vrot.slane %v2107, %v2119
    %2124 = vmatprep.subr.mxu0 %v2060
    %2125 = vmatpush1.msra.mxu0 %v2059
    %2126 = vmatprep.subr.mxu0 %v2063
    %2127 = vmatpush1.msra.mxu0 %v2062
    %2128 = vmatprep.subr.mxu0 %v2066
    %2129 = vmatpush1.msra.mxu0 %v2065
    %2130 = vmatprep.subr.mxu0 %v2069
    %2131 = vmatpush1.msra.mxu0 %v2068
    %2132 = vmatprep.subr.mxu0 %v2072
    %2133 = vmatpush1.msra.mxu0 %v2071
    %2134 = vmatprep.subr.mxu0 %v2075
    %2135 = vmatpush1.msra.mxu0 %v2074
    %2136 = vmatprep.subr.mxu0 %v2078
    %2137 = vmatpush1.msra.mxu0 %v2077
    %2138 = vmatprep.subr.mxu0 %v2081
    %2139 = vmatpush1.msra.mxu0 %v2080
    %2140 = vmatprep.subr.mxu0 %v2084
    %2141 = vmatpush1.msra.mxu0 %v2083
    %2142 = vmatprep.subr.mxu0 %v2087
    %2143 = vmatpush1.msra.mxu0 %v2086
    %2144 = vmatprep.subr.mxu0 %v2090
    %2145 = vmatpush1.msra.mxu0 %v2089
    %2146 = vmatprep.subr.mxu0 %v2093
    %2147 = vmatpush1.msra.mxu0 %v2092
    %2148 = vmatprep.subr.mxu0 %v2096
    %2149 = vmatpush1.msra.mxu0 %v2095
    %2150 = vmatprep.subr.mxu0 %v2099
    %2151 = vmatpush1.msra.mxu0 %v2098
    %2152 = vmatprep.subr.mxu0 %v2102
    %2153 = vmatpush1.msra.mxu0 %v2101
    %2154 = vmatprep.subr.mxu0 %v2105
    %2155 = vmatpush1.msra.mxu0 %v2104
    %2156 = vmatprep.subr.mxu0 0.0
    %2157 = vmatpush1.msra.mxu0 0.0
    %2158 = vmatprep.subr.mxu0 0.0
    %2159 = vmatpush1.msra.mxu0 0.0
    %2160 = vmatprep.subr.mxu0 0.0
    %2161 = vmatpush1.msra.mxu0 0.0
    %2162 = vmatprep.subr.mxu0 0.0
    %2163 = vmatpush1.msra.mxu0 0.0
    %2164 = vmatprep.subr.mxu0 0.0
    %2165 = vmatpush1.msra.mxu0 0.0
    %2166 = vmatprep.subr.mxu0 0.0
    %2167 = vmatpush1.msra.mxu0 0.0
    %2168 = vmatprep.subr.mxu0 0.0
    %2169 = vmatpush1.msra.mxu0 0.0
    %2170 = vmatprep.subr.mxu0 0.0
    %2171 = vmatpush1.msra.mxu0 0.0
    %2172 = vmatprep.subr.mxu0 0.0
    %2173 = vmatpush1.msra.mxu0 0.0
    %2174 = vmatprep.subr.mxu0 0.0
    %2175 = vmatpush1.msra.mxu0 0.0
    %2176 = vmatprep.subr.mxu0 0.0
    %2177 = vmatpush1.msra.mxu0 0.0
    %2178 = vmatprep.subr.mxu0 0.0
    %2179 = vmatpush1.msra.mxu0 0.0
    %2180 = vmatprep.subr.mxu0 0.0
    %2181 = vmatpush1.msra.mxu0 0.0
    %2182 = vmatprep.subr.mxu0 0.0
    %2183 = vmatpush1.msra.mxu0 0.0
    %2184 = vmatprep.subr.mxu0 0.0
    %2185 = vmatpush1.msra.mxu0 0.0
    %2186 = vmatprep.subr.mxu0 0.0
    %2187 = vmatpush1.msra.mxu0 0.0
    %2188 = vmatprep.mubr.f32.mxu0 0.0
    %2189 = vmatmul.mubr.f32.gmra.mrb[0].mxu0 %v1823
    %v2190 = vpop.f32.mrb[0].mxu0
    %v2191 = vadd.f32 %v2112, %v2190
    %v2192 = vpop.f32.mrb[0].mxu0
    %v2193 = vadd.f32 %v2116, %v2192
    %2194 = vdwg.mxu0
    %2195 = vmatprep.subr.mxu0 0.0
    %2196 = vmatpush1.msra.mxu0 %v2061
    %2197 = vmatprep.subr.mxu0 0.0
    %2198 = vmatpush1.msra.mxu0 %v2064
    %2199 = vmatprep.subr.mxu0 0.0
    %2200 = vmatpush1.msra.mxu0 %v2067
    %2201 = vmatprep.subr.mxu0 0.0
    %2202 = vmatpush1.msra.mxu0 %v2070
    %2203 = vmatprep.subr.mxu0 0.0
    %2204 = vmatpush1.msra.mxu0 %v2073
    %2205 = vmatprep.subr.mxu0 0.0
    %2206 = vmatpush1.msra.mxu0 %v2076
    %2207 = vmatprep.subr.mxu0 0.0
    %2208 = vmatpush1.msra.mxu0 %v2079
    %2209 = vmatprep.subr.mxu0 0.0
    %2210 = vmatpush1.msra.mxu0 %v2082
    %2211 = vmatprep.subr.mxu0 0.0
    %2212 = vmatpush1.msra.mxu0 %v2085
    %2213 = vmatprep.subr.mxu0 0.0
    %2214 = vmatpush1.msra.mxu0 %v2088
    %2215 = vmatprep.subr.mxu0 0.0
    %2216 = vmatpush1.msra.mxu0 %v2091
    %2217 = vmatprep.subr.mxu0 0.0
    %2218 = vmatpush1.msra.mxu0 %v2094
    %2219 = vmatprep.subr.mxu0 0.0
    %2220 = vmatpush1.msra.mxu0 %v2097
    %2221 = vmatprep.subr.mxu0 0.0
    %2222 = vmatpush1.msra.mxu0 %v2100
    %2223 = vmatprep.subr.mxu0 0.0
    %2224 = vmatpush1.msra.mxu0 %v2103
    %2225 = vmatprep.subr.mxu0 0.0
    %2226 = vmatpush1.msra.mxu0 %v2106
    %2227 = vmatprep.subr.mxu0 0.0
    %2228 = vmatpush1.msra.mxu0 0.0
    %2229 = vmatprep.subr.mxu0 0.0
    %2230 = vmatpush1.msra.mxu0 0.0
    %2231 = vmatprep.subr.mxu0 0.0
    %2232 = vmatpush1.msra.mxu0 0.0
    %2233 = vmatprep.subr.mxu0 0.0
    %2234 = vmatpush1.msra.mxu0 0.0
    %2235 = vmatprep.subr.mxu0 0.0
    %2236 = vmatpush1.msra.mxu0 0.0
    %2237 = vmatprep.subr.mxu0 0.0
    %2238 = vmatpush1.msra.mxu0 0.0
    %2239 = vmatprep.subr.mxu0 0.0
    %2240 = vmatpush1.msra.mxu0 0.0
    %2241 = vmatprep.subr.mxu0 0.0
    %2242 = vmatpush1.msra.mxu0 0.0
    %2243 = vmatprep.subr.mxu0 0.0
    %2244 = vmatpush1.msra.mxu0 0.0
    %2245 = vmatprep.subr.mxu0 0.0
    %2246 = vmatpush1.msra.mxu0 0.0
    %2247 = vmatprep.subr.mxu0 0.0
    %2248 = vmatpush1.msra.mxu0 0.0
    %2249 = vmatprep.subr.mxu0 0.0
    %2250 = vmatpush1.msra.mxu0 0.0
    %2251 = vmatprep.subr.mxu0 0.0
    %2252 = vmatpush1.msra.mxu0 0.0
    %2253 = vmatprep.subr.mxu0 0.0
    %2254 = vmatpush1.msra.mxu0 0.0
    %2255 = vmatprep.subr.mxu0 0.0
    %2256 = vmatpush1.msra.mxu0 0.0
    %2257 = vmatprep.subr.mxu0 0.0
    %2258 = vmatpush1.msra.mxu0 0.0
    %2259 = vmatprep.mubr.f32.mxu0 0.0
    %2260 = vmatmul.mubr.f32.gmra.mrb[0].mxu0 %v1823
    %v2261 = vpop.f32.mrb[0].mxu0
    %v2262 = vadd.f32 %v2120, %v2261
    %v2263 = vpop.f32.mrb[0].mxu0
    %2264 = vdwg.mxu0
    %s2265 = scalar_lea.vmem [#allocation2], 72
    %v2266 = vld [vmem:[%s2265] sm:$0xff]
    %v2267 = vld [vmem:[%s2265 + $0x8] sm:$0xff]
    %v2268 = vld [vmem:[%s2265 + $0x10] sm:$0xff]
    %v2269 = vadd.f32 %v2266, %v2191
    %v2270 = vxor.u32 %v2269, 2147483648
    %v2271 = vmul.f32 %v2270, 1.442695
    %v2272 = vpow.pop %v2271
    %v2273 = vadd.f32 %v2272, 1.0
    %v2274 = vrcp.pop %v2273
    %v2275 = vmul.f32 1.0, %v2274
    %v2276 = vadd.f32 %v2267, %v2193
    %v2277 = vxor.u32 %v2276, 2147483648
    %v2278 = vmul.f32 %v2277, 1.442695
    %v2279 = vpow.pop %v2278
    %v2280 = vadd.f32 %v2279, 1.0
    %v2281 = vrcp.pop %v2280
    %v2282 = vmul.f32 1.0, %v2281
    %v2283 = vmul.f32 %v2275, %v2262
    %v2284 = vadd.f32 %v2268, %v2283
    %v2285 = vtanh.pop %v2284
    %v2286 = vsub.f32 1.0, %v2282
    %v2287 = vmul.f32 %v2286, %v2285
    %v2288 = vmul.f32 %v2282, %v1823
    %v2289 = vadd.f32 %v2287, %v2288
    %s2290 = scalar_lea.vmem %s12, 24
    %2291 = vst [vmem:[%s2290] sm:$0xff] %v2289
    %v2292 = vld [vmem:[#allocation9] sm:$0xff]
    %v2293 = vld [vmem:[#allocation9 + $0x8] sm:$0xff]
    %v2294 = vld [vmem:[#allocation9 + $0x10] sm:$0xff]
    %v2295 = vld [vmem:[#allocation9 + $0x18] sm:$0xff]
    %v2296 = vld [vmem:[#allocation9 + $0x20] sm:$0xff]
    %v2297 = vld [vmem:[#allocation9 + $0x28] sm:$0xff]
    %v2298 = vld [vmem:[#allocation9 + $0x30] sm:$0xff]
    %v2299 = vld [vmem:[#allocation9 + $0x38] sm:$0xff]
    %v2300 = vld [vmem:[#allocation9 + $0x40] sm:$0xff]
    %v2301 = vld [vmem:[#allocation9 + $0x48] sm:$0xff]
    %v2302 = vld [vmem:[#allocation9 + $0x50] sm:$0xff]
    %v2303 = vld [vmem:[#allocation9 + $0x58] sm:$0xff]
    %v2304 = vld [vmem:[#allocation9 + $0x60] sm:$0xff]
    %v2305 = vld [vmem:[#allocation9 + $0x68] sm:$0xff]
    %v2306 = vld [vmem:[#allocation9 + $0x70] sm:$0xff]
    %v2307 = vld [vmem:[#allocation9 + $0x78] sm:$0xff]
    %v2308 = vld [vmem:[#allocation9 + $0x80] sm:$0xff]
    %v2309 = vld [vmem:[#allocation9 + $0x88] sm:$0xff]
    %v2310 = vld [vmem:[#allocation9 + $0x90] sm:$0xff]
    %v2311 = vld [vmem:[#allocation9 + $0x98] sm:$0xff]
    %v2312 = vld [vmem:[#allocation9 + $0xa0] sm:$0xff]
    %v2313 = vld [vmem:[#allocation9 + $0xa8] sm:$0xff]
    %v2314 = vld [vmem:[#allocation9 + $0xb0] sm:$0xff]
    %v2315 = vld [vmem:[#allocation9 + $0xb8] sm:$0xff]
    %v2316 = vld [vmem:[#allocation9 + $0xc0] sm:$0xff]
    %v2317 = vld [vmem:[#allocation9 + $0xc8] sm:$0xff]
    %v2318 = vld [vmem:[#allocation9 + $0xd0] sm:$0xff]
    %v2319 = vld [vmem:[#allocation9 + $0xd8] sm:$0xff]
    %v2320 = vld [vmem:[#allocation9 + $0xe0] sm:$0xff]
    %v2321 = vld [vmem:[#allocation9 + $0xe8] sm:$0xff]
    %v2322 = vld [vmem:[#allocation9 + $0xf0] sm:$0xff]
    %v2323 = vld [vmem:[#allocation9 + $0xf8] sm:$0xff]
    %v2324 = vld [vmem:[#allocation9 + $0x100] sm:$0xff]
    %v2325 = vld [vmem:[#allocation9 + $0x108] sm:$0xff]
    %v2326 = vld [vmem:[#allocation9 + $0x110] sm:$0xff]
    %v2327 = vld [vmem:[#allocation9 + $0x118] sm:$0xff]
    %v2328 = vld [vmem:[#allocation9 + $0x120] sm:$0xff]
    %v2329 = vld [vmem:[#allocation9 + $0x128] sm:$0xff]
    %v2330 = vld [vmem:[#allocation9 + $0x130] sm:$0xff]
    %v2331 = vld [vmem:[#allocation9 + $0x138] sm:$0xff]
    %v2332 = vld [vmem:[#allocation9 + $0x140] sm:$0xff]
    %v2333 = vld [vmem:[#allocation9 + $0x148] sm:$0xff]
    %v2334 = vld [vmem:[#allocation9 + $0x150] sm:$0xff]
    %v2335 = vld [vmem:[#allocation9 + $0x158] sm:$0xff]
    %v2336 = vld [vmem:[#allocation9 + $0x160] sm:$0xff]
    %v2337 = vld [vmem:[#allocation9 + $0x168] sm:$0xff]
    %v2338 = vld [vmem:[#allocation9 + $0x170] sm:$0xff]
    %v2339 = vld [vmem:[#allocation9 + $0x178] sm:$0xff]
    %v2340 = vld [vmem:[%s8] sm:$0x7]
    %v2342 = vlaneseq
    %v2343 = vshrl.u32 %v2342, 7
    %v2344 = vsub.s32 0, %v2343
    %v2345 = vrot.slane %v2340, %v2344
    %v2346 = vlaneseq
    %v2347 = vshrl.u32 %v2346, 7
    %v2348 = vsub.s32 1, %v2347
    %v2349 = vrot.slane %v2340, %v2348
    %v2350 = vlaneseq
    %v2351 = vshrl.u32 %v2350, 7
    %v2352 = vsub.s32 2, %v2351
    %v2353 = vrot.slane %v2340, %v2352
    %2357 = vmatprep.subr.mxu0 %v2293
    %2358 = vmatpush1.msra.mxu0 %v2292
    %2359 = vmatprep.subr.mxu0 %v2296
    %2360 = vmatpush1.msra.mxu0 %v2295
    %2361 = vmatprep.subr.mxu0 %v2299
    %2362 = vmatpush1.msra.mxu0 %v2298
    %2363 = vmatprep.subr.mxu0 %v2302
    %2364 = vmatpush1.msra.mxu0 %v2301
    %2365 = vmatprep.subr.mxu0 %v2305
    %2366 = vmatpush1.msra.mxu0 %v2304
    %2367 = vmatprep.subr.mxu0 %v2308
    %2368 = vmatpush1.msra.mxu0 %v2307
    %2369 = vmatprep.subr.mxu0 %v2311
    %2370 = vmatpush1.msra.mxu0 %v2310
    %2371 = vmatprep.subr.mxu0 %v2314
    %2372 = vmatpush1.msra.mxu0 %v2313
    %2373 = vmatprep.subr.mxu0 %v2317
    %2374 = vmatpush1.msra.mxu0 %v2316
    %2375 = vmatprep.subr.mxu0 %v2320
    %2376 = vmatpush1.msra.mxu0 %v2319
    %2377 = vmatprep.subr.mxu0 %v2323
    %2378 = vmatpush1.msra.mxu0 %v2322
    %2379 = vmatprep.subr.mxu0 %v2326
    %2380 = vmatpush1.msra.mxu0 %v2325
    %2381 = vmatprep.subr.mxu0 %v2329
    %2382 = vmatpush1.msra.mxu0 %v2328
    %2383 = vmatprep.subr.mxu0 %v2332
    %2384 = vmatpush1.msra.mxu0 %v2331
    %2385 = vmatprep.subr.mxu0 %v2335
    %2386 = vmatpush1.msra.mxu0 %v2334
    %2387 = vmatprep.subr.mxu0 %v2338
    %2388 = vmatpush1.msra.mxu0 %v2337
    %2389 = vmatprep.subr.mxu0 0.0
    %2390 = vmatpush1.msra.mxu0 0.0
    %2391 = vmatprep.subr.mxu0 0.0
    %2392 = vmatpush1.msra.mxu0 0.0
    %2393 = vmatprep.subr.mxu0 0.0
    %2394 = vmatpush1.msra.mxu0 0.0
    %2395 = vmatprep.subr.mxu0 0.0
    %2396 = vmatpush1.msra.mxu0 0.0
    %2397 = vmatprep.subr.mxu0 0.0
    %2398 = vmatpush1.msra.mxu0 0.0
    %2399 = vmatprep.subr.mxu0 0.0
    %2400 = vmatpush1.msra.mxu0 0.0
    %2401 = vmatprep.subr.mxu0 0.0
    %2402 = vmatpush1.msra.mxu0 0.0
    %2403 = vmatprep.subr.mxu0 0.0
    %2404 = vmatpush1.msra.mxu0 0.0
    %2405 = vmatprep.subr.mxu0 0.0
    %2406 = vmatpush1.msra.mxu0 0.0
    %2407 = vmatprep.subr.mxu0 0.0
    %2408 = vmatpush1.msra.mxu0 0.0
    %2409 = vmatprep.subr.mxu0 0.0
    %2410 = vmatpush1.msra.mxu0 0.0
    %2411 = vmatprep.subr.mxu0 0.0
    %2412 = vmatpush1.msra.mxu0 0.0
    %2413 = vmatprep.subr.mxu0 0.0
    %2414 = vmatpush1.msra.mxu0 0.0
    %2415 = vmatprep.subr.mxu0 0.0
    %2416 = vmatpush1.msra.mxu0 0.0
    %2417 = vmatprep.subr.mxu0 0.0
    %2418 = vmatpush1.msra.mxu0 0.0
    %2419 = vmatprep.subr.mxu0 0.0
    %2420 = vmatpush1.msra.mxu0 0.0
    %2421 = vmatprep.mubr.f32.mxu0 0.0
    %2422 = vmatmul.mubr.f32.gmra.mrb[0].mxu0 %v2056
    %v2423 = vpop.f32.mrb[0].mxu0
    %v2424 = vadd.f32 %v2345, %v2423
    %v2425 = vpop.f32.mrb[0].mxu0
    %v2426 = vadd.f32 %v2349, %v2425
    %2427 = vdwg.mxu0
    %2428 = vmatprep.subr.mxu0 0.0
    %2429 = vmatpush1.msra.mxu0 %v2294
    %2430 = vmatprep.subr.mxu0 0.0
    %2431 = vmatpush1.msra.mxu0 %v2297
    %2432 = vmatprep.subr.mxu0 0.0
    %2433 = vmatpush1.msra.mxu0 %v2300
    %2434 = vmatprep.subr.mxu0 0.0
    %2435 = vmatpush1.msra.mxu0 %v2303
    %2436 = vmatprep.subr.mxu0 0.0
    %2437 = vmatpush1.msra.mxu0 %v2306
    %2438 = vmatprep.subr.mxu0 0.0
    %2439 = vmatpush1.msra.mxu0 %v2309
    %2440 = vmatprep.subr.mxu0 0.0
    %2441 = vmatpush1.msra.mxu0 %v2312
    %2442 = vmatprep.subr.mxu0 0.0
    %2443 = vmatpush1.msra.mxu0 %v2315
    %2444 = vmatprep.subr.mxu0 0.0
    %2445 = vmatpush1.msra.mxu0 %v2318
    %2446 = vmatprep.subr.mxu0 0.0
    %2447 = vmatpush1.msra.mxu0 %v2321
    %2448 = vmatprep.subr.mxu0 0.0
    %2449 = vmatpush1.msra.mxu0 %v2324
    %2450 = vmatprep.subr.mxu0 0.0
    %2451 = vmatpush1.msra.mxu0 %v2327
    %2452 = vmatprep.subr.mxu0 0.0
    %2453 = vmatpush1.msra.mxu0 %v2330
    %2454 = vmatprep.subr.mxu0 0.0
    %2455 = vmatpush1.msra.mxu0 %v2333
    %2456 = vmatprep.subr.mxu0 0.0
    %2457 = vmatpush1.msra.mxu0 %v2336
    %2458 = vmatprep.subr.mxu0 0.0
    %2459 = vmatpush1.msra.mxu0 %v2339
    %2460 = vmatprep.subr.mxu0 0.0
    %2461 = vmatpush1.msra.mxu0 0.0
    %2462 = vmatprep.subr.mxu0 0.0
    %2463 = vmatpush1.msra.mxu0 0.0
    %2464 = vmatprep.subr.mxu0 0.0
    %2465 = vmatpush1.msra.mxu0 0.0
    %2466 = vmatprep.subr.mxu0 0.0
    %2467 = vmatpush1.msra.mxu0 0.0
    %2468 = vmatprep.subr.mxu0 0.0
    %2469 = vmatpush1.msra.mxu0 0.0
    %2470 = vmatprep.subr.mxu0 0.0
    %2471 = vmatpush1.msra.mxu0 0.0
    %2472 = vmatprep.subr.mxu0 0.0
    %2473 = vmatpush1.msra.mxu0 0.0
    %2474 = vmatprep.subr.mxu0 0.0
    %2475 = vmatpush1.msra.mxu0 0.0
    %2476 = vmatprep.subr.mxu0 0.0
    %2477 = vmatpush1.msra.mxu0 0.0
    %2478 = vmatprep.subr.mxu0 0.0
    %2479 = vmatpush1.msra.mxu0 0.0
    %2480 = vmatprep.subr.mxu0 0.0
    %2481 = vmatpush1.msra.mxu0 0.0
    %2482 = vmatprep.subr.mxu0 0.0
    %2483 = vmatpush1.msra.mxu0 0.0
    %2484 = vmatprep.subr.mxu0 0.0
    %2485 = vmatpush1.msra.mxu0 0.0
    %2486 = vmatprep.subr.mxu0 0.0
    %2487 = vmatpush1.msra.mxu0 0.0
    %2488 = vmatprep.subr.mxu0 0.0
    %2489 = vmatpush1.msra.mxu0 0.0
    %2490 = vmatprep.subr.mxu0 0.0
    %2491 = vmatpush1.msra.mxu0 0.0
    %2492 = vmatprep.mubr.f32.mxu0 0.0
    %2493 = vmatmul.mubr.f32.gmra.mrb[0].mxu0 %v2056
    %v2494 = vpop.f32.mrb[0].mxu0
    %v2495 = vadd.f32 %v2353, %v2494
    %v2496 = vpop.f32.mrb[0].mxu0
    %2497 = vdwg.mxu0
    %s2498 = scalar_lea.vmem [#allocation3], 48
    %v2499 = vld [vmem:[%s2498] sm:$0xff]
    %v2500 = vld [vmem:[%s2498 + $0x8] sm:$0xff]
    %v2501 = vld [vmem:[%s2498 + $0x10] sm:$0xff]
    %v2502 = vadd.f32 %v2499, %v2424
    %v2503 = vxor.u32 %v2502, 2147483648
    %v2504 = vmul.f32 %v2503, 1.442695
    %v2505 = vpow.pop %v2504
    %v2506 = vadd.f32 %v2505, 1.0
    %v2507 = vrcp.pop %v2506
    %v2508 = vmul.f32 1.0, %v2507
    %v2509 = vadd.f32 %v2500, %v2426
    %v2510 = vxor.u32 %v2509, 2147483648
    %v2511 = vmul.f32 %v2510, 1.442695
    %v2512 = vpow.pop %v2511
    %v2513 = vadd.f32 %v2512, 1.0
    %v2514 = vrcp.pop %v2513
    %v2515 = vmul.f32 1.0, %v2514
    %v2516 = vmul.f32 %v2508, %v2495
    %v2517 = vadd.f32 %v2501, %v2516
    %v2518 = vtanh.pop %v2517
    %v2519 = vsub.f32 1.0, %v2515
    %v2520 = vmul.f32 %v2519, %v2518
    %v2521 = vmul.f32 %v2515, %v2056
    %v2522 = vadd.f32 %v2520, %v2521
    %s2523 = scalar_lea.vmem %s13, 16
    %2524 = vst [vmem:[%s2523] sm:$0xff] %v2522
    %v2525 = vld [vmem:[#allocation6] sm:$0xff]
    %v2526 = vld [vmem:[#allocation6 + $0x8] sm:$0xff]
    %v2527 = vld [vmem:[#allocation6 + $0x10] sm:$0xff]
    %v2528 = vld [vmem:[#allocation6 + $0x18] sm:$0xff]
    %v2529 = vld [vmem:[#allocation6 + $0x20] sm:$0xff]
    %v2530 = vld [vmem:[#allocation6 + $0x28] sm:$0xff]
    %v2531 = vld [vmem:[#allocation6 + $0x30] sm:$0xff]
    %v2532 = vld [vmem:[#allocation6 + $0x38] sm:$0xff]
    %v2533 = vld [vmem:[#allocation6 + $0x40] sm:$0xff]
    %v2534 = vld [vmem:[#allocation6 + $0x48] sm:$0xff]
    %v2535 = vld [vmem:[#allocation6 + $0x50] sm:$0xff]
    %v2536 = vld [vmem:[#allocation6 + $0x58] sm:$0xff]
    %v2537 = vld [vmem:[#allocation6 + $0x60] sm:$0xff]
    %v2538 = vld [vmem:[#allocation6 + $0x68] sm:$0xff]
    %v2539 = vld [vmem:[#allocation6 + $0x70] sm:$0xff]
    %v2540 = vld [vmem:[#allocation6 + $0x78] sm:$0xff]
    %v2541 = vld [vmem:[#allocation6 + $0x80] sm:$0xff]
    %v2542 = vld [vmem:[#allocation6 + $0x88] sm:$0xff]
    %v2543 = vld [vmem:[#allocation6 + $0x90] sm:$0xff]
    %v2544 = vld [vmem:[#allocation6 + $0x98] sm:$0xff]
    %v2545 = vld [vmem:[#allocation6 + $0xa0] sm:$0xff]
    %v2546 = vld [vmem:[#allocation6 + $0xa8] sm:$0xff]
    %v2547 = vld [vmem:[#allocation6 + $0xb0] sm:$0xff]
    %v2548 = vld [vmem:[#allocation6 + $0xb8] sm:$0xff]
    %v2549 = vld [vmem:[#allocation6 + $0xc0] sm:$0xff]
    %v2550 = vld [vmem:[#allocation6 + $0xc8] sm:$0xff]
    %v2551 = vld [vmem:[#allocation6 + $0xd0] sm:$0xff]
    %v2552 = vld [vmem:[#allocation6 + $0xd8] sm:$0xff]
    %v2553 = vld [vmem:[#allocation6 + $0xe0] sm:$0xff]
    %v2554 = vld [vmem:[#allocation6 + $0xe8] sm:$0xff]
    %v2555 = vld [vmem:[#allocation6 + $0xf0] sm:$0xff]
    %v2556 = vld [vmem:[#allocation6 + $0xf8] sm:$0xff]
    %v2557 = vld [vmem:[#allocation6 + $0x100] sm:$0xff]
    %v2558 = vld [vmem:[#allocation6 + $0x108] sm:$0xff]
    %v2559 = vld [vmem:[#allocation6 + $0x110] sm:$0xff]
    %v2560 = vld [vmem:[#allocation6 + $0x118] sm:$0xff]
    %v2561 = vld [vmem:[#allocation6 + $0x120] sm:$0xff]
    %v2562 = vld [vmem:[#allocation6 + $0x128] sm:$0xff]
    %v2563 = vld [vmem:[#allocation6 + $0x130] sm:$0xff]
    %v2564 = vld [vmem:[#allocation6 + $0x138] sm:$0xff]
    %v2565 = vld [vmem:[#allocation6 + $0x140] sm:$0xff]
    %v2566 = vld [vmem:[#allocation6 + $0x148] sm:$0xff]
    %v2567 = vld [vmem:[#allocation6 + $0x150] sm:$0xff]
    %v2568 = vld [vmem:[#allocation6 + $0x158] sm:$0xff]
    %v2569 = vld [vmem:[#allocation6 + $0x160] sm:$0xff]
    %v2570 = vld [vmem:[#allocation6 + $0x168] sm:$0xff]
    %v2571 = vld [vmem:[#allocation6 + $0x170] sm:$0xff]
    %v2572 = vld [vmem:[#allocation6 + $0x178] sm:$0xff]
    %v2573 = vld [vmem:[%s4] sm:$0x7]
    %v2575 = vlaneseq
    %v2576 = vshrl.u32 %v2575, 7
    %v2577 = vsub.s32 0, %v2576
    %v2578 = vrot.slane %v2573, %v2577
    %v2579 = vlaneseq
    %v2580 = vshrl.u32 %v2579, 7
    %v2581 = vsub.s32 1, %v2580
    %v2582 = vrot.slane %v2573, %v2581
    %v2583 = vlaneseq
    %v2584 = vshrl.u32 %v2583, 7
    %v2585 = vsub.s32 2, %v2584
    %v2586 = vrot.slane %v2573, %v2585
    %2590 = vmatprep.subr.mxu0 %v2526
    %2591 = vmatpush1.msra.mxu0 %v2525
    %2592 = vmatprep.subr.mxu0 %v2529
    %2593 = vmatpush1.msra.mxu0 %v2528
    %2594 = vmatprep.subr.mxu0 %v2532
    %2595 = vmatpush1.msra.mxu0 %v2531
    %2596 = vmatprep.subr.mxu0 %v2535
    %2597 = vmatpush1.msra.mxu0 %v2534
    %2598 = vmatprep.subr.mxu0 %v2538
    %2599 = vmatpush1.msra.mxu0 %v2537
    %2600 = vmatprep.subr.mxu0 %v2541
    %2601 = vmatpush1.msra.mxu0 %v2540
    %2602 = vmatprep.subr.mxu0 %v2544
    %2603 = vmatpush1.msra.mxu0 %v2543
    %2604 = vmatprep.subr.mxu0 %v2547
    %2605 = vmatpush1.msra.mxu0 %v2546
    %2606 = vmatprep.subr.mxu0 %v2550
    %2607 = vmatpush1.msra.mxu0 %v2549
    %2608 = vmatprep.subr.mxu0 %v2553
    %2609 = vmatpush1.msra.mxu0 %v2552
    %2610 = vmatprep.subr.mxu0 %v2556
    %2611 = vmatpush1.msra.mxu0 %v2555
    %2612 = vmatprep.subr.mxu0 %v2559
    %2613 = vmatpush1.msra.mxu0 %v2558
    %2614 = vmatprep.subr.mxu0 %v2562
    %2615 = vmatpush1.msra.mxu0 %v2561
    %2616 = vmatprep.subr.mxu0 %v2565
    %2617 = vmatpush1.msra.mxu0 %v2564
    %2618 = vmatprep.subr.mxu0 %v2568
    %2619 = vmatpush1.msra.mxu0 %v2567
    %2620 = vmatprep.subr.mxu0 %v2571
    %2621 = vmatpush1.msra.mxu0 %v2570
    %2622 = vmatprep.subr.mxu0 0.0
    %2623 = vmatpush1.msra.mxu0 0.0
    %2624 = vmatprep.subr.mxu0 0.0
    %2625 = vmatpush1.msra.mxu0 0.0
    %2626 = vmatprep.subr.mxu0 0.0
    %2627 = vmatpush1.msra.mxu0 0.0
    %2628 = vmatprep.subr.mxu0 0.0
    %2629 = vmatpush1.msra.mxu0 0.0
    %2630 = vmatprep.subr.mxu0 0.0
    %2631 = vmatpush1.msra.mxu0 0.0
    %2632 = vmatprep.subr.mxu0 0.0
    %2633 = vmatpush1.msra.mxu0 0.0
    %2634 = vmatprep.subr.mxu0 0.0
    %2635 = vmatpush1.msra.mxu0 0.0
    %2636 = vmatprep.subr.mxu0 0.0
    %2637 = vmatpush1.msra.mxu0 0.0
    %2638 = vmatprep.subr.mxu0 0.0
    %2639 = vmatpush1.msra.mxu0 0.0
    %2640 = vmatprep.subr.mxu0 0.0
    %2641 = vmatpush1.msra.mxu0 0.0
    %2642 = vmatprep.subr.mxu0 0.0
    %2643 = vmatpush1.msra.mxu0 0.0
    %2644 = vmatprep.subr.mxu0 0.0
    %2645 = vmatpush1.msra.mxu0 0.0
    %2646 = vmatprep.subr.mxu0 0.0
    %2647 = vmatpush1.msra.mxu0 0.0
    %2648 = vmatprep.subr.mxu0 0.0
    %2649 = vmatpush1.msra.mxu0 0.0
    %2650 = vmatprep.subr.mxu0 0.0
    %2651 = vmatpush1.msra.mxu0 0.0
    %2652 = vmatprep.subr.mxu0 0.0
    %2653 = vmatpush1.msra.mxu0 0.0
    %2654 = vmatprep.mubr.f32.mxu0 0.0
    %2655 = vmatmul.mubr.f32.gmra.mrb[0].mxu0 %v2289
    %v2656 = vpop.f32.mrb[0].mxu0
    %v2657 = vadd.f32 %v2578, %v2656
    %v2658 = vpop.f32.mrb[0].mxu0
    %v2659 = vadd.f32 %v2582, %v2658
    %2660 = vdwg.mxu0
    %2661 = vmatprep.subr.mxu0 0.0
    %2662 = vmatpush1.msra.mxu0 %v2527
    %2663 = vmatprep.subr.mxu0 0.0
    %2664 = vmatpush1.msra.mxu0 %v2530
    %2665 = vmatprep.subr.mxu0 0.0
    %2666 = vmatpush1.msra.mxu0 %v2533
    %2667 = vmatprep.subr.mxu0 0.0
    %2668 = vmatpush1.msra.mxu0 %v2536
    %2669 = vmatprep.subr.mxu0 0.0
    %2670 = vmatpush1.msra.mxu0 %v2539
    %2671 = vmatprep.subr.mxu0 0.0
    %2672 = vmatpush1.msra.mxu0 %v2542
    %2673 = vmatprep.subr.mxu0 0.0
    %2674 = vmatpush1.msra.mxu0 %v2545
    %2675 = vmatprep.subr.mxu0 0.0
    %2676 = vmatpush1.msra.mxu0 %v2548
    %2677 = vmatprep.subr.mxu0 0.0
    %2678 = vmatpush1.msra.mxu0 %v2551
    %2679 = vmatprep.subr.mxu0 0.0
    %2680 = vmatpush1.msra.mxu0 %v2554
    %2681 = vmatprep.subr.mxu0 0.0
    %2682 = vmatpush1.msra.mxu0 %v2557
    %2683 = vmatprep.subr.mxu0 0.0
    %2684 = vmatpush1.msra.mxu0 %v2560
    %2685 = vmatprep.subr.mxu0 0.0
    %2686 = vmatpush1.msra.mxu0 %v2563
    %2687 = vmatprep.subr.mxu0 0.0
    %2688 = vmatpush1.msra.mxu0 %v2566
    %2689 = vmatprep.subr.mxu0 0.0
    %2690 = vmatpush1.msra.mxu0 %v2569
    %2691 = vmatprep.subr.mxu0 0.0
    %2692 = vmatpush1.msra.mxu0 %v2572
    %2693 = vmatprep.subr.mxu0 0.0
    %2694 = vmatpush1.msra.mxu0 0.0
    %2695 = vmatprep.subr.mxu0 0.0
    %2696 = vmatpush1.msra.mxu0 0.0
    %2697 = vmatprep.subr.mxu0 0.0
    %2698 = vmatpush1.msra.mxu0 0.0
    %2699 = vmatprep.subr.mxu0 0.0
    %2700 = vmatpush1.msra.mxu0 0.0
    %2701 = vmatprep.subr.mxu0 0.0
    %2702 = vmatpush1.msra.mxu0 0.0
    %2703 = vmatprep.subr.mxu0 0.0
    %2704 = vmatpush1.msra.mxu0 0.0
    %2705 = vmatprep.subr.mxu0 0.0
    %2706 = vmatpush1.msra.mxu0 0.0
    %2707 = vmatprep.subr.mxu0 0.0
    %2708 = vmatpush1.msra.mxu0 0.0
    %2709 = vmatprep.subr.mxu0 0.0
    %2710 = vmatpush1.msra.mxu0 0.0
    %2711 = vmatprep.subr.mxu0 0.0
    %2712 = vmatpush1.msra.mxu0 0.0
    %2713 = vmatprep.subr.mxu0 0.0
    %2714 = vmatpush1.msra.mxu0 0.0
    %2715 = vmatprep.subr.mxu0 0.0
    %2716 = vmatpush1.msra.mxu0 0.0
    %2717 = vmatprep.subr.mxu0 0.0
    %2718 = vmatpush1.msra.mxu0 0.0
    %2719 = vmatprep.subr.mxu0 0.0
    %2720 = vmatpush1.msra.mxu0 0.0
    %2721 = vmatprep.subr.mxu0 0.0
    %2722 = vmatpush1.msra.mxu0 0.0
    %2723 = vmatprep.subr.mxu0 0.0
    %2724 = vmatpush1.msra.mxu0 0.0
    %2725 = vmatprep.mubr.f32.mxu0 0.0
    %2726 = vmatmul.mubr.f32.gmra.mrb[0].mxu0 %v2289
    %v2727 = vpop.f32.mrb[0].mxu0
    %v2728 = vadd.f32 %v2586, %v2727
    %v2729 = vpop.f32.mrb[0].mxu0
    %2730 = vdwg.mxu0
    %s2731 = scalar_lea.vmem [#allocation2], 96
    %v2732 = vld [vmem:[%s2731] sm:$0xff]
    %v2733 = vld [vmem:[%s2731 + $0x8] sm:$0xff]
    %v2734 = vld [vmem:[%s2731 + $0x10] sm:$0xff]
    %v2735 = vadd.f32 %v2732, %v2657
    %v2736 = vxor.u32 %v2735, 2147483648
    %v2737 = vmul.f32 %v2736, 1.442695
    %v2738 = vpow.pop %v2737
    %v2739 = vadd.f32 %v2738, 1.0
    %v2740 = vrcp.pop %v2739
    %v2741 = vmul.f32 1.0, %v2740
    %v2742 = vadd.f32 %v2733, %v2659
    %v2743 = vxor.u32 %v2742, 2147483648
    %v2744 = vmul.f32 %v2743, 1.442695
    %v2745 = vpow.pop %v2744
    %v2746 = vadd.f32 %v2745, 1.0
    %v2747 = vrcp.pop %v2746
    %v2748 = vmul.f32 1.0, %v2747
    %v2749 = vmul.f32 %v2741, %v2728
    %v2750 = vadd.f32 %v2734, %v2749
    %v2751 = vtanh.pop %v2750
    %v2752 = vsub.f32 1.0, %v2748
    %v2753 = vmul.f32 %v2752, %v2751
    %v2754 = vmul.f32 %v2748, %v2289
    %v2755 = vadd.f32 %v2753, %v2754
    %s2756 = scalar_lea.vmem %s12, 32
    %2757 = vst [vmem:[%s2756] sm:$0xff] %v2755
    %v2758 = vld [vmem:[#allocation9] sm:$0xff]
    %v2759 = vld [vmem:[#allocation9 + $0x8] sm:$0xff]
    %v2760 = vld [vmem:[#allocation9 + $0x10] sm:$0xff]
    %v2761 = vld [vmem:[#allocation9 + $0x18] sm:$0xff]
    %v2762 = vld [vmem:[#allocation9 + $0x20] sm:$0xff]
    %v2763 = vld [vmem:[#allocation9 + $0x28] sm:$0xff]
    %v2764 = vld [vmem:[#allocation9 + $0x30] sm:$0xff]
    %v2765 = vld [vmem:[#allocation9 + $0x38] sm:$0xff]
    %v2766 = vld [vmem:[#allocation9 + $0x40] sm:$0xff]
    %v2767 = vld [vmem:[#allocation9 + $0x48] sm:$0xff]
    %v2768 = vld [vmem:[#allocation9 + $0x50] sm:$0xff]
    %v2769 = vld [vmem:[#allocation9 + $0x58] sm:$0xff]
    %v2770 = vld [vmem:[#allocation9 + $0x60] sm:$0xff]
    %v2771 = vld [vmem:[#allocation9 + $0x68] sm:$0xff]
    %v2772 = vld [vmem:[#allocation9 + $0x70] sm:$0xff]
    %v2773 = vld [vmem:[#allocation9 + $0x78] sm:$0xff]
    %v2774 = vld [vmem:[#allocation9 + $0x80] sm:$0xff]
    %v2775 = vld [vmem:[#allocation9 + $0x88] sm:$0xff]
    %v2776 = vld [vmem:[#allocation9 + $0x90] sm:$0xff]
    %v2777 = vld [vmem:[#allocation9 + $0x98] sm:$0xff]
    %v2778 = vld [vmem:[#allocation9 + $0xa0] sm:$0xff]
    %v2779 = vld [vmem:[#allocation9 + $0xa8] sm:$0xff]
    %v2780 = vld [vmem:[#allocation9 + $0xb0] sm:$0xff]
    %v2781 = vld [vmem:[#allocation9 + $0xb8] sm:$0xff]
    %v2782 = vld [vmem:[#allocation9 + $0xc0] sm:$0xff]
    %v2783 = vld [vmem:[#allocation9 + $0xc8] sm:$0xff]
    %v2784 = vld [vmem:[#allocation9 + $0xd0] sm:$0xff]
    %v2785 = vld [vmem:[#allocation9 + $0xd8] sm:$0xff]
    %v2786 = vld [vmem:[#allocation9 + $0xe0] sm:$0xff]
    %v2787 = vld [vmem:[#allocation9 + $0xe8] sm:$0xff]
    %v2788 = vld [vmem:[#allocation9 + $0xf0] sm:$0xff]
    %v2789 = vld [vmem:[#allocation9 + $0xf8] sm:$0xff]
    %v2790 = vld [vmem:[#allocation9 + $0x100] sm:$0xff]
    %v2791 = vld [vmem:[#allocation9 + $0x108] sm:$0xff]
    %v2792 = vld [vmem:[#allocation9 + $0x110] sm:$0xff]
    %v2793 = vld [vmem:[#allocation9 + $0x118] sm:$0xff]
    %v2794 = vld [vmem:[#allocation9 + $0x120] sm:$0xff]
    %v2795 = vld [vmem:[#allocation9 + $0x128] sm:$0xff]
    %v2796 = vld [vmem:[#allocation9 + $0x130] sm:$0xff]
    %v2797 = vld [vmem:[#allocation9 + $0x138] sm:$0xff]
    %v2798 = vld [vmem:[#allocation9 + $0x140] sm:$0xff]
    %v2799 = vld [vmem:[#allocation9 + $0x148] sm:$0xff]
    %v2800 = vld [vmem:[#allocation9 + $0x150] sm:$0xff]
    %v2801 = vld [vmem:[#allocation9 + $0x158] sm:$0xff]
    %v2802 = vld [vmem:[#allocation9 + $0x160] sm:$0xff]
    %v2803 = vld [vmem:[#allocation9 + $0x168] sm:$0xff]
    %v2804 = vld [vmem:[#allocation9 + $0x170] sm:$0xff]
    %v2805 = vld [vmem:[#allocation9 + $0x178] sm:$0xff]
    %v2806 = vld [vmem:[%s8] sm:$0x7]
    %v2808 = vlaneseq
    %v2809 = vshrl.u32 %v2808, 7
    %v2810 = vsub.s32 0, %v2809
    %v2811 = vrot.slane %v2806, %v2810
    %v2812 = vlaneseq
    %v2813 = vshrl.u32 %v2812, 7
    %v2814 = vsub.s32 1, %v2813
    %v2815 = vrot.slane %v2806, %v2814
    %v2816 = vlaneseq
    %v2817 = vshrl.u32 %v2816, 7
    %v2818 = vsub.s32 2, %v2817
    %v2819 = vrot.slane %v2806, %v2818
    %2823 = vmatprep.subr.mxu0 %v2759
    %2824 = vmatpush1.msra.mxu0 %v2758
    %2825 = vmatprep.subr.mxu0 %v2762
    %2826 = vmatpush1.msra.mxu0 %v2761
    %2827 = vmatprep.subr.mxu0 %v2765
    %2828 = vmatpush1.msra.mxu0 %v2764
    %2829 = vmatprep.subr.mxu0 %v2768
    %2830 = vmatpush1.msra.mxu0 %v2767
    %2831 = vmatprep.subr.mxu0 %v2771
    %2832 = vmatpush1.msra.mxu0 %v2770
    %2833 = vmatprep.subr.mxu0 %v2774
    %2834 = vmatpush1.msra.mxu0 %v2773
    %2835 = vmatprep.subr.mxu0 %v2777
    %2836 = vmatpush1.msra.mxu0 %v2776
    %2837 = vmatprep.subr.mxu0 %v2780
    %2838 = vmatpush1.msra.mxu0 %v2779
    %2839 = vmatprep.subr.mxu0 %v2783
    %2840 = vmatpush1.msra.mxu0 %v2782
    %2841 = vmatprep.subr.mxu0 %v2786
    %2842 = vmatpush1.msra.mxu0 %v2785
    %2843 = vmatprep.subr.mxu0 %v2789
    %2844 = vmatpush1.msra.mxu0 %v2788
    %2845 = vmatprep.subr.mxu0 %v2792
    %2846 = vmatpush1.msra.mxu0 %v2791
    %2847 = vmatprep.subr.mxu0 %v2795
    %2848 = vmatpush1.msra.mxu0 %v2794
    %2849 = vmatprep.subr.mxu0 %v2798
    %2850 = vmatpush1.msra.mxu0 %v2797
    %2851 = vmatprep.subr.mxu0 %v2801
    %2852 = vmatpush1.msra.mxu0 %v2800
    %2853 = vmatprep.subr.mxu0 %v2804
    %2854 = vmatpush1.msra.mxu0 %v2803
    %2855 = vmatprep.subr.mxu0 0.0
    %2856 = vmatpush1.msra.mxu0 0.0
    %2857 = vmatprep.subr.mxu0 0.0
    %2858 = vmatpush1.msra.mxu0 0.0
    %2859 = vmatprep.subr.mxu0 0.0
    %2860 = vmatpush1.msra.mxu0 0.0
    %2861 = vmatprep.subr.mxu0 0.0
    %2862 = vmatpush1.msra.mxu0 0.0
    %2863 = vmatprep.subr.mxu0 0.0
    %2864 = vmatpush1.msra.mxu0 0.0
    %2865 = vmatprep.subr.mxu0 0.0
    %2866 = vmatpush1.msra.mxu0 0.0
    %2867 = vmatprep.subr.mxu0 0.0
    %2868 = vmatpush1.msra.mxu0 0.0
    %2869 = vmatprep.subr.mxu0 0.0
    %2870 = vmatpush1.msra.mxu0 0.0
    %2871 = vmatprep.subr.mxu0 0.0
    %2872 = vmatpush1.msra.mxu0 0.0
    %2873 = vmatprep.subr.mxu0 0.0
    %2874 = vmatpush1.msra.mxu0 0.0
    %2875 = vmatprep.subr.mxu0 0.0
    %2876 = vmatpush1.msra.mxu0 0.0
    %2877 = vmatprep.subr.mxu0 0.0
    %2878 = vmatpush1.msra.mxu0 0.0
    %2879 = vmatprep.subr.mxu0 0.0
    %2880 = vmatpush1.msra.mxu0 0.0
    %2881 = vmatprep.subr.mxu0 0.0
    %2882 = vmatpush1.msra.mxu0 0.0
    %2883 = vmatprep.subr.mxu0 0.0
    %2884 = vmatpush1.msra.mxu0 0.0
    %2885 = vmatprep.subr.mxu0 0.0
    %2886 = vmatpush1.msra.mxu0 0.0
    %2887 = vmatprep.mubr.f32.mxu0 0.0
    %2888 = vmatmul.mubr.f32.gmra.mrb[0].mxu0 %v2522
    %v2889 = vpop.f32.mrb[0].mxu0
    %v2890 = vadd.f32 %v2811, %v2889
    %v2891 = vpop.f32.mrb[0].mxu0
    %v2892 = vadd.f32 %v2815, %v2891
    %2893 = vdwg.mxu0
    %2894 = vmatprep.subr.mxu0 0.0
    %2895 = vmatpush1.msra.mxu0 %v2760
    %2896 = vmatprep.subr.mxu0 0.0
    %2897 = vmatpush1.msra.mxu0 %v2763
    %2898 = vmatprep.subr.mxu0 0.0
    %2899 = vmatpush1.msra.mxu0 %v2766
    %2900 = vmatprep.subr.mxu0 0.0
    %2901 = vmatpush1.msra.mxu0 %v2769
    %2902 = vmatprep.subr.mxu0 0.0
    %2903 = vmatpush1.msra.mxu0 %v2772
    %2904 = vmatprep.subr.mxu0 0.0
    %2905 = vmatpush1.msra.mxu0 %v2775
    %2906 = vmatprep.subr.mxu0 0.0
    %2907 = vmatpush1.msra.mxu0 %v2778
    %2908 = vmatprep.subr.mxu0 0.0
    %2909 = vmatpush1.msra.mxu0 %v2781
    %2910 = vmatprep.subr.mxu0 0.0
    %2911 = vmatpush1.msra.mxu0 %v2784
    %2912 = vmatprep.subr.mxu0 0.0
    %2913 = vmatpush1.msra.mxu0 %v2787
    %2914 = vmatprep.subr.mxu0 0.0
    %2915 = vmatpush1.msra.mxu0 %v2790
    %2916 = vmatprep.subr.mxu0 0.0
    %2917 = vmatpush1.msra.mxu0 %v2793
    %2918 = vmatprep.subr.mxu0 0.0
    %2919 = vmatpush1.msra.mxu0 %v2796
    %2920 = vmatprep.subr.mxu0 0.0
    %2921 = vmatpush1.msra.mxu0 %v2799
    %2922 = vmatprep.subr.mxu0 0.0
    %2923 = vmatpush1.msra.mxu0 %v2802
    %2924 = vmatprep.subr.mxu0 0.0
    %2925 = vmatpush1.msra.mxu0 %v2805
    %2926 = vmatprep.subr.mxu0 0.0
    %2927 = vmatpush1.msra.mxu0 0.0
    %2928 = vmatprep.subr.mxu0 0.0
    %2929 = vmatpush1.msra.mxu0 0.0
    %2930 = vmatprep.subr.mxu0 0.0
    %2931 = vmatpush1.msra.mxu0 0.0
    %2932 = vmatprep.subr.mxu0 0.0
    %2933 = vmatpush1.msra.mxu0 0.0
    %2934 = vmatprep.subr.mxu0 0.0
    %2935 = vmatpush1.msra.mxu0 0.0
    %2936 = vmatprep.subr.mxu0 0.0
    %2937 = vmatpush1.msra.mxu0 0.0
    %2938 = vmatprep.subr.mxu0 0.0
    %2939 = vmatpush1.msra.mxu0 0.0
    %2940 = vmatprep.subr.mxu0 0.0
    %2941 = vmatpush1.msra.mxu0 0.0
    %2942 = vmatprep.subr.mxu0 0.0
    %2943 = vmatpush1.msra.mxu0 0.0
    %2944 = vmatprep.subr.mxu0 0.0
    %2945 = vmatpush1.msra.mxu0 0.0
    %2946 = vmatprep.subr.mxu0 0.0
    %2947 = vmatpush1.msra.mxu0 0.0
    %2948 = vmatprep.subr.mxu0 0.0
    %2949 = vmatpush1.msra.mxu0 0.0
    %2950 = vmatprep.subr.mxu0 0.0
    %2951 = vmatpush1.msra.mxu0 0.0
    %2952 = vmatprep.subr.mxu0 0.0
    %2953 = vmatpush1.msra.mxu0 0.0
    %2954 = vmatprep.subr.mxu0 0.0
    %2955 = vmatpush1.msra.mxu0 0.0
    %2956 = vmatprep.subr.mxu0 0.0
    %2957 = vmatpush1.msra.mxu0 0.0
    %2958 = vmatprep.mubr.f32.mxu0 0.0
    %2959 = vmatmul.mubr.f32.gmra.mrb[0].mxu0 %v2522
    %v2960 = vpop.f32.mrb[0].mxu0
    %v2961 = vadd.f32 %v2819, %v2960
    %v2962 = vpop.f32.mrb[0].mxu0
    %2963 = vdwg.mxu0
    %s2964 = scalar_lea.vmem [#allocation3], 24
    %v2965 = vld [vmem:[%s2964] sm:$0xff]
    %v2966 = vld [vmem:[%s2964 + $0x8] sm:$0xff]
    %v2967 = vld [vmem:[%s2964 + $0x10] sm:$0xff]
    %v2968 = vadd.f32 %v2965, %v2890
    %v2969 = vxor.u32 %v2968, 2147483648
    %v2970 = vmul.f32 %v2969, 1.442695
    %v2971 = vpow.pop %v2970
    %v2972 = vadd.f32 %v2971, 1.0
    %v2973 = vrcp.pop %v2972
    %v2974 = vmul.f32 1.0, %v2973
    %v2975 = vadd.f32 %v2966, %v2892
    %v2976 = vxor.u32 %v2975, 2147483648
    %v2977 = vmul.f32 %v2976, 1.442695
    %v2978 = vpow.pop %v2977
    %v2979 = vadd.f32 %v2978, 1.0
    %v2980 = vrcp.pop %v2979
    %v2981 = vmul.f32 1.0, %v2980
    %v2982 = vmul.f32 %v2974, %v2961
    %v2983 = vadd.f32 %v2967, %v2982
    %v2984 = vtanh.pop %v2983
    %v2985 = vsub.f32 1.0, %v2981
    %v2986 = vmul.f32 %v2985, %v2984
    %v2987 = vmul.f32 %v2981, %v2522
    %v2988 = vadd.f32 %v2986, %v2987
    %s2989 = scalar_lea.vmem %s13, 8
    %2990 = vst [vmem:[%s2989] sm:$0xff] %v2988
    %v2991 = vld [vmem:[#allocation6] sm:$0xff]
    %v2992 = vld [vmem:[#allocation6 + $0x8] sm:$0xff]
    %v2993 = vld [vmem:[#allocation6 + $0x10] sm:$0xff]
    %v2994 = vld [vmem:[#allocation6 + $0x18] sm:$0xff]
    %v2995 = vld [vmem:[#allocation6 + $0x20] sm:$0xff]
    %v2996 = vld [vmem:[#allocation6 + $0x28] sm:$0xff]
    %v2997 = vld [vmem:[#allocation6 + $0x30] sm:$0xff]
    %v2998 = vld [vmem:[#allocation6 + $0x38] sm:$0xff]
    %v2999 = vld [vmem:[#allocation6 + $0x40] sm:$0xff]
    %v3000 = vld [vmem:[#allocation6 + $0x48] sm:$0xff]
    %v3001 = vld [vmem:[#allocation6 + $0x50] sm:$0xff]
    %v3002 = vld [vmem:[#allocation6 + $0x58] sm:$0xff]
    %v3003 = vld [vmem:[#allocation6 + $0x60] sm:$0xff]
    %v3004 = vld [vmem:[#allocation6 + $0x68] sm:$0xff]
    %v3005 = vld [vmem:[#allocation6 + $0x70] sm:$0xff]
    %v3006 = vld [vmem:[#allocation6 + $0x78] sm:$0xff]
    %v3007 = vld [vmem:[#allocation6 + $0x80] sm:$0xff]
    %v3008 = vld [vmem:[#allocation6 + $0x88] sm:$0xff]
    %v3009 = vld [vmem:[#allocation6 + $0x90] sm:$0xff]
    %v3010 = vld [vmem:[#allocation6 + $0x98] sm:$0xff]
    %v3011 = vld [vmem:[#allocation6 + $0xa0] sm:$0xff]
    %v3012 = vld [vmem:[#allocation6 + $0xa8] sm:$0xff]
    %v3013 = vld [vmem:[#allocation6 + $0xb0] sm:$0xff]
    %v3014 = vld [vmem:[#allocation6 + $0xb8] sm:$0xff]
    %v3015 = vld [vmem:[#allocation6 + $0xc0] sm:$0xff]
    %v3016 = vld [vmem:[#allocation6 + $0xc8] sm:$0xff]
    %v3017 = vld [vmem:[#allocation6 + $0xd0] sm:$0xff]
    %v3018 = vld [vmem:[#allocation6 + $0xd8] sm:$0xff]
    %v3019 = vld [vmem:[#allocation6 + $0xe0] sm:$0xff]
    %v3020 = vld [vmem:[#allocation6 + $0xe8] sm:$0xff]
    %v3021 = vld [vmem:[#allocation6 + $0xf0] sm:$0xff]
    %v3022 = vld [vmem:[#allocation6 + $0xf8] sm:$0xff]
    %v3023 = vld [vmem:[#allocation6 + $0x100] sm:$0xff]
    %v3024 = vld [vmem:[#allocation6 + $0x108] sm:$0xff]
    %v3025 = vld [vmem:[#allocation6 + $0x110] sm:$0xff]
    %v3026 = vld [vmem:[#allocation6 + $0x118] sm:$0xff]
    %v3027 = vld [vmem:[#allocation6 + $0x120] sm:$0xff]
    %v3028 = vld [vmem:[#allocation6 + $0x128] sm:$0xff]
    %v3029 = vld [vmem:[#allocation6 + $0x130] sm:$0xff]
    %v3030 = vld [vmem:[#allocation6 + $0x138] sm:$0xff]
    %v3031 = vld [vmem:[#allocation6 + $0x140] sm:$0xff]
    %v3032 = vld [vmem:[#allocation6 + $0x148] sm:$0xff]
    %v3033 = vld [vmem:[#allocation6 + $0x150] sm:$0xff]
    %v3034 = vld [vmem:[#allocation6 + $0x158] sm:$0xff]
    %v3035 = vld [vmem:[#allocation6 + $0x160] sm:$0xff]
    %v3036 = vld [vmem:[#allocation6 + $0x168] sm:$0xff]
    %v3037 = vld [vmem:[#allocation6 + $0x170] sm:$0xff]
    %v3038 = vld [vmem:[#allocation6 + $0x178] sm:$0xff]
    %v3039 = vld [vmem:[%s4] sm:$0x7]
    %v3041 = vlaneseq
    %v3042 = vshrl.u32 %v3041, 7
    %v3043 = vsub.s32 0, %v3042
    %v3044 = vrot.slane %v3039, %v3043
    %v3045 = vlaneseq
    %v3046 = vshrl.u32 %v3045, 7
    %v3047 = vsub.s32 1, %v3046
    %v3048 = vrot.slane %v3039, %v3047
    %v3049 = vlaneseq
    %v3050 = vshrl.u32 %v3049, 7
    %v3051 = vsub.s32 2, %v3050
    %v3052 = vrot.slane %v3039, %v3051
    %3056 = vmatprep.subr.mxu0 %v2992
    %3057 = vmatpush1.msra.mxu0 %v2991
    %3058 = vmatprep.subr.mxu0 %v2995
    %3059 = vmatpush1.msra.mxu0 %v2994
    %3060 = vmatprep.subr.mxu0 %v2998
    %3061 = vmatpush1.msra.mxu0 %v2997
    %3062 = vmatprep.subr.mxu0 %v3001
    %3063 = vmatpush1.msra.mxu0 %v3000
    %3064 = vmatprep.subr.mxu0 %v3004
    %3065 = vmatpush1.msra.mxu0 %v3003
    %3066 = vmatprep.subr.mxu0 %v3007
    %3067 = vmatpush1.msra.mxu0 %v3006
    %3068 = vmatprep.subr.mxu0 %v3010
    %3069 = vmatpush1.msra.mxu0 %v3009
    %3070 = vmatprep.subr.mxu0 %v3013
    %3071 = vmatpush1.msra.mxu0 %v3012
    %3072 = vmatprep.subr.mxu0 %v3016
    %3073 = vmatpush1.msra.mxu0 %v3015
    %3074 = vmatprep.subr.mxu0 %v3019
    %3075 = vmatpush1.msra.mxu0 %v3018
    %3076 = vmatprep.subr.mxu0 %v3022
    %3077 = vmatpush1.msra.mxu0 %v3021
    %3078 = vmatprep.subr.mxu0 %v3025
    %3079 = vmatpush1.msra.mxu0 %v3024
    %3080 = vmatprep.subr.mxu0 %v3028
    %3081 = vmatpush1.msra.mxu0 %v3027
    %3082 = vmatprep.subr.mxu0 %v3031
    %3083 = vmatpush1.msra.mxu0 %v3030
    %3084 = vmatprep.subr.mxu0 %v3034
    %3085 = vmatpush1.msra.mxu0 %v3033
    %3086 = vmatprep.subr.mxu0 %v3037
    %3087 = vmatpush1.msra.mxu0 %v3036
    %3088 = vmatprep.subr.mxu0 0.0
    %3089 = vmatpush1.msra.mxu0 0.0
    %3090 = vmatprep.subr.mxu0 0.0
    %3091 = vmatpush1.msra.mxu0 0.0
    %3092 = vmatprep.subr.mxu0 0.0
    %3093 = vmatpush1.msra.mxu0 0.0
    %3094 = vmatprep.subr.mxu0 0.0
    %3095 = vmatpush1.msra.mxu0 0.0
    %3096 = vmatprep.subr.mxu0 0.0
    %3097 = vmatpush1.msra.mxu0 0.0
    %3098 = vmatprep.subr.mxu0 0.0
    %3099 = vmatpush1.msra.mxu0 0.0
    %3100 = vmatprep.subr.mxu0 0.0
    %3101 = vmatpush1.msra.mxu0 0.0
    %3102 = vmatprep.subr.mxu0 0.0
    %3103 = vmatpush1.msra.mxu0 0.0
    %3104 = vmatprep.subr.mxu0 0.0
    %3105 = vmatpush1.msra.mxu0 0.0
    %3106 = vmatprep.subr.mxu0 0.0
    %3107 = vmatpush1.msra.mxu0 0.0
    %3108 = vmatprep.subr.mxu0 0.0
    %3109 = vmatpush1.msra.mxu0 0.0
    %3110 = vmatprep.subr.mxu0 0.0
    %3111 = vmatpush1.msra.mxu0 0.0
    %3112 = vmatprep.subr.mxu0 0.0
    %3113 = vmatpush1.msra.mxu0 0.0
    %3114 = vmatprep.subr.mxu0 0.0
    %3115 = vmatpush1.msra.mxu0 0.0
    %3116 = vmatprep.subr.mxu0 0.0
    %3117 = vmatpush1.msra.mxu0 0.0
    %3118 = vmatprep.subr.mxu0 0.0
    %3119 = vmatpush1.msra.mxu0 0.0
    %3120 = vmatprep.mubr.f32.mxu0 0.0
    %3121 = vmatmul.mubr.f32.gmra.mrb[0].mxu0 %v2755
    %v3122 = vpop.f32.mrb[0].mxu0
    %v3123 = vadd.f32 %v3044, %v3122
    %v3124 = vpop.f32.mrb[0].mxu0
    %v3125 = vadd.f32 %v3048, %v3124
    %3126 = vdwg.mxu0
    %3127 = vmatprep.subr.mxu0 0.0
    %3128 = vmatpush1.msra.mxu0 %v2993
    %3129 = vmatprep.subr.mxu0 0.0
    %3130 = vmatpush1.msra.mxu0 %v2996
    %3131 = vmatprep.subr.mxu0 0.0
    %3132 = vmatpush1.msra.mxu0 %v2999
    %3133 = vmatprep.subr.mxu0 0.0
    %3134 = vmatpush1.msra.mxu0 %v3002
    %3135 = vmatprep.subr.mxu0 0.0
    %3136 = vmatpush1.msra.mxu0 %v3005
    %3137 = vmatprep.subr.mxu0 0.0
    %3138 = vmatpush1.msra.mxu0 %v3008
    %3139 = vmatprep.subr.mxu0 0.0
    %3140 = vmatpush1.msra.mxu0 %v3011
    %3141 = vmatprep.subr.mxu0 0.0
    %3142 = vmatpush1.msra.mxu0 %v3014
    %3143 = vmatprep.subr.mxu0 0.0
    %3144 = vmatpush1.msra.mxu0 %v3017
    %3145 = vmatprep.subr.mxu0 0.0
    %3146 = vmatpush1.msra.mxu0 %v3020
    %3147 = vmatprep.subr.mxu0 0.0
    %3148 = vmatpush1.msra.mxu0 %v3023
    %3149 = vmatprep.subr.mxu0 0.0
    %3150 = vmatpush1.msra.mxu0 %v3026
    %3151 = vmatprep.subr.mxu0 0.0
    %3152 = vmatpush1.msra.mxu0 %v3029
    %3153 = vmatprep.subr.mxu0 0.0
    %3154 = vmatpush1.msra.mxu0 %v3032
    %3155 = vmatprep.subr.mxu0 0.0
    %3156 = vmatpush1.msra.mxu0 %v3035
    %3157 = vmatprep.subr.mxu0 0.0
    %3158 = vmatpush1.msra.mxu0 %v3038
    %3159 = vmatprep.subr.mxu0 0.0
    %3160 = vmatpush1.msra.mxu0 0.0
    %3161 = vmatprep.subr.mxu0 0.0
    %3162 = vmatpush1.msra.mxu0 0.0
    %3163 = vmatprep.subr.mxu0 0.0
    %3164 = vmatpush1.msra.mxu0 0.0
    %3165 = vmatprep.subr.mxu0 0.0
    %3166 = vmatpush1.msra.mxu0 0.0
    %3167 = vmatprep.subr.mxu0 0.0
    %3168 = vmatpush1.msra.mxu0 0.0
    %3169 = vmatprep.subr.mxu0 0.0
    %3170 = vmatpush1.msra.mxu0 0.0
    %3171 = vmatprep.subr.mxu0 0.0
    %3172 = vmatpush1.msra.mxu0 0.0
    %3173 = vmatprep.subr.mxu0 0.0
    %3174 = vmatpush1.msra.mxu0 0.0
    %3175 = vmatprep.subr.mxu0 0.0
    %3176 = vmatpush1.msra.mxu0 0.0
    %3177 = vmatprep.subr.mxu0 0.0
    %3178 = vmatpush1.msra.mxu0 0.0
    %3179 = vmatprep.subr.mxu0 0.0
    %3180 = vmatpush1.msra.mxu0 0.0
    %3181 = vmatprep.subr.mxu0 0.0
    %3182 = vmatpush1.msra.mxu0 0.0
    %3183 = vmatprep.subr.mxu0 0.0
    %3184 = vmatpush1.msra.mxu0 0.0
    %3185 = vmatprep.subr.mxu0 0.0
    %3186 = vmatpush1.msra.mxu0 0.0
    %3187 = vmatprep.subr.mxu0 0.0
    %3188 = vmatpush1.msra.mxu0 0.0
    %3189 = vmatprep.subr.mxu0 0.0
    %3190 = vmatpush1.msra.mxu0 0.0
    %3191 = vmatprep.mubr.f32.mxu0 0.0
    %3192 = vmatmul.mubr.f32.gmra.mrb[0].mxu0 %v2755
    %v3193 = vpop.f32.mrb[0].mxu0
    %v3194 = vadd.f32 %v3052, %v3193
    %v3195 = vpop.f32.mrb[0].mxu0
    %3196 = vdwg.mxu0
    %s3197 = scalar_lea.vmem [#allocation2], 120
    %v3198 = vld [vmem:[%s3197] sm:$0xff]
    %v3199 = vld [vmem:[%s3197 + $0x8] sm:$0xff]
    %v3200 = vld [vmem:[%s3197 + $0x10] sm:$0xff]
    %v3201 = vadd.f32 %v3198, %v3123
    %v3202 = vxor.u32 %v3201, 2147483648
    %v3203 = vmul.f32 %v3202, 1.442695
    %v3204 = vpow.pop %v3203
    %v3205 = vadd.f32 %v3204, 1.0
    %v3206 = vrcp.pop %v3205
    %v3207 = vmul.f32 1.0, %v3206
    %v3208 = vadd.f32 %v3199, %v3125
    %v3209 = vxor.u32 %v3208, 2147483648
    %v3210 = vmul.f32 %v3209, 1.442695
    %v3211 = vpow.pop %v3210
    %v3212 = vadd.f32 %v3211, 1.0
    %v3213 = vrcp.pop %v3212
    %v3214 = vmul.f32 1.0, %v3213
    %v3215 = vmul.f32 %v3207, %v3194
    %v3216 = vadd.f32 %v3200, %v3215
    %v3217 = vtanh.pop %v3216
    %v3218 = vsub.f32 1.0, %v3214
    %v3219 = vmul.f32 %v3218, %v3217
    %v3220 = vmul.f32 %v3214, %v2755
    %v3221 = vadd.f32 %v3219, %v3220
    %s3222 = scalar_lea.vmem %s12, 40
    %3223 = vst [vmem:[%s3222] sm:$0xff] %v3221
    %v3224 = vld [vmem:[#allocation9] sm:$0xff]
    %v3225 = vld [vmem:[#allocation9 + $0x8] sm:$0xff]
    %v3226 = vld [vmem:[#allocation9 + $0x10] sm:$0xff]
    %v3227 = vld [vmem:[#allocation9 + $0x18] sm:$0xff]
    %v3228 = vld [vmem:[#allocation9 + $0x20] sm:$0xff]
    %v3229 = vld [vmem:[#allocation9 + $0x28] sm:$0xff]
    %v3230 = vld [vmem:[#allocation9 + $0x30] sm:$0xff]
    %v3231 = vld [vmem:[#allocation9 + $0x38] sm:$0xff]
    %v3232 = vld [vmem:[#allocation9 + $0x40] sm:$0xff]
    %v3233 = vld [vmem:[#allocation9 + $0x48] sm:$0xff]
    %v3234 = vld [vmem:[#allocation9 + $0x50] sm:$0xff]
    %v3235 = vld [vmem:[#allocation9 + $0x58] sm:$0xff]
    %v3236 = vld [vmem:[#allocation9 + $0x60] sm:$0xff]
    %v3237 = vld [vmem:[#allocation9 + $0x68] sm:$0xff]
    %v3238 = vld [vmem:[#allocation9 + $0x70] sm:$0xff]
    %v3239 = vld [vmem:[#allocation9 + $0x78] sm:$0xff]
    %v3240 = vld [vmem:[#allocation9 + $0x80] sm:$0xff]
    %v3241 = vld [vmem:[#allocation9 + $0x88] sm:$0xff]
    %v3242 = vld [vmem:[#allocation9 + $0x90] sm:$0xff]
    %v3243 = vld [vmem:[#allocation9 + $0x98] sm:$0xff]
    %v3244 = vld [vmem:[#allocation9 + $0xa0] sm:$0xff]
    %v3245 = vld [vmem:[#allocation9 + $0xa8] sm:$0xff]
    %v3246 = vld [vmem:[#allocation9 + $0xb0] sm:$0xff]
    %v3247 = vld [vmem:[#allocation9 + $0xb8] sm:$0xff]
    %v3248 = vld [vmem:[#allocation9 + $0xc0] sm:$0xff]
    %v3249 = vld [vmem:[#allocation9 + $0xc8] sm:$0xff]
    %v3250 = vld [vmem:[#allocation9 + $0xd0] sm:$0xff]
    %v3251 = vld [vmem:[#allocation9 + $0xd8] sm:$0xff]
    %v3252 = vld [vmem:[#allocation9 + $0xe0] sm:$0xff]
    %v3253 = vld [vmem:[#allocation9 + $0xe8] sm:$0xff]
    %v3254 = vld [vmem:[#allocation9 + $0xf0] sm:$0xff]
    %v3255 = vld [vmem:[#allocation9 + $0xf8] sm:$0xff]
    %v3256 = vld [vmem:[#allocation9 + $0x100] sm:$0xff]
    %v3257 = vld [vmem:[#allocation9 + $0x108] sm:$0xff]
    %v3258 = vld [vmem:[#allocation9 + $0x110] sm:$0xff]
    %v3259 = vld [vmem:[#allocation9 + $0x118] sm:$0xff]
    %v3260 = vld [vmem:[#allocation9 + $0x120] sm:$0xff]
    %v3261 = vld [vmem:[#allocation9 + $0x128] sm:$0xff]
    %v3262 = vld [vmem:[#allocation9 + $0x130] sm:$0xff]
    %v3263 = vld [vmem:[#allocation9 + $0x138] sm:$0xff]
    %v3264 = vld [vmem:[#allocation9 + $0x140] sm:$0xff]
    %v3265 = vld [vmem:[#allocation9 + $0x148] sm:$0xff]
    %v3266 = vld [vmem:[#allocation9 + $0x150] sm:$0xff]
    %v3267 = vld [vmem:[#allocation9 + $0x158] sm:$0xff]
    %v3268 = vld [vmem:[#allocation9 + $0x160] sm:$0xff]
    %v3269 = vld [vmem:[#allocation9 + $0x168] sm:$0xff]
    %v3270 = vld [vmem:[#allocation9 + $0x170] sm:$0xff]
    %v3271 = vld [vmem:[#allocation9 + $0x178] sm:$0xff]
    %v3272 = vld [vmem:[%s8] sm:$0x7]
    %v3274 = vlaneseq
    %v3275 = vshrl.u32 %v3274, 7
    %v3276 = vsub.s32 0, %v3275
    %v3277 = vrot.slane %v3272, %v3276
    %v3278 = vlaneseq
    %v3279 = vshrl.u32 %v3278, 7
    %v3280 = vsub.s32 1, %v3279
    %v3281 = vrot.slane %v3272, %v3280
    %v3282 = vlaneseq
    %v3283 = vshrl.u32 %v3282, 7
    %v3284 = vsub.s32 2, %v3283
    %v3285 = vrot.slane %v3272, %v3284
    %3289 = vmatprep.subr.mxu0 %v3225
    %3290 = vmatpush1.msra.mxu0 %v3224
    %3291 = vmatprep.subr.mxu0 %v3228
    %3292 = vmatpush1.msra.mxu0 %v3227
    %3293 = vmatprep.subr.mxu0 %v3231
    %3294 = vmatpush1.msra.mxu0 %v3230
    %3295 = vmatprep.subr.mxu0 %v3234
    %3296 = vmatpush1.msra.mxu0 %v3233
    %3297 = vmatprep.subr.mxu0 %v3237
    %3298 = vmatpush1.msra.mxu0 %v3236
    %3299 = vmatprep.subr.mxu0 %v3240
    %3300 = vmatpush1.msra.mxu0 %v3239
    %3301 = vmatprep.subr.mxu0 %v3243
    %3302 = vmatpush1.msra.mxu0 %v3242
    %3303 = vmatprep.subr.mxu0 %v3246
    %3304 = vmatpush1.msra.mxu0 %v3245
    %3305 = vmatprep.subr.mxu0 %v3249
    %3306 = vmatpush1.msra.mxu0 %v3248
    %3307 = vmatprep.subr.mxu0 %v3252
    %3308 = vmatpush1.msra.mxu0 %v3251
    %3309 = vmatprep.subr.mxu0 %v3255
    %3310 = vmatpush1.msra.mxu0 %v3254
    %3311 = vmatprep.subr.mxu0 %v3258
    %3312 = vmatpush1.msra.mxu0 %v3257
    %3313 = vmatprep.subr.mxu0 %v3261
    %3314 = vmatpush1.msra.mxu0 %v3260
    %3315 = vmatprep.subr.mxu0 %v3264
    %3316 = vmatpush1.msra.mxu0 %v3263
    %3317 = vmatprep.subr.mxu0 %v3267
    %3318 = vmatpush1.msra.mxu0 %v3266
    %3319 = vmatprep.subr.mxu0 %v3270
    %3320 = vmatpush1.msra.mxu0 %v3269
    %3321 = vmatprep.subr.mxu0 0.0
    %3322 = vmatpush1.msra.mxu0 0.0
    %3323 = vmatprep.subr.mxu0 0.0
    %3324 = vmatpush1.msra.mxu0 0.0
    %3325 = vmatprep.subr.mxu0 0.0
    %3326 = vmatpush1.msra.mxu0 0.0
    %3327 = vmatprep.subr.mxu0 0.0
    %3328 = vmatpush1.msra.mxu0 0.0
    %3329 = vmatprep.subr.mxu0 0.0
    %3330 = vmatpush1.msra.mxu0 0.0
    %3331 = vmatprep.subr.mxu0 0.0
    %3332 = vmatpush1.msra.mxu0 0.0
    %3333 = vmatprep.subr.mxu0 0.0
    %3334 = vmatpush1.msra.mxu0 0.0
    %3335 = vmatprep.subr.mxu0 0.0
    %3336 = vmatpush1.msra.mxu0 0.0
    %3337 = vmatprep.subr.mxu0 0.0
    %3338 = vmatpush1.msra.mxu0 0.0
    %3339 = vmatprep.subr.mxu0 0.0
    %3340 = vmatpush1.msra.mxu0 0.0
    %3341 = vmatprep.subr.mxu0 0.0
    %3342 = vmatpush1.msra.mxu0 0.0
    %3343 = vmatprep.subr.mxu0 0.0
    %3344 = vmatpush1.msra.mxu0 0.0
    %3345 = vmatprep.subr.mxu0 0.0
    %3346 = vmatpush1.msra.mxu0 0.0
    %3347 = vmatprep.subr.mxu0 0.0
    %3348 = vmatpush1.msra.mxu0 0.0
    %3349 = vmatprep.subr.mxu0 0.0
    %3350 = vmatpush1.msra.mxu0 0.0
    %3351 = vmatprep.subr.mxu0 0.0
    %3352 = vmatpush1.msra.mxu0 0.0
    %3353 = vmatprep.mubr.f32.mxu0 0.0
    %3354 = vmatmul.mubr.f32.gmra.mrb[0].mxu0 %v2988
    %v3355 = vpop.f32.mrb[0].mxu0
    %v3356 = vadd.f32 %v3277, %v3355
    %v3357 = vpop.f32.mrb[0].mxu0
    %v3358 = vadd.f32 %v3281, %v3357
    %3359 = vdwg.mxu0
    %3360 = vmatprep.subr.mxu0 0.0
    %3361 = vmatpush1.msra.mxu0 %v3226
    %3362 = vmatprep.subr.mxu0 0.0
    %3363 = vmatpush1.msra.mxu0 %v3229
    %3364 = vmatprep.subr.mxu0 0.0
    %3365 = vmatpush1.msra.mxu0 %v3232
    %3366 = vmatprep.subr.mxu0 0.0
    %3367 = vmatpush1.msra.mxu0 %v3235
    %3368 = vmatprep.subr.mxu0 0.0
    %3369 = vmatpush1.msra.mxu0 %v3238
    %3370 = vmatprep.subr.mxu0 0.0
    %3371 = vmatpush1.msra.mxu0 %v3241
    %3372 = vmatprep.subr.mxu0 0.0
    %3373 = vmatpush1.msra.mxu0 %v3244
    %3374 = vmatprep.subr.mxu0 0.0
    %3375 = vmatpush1.msra.mxu0 %v3247
    %3376 = vmatprep.subr.mxu0 0.0
    %3377 = vmatpush1.msra.mxu0 %v3250
    %3378 = vmatprep.subr.mxu0 0.0
    %3379 = vmatpush1.msra.mxu0 %v3253
    %3380 = vmatprep.subr.mxu0 0.0
    %3381 = vmatpush1.msra.mxu0 %v3256
    %3382 = vmatprep.subr.mxu0 0.0
    %3383 = vmatpush1.msra.mxu0 %v3259
    %3384 = vmatprep.subr.mxu0 0.0
    %3385 = vmatpush1.msra.mxu0 %v3262
    %3386 = vmatprep.subr.mxu0 0.0
    %3387 = vmatpush1.msra.mxu0 %v3265
    %3388 = vmatprep.subr.mxu0 0.0
    %3389 = vmatpush1.msra.mxu0 %v3268
    %3390 = vmatprep.subr.mxu0 0.0
    %3391 = vmatpush1.msra.mxu0 %v3271
    %3392 = vmatprep.subr.mxu0 0.0
    %3393 = vmatpush1.msra.mxu0 0.0
    %3394 = vmatprep.subr.mxu0 0.0
    %3395 = vmatpush1.msra.mxu0 0.0
    %3396 = vmatprep.subr.mxu0 0.0
    %3397 = vmatpush1.msra.mxu0 0.0
    %3398 = vmatprep.subr.mxu0 0.0
    %3399 = vmatpush1.msra.mxu0 0.0
    %3400 = vmatprep.subr.mxu0 0.0
    %3401 = vmatpush1.msra.mxu0 0.0
    %3402 = vmatprep.subr.mxu0 0.0
    %3403 = vmatpush1.msra.mxu0 0.0
    %3404 = vmatprep.subr.mxu0 0.0
    %3405 = vmatpush1.msra.mxu0 0.0
    %3406 = vmatprep.subr.mxu0 0.0
    %3407 = vmatpush1.msra.mxu0 0.0
    %3408 = vmatprep.subr.mxu0 0.0
    %3409 = vmatpush1.msra.mxu0 0.0
    %3410 = vmatprep.subr.mxu0 0.0
    %3411 = vmatpush1.msra.mxu0 0.0
    %3412 = vmatprep.subr.mxu0 0.0
    %3413 = vmatpush1.msra.mxu0 0.0
    %3414 = vmatprep.subr.mxu0 0.0
    %3415 = vmatpush1.msra.mxu0 0.0
    %3416 = vmatprep.subr.mxu0 0.0
    %3417 = vmatpush1.msra.mxu0 0.0
    %3418 = vmatprep.subr.mxu0 0.0
    %3419 = vmatpush1.msra.mxu0 0.0
    %3420 = vmatprep.subr.mxu0 0.0
    %3421 = vmatpush1.msra.mxu0 0.0
    %3422 = vmatprep.subr.mxu0 0.0
    %3423 = vmatpush1.msra.mxu0 0.0
    %3424 = vmatprep.mubr.f32.mxu0 0.0
    %3425 = vmatmul.mubr.f32.gmra.mrb[0].mxu0 %v2988
    %v3426 = vpop.f32.mrb[0].mxu0
    %v3427 = vadd.f32 %v3285, %v3426
    %v3428 = vpop.f32.mrb[0].mxu0
    %3429 = vdwg.mxu0
    %v3430 = vld [vmem:[#allocation3] sm:$0xff]
    %v3431 = vld [vmem:[#allocation3 + $0x8] sm:$0xff]
    %v3432 = vld [vmem:[#allocation3 + $0x10] sm:$0xff]
    %v3433 = vadd.f32 %v3430, %v3356
    %v3434 = vxor.u32 %v3433, 2147483648
    %v3435 = vmul.f32 %v3434, 1.442695
    %v3436 = vpow.pop %v3435
    %v3437 = vadd.f32 %v3436, 1.0
    %v3438 = vrcp.pop %v3437
    %v3439 = vmul.f32 1.0, %v3438
    %v3440 = vadd.f32 %v3431, %v3358
    %v3441 = vxor.u32 %v3440, 2147483648
    %v3442 = vmul.f32 %v3441, 1.442695
    %v3443 = vpow.pop %v3442
    %v3444 = vadd.f32 %v3443, 1.0
    %v3445 = vrcp.pop %v3444
    %v3446 = vmul.f32 1.0, %v3445
    %v3447 = vmul.f32 %v3439, %v3427
    %v3448 = vadd.f32 %v3432, %v3447
    %v3449 = vtanh.pop %v3448
    %v3450 = vsub.f32 1.0, %v3446
    %v3451 = vmul.f32 %v3450, %v3449
    %v3452 = vmul.f32 %v3446, %v2988
    %v3453 = vadd.f32 %v3451, %v3452
    %3454 = vst [vmem:[%s13] sm:$0xff] %v3453
    %v3455 = vld [vmem:[%s9] sm:$0xff]
    %v3456 = vld [vmem:[%s9 + $0x8] sm:$0xff]
    %v3457 = vld [vmem:[%s9 + $0x10] sm:$0xff]
    %v3458 = vld [vmem:[%s9 + $0x18] sm:$0xff]
    %v3459 = vld [vmem:[%s9 + $0x20] sm:$0xff]
    %v3460 = vld [vmem:[%s9 + $0x28] sm:$0xff]
    %v3461 = vld [vmem:[%s9 + $0x30] sm:$0xff]
    %v3462 = vld [vmem:[%s9 + $0x38] sm:$0xff]
    %v3463 = vld [vmem:[%s9 + $0x40] sm:$0xff]
    %v3464 = vld [vmem:[%s9 + $0x48] sm:$0xff]
    %v3465 = vld [vmem:[%s9 + $0x50] sm:$0xff]
    %v3466 = vld [vmem:[%s9 + $0x58] sm:$0xff]
    %v3467 = vld [vmem:[%s9 + $0x60] sm:$0xff]
    %v3468 = vld [vmem:[%s9 + $0x68] sm:$0xff]
    %v3469 = vld [vmem:[%s9 + $0x70] sm:$0xff]
    %v3470 = vld [vmem:[%s9 + $0x78] sm:$0xff]
    %v3471 = vld [vmem:[%s10] sm:$0xff]
    %v3472 = vld [vmem:[%s10 + $0x8] sm:$0xff]
    %v3473 = vld [vmem:[%s10 + $0x10] sm:$0xff]
    %v3474 = vld [vmem:[%s10 + $0x18] sm:$0xff]
    %v3475 = vld [vmem:[%s10 + $0x20] sm:$0xff]
    %v3476 = vld [vmem:[%s10 + $0x28] sm:$0xff]
    %v3477 = vld [vmem:[%s10 + $0x30] sm:$0xff]
    %v3478 = vld [vmem:[%s10 + $0x38] sm:$0xff]
    %v3479 = vld [vmem:[%s10 + $0x40] sm:$0xff]
    %v3480 = vld [vmem:[%s10 + $0x48] sm:$0xff]
    %v3481 = vld [vmem:[%s10 + $0x50] sm:$0xff]
    %v3482 = vld [vmem:[%s10 + $0x58] sm:$0xff]
    %v3483 = vld [vmem:[%s10 + $0x60] sm:$0xff]
    %v3484 = vld [vmem:[%s10 + $0x68] sm:$0xff]
    %v3485 = vld [vmem:[%s10 + $0x70] sm:$0xff]
    %v3486 = vld [vmem:[%s10 + $0x78] sm:$0xff]
    %3487 = vmatprep.subr.mxu0 0.0
    %3488 = vmatpush1.msra.mxu0 %v3471
    %3489 = vmatprep.subr.mxu0 0.0
    %3490 = vmatpush1.msra.mxu0 %v3472
    %3491 = vmatprep.subr.mxu0 0.0
    %3492 = vmatpush1.msra.mxu0 %v3473
    %3493 = vmatprep.subr.mxu0 0.0
    %3494 = vmatpush1.msra.mxu0 %v3474
    %3495 = vmatprep.subr.mxu0 0.0
    %3496 = vmatpush1.msra.mxu0 %v3475
    %3497 = vmatprep.subr.mxu0 0.0
    %3498 = vmatpush1.msra.mxu0 %v3476
    %3499 = vmatprep.subr.mxu0 0.0
    %3500 = vmatpush1.msra.mxu0 %v3477
    %3501 = vmatprep.subr.mxu0 0.0
    %3502 = vmatpush1.msra.mxu0 %v3478
    %3503 = vmatprep.subr.mxu0 0.0
    %3504 = vmatpush1.msra.mxu0 %v3479
    %3505 = vmatprep.subr.mxu0 0.0
    %3506 = vmatpush1.msra.mxu0 %v3480
    %3507 = vmatprep.subr.mxu0 0.0
    %3508 = vmatpush1.msra.mxu0 %v3481
    %3509 = vmatprep.subr.mxu0 0.0
    %3510 = vmatpush1.msra.mxu0 %v3482
    %3511 = vmatprep.subr.mxu0 0.0
    %3512 = vmatpush1.msra.mxu0 %v3483
    %3513 = vmatprep.subr.mxu0 0.0
    %3514 = vmatpush1.msra.mxu0 %v3484
    %3515 = vmatprep.subr.mxu0 0.0
    %3516 = vmatpush1.msra.mxu0 %v3485
    %3517 = vmatprep.subr.mxu0 0.0
    %3518 = vmatpush1.msra.mxu0 %v3486
    %3519 = vmatprep.subr.mxu0 0.0
    %3520 = vmatpush1.msra.mxu0 0.0
    %3521 = vmatprep.subr.mxu0 0.0
    %3522 = vmatpush1.msra.mxu0 0.0
    %3523 = vmatprep.subr.mxu0 0.0
    %3524 = vmatpush1.msra.mxu0 0.0
    %3525 = vmatprep.subr.mxu0 0.0
    %3526 = vmatpush1.msra.mxu0 0.0
    %3527 = vmatprep.subr.mxu0 0.0
    %3528 = vmatpush1.msra.mxu0 0.0
    %3529 = vmatprep.subr.mxu0 0.0
    %3530 = vmatpush1.msra.mxu0 0.0
    %3531 = vmatprep.subr.mxu0 0.0
    %3532 = vmatpush1.msra.mxu0 0.0
    %3533 = vmatprep.subr.mxu0 0.0
    %3534 = vmatpush1.msra.mxu0 0.0
    %3535 = vmatprep.subr.mxu0 0.0
    %3536 = vmatpush1.msra.mxu0 0.0
    %3537 = vmatprep.subr.mxu0 0.0
    %3538 = vmatpush1.msra.mxu0 0.0
    %3539 = vmatprep.subr.mxu0 0.0
    %3540 = vmatpush1.msra.mxu0 0.0
    %3541 = vmatprep.subr.mxu0 0.0
    %3542 = vmatpush1.msra.mxu0 0.0
    %3543 = vmatprep.subr.mxu0 0.0
    %3544 = vmatpush1.msra.mxu0 0.0
    %3545 = vmatprep.subr.mxu0 0.0
    %3546 = vmatpush1.msra.mxu0 0.0
    %3547 = vmatprep.subr.mxu0 0.0
    %3548 = vmatpush1.msra.mxu0 0.0
    %3549 = vmatprep.subr.mxu0 0.0
    %3550 = vmatpush1.msra.mxu0 0.0
    %3551 = vmatprep.mubr.f32.mxu0 0.0
    %3552 = vmatmul.mubr.f32.gmra.mrb[0].mxu0 %v3453
    %v3553 = vpop.f32.mrb[0].mxu0
    %v3554 = vadd.f32 0.0, %v3553
    %v3555 = vpop.f32.mrb[0].mxu0
    %3556 = vdwg.mxu0
    %3557 = vmatprep.subr.mxu0 0.0
    %3558 = vmatpush1.msra.mxu0 %v3455
    %3559 = vmatprep.subr.mxu0 0.0
    %3560 = vmatpush1.msra.mxu0 %v3456
    %3561 = vmatprep.subr.mxu0 0.0
    %3562 = vmatpush1.msra.mxu0 %v3457
    %3563 = vmatprep.subr.mxu0 0.0
    %3564 = vmatpush1.msra.mxu0 %v3458
    %3565 = vmatprep.subr.mxu0 0.0
    %3566 = vmatpush1.msra.mxu0 %v3459
    %3567 = vmatprep.subr.mxu0 0.0
    %3568 = vmatpush1.msra.mxu0 %v3460
    %3569 = vmatprep.subr.mxu0 0.0
    %3570 = vmatpush1.msra.mxu0 %v3461
    %3571 = vmatprep.subr.mxu0 0.0
    %3572 = vmatpush1.msra.mxu0 %v3462
    %3573 = vmatprep.subr.mxu0 0.0
    %3574 = vmatpush1.msra.mxu0 %v3463
    %3575 = vmatprep.subr.mxu0 0.0
    %3576 = vmatpush1.msra.mxu0 %v3464
    %3577 = vmatprep.subr.mxu0 0.0
    %3578 = vmatpush1.msra.mxu0 %v3465
    %3579 = vmatprep.subr.mxu0 0.0
    %3580 = vmatpush1.msra.mxu0 %v3466
    %3581 = vmatprep.subr.mxu0 0.0
    %3582 = vmatpush1.msra.mxu0 %v3467
    %3583 = vmatprep.subr.mxu0 0.0
    %3584 = vmatpush1.msra.mxu0 %v3468
    %3585 = vmatprep.subr.mxu0 0.0
    %3586 = vmatpush1.msra.mxu0 %v3469
    %3587 = vmatprep.subr.mxu0 0.0
    %3588 = vmatpush1.msra.mxu0 %v3470
    %3589 = vmatprep.subr.mxu0 0.0
    %3590 = vmatpush1.msra.mxu0 0.0
    %3591 = vmatprep.subr.mxu0 0.0
    %3592 = vmatpush1.msra.mxu0 0.0
    %3593 = vmatprep.subr.mxu0 0.0
    %3594 = vmatpush1.msra.mxu0 0.0
    %3595 = vmatprep.subr.mxu0 0.0
    %3596 = vmatpush1.msra.mxu0 0.0
    %3597 = vmatprep.subr.mxu0 0.0
    %3598 = vmatpush1.msra.mxu0 0.0
    %3599 = vmatprep.subr.mxu0 0.0
    %3600 = vmatpush1.msra.mxu0 0.0
    %3601 = vmatprep.subr.mxu0 0.0
    %3602 = vmatpush1.msra.mxu0 0.0
    %3603 = vmatprep.subr.mxu0 0.0
    %3604 = vmatpush1.msra.mxu0 0.0
    %3605 = vmatprep.subr.mxu0 0.0
    %3606 = vmatpush1.msra.mxu0 0.0
    %3607 = vmatprep.subr.mxu0 0.0
    %3608 = vmatpush1.msra.mxu0 0.0
    %3609 = vmatprep.subr.mxu0 0.0
    %3610 = vmatpush1.msra.mxu0 0.0
    %3611 = vmatprep.subr.mxu0 0.0
    %3612 = vmatpush1.msra.mxu0 0.0
    %3613 = vmatprep.subr.mxu0 0.0
    %3614 = vmatpush1.msra.mxu0 0.0
    %3615 = vmatprep.subr.mxu0 0.0
    %3616 = vmatpush1.msra.mxu0 0.0
    %3617 = vmatprep.subr.mxu0 0.0
    %3618 = vmatpush1.msra.mxu0 0.0
    %3619 = vmatprep.subr.mxu0 0.0
    %3620 = vmatpush1.msra.mxu0 0.0
    %3621 = vmatprep.mubr.f32.mxu0 0.0
    %3622 = vmatmul.mubr.f32.gmra.mrb[0].mxu0 %v3221
    %v3623 = vpop.f32.mrb[0].mxu0
    %v3624 = vadd.f32 %v3554, %v3623
    %v3625 = vpop.f32.mrb[0].mxu0
    %3626 = vdwg.mxu0
    %v3627 = vld [vmem:[%s11] sm:$0x1]
    %v3629 = vlaneseq
    %v3630 = vshrl.u32 %v3629, 7
    %v3631 = vsub.s32 0, %v3630
    %v3632 = vrot.slane %v3627, %v3631
    %v3634 = vadd.f32 %v3624, %v3632
    %v3635 = vtanh.pop %v3634
    %3636 = vst [vmem:[%s14] sm:$0xff] %v3635
    // Predicated region
    $region66: #{seq2seq_forward.2} parent=1 // pred_check
      _
    $region67: #{seq2seq_forward.2} parent=1 // pred_check_branch
      %3638 = sbr.rel (0) target = $region69
    $region68: #{seq2seq_forward.2} parent=1 // pred_region
      _
    $region69: #{seq2seq_forward.2} parent=1 // pred_fallthru
      _
    // Predicated region
    $region70: #{seq2seq_forward.2} parent=1 // pred_check
      _
    $region71: #{seq2seq_forward.2} parent=1 // pred_check_branch
      %3640 = sbr.rel (0) target = $region73
    $region72: #{seq2seq_forward.2} parent=1 // pred_region
      _
    $region73: #{seq2seq_forward.2} parent=1 // pred_fallthru
      _
    // Predicated region
    $region74: #{seq2seq_forward.2} parent=1 // pred_check
      _
    $region75: #{seq2seq_forward.2} parent=1 // pred_check_branch
      %3642 = sbr.rel (0) target = $region77
    $region76: #{seq2seq_forward.2} parent=1 // pred_region
      _
    $region77: #{seq2seq_forward.2} parent=1 // pred_fallthru
      _
    // Predicated region
    $region78: #{seq2seq_forward.2} parent=1 // pred_check
      _
    $region79: #{seq2seq_forward.2} parent=1 // pred_check_branch
      %3644 = sbr.rel (0) target = $region81
    $region80: #{seq2seq_forward.2} parent=1 // pred_region
      _
    $region81: #{seq2seq_forward.2} parent=1 // pred_fallthru
      _
    // Predicated region
    $region82: #{seq2seq_forward.2} parent=1 // pred_check
      _
    $region83: #{seq2seq_forward.2} parent=1 // pred_check_branch
      %3646 = sbr.rel (0) target = $region85
    $region84: #{seq2seq_forward.2} parent=1 // pred_region
      _
    $region85: #{seq2seq_forward.2} parent=1 // pred_fallthru
      _
    // Predicated region
    $region86: #{seq2seq_forward.2} parent=1 // pred_check
      _
    $region87: #{seq2seq_forward.2} parent=1 // pred_check_branch
      %3648 = sbr.rel (0) target = $region89
    $region88: #{seq2seq_forward.2} parent=1 // pred_region
      _
    $region89: #{seq2seq_forward.2} parent=1 // pred_fallthru
      _
    %3649 = vsyncpa [#allocation5], 1
    %3650 = vsyncpa [#allocation7], 1
    %3651 = vsyncpa [#allocation10], 1

// kernel: seq2seq_forward.3
$region0: #{seq2seq_forward.3}
  #allocation0 [shape = 'u32[]', space=smem, size = 0x4, offset = 0x4, fixed_abs, tag = 'smem constant byte address 0x4 - core index']
  #allocation1 [shape = 'u32[144,128]{1,0:T(1,128)}', space=vmem, size = 0x12000, scoped, tag = 'internal scratch']
  #allocation2 [shape = 'f32[6,8,128]{2,1,0:T(8,128)}', space=vmem, size = 0x6000, scoped, tag = 'scratch operand']
  #allocation3 [shape = 'f32[8,128]{1,0:T(8,128)}', space=vmem, size = 0x1000, scoped, tag = 'scratch operand']
  %s0 = inlined_call_operand.hbm [shape: s32[4], index: 0, kind: input, shape index: {}]
  %s1 = inlined_call_operand.vmem [shape: s32[5,8,1], index: 1, kind: input, shape index: {}]
  %s2 = inlined_call_operand.vmem [shape: f32[6,8,128], index: 2, kind: input, shape index: {}]
  %s3 = inlined_call_operand.vmem [shape: f32[6,8,128], index: 3, kind: input, shape index: {}]
  %s4 = inlined_call_operand.vmem [shape: f32[8,128], index: 4, kind: input, shape index: {}]
  %s5 = inlined_call_operand.hbm [shape: f32[128,128], index: 5, kind: input, shape index: {}]
  %s6 = inlined_call_operand.hbm [shape: f32[128,128], index: 6, kind: input, shape index: {}]
  %s7 = inlined_call_operand.hbm [shape: f32[128,128], index: 7, kind: input, shape index: {}]
  %s8 = inlined_call_operand.vmem [shape: f32[1,128], index: 8, kind: input, shape index: {}]
  %s9 = inlined_call_operand.vmem [shape: f32[1,1,128], index: 9, kind: input, shape index: {}]
  %s10 = inlined_call_operand.vmem [shape: f32[128,512], index: 10, kind: input, shape index: {}]
  %s11 = inlined_call_operand.vmem [shape: f32[1,512], index: 11, kind: input, shape index: {}]
  %s12 = inlined_call_operand.vmem [shape: f32[128,512], index: 12, kind: input, shape index: {}]
  %s13 = inlined_call_operand.vmem [shape: f32[128,512], index: 13, kind: input, shape index: {}]
  %s14 = inlined_call_operand.vmem [shape: f32[128,512], index: 14, kind: input, shape index: {}]
  %s15 = inlined_call_operand.vmem [shape: f32[1,512], index: 15, kind: input, shape index: {}]
  %s16 = inlined_call_operand.hbm [shape: f32[128,128], index: 16, kind: input, shape index: {}]
  %s17 = inlined_call_operand.vmem [shape: f32[5,8,128], index: 17, kind: output, shape index: {}]
  %s18 = sld [smem:[#allocation0]]
  $region122: #{seq2seq_forward.3} parent=0
    _
  %s20 = ssub.s32 1, %s18
  %s21 = scalar_select 0, %s20, %s18
  $region1: #{seq2seq_forward.3} parent=0
    #allocation4 [shape = 'u8[512]{0}', space=smem, size = 0x200, scoped, tag = 'input window, operand 0, single buffered']
    #allocation5 [shape = 's32[1]{0}', space=sflag, size = 0x4, scoped, tag = 'scoped memory for seq2seq_forward.3']
    #allocation6 [shape = 's32[1]{0}', space=sflag, size = 0x4, scoped, tag = 'scoped memory for seq2seq_forward.3']
    #allocation7 [shape = 'u8[65536]{0}', space=vmem, size = 0x10000, scoped, tag = 'input window, operand 5, single buffered']
    #allocation8 [shape = 'u8[65536]{0}', space=vmem, size = 0x10000, scoped, tag = 'input window, operand 6, single buffered']
    #allocation9 [shape = 's32[1]{0}', space=sflag, size = 0x4, scoped, tag = 'scoped memory for seq2seq_forward.3']
    #allocation10 [shape = 'u8[65536]{0}', space=vmem, size = 0x10000, scoped, tag = 'input window, operand 7, single buffered']
    #allocation11 [shape = 'u8[65536]{0}', space=vmem, size = 0x10000, scoped, tag = 'input window, operand 16, single buffered']
    #allocation12 [shape = 's32[1]{0}', space=sflag, size = 0x4, scoped, tag = 'scoped memory for seq2seq_forward.3']
    %22 = vsyncpa [#allocation6], 0
    %23 = vsyncpa [#allocation5], 0
    %24 = vsyncpa [#allocation9], 0
    %25 = vsyncpa [#allocation12], 0
    // Predicated region
    $region2: #{seq2seq_forward.3} parent=1 // pred_check
      _
    $region3: #{seq2seq_forward.3} parent=1 // pred_check_branch
      %27 = sbr.rel (0) target = $region5
    $region4: #{seq2seq_forward.3} parent=1 // pred_region
      %s29 = ssub.s32 16, 16
      %30 = vsyncadd [#allocation6], %s29
      %33 = dma.hbm_to_smem %s0, 16, [#allocation4], [#allocation6]
    $region5: #{seq2seq_forward.3} parent=1 // pred_fallthru
      _
    // Predicated region
    $region6: #{seq2seq_forward.3} parent=1 // pred_check
      _
    $region7: #{seq2seq_forward.3} parent=1 // pred_check_branch
      %35 = sbr.rel (0) target = $region9
    $region8: #{seq2seq_forward.3} parent=1 // pred_region
      _
    $region9: #{seq2seq_forward.3} parent=1 // pred_fallthru
      _
    // Predicated region
    $region10: #{seq2seq_forward.3} parent=1 // pred_check
      _
    $region11: #{seq2seq_forward.3} parent=1 // pred_check_branch
      %37 = sbr.rel (0) target = $region13
    $region12: #{seq2seq_forward.3} parent=1 // pred_region
      _
    $region13: #{seq2seq_forward.3} parent=1 // pred_fallthru
      _
    // Predicated region
    $region14: #{seq2seq_forward.3} parent=1 // pred_check
      _
    $region15: #{seq2seq_forward.3} parent=1 // pred_check_branch
      %39 = sbr.rel (0) target = $region17
    $region16: #{seq2seq_forward.3} parent=1 // pred_region
      _
    $region17: #{seq2seq_forward.3} parent=1 // pred_fallthru
      _
    // Predicated region
    $region18: #{seq2seq_forward.3} parent=1 // pred_check
      _
    $region19: #{seq2seq_forward.3} parent=1 // pred_check_branch
      %41 = sbr.rel (0) target = $region21
    $region20: #{seq2seq_forward.3} parent=1 // pred_region
      _
    $region21: #{seq2seq_forward.3} parent=1 // pred_fallthru
      _
    // Predicated region
    $region22: #{seq2seq_forward.3} parent=1 // pred_check
      _
    $region23: #{seq2seq_forward.3} parent=1 // pred_check_branch
      %43 = sbr.rel (0) target = $region25
    $region24: #{seq2seq_forward.3} parent=1 // pred_region
      %s45 = ssub.s32 2048, 2048
      %46 = vsyncadd [#allocation5], %s45
      %s47 = sshll.u32 [#allocation7], 4
      %s48 = int_to_ptr.vmem [resolvable:$true] %s47
      %53 = dma.hbm_to_vmem [thread:$0]  %s5, 2048, %s48, [#allocation5], 128, 128, 8
    $region25: #{seq2seq_forward.3} parent=1 // pred_fallthru
      _
    // Predicated region
    $region26: #{seq2seq_forward.3} parent=1 // pred_check
      _
    $region27: #{seq2seq_forward.3} parent=1 // pred_check_branch
      %55 = sbr.rel (0) target = $region29
    $region28: #{seq2seq_forward.3} parent=1 // pred_region
      %s57 = ssub.s32 2048, 2048
      %58 = vsyncadd [#allocation9], %s57
      %s59 = sshll.u32 [#allocation8], 4
      %s60 = int_to_ptr.vmem [resolvable:$true] %s59
      %65 = dma.hbm_to_vmem [thread:$0]  %s6, 2048, %s60, [#allocation9], 128, 128, 8
    $region29: #{seq2seq_forward.3} parent=1 // pred_fallthru
      _
    // Predicated region
    $region30: #{seq2seq_forward.3} parent=1 // pred_check
      _
    $region31: #{seq2seq_forward.3} parent=1 // pred_check_branch
      %67 = sbr.rel (0) target = $region33
    $region32: #{seq2seq_forward.3} parent=1 // pred_region
      %s69 = ssub.s32 2048, 2048
      %70 = vsyncadd [#allocation9], %s69
      %s71 = sshll.u32 [#allocation10], 4
      %s72 = int_to_ptr.vmem [resolvable:$true] %s71
      %77 = dma.hbm_to_vmem [thread:$0]  %s7, 2048, %s72, [#allocation9], 128, 128, 8
    $region33: #{seq2seq_forward.3} parent=1 // pred_fallthru
      _
    // Predicated region
    $region34: #{seq2seq_forward.3} parent=1 // pred_check
      _
    $region35: #{seq2seq_forward.3} parent=1 // pred_check_branch
      %79 = sbr.rel (0) target = $region37
    $region36: #{seq2seq_forward.3} parent=1 // pred_region
      _
    $region37: #{seq2seq_forward.3} parent=1 // pred_fallthru
      _
    // Predicated region
    $region38: #{seq2seq_forward.3} parent=1 // pred_check
      _
    $region39: #{seq2seq_forward.3} parent=1 // pred_check_branch
      %81 = sbr.rel (0) target = $region41
    $region40: #{seq2seq_forward.3} parent=1 // pred_region
      _
    $region41: #{seq2seq_forward.3} parent=1 // pred_fallthru
      _
    // Predicated region
    $region42: #{seq2seq_forward.3} parent=1 // pred_check
      _
    $region43: #{seq2seq_forward.3} parent=1 // pred_check_branch
      %83 = sbr.rel (0) target = $region45
    $region44: #{seq2seq_forward.3} parent=1 // pred_region
      _
    $region45: #{seq2seq_forward.3} parent=1 // pred_fallthru
      _
    // Predicated region
    $region46: #{seq2seq_forward.3} parent=1 // pred_check
      _
    $region47: #{seq2seq_forward.3} parent=1 // pred_check_branch
      %85 = sbr.rel (0) target = $region49
    $region48: #{seq2seq_forward.3} parent=1 // pred_region
      _
    $region49: #{seq2seq_forward.3} parent=1 // pred_fallthru
      _
    // Predicated region
    $region50: #{seq2seq_forward.3} parent=1 // pred_check
      _
    $region51: #{seq2seq_forward.3} parent=1 // pred_check_branch
      %87 = sbr.rel (0) target = $region53
    $region52: #{seq2seq_forward.3} parent=1 // pred_region
      _
    $region53: #{seq2seq_forward.3} parent=1 // pred_fallthru
      _
    // Predicated region
    $region54: #{seq2seq_forward.3} parent=1 // pred_check
      _
    $region55: #{seq2seq_forward.3} parent=1 // pred_check_branch
      %89 = sbr.rel (0) target = $region57
    $region56: #{seq2seq_forward.3} parent=1 // pred_region
      _
    $region57: #{seq2seq_forward.3} parent=1 // pred_fallthru
      _
    // Predicated region
    $region58: #{seq2seq_forward.3} parent=1 // pred_check
      _
    $region59: #{seq2seq_forward.3} parent=1 // pred_check_branch
      %91 = sbr.rel (0) target = $region61
    $region60: #{seq2seq_forward.3} parent=1 // pred_region
      _
    $region61: #{seq2seq_forward.3} parent=1 // pred_fallthru
      _
    // Predicated region
    $region62: #{seq2seq_forward.3} parent=1 // pred_check
      _
    $region63: #{seq2seq_forward.3} parent=1 // pred_check_branch
      %93 = sbr.rel (0) target = $region65
    $region64: #{seq2seq_forward.3} parent=1 // pred_region
      _
    $region65: #{seq2seq_forward.3} parent=1 // pred_fallthru
      _
    // Predicated region
    $region66: #{seq2seq_forward.3} parent=1 // pred_check
      _
    $region67: #{seq2seq_forward.3} parent=1 // pred_check_branch
      %95 = sbr.rel (0) target = $region69
    $region68: #{seq2seq_forward.3} parent=1 // pred_region
      %s97 = ssub.s32 2048, 2048
      %98 = vsyncadd [#allocation12], %s97
      %s99 = sshll.u32 [#allocation11], 4
      %s100 = int_to_ptr.vmem [resolvable:$true] %s99
      %105 = dma.hbm_to_vmem [thread:$0]  %s16, 2048, %s100, [#allocation12], 128, 128, 8
    $region69: #{seq2seq_forward.3} parent=1 // pred_fallthru
      _
    // Predicated region
    $region70: #{seq2seq_forward.3} parent=1 // pred_check
      _
    $region71: #{seq2seq_forward.3} parent=1 // pred_check_branch
      %107 = sbr.rel (0) target = $region73
    $region72: #{seq2seq_forward.3} parent=1 // pred_region
      %108 = dma.done [#allocation6], 16
    $region73: #{seq2seq_forward.3} parent=1 // pred_fallthru
      _
    // Predicated region
    $region74: #{seq2seq_forward.3} parent=1 // pred_check
      _
    $region75: #{seq2seq_forward.3} parent=1 // pred_check_branch
      %110 = sbr.rel (0) target = $region77
    $region76: #{seq2seq_forward.3} parent=1 // pred_region
      %111 = dma.done [#allocation5], 2048
    $region77: #{seq2seq_forward.3} parent=1 // pred_fallthru
      _
    // Predicated region
    $region78: #{seq2seq_forward.3} parent=1 // pred_check
      _
    $region79: #{seq2seq_forward.3} parent=1 // pred_check_branch
      %113 = sbr.rel (0) target = $region81
    $region80: #{seq2seq_forward.3} parent=1 // pred_region
      %114 = dma.done [#allocation9], 2048
    $region81: #{seq2seq_forward.3} parent=1 // pred_fallthru
      _
    // Predicated region
    $region82: #{seq2seq_forward.3} parent=1 // pred_check
      _
    $region83: #{seq2seq_forward.3} parent=1 // pred_check_branch
      %116 = sbr.rel (0) target = $region85
    $region84: #{seq2seq_forward.3} parent=1 // pred_region
      %117 = dma.done [#allocation9], 2048
    $region85: #{seq2seq_forward.3} parent=1 // pred_fallthru
      _
    // Predicated region
    $region86: #{seq2seq_forward.3} parent=1 // pred_check
      _
    $region87: #{seq2seq_forward.3} parent=1 // pred_check_branch
      %119 = sbr.rel (0) target = $region89
    $region88: #{seq2seq_forward.3} parent=1 // pred_region
      %120 = dma.done [#allocation12], 2048
    $region89: #{seq2seq_forward.3} parent=1 // pred_fallthru
      _
    %121 = sfence
    %v122 = vld [vmem:[%s2] sm:$0xff]
    %v123 = vld [vmem:[%s2 + $0x8] sm:$0xff]
    %v124 = vld [vmem:[%s2 + $0x10] sm:$0xff]
    %v125 = vld [vmem:[%s2 + $0x18] sm:$0xff]
    %v126 = vld [vmem:[%s2 + $0x20] sm:$0xff]
    %v127 = vld [vmem:[%s2 + $0x28] sm:$0xff]
    %v128 = vld [vmem:[%s3] sm:$0xff]
    %v129 = vld [vmem:[%s3 + $0x8] sm:$0xff]
    %v130 = vld [vmem:[%s3 + $0x10] sm:$0xff]
    %v131 = vld [vmem:[%s3 + $0x18] sm:$0xff]
    %v132 = vld [vmem:[%s3 + $0x20] sm:$0xff]
    %v133 = vld [vmem:[%s3 + $0x28] sm:$0xff]
    %v134 = vld [vmem:[#allocation8] sm:$0xff]
    %v135 = vld [vmem:[#allocation8 + $0x8] sm:$0xff]
    %v136 = vld [vmem:[#allocation8 + $0x10] sm:$0xff]
    %v137 = vld [vmem:[#allocation8 + $0x18] sm:$0xff]
    %v138 = vld [vmem:[#allocation8 + $0x20] sm:$0xff]
    %v139 = vld [vmem:[#allocation8 + $0x28] sm:$0xff]
    %v140 = vld [vmem:[#allocation8 + $0x30] sm:$0xff]
    %v141 = vld [vmem:[#allocation8 + $0x38] sm:$0xff]
    %v142 = vld [vmem:[#allocation8 + $0x40] sm:$0xff]
    %v143 = vld [vmem:[#allocation8 + $0x48] sm:$0xff]
    %v144 = vld [vmem:[#allocation8 + $0x50] sm:$0xff]
    %v145 = vld [vmem:[#allocation8 + $0x58] sm:$0xff]
    %v146 = vld [vmem:[#allocation8 + $0x60] sm:$0xff]
    %v147 = vld [vmem:[#allocation8 + $0x68] sm:$0xff]
    %v148 = vld [vmem:[#allocation8 + $0x70] sm:$0xff]
    %v149 = vld [vmem:[#allocation8 + $0x78] sm:$0xff]
    %v150 = vld [vmem:[#allocation10] sm:$0xff]
    %v151 = vld [vmem:[#allocation10 + $0x8] sm:$0xff]
    %v152 = vld [vmem:[#allocation10 + $0x10] sm:$0xff]
    %v153 = vld [vmem:[#allocation10 + $0x18] sm:$0xff]
    %v154 = vld [vmem:[#allocation10 + $0x20] sm:$0xff]
    %v155 = vld [vmem:[#allocation10 + $0x28] sm:$0xff]
    %v156 = vld [vmem:[#allocation10 + $0x30] sm:$0xff]
    %v157 = vld [vmem:[#allocation10 + $0x38] sm:$0xff]
    %v158 = vld [vmem:[#allocation10 + $0x40] sm:$0xff]
    %v159 = vld [vmem:[#allocation10 + $0x48] sm:$0xff]
    %v160 = vld [vmem:[#allocation10 + $0x50] sm:$0xff]
    %v161 = vld [vmem:[#allocation10 + $0x58] sm:$0xff]
    %v162 = vld [vmem:[#allocation10 + $0x60] sm:$0xff]
    %v163 = vld [vmem:[#allocation10 + $0x68] sm:$0xff]
    %v164 = vld [vmem:[#allocation10 + $0x70] sm:$0xff]
    %v165 = vld [vmem:[#allocation10 + $0x78] sm:$0xff]
    %166 = vmatprep.subr.mxu0 0.0
    %167 = vmatpush1.msra.mxu0 %v150
    %168 = vmatprep.subr.mxu0 0.0
    %169 = vmatpush1.msra.mxu0 %v151
    %170 = vmatprep.subr.mxu0 0.0
    %171 = vmatpush1.msra.mxu0 %v152
    %172 = vmatprep.subr.mxu0 0.0
    %173 = vmatpush1.msra.mxu0 %v153
    %174 = vmatprep.subr.mxu0 0.0
    %175 = vmatpush1.msra.mxu0 %v154
    %176 = vmatprep.subr.mxu0 0.0
    %177 = vmatpush1.msra.mxu0 %v155
    %178 = vmatprep.subr.mxu0 0.0
    %179 = vmatpush1.msra.mxu0 %v156
    %180 = vmatprep.subr.mxu0 0.0
    %181 = vmatpush1.msra.mxu0 %v157
    %182 = vmatprep.subr.mxu0 0.0
    %183 = vmatpush1.msra.mxu0 %v158
    %184 = vmatprep.subr.mxu0 0.0
    %185 = vmatpush1.msra.mxu0 %v159
    %186 = vmatprep.subr.mxu0 0.0
    %187 = vmatpush1.msra.mxu0 %v160
    %188 = vmatprep.subr.mxu0 0.0
    %189 = vmatpush1.msra.mxu0 %v161
    %190 = vmatprep.subr.mxu0 0.0
    %191 = vmatpush1.msra.mxu0 %v162
    %192 = vmatprep.subr.mxu0 0.0
    %193 = vmatpush1.msra.mxu0 %v163
    %194 = vmatprep.subr.mxu0 0.0
    %195 = vmatpush1.msra.mxu0 %v164
    %196 = vmatprep.subr.mxu0 0.0
    %197 = vmatpush1.msra.mxu0 %v165
    %198 = vmatprep.subr.mxu0 0.0
    %199 = vmatpush1.msra.mxu0 0.0
    %200 = vmatprep.subr.mxu0 0.0
    %201 = vmatpush1.msra.mxu0 0.0
    %202 = vmatprep.subr.mxu0 0.0
    %203 = vmatpush1.msra.mxu0 0.0
    %204 = vmatprep.subr.mxu0 0.0
    %205 = vmatpush1.msra.mxu0 0.0
    %206 = vmatprep.subr.mxu0 0.0
    %207 = vmatpush1.msra.mxu0 0.0
    %208 = vmatprep.subr.mxu0 0.0
    %209 = vmatpush1.msra.mxu0 0.0
    %210 = vmatprep.subr.mxu0 0.0
    %211 = vmatpush1.msra.mxu0 0.0
    %212 = vmatprep.subr.mxu0 0.0
    %213 = vmatpush1.msra.mxu0 0.0
    %214 = vmatprep.subr.mxu0 0.0
    %215 = vmatpush1.msra.mxu0 0.0
    %216 = vmatprep.subr.mxu0 0.0
    %217 = vmatpush1.msra.mxu0 0.0
    %218 = vmatprep.subr.mxu0 0.0
    %219 = vmatpush1.msra.mxu0 0.0
    %220 = vmatprep.subr.mxu0 0.0
    %221 = vmatpush1.msra.mxu0 0.0
    %222 = vmatprep.subr.mxu0 0.0
    %223 = vmatpush1.msra.mxu0 0.0
    %224 = vmatprep.subr.mxu0 0.0
    %225 = vmatpush1.msra.mxu0 0.0
    %226 = vmatprep.subr.mxu0 0.0
    %227 = vmatpush1.msra.mxu0 0.0
    %228 = vmatprep.subr.mxu0 0.0
    %229 = vmatpush1.msra.mxu0 0.0
    %230 = vmatprep.mubr.f32.mxu0 0.0
    %231 = vmatmul.mubr.f32.gmra.mrb[0].mxu0 %v128
    %v232 = vpop.f32.mrb[0].mxu0
    %v233 = vadd.f32 0.0, %v232
    %v234 = vpop.f32.mrb[0].mxu0
    %235 = vmatprep.mubr.f32.mxu0 0.0
    %236 = vmatmul.mubr.f32.gmra.mrb[0].mxu0 %v129
    %v237 = vpop.f32.mrb[0].mxu0
    %v238 = vadd.f32 0.0, %v237
    %v239 = vpop.f32.mrb[0].mxu0
    %240 = vmatprep.mubr.f32.mxu0 0.0
    %241 = vmatmul.mubr.f32.gmra.mrb[0].mxu0 %v130
    %v242 = vpop.f32.mrb[0].mxu0
    %v243 = vadd.f32 0.0, %v242
    %v244 = vpop.f32.mrb[0].mxu0
    %245 = vmatprep.mubr.f32.mxu0 0.0
    %246 = vmatmul.mubr.f32.gmra.mrb[0].mxu0 %v131
    %v247 = vpop.f32.mrb[0].mxu0
    %v248 = vadd.f32 0.0, %v247
    %v249 = vpop.f32.mrb[0].mxu0
    %250 = vmatprep.mubr.f32.mxu0 0.0
    %251 = vmatmul.mubr.f32.gmra.mrb[0].mxu0 %v132
    %v252 = vpop.f32.mrb[0].mxu0
    %v253 = vadd.f32 0.0, %v252
    %v254 = vpop.f32.mrb[0].mxu0
    %255 = vmatprep.mubr.f32.mxu0 0.0
    %256 = vmatmul.mubr.f32.gmra.mrb[0].mxu0 %v133
    %v257 = vpop.f32.mrb[0].mxu0
    %v258 = vadd.f32 0.0, %v257
    %v259 = vpop.f32.mrb[0].mxu0
    %260 = vdwg.mxu0
    %261 = vmatprep.subr.mxu0 0.0
    %262 = vmatpush1.msra.mxu0 %v134
    %263 = vmatprep.subr.mxu0 0.0
    %264 = vmatpush1.msra.mxu0 %v135
    %265 = vmatprep.subr.mxu0 0.0
    %266 = vmatpush1.msra.mxu0 %v136
    %267 = vmatprep.subr.mxu0 0.0
    %268 = vmatpush1.msra.mxu0 %v137
    %269 = vmatprep.subr.mxu0 0.0
    %270 = vmatpush1.msra.mxu0 %v138
    %271 = vmatprep.subr.mxu0 0.0
    %272 = vmatpush1.msra.mxu0 %v139
    %273 = vmatprep.subr.mxu0 0.0
    %274 = vmatpush1.msra.mxu0 %v140
    %275 = vmatprep.subr.mxu0 0.0
    %276 = vmatpush1.msra.mxu0 %v141
    %277 = vmatprep.subr.mxu0 0.0
    %278 = vmatpush1.msra.mxu0 %v142
    %279 = vmatprep.subr.mxu0 0.0
    %280 = vmatpush1.msra.mxu0 %v143
    %281 = vmatprep.subr.mxu0 0.0
    %282 = vmatpush1.msra.mxu0 %v144
    %283 = vmatprep.subr.mxu0 0.0
    %284 = vmatpush1.msra.mxu0 %v145
    %285 = vmatprep.subr.mxu0 0.0
    %286 = vmatpush1.msra.mxu0 %v146
    %287 = vmatprep.subr.mxu0 0.0
    %288 = vmatpush1.msra.mxu0 %v147
    %289 = vmatprep.subr.mxu0 0.0
    %290 = vmatpush1.msra.mxu0 %v148
    %291 = vmatprep.subr.mxu0 0.0
    %292 = vmatpush1.msra.mxu0 %v149
    %293 = vmatprep.subr.mxu0 0.0
    %294 = vmatpush1.msra.mxu0 0.0
    %295 = vmatprep.subr.mxu0 0.0
    %296 = vmatpush1.msra.mxu0 0.0
    %297 = vmatprep.subr.mxu0 0.0
    %298 = vmatpush1.msra.mxu0 0.0
    %299 = vmatprep.subr.mxu0 0.0
    %300 = vmatpush1.msra.mxu0 0.0
    %301 = vmatprep.subr.mxu0 0.0
    %302 = vmatpush1.msra.mxu0 0.0
    %303 = vmatprep.subr.mxu0 0.0
    %304 = vmatpush1.msra.mxu0 0.0
    %305 = vmatprep.subr.mxu0 0.0
    %306 = vmatpush1.msra.mxu0 0.0
    %307 = vmatprep.subr.mxu0 0.0
    %308 = vmatpush1.msra.mxu0 0.0
    %309 = vmatprep.subr.mxu0 0.0
    %310 = vmatpush1.msra.mxu0 0.0
    %311 = vmatprep.subr.mxu0 0.0
    %312 = vmatpush1.msra.mxu0 0.0
    %313 = vmatprep.subr.mxu0 0.0
    %314 = vmatpush1.msra.mxu0 0.0
    %315 = vmatprep.subr.mxu0 0.0
    %316 = vmatpush1.msra.mxu0 0.0
    %317 = vmatprep.subr.mxu0 0.0
    %318 = vmatpush1.msra.mxu0 0.0
    %319 = vmatprep.subr.mxu0 0.0
    %320 = vmatpush1.msra.mxu0 0.0
    %321 = vmatprep.subr.mxu0 0.0
    %322 = vmatpush1.msra.mxu0 0.0
    %323 = vmatprep.subr.mxu0 0.0
    %324 = vmatpush1.msra.mxu0 0.0
    %325 = vmatprep.mubr.f32.mxu0 0.0
    %326 = vmatmul.mubr.f32.gmra.mrb[0].mxu0 %v122
    %v327 = vpop.f32.mrb[0].mxu0
    %v328 = vadd.f32 %v233, %v327
    %v329 = vpop.f32.mrb[0].mxu0
    %330 = vmatprep.mubr.f32.mxu0 0.0
    %331 = vmatmul.mubr.f32.gmra.mrb[0].mxu0 %v123
    %v332 = vpop.f32.mrb[0].mxu0
    %v333 = vadd.f32 %v238, %v332
    %v334 = vpop.f32.mrb[0].mxu0
    %335 = vmatprep.mubr.f32.mxu0 0.0
    %336 = vmatmul.mubr.f32.gmra.mrb[0].mxu0 %v124
    %v337 = vpop.f32.mrb[0].mxu0
    %v338 = vadd.f32 %v243, %v337
    %v339 = vpop.f32.mrb[0].mxu0
    %340 = vmatprep.mubr.f32.mxu0 0.0
    %341 = vmatmul.mubr.f32.gmra.mrb[0].mxu0 %v125
    %v342 = vpop.f32.mrb[0].mxu0
    %v343 = vadd.f32 %v248, %v342
    %v344 = vpop.f32.mrb[0].mxu0
    %345 = vmatprep.mubr.f32.mxu0 0.0
    %346 = vmatmul.mubr.f32.gmra.mrb[0].mxu0 %v126
    %v347 = vpop.f32.mrb[0].mxu0
    %v348 = vadd.f32 %v253, %v347
    %v349 = vpop.f32.mrb[0].mxu0
    %350 = vmatprep.mubr.f32.mxu0 0.0
    %351 = vmatmul.mubr.f32.gmra.mrb[0].mxu0 %v127
    %v352 = vpop.f32.mrb[0].mxu0
    %v353 = vadd.f32 %v258, %v352
    %v354 = vpop.f32.mrb[0].mxu0
    %355 = vdwg.mxu0
    %v356 = vld [vmem:[%s8] sm:$0x1]
    %v358 = vlaneseq
    %v359 = vshrl.u32 %v358, 7
    %v360 = vsub.s32 0, %v359
    %v361 = vrot.slane %v356, %v360
    %v363 = vadd.f32 %v328, %v361
    %v364 = vadd.f32 %v333, %v361
    %v365 = vadd.f32 %v338, %v361
    %v366 = vadd.f32 %v343, %v361
    %v367 = vadd.f32 %v348, %v361
    %v368 = vadd.f32 %v353, %v361
    %369 = vst [vmem:[#allocation2] sm:$0xff] %v363
    %370 = vst [vmem:[#allocation2 + $0x8] sm:$0xff] %v364
    %371 = vst [vmem:[#allocation2 + $0x10] sm:$0xff] %v365
    %372 = vst [vmem:[#allocation2 + $0x18] sm:$0xff] %v366
    %373 = vst [vmem:[#allocation2 + $0x20] sm:$0xff] %v367
    %374 = vst [vmem:[#allocation2 + $0x28] sm:$0xff] %v368
    %v375 = vlaneseq
    %v376 = vand.u32 %v375, 127
    %v377 = vcvt.s32.f32 %v376
    %vm378 = vcmp.lt.s32.totalorder %v376, 32
    %379 = vst [vmem:[%s17] sm:$0xff] 0.0
    %v380 = vld [vmem:[%s1] sm:$0xff]
    %381 = vset.pattern.permute.xlu0 0
    %382 = vperm.xlu0 %381, %v380
    %v383 = vpop.permute.xlu0 %382
    %vm384 = vcmp.eq.s32.totalorder %v376, %v383
    %v385 = vsel %vm384, 1, 0
    %v386 = vcvt.s32.f32 %v385
    %387 = vst [vmem:[#allocation3] sm:$0xff] %v386
    %v388 = vld [vmem:[%s4] sm:$0xff]
    %v389 = vld [vmem:[#allocation3] sm:$0xff]
    %v390 = vld [vmem:[#allocation7] sm:$0xff]
    %v391 = vld [vmem:[#allocation7 + $0x8] sm:$0xff]
    %v392 = vld [vmem:[#allocation7 + $0x10] sm:$0xff]
    %v393 = vld [vmem:[#allocation7 + $0x18] sm:$0xff]
    %v394 = vld [vmem:[#allocation7 + $0x20] sm:$0xff]
    %v395 = vld [vmem:[#allocation7 + $0x28] sm:$0xff]
    %v396 = vld [vmem:[#allocation7 + $0x30] sm:$0xff]
    %v397 = vld [vmem:[#allocation7 + $0x38] sm:$0xff]
    %v398 = vld [vmem:[#allocation7 + $0x40] sm:$0xff]
    %v399 = vld [vmem:[#allocation7 + $0x48] sm:$0xff]
    %v400 = vld [vmem:[#allocation7 + $0x50] sm:$0xff]
    %v401 = vld [vmem:[#allocation7 + $0x58] sm:$0xff]
    %v402 = vld [vmem:[#allocation7 + $0x60] sm:$0xff]
    %v403 = vld [vmem:[#allocation7 + $0x68] sm:$0xff]
    %v404 = vld [vmem:[#allocation7 + $0x70] sm:$0xff]
    %v405 = vld [vmem:[#allocation7 + $0x78] sm:$0xff]
    %406 = vmatprep.subr.mxu0 0.0
    %407 = vmatpush1.msra.mxu0 %v390
    %408 = vmatprep.subr.mxu0 0.0
    %409 = vmatpush1.msra.mxu0 %v391
    %410 = vmatprep.subr.mxu0 0.0
    %411 = vmatpush1.msra.mxu0 %v392
    %412 = vmatprep.subr.mxu0 0.0
    %413 = vmatpush1.msra.mxu0 %v393
    %414 = vmatprep.subr.mxu0 0.0
    %415 = vmatpush1.msra.mxu0 %v394
    %416 = vmatprep.subr.mxu0 0.0
    %417 = vmatpush1.msra.mxu0 %v395
    %418 = vmatprep.subr.mxu0 0.0
    %419 = vmatpush1.msra.mxu0 %v396
    %420 = vmatprep.subr.mxu0 0.0
    %421 = vmatpush1.msra.mxu0 %v397
    %422 = vmatprep.subr.mxu0 0.0
    %423 = vmatpush1.msra.mxu0 %v398
    %424 = vmatprep.subr.mxu0 0.0
    %425 = vmatpush1.msra.mxu0 %v399
    %426 = vmatprep.subr.mxu0 0.0
    %427 = vmatpush1.msra.mxu0 %v400
    %428 = vmatprep.subr.mxu0 0.0
    %429 = vmatpush1.msra.mxu0 %v401
    %430 = vmatprep.subr.mxu0 0.0
    %431 = vmatpush1.msra.mxu0 %v402
    %432 = vmatprep.subr.mxu0 0.0
    %433 = vmatpush1.msra.mxu0 %v403
    %434 = vmatprep.subr.mxu0 0.0
    %435 = vmatpush1.msra.mxu0 %v404
    %436 = vmatprep.subr.mxu0 0.0
    %437 = vmatpush1.msra.mxu0 %v405
    %438 = vmatprep.subr.mxu0 0.0
    %439 = vmatpush1.msra.mxu0 0.0
    %440 = vmatprep.subr.mxu0 0.0
    %441 = vmatpush1.msra.mxu0 0.0
    %442 = vmatprep.subr.mxu0 0.0
    %443 = vmatpush1.msra.mxu0 0.0
    %444 = vmatprep.subr.mxu0 0.0
    %445 = vmatpush1.msra.mxu0 0.0
    %446 = vmatprep.subr.mxu0 0.0
    %447 = vmatpush1.msra.mxu0 0.0
    %448 = vmatprep.subr.mxu0 0.0
    %449 = vmatpush1.msra.mxu0 0.0
    %450 = vmatprep.subr.mxu0 0.0
    %451 = vmatpush1.msra.mxu0 0.0
    %452 = vmatprep.subr.mxu0 0.0
    %453 = vmatpush1.msra.mxu0 0.0
    %454 = vmatprep.subr.mxu0 0.0
    %455 = vmatpush1.msra.mxu0 0.0
    %456 = vmatprep.subr.mxu0 0.0
    %457 = vmatpush1.msra.mxu0 0.0
    %458 = vmatprep.subr.mxu0 0.0
    %459 = vmatpush1.msra.mxu0 0.0
    %460 = vmatprep.subr.mxu0 0.0
    %461 = vmatpush1.msra.mxu0 0.0
    %462 = vmatprep.subr.mxu0 0.0
    %463 = vmatpush1.msra.mxu0 0.0
    %464 = vmatprep.subr.mxu0 0.0
    %465 = vmatpush1.msra.mxu0 0.0
    %466 = vmatprep.subr.mxu0 0.0
    %467 = vmatpush1.msra.mxu0 0.0
    %468 = vmatprep.subr.mxu0 0.0
    %469 = vmatpush1.msra.mxu0 0.0
    %470 = vmatprep.mubr.f32.mxu0 0.0
    %471 = vmatmul.mubr.f32.gmra.mrb[0].mxu0 %v389
    %v472 = vpop.f32.mrb[0].mxu0
    %v473 = vadd.f32 0.0, %v472
    %v474 = vpop.f32.mrb[0].mxu0
    %475 = vdwg.mxu0
    %v476 = vld [vmem:[%s10] sm:$0xff]
    %v477 = vld [vmem:[%s10 + $0x8] sm:$0xff]
    %v478 = vld [vmem:[%s10 + $0x10] sm:$0xff]
    %v479 = vld [vmem:[%s10 + $0x18] sm:$0xff]
    %v480 = vld [vmem:[%s10 + $0x20] sm:$0xff]
    %v481 = vld [vmem:[%s10 + $0x28] sm:$0xff]
    %v482 = vld [vmem:[%s10 + $0x30] sm:$0xff]
    %v483 = vld [vmem:[%s10 + $0x38] sm:$0xff]
    %v484 = vld [vmem:[%s10 + $0x40] sm:$0xff]
    %v485 = vld [vmem:[%s10 + $0x48] sm:$0xff]
    %v486 = vld [vmem:[%s10 + $0x50] sm:$0xff]
    %v487 = vld [vmem:[%s10 + $0x58] sm:$0xff]
    %v488 = vld [vmem:[%s10 + $0x60] sm:$0xff]
    %v489 = vld [vmem:[%s10 + $0x68] sm:$0xff]
    %v490 = vld [vmem:[%s10 + $0x70] sm:$0xff]
    %v491 = vld [vmem:[%s10 + $0x78] sm:$0xff]
    %v492 = vld [vmem:[%s10 + $0x80] sm:$0xff]
    %v493 = vld [vmem:[%s10 + $0x88] sm:$0xff]
    %v494 = vld [vmem:[%s10 + $0x90] sm:$0xff]
    %v495 = vld [vmem:[%s10 + $0x98] sm:$0xff]
    %v496 = vld [vmem:[%s10 + $0xa0] sm:$0xff]
    %v497 = vld [vmem:[%s10 + $0xa8] sm:$0xff]
    %v498 = vld [vmem:[%s10 + $0xb0] sm:$0xff]
    %v499 = vld [vmem:[%s10 + $0xb8] sm:$0xff]
    %v500 = vld [vmem:[%s10 + $0xc0] sm:$0xff]
    %v501 = vld [vmem:[%s10 + $0xc8] sm:$0xff]
    %v502 = vld [vmem:[%s10 + $0xd0] sm:$0xff]
    %v503 = vld [vmem:[%s10 + $0xd8] sm:$0xff]
    %v504 = vld [vmem:[%s10 + $0xe0] sm:$0xff]
    %v505 = vld [vmem:[%s10 + $0xe8] sm:$0xff]
    %v506 = vld [vmem:[%s10 + $0xf0] sm:$0xff]
    %v507 = vld [vmem:[%s10 + $0xf8] sm:$0xff]
    %v508 = vld [vmem:[%s10 + $0x100] sm:$0xff]
    %v509 = vld [vmem:[%s10 + $0x108] sm:$0xff]
    %v510 = vld [vmem:[%s10 + $0x110] sm:$0xff]
    %v511 = vld [vmem:[%s10 + $0x118] sm:$0xff]
    %v512 = vld [vmem:[%s10 + $0x120] sm:$0xff]
    %v513 = vld [vmem:[%s10 + $0x128] sm:$0xff]
    %v514 = vld [vmem:[%s10 + $0x130] sm:$0xff]
    %v515 = vld [vmem:[%s10 + $0x138] sm:$0xff]
    %v516 = vld [vmem:[%s10 + $0x140] sm:$0xff]
    %v517 = vld [vmem:[%s10 + $0x148] sm:$0xff]
    %v518 = vld [vmem:[%s10 + $0x150] sm:$0xff]
    %v519 = vld [vmem:[%s10 + $0x158] sm:$0xff]
    %v520 = vld [vmem:[%s10 + $0x160] sm:$0xff]
    %v521 = vld [vmem:[%s10 + $0x168] sm:$0xff]
    %v522 = vld [vmem:[%s10 + $0x170] sm:$0xff]
    %v523 = vld [vmem:[%s10 + $0x178] sm:$0xff]
    %v524 = vld [vmem:[%s10 + $0x180] sm:$0xff]
    %v525 = vld [vmem:[%s10 + $0x188] sm:$0xff]
    %v526 = vld [vmem:[%s10 + $0x190] sm:$0xff]
    %v527 = vld [vmem:[%s10 + $0x198] sm:$0xff]
    %v528 = vld [vmem:[%s10 + $0x1a0] sm:$0xff]
    %v529 = vld [vmem:[%s10 + $0x1a8] sm:$0xff]
    %v530 = vld [vmem:[%s10 + $0x1b0] sm:$0xff]
    %v531 = vld [vmem:[%s10 + $0x1b8] sm:$0xff]
    %v532 = vld [vmem:[%s10 + $0x1c0] sm:$0xff]
    %v533 = vld [vmem:[%s10 + $0x1c8] sm:$0xff]
    %v534 = vld [vmem:[%s10 + $0x1d0] sm:$0xff]
    %v535 = vld [vmem:[%s10 + $0x1d8] sm:$0xff]
    %v536 = vld [vmem:[%s10 + $0x1e0] sm:$0xff]
    %v537 = vld [vmem:[%s10 + $0x1e8] sm:$0xff]
    %v538 = vld [vmem:[%s10 + $0x1f0] sm:$0xff]
    %v539 = vld [vmem:[%s10 + $0x1f8] sm:$0xff]
    %v540 = vld [vmem:[%s11] sm:$0xf]
    %v542 = vlaneseq
    %v543 = vshrl.u32 %v542, 7
    %v544 = vsub.s32 0, %v543
    %v545 = vrot.slane %v540, %v544
    %v546 = vlaneseq
    %v547 = vshrl.u32 %v546, 7
    %v548 = vsub.s32 1, %v547
    %v549 = vrot.slane %v540, %v548
    %v550 = vlaneseq
    %v551 = vshrl.u32 %v550, 7
    %v552 = vsub.s32 2, %v551
    %v553 = vrot.slane %v540, %v552
    %v554 = vlaneseq
    %v555 = vshrl.u32 %v554, 7
    %v556 = vsub.s32 3, %v555
    %v557 = vrot.slane %v540, %v556
    %562 = vmatprep.subr.mxu0 %v477
    %563 = vmatpush1.msra.mxu0 %v476
    %564 = vmatprep.subr.mxu0 %v481
    %565 = vmatpush1.msra.mxu0 %v480
    %566 = vmatprep.subr.mxu0 %v485
    %567 = vmatpush1.msra.mxu0 %v484
    %568 = vmatprep.subr.mxu0 %v489
    %569 = vmatpush1.msra.mxu0 %v488
    %570 = vmatprep.subr.mxu0 %v493
    %571 = vmatpush1.msra.mxu0 %v492
    %572 = vmatprep.subr.mxu0 %v497
    %573 = vmatpush1.msra.mxu0 %v496
    %574 = vmatprep.subr.mxu0 %v501
    %575 = vmatpush1.msra.mxu0 %v500
    %576 = vmatprep.subr.mxu0 %v505
    %577 = vmatpush1.msra.mxu0 %v504
    %578 = vmatprep.subr.mxu0 %v509
    %579 = vmatpush1.msra.mxu0 %v508
    %580 = vmatprep.subr.mxu0 %v513
    %581 = vmatpush1.msra.mxu0 %v512
    %582 = vmatprep.subr.mxu0 %v517
    %583 = vmatpush1.msra.mxu0 %v516
    %584 = vmatprep.subr.mxu0 %v521
    %585 = vmatpush1.msra.mxu0 %v520
    %586 = vmatprep.subr.mxu0 %v525
    %587 = vmatpush1.msra.mxu0 %v524
    %588 = vmatprep.subr.mxu0 %v529
    %589 = vmatpush1.msra.mxu0 %v528
    %590 = vmatprep.subr.mxu0 %v533
    %591 = vmatpush1.msra.mxu0 %v532
    %592 = vmatprep.subr.mxu0 %v537
    %593 = vmatpush1.msra.mxu0 %v536
    %594 = vmatprep.subr.mxu0 0.0
    %595 = vmatpush1.msra.mxu0 0.0
    %596 = vmatprep.subr.mxu0 0.0
    %597 = vmatpush1.msra.mxu0 0.0
    %598 = vmatprep.subr.mxu0 0.0
    %599 = vmatpush1.msra.mxu0 0.0
    %600 = vmatprep.subr.mxu0 0.0
    %601 = vmatpush1.msra.mxu0 0.0
    %602 = vmatprep.subr.mxu0 0.0
    %603 = vmatpush1.msra.mxu0 0.0
    %604 = vmatprep.subr.mxu0 0.0
    %605 = vmatpush1.msra.mxu0 0.0
    %606 = vmatprep.subr.mxu0 0.0
    %607 = vmatpush1.msra.mxu0 0.0
    %608 = vmatprep.subr.mxu0 0.0
    %609 = vmatpush1.msra.mxu0 0.0
    %610 = vmatprep.subr.mxu0 0.0
    %611 = vmatpush1.msra.mxu0 0.0
    %612 = vmatprep.subr.mxu0 0.0
    %613 = vmatpush1.msra.mxu0 0.0
    %614 = vmatprep.subr.mxu0 0.0
    %615 = vmatpush1.msra.mxu0 0.0
    %616 = vmatprep.subr.mxu0 0.0
    %617 = vmatpush1.msra.mxu0 0.0
    %618 = vmatprep.subr.mxu0 0.0
    %619 = vmatpush1.msra.mxu0 0.0
    %620 = vmatprep.subr.mxu0 0.0
    %621 = vmatpush1.msra.mxu0 0.0
    %622 = vmatprep.subr.mxu0 0.0
    %623 = vmatpush1.msra.mxu0 0.0
    %624 = vmatprep.subr.mxu0 0.0
    %625 = vmatpush1.msra.mxu0 0.0
    %626 = vmatprep.mubr.f32.mxu0 0.0
    %627 = vmatmul.mubr.f32.gmra.mrb[0].mxu0 %v388
    %v628 = vpop.f32.mrb[0].mxu0
    %v629 = vadd.f32 %v545, %v628
    %v630 = vpop.f32.mrb[0].mxu0
    %v631 = vadd.f32 %v549, %v630
    %632 = vdwg.mxu0
    %633 = vmatprep.subr.mxu0 %v479
    %634 = vmatpush1.msra.mxu0 %v478
    %635 = vmatprep.subr.mxu0 %v483
    %636 = vmatpush1.msra.mxu0 %v482
    %637 = vmatprep.subr.mxu0 %v487
    %638 = vmatpush1.msra.mxu0 %v486
    %639 = vmatprep.subr.mxu0 %v491
    %640 = vmatpush1.msra.mxu0 %v490
    %641 = vmatprep.subr.mxu0 %v495
    %642 = vmatpush1.msra.mxu0 %v494
    %643 = vmatprep.subr.mxu0 %v499
    %644 = vmatpush1.msra.mxu0 %v498
    %645 = vmatprep.subr.mxu0 %v503
    %646 = vmatpush1.msra.mxu0 %v502
    %647 = vmatprep.subr.mxu0 %v507
    %648 = vmatpush1.msra.mxu0 %v506
    %649 = vmatprep.subr.mxu0 %v511
    %650 = vmatpush1.msra.mxu0 %v510
    %651 = vmatprep.subr.mxu0 %v515
    %652 = vmatpush1.msra.mxu0 %v514
    %653 = vmatprep.subr.mxu0 %v519
    %654 = vmatpush1.msra.mxu0 %v518
    %655 = vmatprep.subr.mxu0 %v523
    %656 = vmatpush1.msra.mxu0 %v522
    %657 = vmatprep.subr.mxu0 %v527
    %658 = vmatpush1.msra.mxu0 %v526
    %659 = vmatprep.subr.mxu0 %v531
    %660 = vmatpush1.msra.mxu0 %v530
    %661 = vmatprep.subr.mxu0 %v535
    %662 = vmatpush1.msra.mxu0 %v534
    %663 = vmatprep.subr.mxu0 %v539
    %664 = vmatpush1.msra.mxu0 %v538
    %665 = vmatprep.subr.mxu0 0.0
    %666 = vmatpush1.msra.mxu0 0.0
    %667 = vmatprep.subr.mxu0 0.0
    %668 = vmatpush1.msra.mxu0 0.0
    %669 = vmatprep.subr.mxu0 0.0
    %670 = vmatpush1.msra.mxu0 0.0
    %671 = vmatprep.subr.mxu0 0.0
    %672 = vmatpush1.msra.mxu0 0.0
    %673 = vmatprep.subr.mxu0 0.0
    %674 = vmatpush1.msra.mxu0 0.0
    %675 = vmatprep.subr.mxu0 0.0
    %676 = vmatpush1.msra.mxu0 0.0
    %677 = vmatprep.subr.mxu0 0.0
    %678 = vmatpush1.msra.mxu0 0.0
    %679 = vmatprep.subr.mxu0 0.0
    %680 = vmatpush1.msra.mxu0 0.0
    %681 = vmatprep.subr.mxu0 0.0
    %682 = vmatpush1.msra.mxu0 0.0
    %683 = vmatprep.subr.mxu0 0.0
    %684 = vmatpush1.msra.mxu0 0.0
    %685 = vmatprep.subr.mxu0 0.0
    %686 = vmatpush1.msra.mxu0 0.0
    %687 = vmatprep.subr.mxu0 0.0
    %688 = vmatpush1.msra.mxu0 0.0
    %689 = vmatprep.subr.mxu0 0.0
    %690 = vmatpush1.msra.mxu0 0.0
    %691 = vmatprep.subr.mxu0 0.0
    %692 = vmatpush1.msra.mxu0 0.0
    %693 = vmatprep.subr.mxu0 0.0
    %694 = vmatpush1.msra.mxu0 0.0
    %695 = vmatprep.subr.mxu0 0.0
    %696 = vmatpush1.msra.mxu0 0.0
    %697 = vmatprep.mubr.f32.mxu0 0.0
    %698 = vmatmul.mubr.f32.gmra.mrb[0].mxu0 %v388
    %v699 = vpop.f32.mrb[0].mxu0
    %v700 = vadd.f32 %v553, %v699
    %v701 = vpop.f32.mrb[0].mxu0
    %v702 = vadd.f32 %v557, %v701
    %703 = vdwg.mxu0
    %v704 = vld [vmem:[#allocation2] sm:$0xff]
    %v705 = vld [vmem:[#allocation2 + $0x8] sm:$0xff]
    %v706 = vld [vmem:[#allocation2 + $0x10] sm:$0xff]
    %v707 = vld [vmem:[#allocation2 + $0x18] sm:$0xff]
    %v708 = vld [vmem:[#allocation2 + $0x20] sm:$0xff]
    %v709 = vld [vmem:[#allocation2 + $0x28] sm:$0xff]
    %v710 = vadd.f32 %v704, %v629
    %v711 = vadd.f32 %v705, %v629
    %v712 = vadd.f32 %v706, %v629
    %v713 = vadd.f32 %v707, %v629
    %v714 = vadd.f32 %v708, %v629
    %v715 = vadd.f32 %v709, %v629
    %v716 = vtanh.pop %v710
    %v717 = vtanh.pop %v711
    %v718 = vtanh.pop %v712
    %v719 = vtanh.pop %v713
    %v720 = vtanh.pop %v714
    %v721 = vtanh.pop %v715
    %v722 = vld [vmem:[%s9] sm:$0x1]
    %v724 = vlaneseq
    %v725 = vshrl.u32 %v724, 7
    %v726 = vsub.s32 0, %v725
    %v727 = vrot.slane %v722, %v726
    %v729 = vmul.f32 %v716, %v727
    %v730 = vmul.f32 %v717, %v727
    %v731 = vmul.f32 %v718, %v727
    %v732 = vmul.f32 %v719, %v727
    %v733 = vmul.f32 %v720, %v727
    %v734 = vmul.f32 %v721, %v727
    %735 = vadd.xlane.f32.xlu0 %v729
    %v736 = vpop.xlane.xlu0 %735
    %737 = vadd.xlane.f32.xlu0 %v730
    %v738 = vpop.xlane.xlu0 %737
    %739 = vadd.xlane.f32.xlu0 %v731
    %v740 = vpop.xlane.xlu0 %739
    %741 = vadd.xlane.f32.xlu0 %v732
    %v742 = vpop.xlane.xlu0 %741
    %743 = vadd.xlane.f32.xlu0 %v733
    %v744 = vpop.xlane.xlu0 %743
    %745 = vadd.xlane.f32.xlu0 %v734
    %v746 = vpop.xlane.xlu0 %745
    %v747 = vmax.f32 %v736, %v744
    %v748 = vmax.f32 %v738, %v746
    %v749 = vmax.f32 %v747, %v748
    %v750 = vmax.f32 %v740, %v742
    %v751 = vmax.f32 %v749, %v750
    %v752 = vsub.f32 %v736, %v751
    %v753 = vsub.f32 %v738, %v751
    %v754 = vsub.f32 %v740, %v751
    %v755 = vsub.f32 %v742, %v751
    %v756 = vsub.f32 %v744, %v751
    %v757 = vsub.f32 %v746, %v751
    %v758 = vmul.f32 %v752, 1.442695
    %v759 = vpow.pop %v758
    %v760 = vmul.f32 %v753, 1.442695
    %v761 = vpow.pop %v760
    %v762 = vmul.f32 %v754, 1.442695
    %v763 = vpow.pop %v762
    %v764 = vmul.f32 %v755, 1.442695
    %v765 = vpow.pop %v764
    %v766 = vmul.f32 %v756, 1.442695
    %v767 = vpow.pop %v766
    %v768 = vmul.f32 %v757, 1.442695
    %v769 = vpow.pop %v768
    %v770 = vadd.f32 %v759, %v761
    %v771 = vadd.f32 %v770, %v763
    %v772 = vadd.f32 %v771, %v765
    %v773 = vadd.f32 %v772, %v767
    %v774 = vadd.f32 %v773, %v769
    %v775 = vrcp.pop %v774
    %v776 = vmul.f32 %v759, %v775
    %v777 = vmul.f32 %v761, %v775
    %v778 = vmul.f32 %v763, %v775
    %v779 = vmul.f32 %v765, %v775
    %v780 = vmul.f32 %v767, %v775
    %v781 = vmul.f32 %v769, %v775
    %v782 = vld [vmem:[%s2] sm:$0xff]
    %v783 = vld [vmem:[%s2 + $0x8] sm:$0xff]
    %v784 = vld [vmem:[%s2 + $0x10] sm:$0xff]
    %v785 = vld [vmem:[%s2 + $0x18] sm:$0xff]
    %v786 = vld [vmem:[%s2 + $0x20] sm:$0xff]
    %v787 = vld [vmem:[%s2 + $0x28] sm:$0xff]
    %v788 = vmul.f32 %v776, %v782
    %v789 = vmul.f32 %v777, %v783
    %v790 = vmul.f32 %v778, %v784
    %v791 = vmul.f32 %v779, %v785
    %v792 = vmul.f32 %v780, %v786
    %v793 = vmul.f32 %v781, %v787
    %v794 = vadd.f32 %v788, %v789
    %v795 = vadd.f32 %v794, %v790
    %v796 = vadd.f32 %v795, %v791
    %v797 = vadd.f32 %v796, %v792
    %v798 = vadd.f32 %v797, %v793
    %v799 = vld [vmem:[%s3] sm:$0xff]
    %v800 = vld [vmem:[%s3 + $0x8] sm:$0xff]
    %v801 = vld [vmem:[%s3 + $0x10] sm:$0xff]
    %v802 = vld [vmem:[%s3 + $0x18] sm:$0xff]
    %v803 = vld [vmem:[%s3 + $0x20] sm:$0xff]
    %v804 = vld [vmem:[%s3 + $0x28] sm:$0xff]
    %v805 = vmul.f32 %v776, %v799
    %v806 = vmul.f32 %v777, %v800
    %v807 = vmul.f32 %v778, %v801
    %v808 = vmul.f32 %v779, %v802
    %v809 = vmul.f32 %v780, %v803
    %v810 = vmul.f32 %v781, %v804
    %v811 = vadd.f32 %v805, %v806
    %v812 = vadd.f32 %v811, %v807
    %v813 = vadd.f32 %v812, %v808
    %v814 = vadd.f32 %v813, %v809
    %v815 = vadd.f32 %v814, %v810
    %v816 = vld [vmem:[%s12] sm:$0xff]
    %v817 = vld [vmem:[%s12 + $0x8] sm:$0xff]
    %v818 = vld [vmem:[%s12 + $0x10] sm:$0xff]
    %v819 = vld [vmem:[%s12 + $0x18] sm:$0xff]
    %v820 = vld [vmem:[%s12 + $0x20] sm:$0xff]
    %v821 = vld [vmem:[%s12 + $0x28] sm:$0xff]
    %v822 = vld [vmem:[%s12 + $0x30] sm:$0xff]
    %v823 = vld [vmem:[%s12 + $0x38] sm:$0xff]
    %v824 = vld [vmem:[%s12 + $0x40] sm:$0xff]
    %v825 = vld [vmem:[%s12 + $0x48] sm:$0xff]
    %v826 = vld [vmem:[%s12 + $0x50] sm:$0xff]
    %v827 = vld [vmem:[%s12 + $0x58] sm:$0xff]
    %v828 = vld [vmem:[%s12 + $0x60] sm:$0xff]
    %v829 = vld [vmem:[%s12 + $0x68] sm:$0xff]
    %v830 = vld [vmem:[%s12 + $0x70] sm:$0xff]
    %v831 = vld [vmem:[%s12 + $0x78] sm:$0xff]
    %v832 = vld [vmem:[%s12 + $0x80] sm:$0xff]
    %v833 = vld [vmem:[%s12 + $0x88] sm:$0xff]
    %v834 = vld [vmem:[%s12 + $0x90] sm:$0xff]
    %v835 = vld [vmem:[%s12 + $0x98] sm:$0xff]
    %v836 = vld [vmem:[%s12 + $0xa0] sm:$0xff]
    %v837 = vld [vmem:[%s12 + $0xa8] sm:$0xff]
    %v838 = vld [vmem:[%s12 + $0xb0] sm:$0xff]
    %v839 = vld [vmem:[%s12 + $0xb8] sm:$0xff]
    %v840 = vld [vmem:[%s12 + $0xc0] sm:$0xff]
    %v841 = vld [vmem:[%s12 + $0xc8] sm:$0xff]
    %v842 = vld [vmem:[%s12 + $0xd0] sm:$0xff]
    %v843 = vld [vmem:[%s12 + $0xd8] sm:$0xff]
    %v844 = vld [vmem:[%s12 + $0xe0] sm:$0xff]
    %v845 = vld [vmem:[%s12 + $0xe8] sm:$0xff]
    %v846 = vld [vmem:[%s12 + $0xf0] sm:$0xff]
    %v847 = vld [vmem:[%s12 + $0xf8] sm:$0xff]
    %v848 = vld [vmem:[%s12 + $0x100] sm:$0xff]
    %v849 = vld [vmem:[%s12 + $0x108] sm:$0xff]
    %v850 = vld [vmem:[%s12 + $0x110] sm:$0xff]
    %v851 = vld [vmem:[%s12 + $0x118] sm:$0xff]
    %v852 = vld [vmem:[%s12 + $0x120] sm:$0xff]
    %v853 = vld [vmem:[%s12 + $0x128] sm:$0xff]
    %v854 = vld [vmem:[%s12 + $0x130] sm:$0xff]
    %v855 = vld [vmem:[%s12 + $0x138] sm:$0xff]
    %v856 = vld [vmem:[%s12 + $0x140] sm:$0xff]
    %v857 = vld [vmem:[%s12 + $0x148] sm:$0xff]
    %v858 = vld [vmem:[%s12 + $0x150] sm:$0xff]
    %v859 = vld [vmem:[%s12 + $0x158] sm:$0xff]
    %v860 = vld [vmem:[%s12 + $0x160] sm:$0xff]
    %v861 = vld [vmem:[%s12 + $0x168] sm:$0xff]
    %v862 = vld [vmem:[%s12 + $0x170] sm:$0xff]
    %v863 = vld [vmem:[%s12 + $0x178] sm:$0xff]
    %v864 = vld [vmem:[%s12 + $0x180] sm:$0xff]
    %v865 = vld [vmem:[%s12 + $0x188] sm:$0xff]
    %v866 = vld [vmem:[%s12 + $0x190] sm:$0xff]
    %v867 = vld [vmem:[%s12 + $0x198] sm:$0xff]
    %v868 = vld [vmem:[%s12 + $0x1a0] sm:$0xff]
    %v869 = vld [vmem:[%s12 + $0x1a8] sm:$0xff]
    %v870 = vld [vmem:[%s12 + $0x1b0] sm:$0xff]
    %v871 = vld [vmem:[%s12 + $0x1b8] sm:$0xff]
    %v872 = vld [vmem:[%s12 + $0x1c0] sm:$0xff]
    %v873 = vld [vmem:[%s12 + $0x1c8] sm:$0xff]
    %v874 = vld [vmem:[%s12 + $0x1d0] sm:$0xff]
    %v875 = vld [vmem:[%s12 + $0x1d8] sm:$0xff]
    %v876 = vld [vmem:[%s12 + $0x1e0] sm:$0xff]
    %v877 = vld [vmem:[%s12 + $0x1e8] sm:$0xff]
    %v878 = vld [vmem:[%s12 + $0x1f0] sm:$0xff]
    %v879 = vld [vmem:[%s12 + $0x1f8] sm:$0xff]
    %v880 = vld [vmem:[%s13] sm:$0xff]
    %v881 = vld [vmem:[%s13 + $0x8] sm:$0xff]
    %v882 = vld [vmem:[%s13 + $0x10] sm:$0xff]
    %v883 = vld [vmem:[%s13 + $0x18] sm:$0xff]
    %v884 = vld [vmem:[%s13 + $0x20] sm:$0xff]
    %v885 = vld [vmem:[%s13 + $0x28] sm:$0xff]
    %v886 = vld [vmem:[%s13 + $0x30] sm:$0xff]
    %v887 = vld [vmem:[%s13 + $0x38] sm:$0xff]
    %v888 = vld [vmem:[%s13 + $0x40] sm:$0xff]
    %v889 = vld [vmem:[%s13 + $0x48] sm:$0xff]
    %v890 = vld [vmem:[%s13 + $0x50] sm:$0xff]
    %v891 = vld [vmem:[%s13 + $0x58] sm:$0xff]
    %v892 = vld [vmem:[%s13 + $0x60] sm:$0xff]
    %v893 = vld [vmem:[%s13 + $0x68] sm:$0xff]
    %v894 = vld [vmem:[%s13 + $0x70] sm:$0xff]
    %v895 = vld [vmem:[%s13 + $0x78] sm:$0xff]
    %v896 = vld [vmem:[%s13 + $0x80] sm:$0xff]
    %v897 = vld [vmem:[%s13 + $0x88] sm:$0xff]
    %v898 = vld [vmem:[%s13 + $0x90] sm:$0xff]
    %v899 = vld [vmem:[%s13 + $0x98] sm:$0xff]
    %v900 = vld [vmem:[%s13 + $0xa0] sm:$0xff]
    %v901 = vld [vmem:[%s13 + $0xa8] sm:$0xff]
    %v902 = vld [vmem:[%s13 + $0xb0] sm:$0xff]
    %v903 = vld [vmem:[%s13 + $0xb8] sm:$0xff]
    %v904 = vld [vmem:[%s13 + $0xc0] sm:$0xff]
    %v905 = vld [vmem:[%s13 + $0xc8] sm:$0xff]
    %v906 = vld [vmem:[%s13 + $0xd0] sm:$0xff]
    %v907 = vld [vmem:[%s13 + $0xd8] sm:$0xff]
    %v908 = vld [vmem:[%s13 + $0xe0] sm:$0xff]
    %v909 = vld [vmem:[%s13 + $0xe8] sm:$0xff]
    %v910 = vld [vmem:[%s13 + $0xf0] sm:$0xff]
    %v911 = vld [vmem:[%s13 + $0xf8] sm:$0xff]
    %v912 = vld [vmem:[%s13 + $0x100] sm:$0xff]
    %v913 = vld [vmem:[%s13 + $0x108] sm:$0xff]
    %v914 = vld [vmem:[%s13 + $0x110] sm:$0xff]
    %v915 = vld [vmem:[%s13 + $0x118] sm:$0xff]
    %v916 = vld [vmem:[%s13 + $0x120] sm:$0xff]
    %v917 = vld [vmem:[%s13 + $0x128] sm:$0xff]
    %v918 = vld [vmem:[%s13 + $0x130] sm:$0xff]
    %v919 = vld [vmem:[%s13 + $0x138] sm:$0xff]
    %v920 = vld [vmem:[%s13 + $0x140] sm:$0xff]
    %v921 = vld [vmem:[%s13 + $0x148] sm:$0xff]
    %v922 = vld [vmem:[%s13 + $0x150] sm:$0xff]
    %v923 = vld [vmem:[%s13 + $0x158] sm:$0xff]
    %v924 = vld [vmem:[%s13 + $0x160] sm:$0xff]
    %v925 = vld [vmem:[%s13 + $0x168] sm:$0xff]
    %v926 = vld [vmem:[%s13 + $0x170] sm:$0xff]
    %v927 = vld [vmem:[%s13 + $0x178] sm:$0xff]
    %v928 = vld [vmem:[%s13 + $0x180] sm:$0xff]
    %v929 = vld [vmem:[%s13 + $0x188] sm:$0xff]
    %v930 = vld [vmem:[%s13 + $0x190] sm:$0xff]
    %v931 = vld [vmem:[%s13 + $0x198] sm:$0xff]
    %v932 = vld [vmem:[%s13 + $0x1a0] sm:$0xff]
    %v933 = vld [vmem:[%s13 + $0x1a8] sm:$0xff]
    %v934 = vld [vmem:[%s13 + $0x1b0] sm:$0xff]
    %v935 = vld [vmem:[%s13 + $0x1b8] sm:$0xff]
    %v936 = vld [vmem:[%s13 + $0x1c0] sm:$0xff]
    %v937 = vld [vmem:[%s13 + $0x1c8] sm:$0xff]
    %v938 = vld [vmem:[%s13 + $0x1d0] sm:$0xff]
    %v939 = vld [vmem:[%s13 + $0x1d8] sm:$0xff]
    %v940 = vld [vmem:[%s13 + $0x1e0] sm:$0xff]
    %v941 = vld [vmem:[%s13 + $0x1e8] sm:$0xff]
    %v942 = vld [vmem:[%s13 + $0x1f0] sm:$0xff]
    %v943 = vld [vmem:[%s13 + $0x1f8] sm:$0xff]
    %944 = vmatprep.subr.mxu0 %v881
    %945 = vmatpush1.msra.mxu0 %v880
    %946 = vmatprep.subr.mxu0 %v885
    %947 = vmatpush1.msra.mxu0 %v884
    %948 = vmatprep.subr.mxu0 %v889
    %949 = vmatpush1.msra.mxu0 %v888
    %950 = vmatprep.subr.mxu0 %v893
    %951 = vmatpush1.msra.mxu0 %v892
    %952 = vmatprep.subr.mxu0 %v897
    %953 = vmatpush1.msra.mxu0 %v896
    %954 = vmatprep.subr.mxu0 %v901
    %955 = vmatpush1.msra.mxu0 %v900
    %956 = vmatprep.subr.mxu0 %v905
    %957 = vmatpush1.msra.mxu0 %v904
    %958 = vmatprep.subr.mxu0 %v909
    %959 = vmatpush1.msra.mxu0 %v908
    %960 = vmatprep.subr.mxu0 %v913
    %961 = vmatpush1.msra.mxu0 %v912
    %962 = vmatprep.subr.mxu0 %v917
    %963 = vmatpush1.msra.mxu0 %v916
    %964 = vmatprep.subr.mxu0 %v921
    %965 = vmatpush1.msra.mxu0 %v920
    %966 = vmatprep.subr.mxu0 %v925
    %967 = vmatpush1.msra.mxu0 %v924
    %968 = vmatprep.subr.mxu0 %v929
    %969 = vmatpush1.msra.mxu0 %v928
    %970 = vmatprep.subr.mxu0 %v933
    %971 = vmatpush1.msra.mxu0 %v932
    %972 = vmatprep.subr.mxu0 %v937
    %973 = vmatpush1.msra.mxu0 %v936
    %974 = vmatprep.subr.mxu0 %v941
    %975 = vmatpush1.msra.mxu0 %v940
    %976 = vmatprep.subr.mxu0 0.0
    %977 = vmatpush1.msra.mxu0 0.0
    %978 = vmatprep.subr.mxu0 0.0
    %979 = vmatpush1.msra.mxu0 0.0
    %980 = vmatprep.subr.mxu0 0.0
    %981 = vmatpush1.msra.mxu0 0.0
    %982 = vmatprep.subr.mxu0 0.0
    %983 = vmatpush1.msra.mxu0 0.0
    %984 = vmatprep.subr.mxu0 0.0
    %985 = vmatpush1.msra.mxu0 0.0
    %986 = vmatprep.subr.mxu0 0.0
    %987 = vmatpush1.msra.mxu0 0.0
    %988 = vmatprep.subr.mxu0 0.0
    %989 = vmatpush1.msra.mxu0 0.0
    %990 = vmatprep.subr.mxu0 0.0
    %991 = vmatpush1.msra.mxu0 0.0
    %992 = vmatprep.subr.mxu0 0.0
    %993 = vmatpush1.msra.mxu0 0.0
    %994 = vmatprep.subr.mxu0 0.0
    %995 = vmatpush1.msra.mxu0 0.0
    %996 = vmatprep.subr.mxu0 0.0
    %997 = vmatpush1.msra.mxu0 0.0
    %998 = vmatprep.subr.mxu0 0.0
    %999 = vmatpush1.msra.mxu0 0.0
    %1000 = vmatprep.subr.mxu0 0.0
    %1001 = vmatpush1.msra.mxu0 0.0
    %1002 = vmatprep.subr.mxu0 0.0
    %1003 = vmatpush1.msra.mxu0 0.0
    %1004 = vmatprep.subr.mxu0 0.0
    %1005 = vmatpush1.msra.mxu0 0.0
    %1006 = vmatprep.subr.mxu0 0.0
    %1007 = vmatpush1.msra.mxu0 0.0
    %1008 = vmatprep.mubr.f32.mxu0 0.0
    %1009 = vmatmul.mubr.f32.gmra.mrb[0].mxu0 %v798
    %v1010 = vpop.f32.mrb[0].mxu0
    %v1011 = vadd.f32 0.0, %v1010
    %v1012 = vpop.f32.mrb[0].mxu0
    %v1013 = vadd.f32 0.0, %v1012
    %1014 = vdwg.mxu0
    %1015 = vmatprep.subr.mxu0 %v883
    %1016 = vmatpush1.msra.mxu0 %v882
    %1017 = vmatprep.subr.mxu0 %v887
    %1018 = vmatpush1.msra.mxu0 %v886
    %1019 = vmatprep.subr.mxu0 %v891
    %1020 = vmatpush1.msra.mxu0 %v890
    %1021 = vmatprep.subr.mxu0 %v895
    %1022 = vmatpush1.msra.mxu0 %v894
    %1023 = vmatprep.subr.mxu0 %v899
    %1024 = vmatpush1.msra.mxu0 %v898
    %1025 = vmatprep.subr.mxu0 %v903
    %1026 = vmatpush1.msra.mxu0 %v902
    %1027 = vmatprep.subr.mxu0 %v907
    %1028 = vmatpush1.msra.mxu0 %v906
    %1029 = vmatprep.subr.mxu0 %v911
    %1030 = vmatpush1.msra.mxu0 %v910
    %1031 = vmatprep.subr.mxu0 %v915
    %1032 = vmatpush1.msra.mxu0 %v914
    %1033 = vmatprep.subr.mxu0 %v919
    %1034 = vmatpush1.msra.mxu0 %v918
    %1035 = vmatprep.subr.mxu0 %v923
    %1036 = vmatpush1.msra.mxu0 %v922
    %1037 = vmatprep.subr.mxu0 %v927
    %1038 = vmatpush1.msra.mxu0 %v926
    %1039 = vmatprep.subr.mxu0 %v931
    %1040 = vmatpush1.msra.mxu0 %v930
    %1041 = vmatprep.subr.mxu0 %v935
    %1042 = vmatpush1.msra.mxu0 %v934
    %1043 = vmatprep.subr.mxu0 %v939
    %1044 = vmatpush1.msra.mxu0 %v938
    %1045 = vmatprep.subr.mxu0 %v943
    %1046 = vmatpush1.msra.mxu0 %v942
    %1047 = vmatprep.subr.mxu0 0.0
    %1048 = vmatpush1.msra.mxu0 0.0
    %1049 = vmatprep.subr.mxu0 0.0
    %1050 = vmatpush1.msra.mxu0 0.0
    %1051 = vmatprep.subr.mxu0 0.0
    %1052 = vmatpush1.msra.mxu0 0.0
    %1053 = vmatprep.subr.mxu0 0.0
    %1054 = vmatpush1.msra.mxu0 0.0
    %1055 = vmatprep.subr.mxu0 0.0
    %1056 = vmatpush1.msra.mxu0 0.0
    %1057 = vmatprep.subr.mxu0 0.0
    %1058 = vmatpush1.msra.mxu0 0.0
    %1059 = vmatprep.subr.mxu0 0.0
    %1060 = vmatpush1.msra.mxu0 0.0
    %1061 = vmatprep.subr.mxu0 0.0
    %1062 = vmatpush1.msra.mxu0 0.0
    %1063 = vmatprep.subr.mxu0 0.0
    %1064 = vmatpush1.msra.mxu0 0.0
    %1065 = vmatprep.subr.mxu0 0.0
    %1066 = vmatpush1.msra.mxu0 0.0
    %1067 = vmatprep.subr.mxu0 0.0
    %1068 = vmatpush1.msra.mxu0 0.0
    %1069 = vmatprep.subr.mxu0 0.0
    %1070 = vmatpush1.msra.mxu0 0.0
    %1071 = vmatprep.subr.mxu0 0.0
    %1072 = vmatpush1.msra.mxu0 0.0
    %1073 = vmatprep.subr.mxu0 0.0
    %1074 = vmatpush1.msra.mxu0 0.0
    %1075 = vmatprep.subr.mxu0 0.0
    %1076 = vmatpush1.msra.mxu0 0.0
    %1077 = vmatprep.subr.mxu0 0.0
    %1078 = vmatpush1.msra.mxu0 0.0
    %1079 = vmatprep.mubr.f32.mxu0 0.0
    %1080 = vmatmul.mubr.f32.gmra.mrb[0].mxu0 %v798
    %v1081 = vpop.f32.mrb[0].mxu0
    %v1082 = vadd.f32 0.0, %v1081
    %v1083 = vpop.f32.mrb[0].mxu0
    %v1084 = vadd.f32 0.0, %v1083
    %1085 = vdwg.mxu0
    %1086 = vmatprep.subr.mxu0 %v817
    %1087 = vmatpush1.msra.mxu0 %v816
    %1088 = vmatprep.subr.mxu0 %v821
    %1089 = vmatpush1.msra.mxu0 %v820
    %1090 = vmatprep.subr.mxu0 %v825
    %1091 = vmatpush1.msra.mxu0 %v824
    %1092 = vmatprep.subr.mxu0 %v829
    %1093 = vmatpush1.msra.mxu0 %v828
    %1094 = vmatprep.subr.mxu0 %v833
    %1095 = vmatpush1.msra.mxu0 %v832
    %1096 = vmatprep.subr.mxu0 %v837
    %1097 = vmatpush1.msra.mxu0 %v836
    %1098 = vmatprep.subr.mxu0 %v841
    %1099 = vmatpush1.msra.mxu0 %v840
    %1100 = vmatprep.subr.mxu0 %v845
    %1101 = vmatpush1.msra.mxu0 %v844
    %1102 = vmatprep.subr.mxu0 %v849
    %1103 = vmatpush1.msra.mxu0 %v848
    %1104 = vmatprep.subr.mxu0 %v853
    %1105 = vmatpush1.msra.mxu0 %v852
    %1106 = vmatprep.subr.mxu0 %v857
    %1107 = vmatpush1.msra.mxu0 %v856
    %1108 = vmatprep.subr.mxu0 %v861
    %1109 = vmatpush1.msra.mxu0 %v860
    %1110 = vmatprep.subr.mxu0 %v865
    %1111 = vmatpush1.msra.mxu0 %v864
    %1112 = vmatprep.subr.mxu0 %v869
    %1113 = vmatpush1.msra.mxu0 %v868
    %1114 = vmatprep.subr.mxu0 %v873
    %1115 = vmatpush1.msra.mxu0 %v872
    %1116 = vmatprep.subr.mxu0 %v877
    %1117 = vmatpush1.msra.mxu0 %v876
    %1118 = vmatprep.subr.mxu0 0.0
    %1119 = vmatpush1.msra.mxu0 0.0
    %1120 = vmatprep.subr.mxu0 0.0
    %1121 = vmatpush1.msra.mxu0 0.0
    %1122 = vmatprep.subr.mxu0 0.0
    %1123 = vmatpush1.msra.mxu0 0.0
    %1124 = vmatprep.subr.mxu0 0.0
    %1125 = vmatpush1.msra.mxu0 0.0
    %1126 = vmatprep.subr.mxu0 0.0
    %1127 = vmatpush1.msra.mxu0 0.0
    %1128 = vmatprep.subr.mxu0 0.0
    %1129 = vmatpush1.msra.mxu0 0.0
    %1130 = vmatprep.subr.mxu0 0.0
    %1131 = vmatpush1.msra.mxu0 0.0
    %1132 = vmatprep.subr.mxu0 0.0
    %1133 = vmatpush1.msra.mxu0 0.0
    %1134 = vmatprep.subr.mxu0 0.0
    %1135 = vmatpush1.msra.mxu0 0.0
    %1136 = vmatprep.subr.mxu0 0.0
    %1137 = vmatpush1.msra.mxu0 0.0
    %1138 = vmatprep.subr.mxu0 0.0
    %1139 = vmatpush1.msra.mxu0 0.0
    %1140 = vmatprep.subr.mxu0 0.0
    %1141 = vmatpush1.msra.mxu0 0.0
    %1142 = vmatprep.subr.mxu0 0.0
    %1143 = vmatpush1.msra.mxu0 0.0
    %1144 = vmatprep.subr.mxu0 0.0
    %1145 = vmatpush1.msra.mxu0 0.0
    %1146 = vmatprep.subr.mxu0 0.0
    %1147 = vmatpush1.msra.mxu0 0.0
    %1148 = vmatprep.subr.mxu0 0.0
    %1149 = vmatpush1.msra.mxu0 0.0
    %1150 = vmatprep.mubr.f32.mxu0 0.0
    %1151 = vmatmul.mubr.f32.gmra.mrb[0].mxu0 %v473
    %v1152 = vpop.f32.mrb[0].mxu0
    %v1153 = vadd.f32 %v1011, %v1152
    %v1154 = vpop.f32.mrb[0].mxu0
    %v1155 = vadd.f32 %v1013, %v1154
    %1156 = vdwg.mxu0
    %1157 = vmatprep.subr.mxu0 %v819
    %1158 = vmatpush1.msra.mxu0 %v818
    %1159 = vmatprep.subr.mxu0 %v823
    %1160 = vmatpush1.msra.mxu0 %v822
    %1161 = vmatprep.subr.mxu0 %v827
    %1162 = vmatpush1.msra.mxu0 %v826
    %1163 = vmatprep.subr.mxu0 %v831
    %1164 = vmatpush1.msra.mxu0 %v830
    %1165 = vmatprep.subr.mxu0 %v835
    %1166 = vmatpush1.msra.mxu0 %v834
    %1167 = vmatprep.subr.mxu0 %v839
    %1168 = vmatpush1.msra.mxu0 %v838
    %1169 = vmatprep.subr.mxu0 %v843
    %1170 = vmatpush1.msra.mxu0 %v842
    %1171 = vmatprep.subr.mxu0 %v847
    %1172 = vmatpush1.msra.mxu0 %v846
    %1173 = vmatprep.subr.mxu0 %v851
    %1174 = vmatpush1.msra.mxu0 %v850
    %1175 = vmatprep.subr.mxu0 %v855
    %1176 = vmatpush1.msra.mxu0 %v854
    %1177 = vmatprep.subr.mxu0 %v859
    %1178 = vmatpush1.msra.mxu0 %v858
    %1179 = vmatprep.subr.mxu0 %v863
    %1180 = vmatpush1.msra.mxu0 %v862
    %1181 = vmatprep.subr.mxu0 %v867
    %1182 = vmatpush1.msra.mxu0 %v866
    %1183 = vmatprep.subr.mxu0 %v871
    %1184 = vmatpush1.msra.mxu0 %v870
    %1185 = vmatprep.subr.mxu0 %v875
    %1186 = vmatpush1.msra.mxu0 %v874
    %1187 = vmatprep.subr.mxu0 %v879
    %1188 = vmatpush1.msra.mxu0 %v878
    %1189 = vmatprep.subr.mxu0 0.0
    %1190 = vmatpush1.msra.mxu0 0.0
    %1191 = vmatprep.subr.mxu0 0.0
    %1192 = vmatpush1.msra.mxu0 0.0
    %1193 = vmatprep.subr.mxu0 0.0
    %1194 = vmatpush1.msra.mxu0 0.0
    %1195 = vmatprep.subr.mxu0 0.0
    %1196 = vmatpush1.msra.mxu0 0.0
    %1197 = vmatprep.subr.mxu0 0.0
    %1198 = vmatpush1.msra.mxu0 0.0
    %1199 = vmatprep.subr.mxu0 0.0
    %1200 = vmatpush1.msra.mxu0 0.0
    %1201 = vmatprep.subr.mxu0 0.0
    %1202 = vmatpush1.msra.mxu0 0.0
    %1203 = vmatprep.subr.mxu0 0.0
    %1204 = vmatpush1.msra.mxu0 0.0
    %1205 = vmatprep.subr.mxu0 0.0
    %1206 = vmatpush1.msra.mxu0 0.0
    %1207 = vmatprep.subr.mxu0 0.0
    %1208 = vmatpush1.msra.mxu0 0.0
    %1209 = vmatprep.subr.mxu0 0.0
    %1210 = vmatpush1.msra.mxu0 0.0
    %1211 = vmatprep.subr.mxu0 0.0
    %1212 = vmatpush1.msra.mxu0 0.0
    %1213 = vmatprep.subr.mxu0 0.0
    %1214 = vmatpush1.msra.mxu0 0.0
    %1215 = vmatprep.subr.mxu0 0.0
    %1216 = vmatpush1.msra.mxu0 0.0
    %1217 = vmatprep.subr.mxu0 0.0
    %1218 = vmatpush1.msra.mxu0 0.0
    %1219 = vmatprep.subr.mxu0 0.0
    %1220 = vmatpush1.msra.mxu0 0.0
    %1221 = vmatprep.mubr.f32.mxu0 0.0
    %1222 = vmatmul.mubr.f32.gmra.mrb[0].mxu0 %v473
    %v1223 = vpop.f32.mrb[0].mxu0
    %v1224 = vadd.f32 %v1082, %v1223
    %v1225 = vpop.f32.mrb[0].mxu0
    %v1226 = vadd.f32 %v1084, %v1225
    %1227 = vdwg.mxu0
    %v1228 = vld [vmem:[%s14] sm:$0xff]
    %v1229 = vld [vmem:[%s14 + $0x8] sm:$0xff]
    %v1230 = vld [vmem:[%s14 + $0x10] sm:$0xff]
    %v1231 = vld [vmem:[%s14 + $0x18] sm:$0xff]
    %v1232 = vld [vmem:[%s14 + $0x20] sm:$0xff]
    %v1233 = vld [vmem:[%s14 + $0x28] sm:$0xff]
    %v1234 = vld [vmem:[%s14 + $0x30] sm:$0xff]
    %v1235 = vld [vmem:[%s14 + $0x38] sm:$0xff]
    %v1236 = vld [vmem:[%s14 + $0x40] sm:$0xff]
    %v1237 = vld [vmem:[%s14 + $0x48] sm:$0xff]
    %v1238 = vld [vmem:[%s14 + $0x50] sm:$0xff]
    %v1239 = vld [vmem:[%s14 + $0x58] sm:$0xff]
    %v1240 = vld [vmem:[%s14 + $0x60] sm:$0xff]
    %v1241 = vld [vmem:[%s14 + $0x68] sm:$0xff]
    %v1242 = vld [vmem:[%s14 + $0x70] sm:$0xff]
    %v1243 = vld [vmem:[%s14 + $0x78] sm:$0xff]
    %v1244 = vld [vmem:[%s14 + $0x80] sm:$0xff]
    %v1245 = vld [vmem:[%s14 + $0x88] sm:$0xff]
    %v1246 = vld [vmem:[%s14 + $0x90] sm:$0xff]
    %v1247 = vld [vmem:[%s14 + $0x98] sm:$0xff]
    %v1248 = vld [vmem:[%s14 + $0xa0] sm:$0xff]
    %v1249 = vld [vmem:[%s14 + $0xa8] sm:$0xff]
    %v1250 = vld [vmem:[%s14 + $0xb0] sm:$0xff]
    %v1251 = vld [vmem:[%s14 + $0xb8] sm:$0xff]
    %v1252 = vld [vmem:[%s14 + $0xc0] sm:$0xff]
    %v1253 = vld [vmem:[%s14 + $0xc8] sm:$0xff]
    %v1254 = vld [vmem:[%s14 + $0xd0] sm:$0xff]
    %v1255 = vld [vmem:[%s14 + $0xd8] sm:$0xff]
    %v1256 = vld [vmem:[%s14 + $0xe0] sm:$0xff]
    %v1257 = vld [vmem:[%s14 + $0xe8] sm:$0xff]
    %v1258 = vld [vmem:[%s14 + $0xf0] sm:$0xff]
    %v1259 = vld [vmem:[%s14 + $0xf8] sm:$0xff]
    %v1260 = vld [vmem:[%s14 + $0x100] sm:$0xff]
    %v1261 = vld [vmem:[%s14 + $0x108] sm:$0xff]
    %v1262 = vld [vmem:[%s14 + $0x110] sm:$0xff]
    %v1263 = vld [vmem:[%s14 + $0x118] sm:$0xff]
    %v1264 = vld [vmem:[%s14 + $0x120] sm:$0xff]
    %v1265 = vld [vmem:[%s14 + $0x128] sm:$0xff]
    %v1266 = vld [vmem:[%s14 + $0x130] sm:$0xff]
    %v1267 = vld [vmem:[%s14 + $0x138] sm:$0xff]
    %v1268 = vld [vmem:[%s14 + $0x140] sm:$0xff]
    %v1269 = vld [vmem:[%s14 + $0x148] sm:$0xff]
    %v1270 = vld [vmem:[%s14 + $0x150] sm:$0xff]
    %v1271 = vld [vmem:[%s14 + $0x158] sm:$0xff]
    %v1272 = vld [vmem:[%s14 + $0x160] sm:$0xff]
    %v1273 = vld [vmem:[%s14 + $0x168] sm:$0xff]
    %v1274 = vld [vmem:[%s14 + $0x170] sm:$0xff]
    %v1275 = vld [vmem:[%s14 + $0x178] sm:$0xff]
    %v1276 = vld [vmem:[%s14 + $0x180] sm:$0xff]
    %v1277 = vld [vmem:[%s14 + $0x188] sm:$0xff]
    %v1278 = vld [vmem:[%s14 + $0x190] sm:$0xff]
    %v1279 = vld [vmem:[%s14 + $0x198] sm:$0xff]
    %v1280 = vld [vmem:[%s14 + $0x1a0] sm:$0xff]
    %v1281 = vld [vmem:[%s14 + $0x1a8] sm:$0xff]
    %v1282 = vld [vmem:[%s14 + $0x1b0] sm:$0xff]
    %v1283 = vld [vmem:[%s14 + $0x1b8] sm:$0xff]
    %v1284 = vld [vmem:[%s14 + $0x1c0] sm:$0xff]
    %v1285 = vld [vmem:[%s14 + $0x1c8] sm:$0xff]
    %v1286 = vld [vmem:[%s14 + $0x1d0] sm:$0xff]
    %v1287 = vld [vmem:[%s14 + $0x1d8] sm:$0xff]
    %v1288 = vld [vmem:[%s14 + $0x1e0] sm:$0xff]
    %v1289 = vld [vmem:[%s14 + $0x1e8] sm:$0xff]
    %v1290 = vld [vmem:[%s14 + $0x1f0] sm:$0xff]
    %v1291 = vld [vmem:[%s14 + $0x1f8] sm:$0xff]
    %1292 = vmatprep.subr.mxu0 %v1229
    %1293 = vmatpush1.msra.mxu0 %v1228
    %1294 = vmatprep.subr.mxu0 %v1233
    %1295 = vmatpush1.msra.mxu0 %v1232
    %1296 = vmatprep.subr.mxu0 %v1237
    %1297 = vmatpush1.msra.mxu0 %v1236
    %1298 = vmatprep.subr.mxu0 %v1241
    %1299 = vmatpush1.msra.mxu0 %v1240
    %1300 = vmatprep.subr.mxu0 %v1245
    %1301 = vmatpush1.msra.mxu0 %v1244
    %1302 = vmatprep.subr.mxu0 %v1249
    %1303 = vmatpush1.msra.mxu0 %v1248
    %1304 = vmatprep.subr.mxu0 %v1253
    %1305 = vmatpush1.msra.mxu0 %v1252
    %1306 = vmatprep.subr.mxu0 %v1257
    %1307 = vmatpush1.msra.mxu0 %v1256
    %1308 = vmatprep.subr.mxu0 %v1261
    %1309 = vmatpush1.msra.mxu0 %v1260
    %1310 = vmatprep.subr.mxu0 %v1265
    %1311 = vmatpush1.msra.mxu0 %v1264
    %1312 = vmatprep.subr.mxu0 %v1269
    %1313 = vmatpush1.msra.mxu0 %v1268
    %1314 = vmatprep.subr.mxu0 %v1273
    %1315 = vmatpush1.msra.mxu0 %v1272
    %1316 = vmatprep.subr.mxu0 %v1277
    %1317 = vmatpush1.msra.mxu0 %v1276
    %1318 = vmatprep.subr.mxu0 %v1281
    %1319 = vmatpush1.msra.mxu0 %v1280
    %1320 = vmatprep.subr.mxu0 %v1285
    %1321 = vmatpush1.msra.mxu0 %v1284
    %1322 = vmatprep.subr.mxu0 %v1289
    %1323 = vmatpush1.msra.mxu0 %v1288
    %1324 = vmatprep.subr.mxu0 0.0
    %1325 = vmatpush1.msra.mxu0 0.0
    %1326 = vmatprep.subr.mxu0 0.0
    %1327 = vmatpush1.msra.mxu0 0.0
    %1328 = vmatprep.subr.mxu0 0.0
    %1329 = vmatpush1.msra.mxu0 0.0
    %1330 = vmatprep.subr.mxu0 0.0
    %1331 = vmatpush1.msra.mxu0 0.0
    %1332 = vmatprep.subr.mxu0 0.0
    %1333 = vmatpush1.msra.mxu0 0.0
    %1334 = vmatprep.subr.mxu0 0.0
    %1335 = vmatpush1.msra.mxu0 0.0
    %1336 = vmatprep.subr.mxu0 0.0
    %1337 = vmatpush1.msra.mxu0 0.0
    %1338 = vmatprep.subr.mxu0 0.0
    %1339 = vmatpush1.msra.mxu0 0.0
    %1340 = vmatprep.subr.mxu0 0.0
    %1341 = vmatpush1.msra.mxu0 0.0
    %1342 = vmatprep.subr.mxu0 0.0
    %1343 = vmatpush1.msra.mxu0 0.0
    %1344 = vmatprep.subr.mxu0 0.0
    %1345 = vmatpush1.msra.mxu0 0.0
    %1346 = vmatprep.subr.mxu0 0.0
    %1347 = vmatpush1.msra.mxu0 0.0
    %1348 = vmatprep.subr.mxu0 0.0
    %1349 = vmatpush1.msra.mxu0 0.0
    %1350 = vmatprep.subr.mxu0 0.0
    %1351 = vmatpush1.msra.mxu0 0.0
    %1352 = vmatprep.subr.mxu0 0.0
    %1353 = vmatpush1.msra.mxu0 0.0
    %1354 = vmatprep.subr.mxu0 0.0
    %1355 = vmatpush1.msra.mxu0 0.0
    %1356 = vmatprep.mubr.f32.mxu0 0.0
    %1357 = vmatmul.mubr.f32.gmra.mrb[0].mxu0 %v815
    %v1358 = vpop.f32.mrb[0].mxu0
    %v1359 = vadd.f32 0.0, %v1358
    %v1360 = vpop.f32.mrb[0].mxu0
    %v1361 = vadd.f32 0.0, %v1360
    %1362 = vdwg.mxu0
    %1363 = vmatprep.subr.mxu0 %v1231
    %1364 = vmatpush1.msra.mxu0 %v1230
    %1365 = vmatprep.subr.mxu0 %v1235
    %1366 = vmatpush1.msra.mxu0 %v1234
    %1367 = vmatprep.subr.mxu0 %v1239
    %1368 = vmatpush1.msra.mxu0 %v1238
    %1369 = vmatprep.subr.mxu0 %v1243
    %1370 = vmatpush1.msra.mxu0 %v1242
    %1371 = vmatprep.subr.mxu0 %v1247
    %1372 = vmatpush1.msra.mxu0 %v1246
    %1373 = vmatprep.subr.mxu0 %v1251
    %1374 = vmatpush1.msra.mxu0 %v1250
    %1375 = vmatprep.subr.mxu0 %v1255
    %1376 = vmatpush1.msra.mxu0 %v1254
    %1377 = vmatprep.subr.mxu0 %v1259
    %1378 = vmatpush1.msra.mxu0 %v1258
    %1379 = vmatprep.subr.mxu0 %v1263
    %1380 = vmatpush1.msra.mxu0 %v1262
    %1381 = vmatprep.subr.mxu0 %v1267
    %1382 = vmatpush1.msra.mxu0 %v1266
    %1383 = vmatprep.subr.mxu0 %v1271
    %1384 = vmatpush1.msra.mxu0 %v1270
    %1385 = vmatprep.subr.mxu0 %v1275
    %1386 = vmatpush1.msra.mxu0 %v1274
    %1387 = vmatprep.subr.mxu0 %v1279
    %1388 = vmatpush1.msra.mxu0 %v1278
    %1389 = vmatprep.subr.mxu0 %v1283
    %1390 = vmatpush1.msra.mxu0 %v1282
    %1391 = vmatprep.subr.mxu0 %v1287
    %1392 = vmatpush1.msra.mxu0 %v1286
    %1393 = vmatprep.subr.mxu0 %v1291
    %1394 = vmatpush1.msra.mxu0 %v1290
    %1395 = vmatprep.subr.mxu0 0.0
    %1396 = vmatpush1.msra.mxu0 0.0
    %1397 = vmatprep.subr.mxu0 0.0
    %1398 = vmatpush1.msra.mxu0 0.0
    %1399 = vmatprep.subr.mxu0 0.0
    %1400 = vmatpush1.msra.mxu0 0.0
    %1401 = vmatprep.subr.mxu0 0.0
    %1402 = vmatpush1.msra.mxu0 0.0
    %1403 = vmatprep.subr.mxu0 0.0
    %1404 = vmatpush1.msra.mxu0 0.0
    %1405 = vmatprep.subr.mxu0 0.0
    %1406 = vmatpush1.msra.mxu0 0.0
    %1407 = vmatprep.subr.mxu0 0.0
    %1408 = vmatpush1.msra.mxu0 0.0
    %1409 = vmatprep.subr.mxu0 0.0
    %1410 = vmatpush1.msra.mxu0 0.0
    %1411 = vmatprep.subr.mxu0 0.0
    %1412 = vmatpush1.msra.mxu0 0.0
    %1413 = vmatprep.subr.mxu0 0.0
    %1414 = vmatpush1.msra.mxu0 0.0
    %1415 = vmatprep.subr.mxu0 0.0
    %1416 = vmatpush1.msra.mxu0 0.0
    %1417 = vmatprep.subr.mxu0 0.0
    %1418 = vmatpush1.msra.mxu0 0.0
    %1419 = vmatprep.subr.mxu0 0.0
    %1420 = vmatpush1.msra.mxu0 0.0
    %1421 = vmatprep.subr.mxu0 0.0
    %1422 = vmatpush1.msra.mxu0 0.0
    %1423 = vmatprep.subr.mxu0 0.0
    %1424 = vmatpush1.msra.mxu0 0.0
    %1425 = vmatprep.subr.mxu0 0.0
    %1426 = vmatpush1.msra.mxu0 0.0
    %1427 = vmatprep.mubr.f32.mxu0 0.0
    %1428 = vmatmul.mubr.f32.gmra.mrb[0].mxu0 %v815
    %v1429 = vpop.f32.mrb[0].mxu0
    %v1430 = vadd.f32 0.0, %v1429
    %v1431 = vpop.f32.mrb[0].mxu0
    %v1432 = vadd.f32 0.0, %v1431
    %1433 = vdwg.mxu0
    %v1434 = vadd.f32 %v1153, %v1359
    %v1435 = vadd.f32 %v1155, %v1361
    %v1436 = vadd.f32 %v1224, %v1430
    %v1437 = vadd.f32 %v1226, %v1432
    %v1438 = vld [vmem:[%s15] sm:$0xf]
    %v1440 = vlaneseq
    %v1441 = vshrl.u32 %v1440, 7
    %v1442 = vsub.s32 0, %v1441
    %v1443 = vrot.slane %v1438, %v1442
    %v1444 = vlaneseq
    %v1445 = vshrl.u32 %v1444, 7
    %v1446 = vsub.s32 1, %v1445
    %v1447 = vrot.slane %v1438, %v1446
    %v1448 = vlaneseq
    %v1449 = vshrl.u32 %v1448, 7
    %v1450 = vsub.s32 2, %v1449
    %v1451 = vrot.slane %v1438, %v1450
    %v1452 = vlaneseq
    %v1453 = vshrl.u32 %v1452, 7
    %v1454 = vsub.s32 3, %v1453
    %v1455 = vrot.slane %v1438, %v1454
    %v1460 = vadd.f32 %v1434, %v1443
    %v1461 = vadd.f32 %v1435, %v1447
    %v1462 = vadd.f32 %v1436, %v1451
    %v1463 = vadd.f32 %v1437, %v1455
    %v1464 = vadd.f32 %v1460, %v631
    %v1465 = vxor.u32 %v1464, 2147483648
    %v1466 = vmul.f32 %v1465, 1.442695
    %v1467 = vpow.pop %v1466
    %v1468 = vadd.f32 %v1467, 1.0
    %v1469 = vrcp.pop %v1468
    %v1470 = vmul.f32 1.0, %v1469
    %v1471 = vadd.f32 %v1461, %v700
    %v1472 = vxor.u32 %v1471, 2147483648
    %v1473 = vmul.f32 %v1472, 1.442695
    %v1474 = vpow.pop %v1473
    %v1475 = vadd.f32 %v1474, 1.0
    %v1476 = vrcp.pop %v1475
    %v1477 = vmul.f32 1.0, %v1476
    %v1478 = vmul.f32 %v1470, %v702
    %v1479 = vadd.f32 %v1462, %v1478
    %v1480 = vtanh.pop %v1479
    %v1481 = vsub.f32 1.0, %v1477
    %v1482 = vmul.f32 %v1481, %v1480
    %v1483 = vmul.f32 %v1477, %v388
    %v1484 = vadd.f32 %v1482, %v1483
    %v1485 = vld [vmem:[#allocation11] sm:$0xff]
    %v1486 = vld [vmem:[#allocation11 + $0x8] sm:$0xff]
    %v1487 = vld [vmem:[#allocation11 + $0x10] sm:$0xff]
    %v1488 = vld [vmem:[#allocation11 + $0x18] sm:$0xff]
    %v1489 = vld [vmem:[#allocation11 + $0x20] sm:$0xff]
    %v1490 = vld [vmem:[#allocation11 + $0x28] sm:$0xff]
    %v1491 = vld [vmem:[#allocation11 + $0x30] sm:$0xff]
    %v1492 = vld [vmem:[#allocation11 + $0x38] sm:$0xff]
    %v1493 = vld [vmem:[#allocation11 + $0x40] sm:$0xff]
    %v1494 = vld [vmem:[#allocation11 + $0x48] sm:$0xff]
    %v1495 = vld [vmem:[#allocation11 + $0x50] sm:$0xff]
    %v1496 = vld [vmem:[#allocation11 + $0x58] sm:$0xff]
    %v1497 = vld [vmem:[#allocation11 + $0x60] sm:$0xff]
    %v1498 = vld [vmem:[#allocation11 + $0x68] sm:$0xff]
    %v1499 = vld [vmem:[#allocation11 + $0x70] sm:$0xff]
    %v1500 = vld [vmem:[#allocation11 + $0x78] sm:$0xff]
    %1501 = vmatprep.subr.mxu0 0.0
    %1502 = vmatpush1.msra.mxu0 %v1485
    %1503 = vmatprep.subr.mxu0 0.0
    %1504 = vmatpush1.msra.mxu0 %v1486
    %1505 = vmatprep.subr.mxu0 0.0
    %1506 = vmatpush1.msra.mxu0 %v1487
    %1507 = vmatprep.subr.mxu0 0.0
    %1508 = vmatpush1.msra.mxu0 %v1488
    %1509 = vmatprep.subr.mxu0 0.0
    %1510 = vmatpush1.msra.mxu0 %v1489
    %1511 = vmatprep.subr.mxu0 0.0
    %1512 = vmatpush1.msra.mxu0 %v1490
    %1513 = vmatprep.subr.mxu0 0.0
    %1514 = vmatpush1.msra.mxu0 %v1491
    %1515 = vmatprep.subr.mxu0 0.0
    %1516 = vmatpush1.msra.mxu0 %v1492
    %1517 = vmatprep.subr.mxu0 0.0
    %1518 = vmatpush1.msra.mxu0 %v1493
    %1519 = vmatprep.subr.mxu0 0.0
    %1520 = vmatpush1.msra.mxu0 %v1494
    %1521 = vmatprep.subr.mxu0 0.0
    %1522 = vmatpush1.msra.mxu0 %v1495
    %1523 = vmatprep.subr.mxu0 0.0
    %1524 = vmatpush1.msra.mxu0 %v1496
    %1525 = vmatprep.subr.mxu0 0.0
    %1526 = vmatpush1.msra.mxu0 %v1497
    %1527 = vmatprep.subr.mxu0 0.0
    %1528 = vmatpush1.msra.mxu0 %v1498
    %1529 = vmatprep.subr.mxu0 0.0
    %1530 = vmatpush1.msra.mxu0 %v1499
    %1531 = vmatprep.subr.mxu0 0.0
    %1532 = vmatpush1.msra.mxu0 %v1500
    %1533 = vmatprep.subr.mxu0 0.0
    %1534 = vmatpush1.msra.mxu0 0.0
    %1535 = vmatprep.subr.mxu0 0.0
    %1536 = vmatpush1.msra.mxu0 0.0
    %1537 = vmatprep.subr.mxu0 0.0
    %1538 = vmatpush1.msra.mxu0 0.0
    %1539 = vmatprep.subr.mxu0 0.0
    %1540 = vmatpush1.msra.mxu0 0.0
    %1541 = vmatprep.subr.mxu0 0.0
    %1542 = vmatpush1.msra.mxu0 0.0
    %1543 = vmatprep.subr.mxu0 0.0
    %1544 = vmatpush1.msra.mxu0 0.0
    %1545 = vmatprep.subr.mxu0 0.0
    %1546 = vmatpush1.msra.mxu0 0.0
    %1547 = vmatprep.subr.mxu0 0.0
    %1548 = vmatpush1.msra.mxu0 0.0
    %1549 = vmatprep.subr.mxu0 0.0
    %1550 = vmatpush1.msra.mxu0 0.0
    %1551 = vmatprep.subr.mxu0 0.0
    %1552 = vmatpush1.msra.mxu0 0.0
    %1553 = vmatprep.subr.mxu0 0.0
    %1554 = vmatpush1.msra.mxu0 0.0
    %1555 = vmatprep.subr.mxu0 0.0
    %1556 = vmatpush1.msra.mxu0 0.0
    %1557 = vmatprep.subr.mxu0 0.0
    %1558 = vmatpush1.msra.mxu0 0.0
    %1559 = vmatprep.subr.mxu0 0.0
    %1560 = vmatpush1.msra.mxu0 0.0
    %1561 = vmatprep.subr.mxu0 0.0
    %1562 = vmatpush1.msra.mxu0 0.0
    %1563 = vmatprep.subr.mxu0 0.0
    %1564 = vmatpush1.msra.mxu0 0.0
    %1565 = vmatprep.mubr.f32.mxu0 0.0
    %1566 = vmatmul.mubr.f32.gmra.mrb[0].mxu0 %v1484
    %v1567 = vpop.f32.mrb[0].mxu0
    %v1568 = vadd.f32 0.0, %v1567
    %v1569 = vpop.f32.mrb[0].mxu0
    %1570 = vdwg.mxu0
    %v1571 = vadd.f32 %v1463, %v1568
    %s1572 = scalar_lea.vmem %s17, 8
    %1573 = vst [vmem:[%s1572] sm:$0xff] %v1571
    %s1574 = sld [smem:[#allocation4]]
    %p1575 = scmp.ne.s32.totalorder %s1574, 0
    // Predicated region
    $region90: #{seq2seq_forward.3} parent=1 // pred_check
      %p1576 = pneg %p1575
    $region91: #{seq2seq_forward.3} parent=1 // pred_check_branch
      %1578 = sbr.rel (%p1576) target = $region93
    $region92: #{seq2seq_forward.3} parent=1 // pred_region
      %s1579 = scalar_lea.vmem %s1, 8
      %v1580 = vld [vmem:[%s1579] sm:$0xff]
      %1581 = vset.pattern.permute.xlu0 0
      %1582 = vperm.xlu0 %1581, %v1580
      %v1583 = vpop.permute.xlu0 %1582
      %vm1584 = vcmp.eq.s32.totalorder %v376, %v1583
      %v1585 = vsel %vm1584, 1, 0
      %v1586 = vcvt.s32.f32 %v1585
      %1587 = vst [vmem:[#allocation3] sm:$0xff] %v1586
    $region93: #{seq2seq_forward.3} parent=1 // pred_fallthru
      _
    %p1588 = scmp.eq.s32.totalorder %s1574, 0
    // Predicated region
    $region94: #{seq2seq_forward.3} parent=1 // pred_check
      %p1589 = pneg %p1588
    $region95: #{seq2seq_forward.3} parent=1 // pred_check_branch
      %1591 = sbr.rel (%p1589) target = $region97
    $region96: #{seq2seq_forward.3} parent=1 // pred_region
      %v1592 = vsel %vm378, %v1571, -inf
      %1593 = vmax.xlane.f32.xlu0 %v1592
      %v1594 = vpop.xlane.xlu0 %1593
      %vm1595 = vcmp.eq.f32.partialorder %v1592, %v1594
      %v1596 = vsel %vm1595, %v377, 128.0
      %1597 = vmin.xlane.f32.xlu0 %v1596
      %v1598 = vpop.xlane.xlu0 %1597
      %vm1599 = vcmp.eq.f32.partialorder %v377, %v1598
      %v1600 = vsel %vm1599, 1, 0
      %v1601 = vcvt.s32.f32 %v1600
      %1602 = vst [vmem:[#allocation3] sm:$0xff] %v1601
    $region97: #{seq2seq_forward.3} parent=1 // pred_fallthru
      _
    %v1603 = vld [vmem:[#allocation3] sm:$0xff]
    %v1604 = vld [vmem:[#allocation7] sm:$0xff]
    %v1605 = vld [vmem:[#allocation7 + $0x8] sm:$0xff]
    %v1606 = vld [vmem:[#allocation7 + $0x10] sm:$0xff]
    %v1607 = vld [vmem:[#allocation7 + $0x18] sm:$0xff]
    %v1608 = vld [vmem:[#allocation7 + $0x20] sm:$0xff]
    %v1609 = vld [vmem:[#allocation7 + $0x28] sm:$0xff]
    %v1610 = vld [vmem:[#allocation7 + $0x30] sm:$0xff]
    %v1611 = vld [vmem:[#allocation7 + $0x38] sm:$0xff]
    %v1612 = vld [vmem:[#allocation7 + $0x40] sm:$0xff]
    %v1613 = vld [vmem:[#allocation7 + $0x48] sm:$0xff]
    %v1614 = vld [vmem:[#allocation7 + $0x50] sm:$0xff]
    %v1615 = vld [vmem:[#allocation7 + $0x58] sm:$0xff]
    %v1616 = vld [vmem:[#allocation7 + $0x60] sm:$0xff]
    %v1617 = vld [vmem:[#allocation7 + $0x68] sm:$0xff]
    %v1618 = vld [vmem:[#allocation7 + $0x70] sm:$0xff]
    %v1619 = vld [vmem:[#allocation7 + $0x78] sm:$0xff]
    %1620 = vmatprep.subr.mxu0 0.0
    %1621 = vmatpush1.msra.mxu0 %v1604
    %1622 = vmatprep.subr.mxu0 0.0
    %1623 = vmatpush1.msra.mxu0 %v1605
    %1624 = vmatprep.subr.mxu0 0.0
    %1625 = vmatpush1.msra.mxu0 %v1606
    %1626 = vmatprep.subr.mxu0 0.0
    %1627 = vmatpush1.msra.mxu0 %v1607
    %1628 = vmatprep.subr.mxu0 0.0
    %1629 = vmatpush1.msra.mxu0 %v1608
    %1630 = vmatprep.subr.mxu0 0.0
    %1631 = vmatpush1.msra.mxu0 %v1609
    %1632 = vmatprep.subr.mxu0 0.0
    %1633 = vmatpush1.msra.mxu0 %v1610
    %1634 = vmatprep.subr.mxu0 0.0
    %1635 = vmatpush1.msra.mxu0 %v1611
    %1636 = vmatprep.subr.mxu0 0.0
    %1637 = vmatpush1.msra.mxu0 %v1612
    %1638 = vmatprep.subr.mxu0 0.0
    %1639 = vmatpush1.msra.mxu0 %v1613
    %1640 = vmatprep.subr.mxu0 0.0
    %1641 = vmatpush1.msra.mxu0 %v1614
    %1642 = vmatprep.subr.mxu0 0.0
    %1643 = vmatpush1.msra.mxu0 %v1615
    %1644 = vmatprep.subr.mxu0 0.0
    %1645 = vmatpush1.msra.mxu0 %v1616
    %1646 = vmatprep.subr.mxu0 0.0
    %1647 = vmatpush1.msra.mxu0 %v1617
    %1648 = vmatprep.subr.mxu0 0.0
    %1649 = vmatpush1.msra.mxu0 %v1618
    %1650 = vmatprep.subr.mxu0 0.0
    %1651 = vmatpush1.msra.mxu0 %v1619
    %1652 = vmatprep.subr.mxu0 0.0
    %1653 = vmatpush1.msra.mxu0 0.0
    %1654 = vmatprep.subr.mxu0 0.0
    %1655 = vmatpush1.msra.mxu0 0.0
    %1656 = vmatprep.subr.mxu0 0.0
    %1657 = vmatpush1.msra.mxu0 0.0
    %1658 = vmatprep.subr.mxu0 0.0
    %1659 = vmatpush1.msra.mxu0 0.0
    %1660 = vmatprep.subr.mxu0 0.0
    %1661 = vmatpush1.msra.mxu0 0.0
    %1662 = vmatprep.subr.mxu0 0.0
    %1663 = vmatpush1.msra.mxu0 0.0
    %1664 = vmatprep.subr.mxu0 0.0
    %1665 = vmatpush1.msra.mxu0 0.0
    %1666 = vmatprep.subr.mxu0 0.0
    %1667 = vmatpush1.msra.mxu0 0.0
    %1668 = vmatprep.subr.mxu0 0.0
    %1669 = vmatpush1.msra.mxu0 0.0
    %1670 = vmatprep.subr.mxu0 0.0
    %1671 = vmatpush1.msra.mxu0 0.0
    %1672 = vmatprep.subr.mxu0 0.0
    %1673 = vmatpush1.msra.mxu0 0.0
    %1674 = vmatprep.subr.mxu0 0.0
    %1675 = vmatpush1.msra.mxu0 0.0
    %1676 = vmatprep.subr.mxu0 0.0
    %1677 = vmatpush1.msra.mxu0 0.0
    %1678 = vmatprep.subr.mxu0 0.0
    %1679 = vmatpush1.msra.mxu0 0.0
    %1680 = vmatprep.subr.mxu0 0.0
    %1681 = vmatpush1.msra.mxu0 0.0
    %1682 = vmatprep.subr.mxu0 0.0
    %1683 = vmatpush1.msra.mxu0 0.0
    %1684 = vmatprep.mubr.f32.mxu0 0.0
    %1685 = vmatmul.mubr.f32.gmra.mrb[0].mxu0 %v1603
    %v1686 = vpop.f32.mrb[0].mxu0
    %v1687 = vadd.f32 0.0, %v1686
    %v1688 = vpop.f32.mrb[0].mxu0
    %1689 = vdwg.mxu0
    %v1690 = vld [vmem:[%s10] sm:$0xff]
    %v1691 = vld [vmem:[%s10 + $0x8] sm:$0xff]
    %v1692 = vld [vmem:[%s10 + $0x10] sm:$0xff]
    %v1693 = vld [vmem:[%s10 + $0x18] sm:$0xff]
    %v1694 = vld [vmem:[%s10 + $0x20] sm:$0xff]
    %v1695 = vld [vmem:[%s10 + $0x28] sm:$0xff]
    %v1696 = vld [vmem:[%s10 + $0x30] sm:$0xff]
    %v1697 = vld [vmem:[%s10 + $0x38] sm:$0xff]
    %v1698 = vld [vmem:[%s10 + $0x40] sm:$0xff]
    %v1699 = vld [vmem:[%s10 + $0x48] sm:$0xff]
    %v1700 = vld [vmem:[%s10 + $0x50] sm:$0xff]
    %v1701 = vld [vmem:[%s10 + $0x58] sm:$0xff]
    %v1702 = vld [vmem:[%s10 + $0x60] sm:$0xff]
    %v1703 = vld [vmem:[%s10 + $0x68] sm:$0xff]
    %v1704 = vld [vmem:[%s10 + $0x70] sm:$0xff]
    %v1705 = vld [vmem:[%s10 + $0x78] sm:$0xff]
    %v1706 = vld [vmem:[%s10 + $0x80] sm:$0xff]
    %v1707 = vld [vmem:[%s10 + $0x88] sm:$0xff]
    %v1708 = vld [vmem:[%s10 + $0x90] sm:$0xff]
    %v1709 = vld [vmem:[%s10 + $0x98] sm:$0xff]
    %v1710 = vld [vmem:[%s10 + $0xa0] sm:$0xff]
    %v1711 = vld [vmem:[%s10 + $0xa8] sm:$0xff]
    %v1712 = vld [vmem:[%s10 + $0xb0] sm:$0xff]
    %v1713 = vld [vmem:[%s10 + $0xb8] sm:$0xff]
    %v1714 = vld [vmem:[%s10 + $0xc0] sm:$0xff]
    %v1715 = vld [vmem:[%s10 + $0xc8] sm:$0xff]
    %v1716 = vld [vmem:[%s10 + $0xd0] sm:$0xff]
    %v1717 = vld [vmem:[%s10 + $0xd8] sm:$0xff]
    %v1718 = vld [vmem:[%s10 + $0xe0] sm:$0xff]
    %v1719 = vld [vmem:[%s10 + $0xe8] sm:$0xff]
    %v1720 = vld [vmem:[%s10 + $0xf0] sm:$0xff]
    %v1721 = vld [vmem:[%s10 + $0xf8] sm:$0xff]
    %v1722 = vld [vmem:[%s10 + $0x100] sm:$0xff]
    %v1723 = vld [vmem:[%s10 + $0x108] sm:$0xff]
    %v1724 = vld [vmem:[%s10 + $0x110] sm:$0xff]
    %v1725 = vld [vmem:[%s10 + $0x118] sm:$0xff]
    %v1726 = vld [vmem:[%s10 + $0x120] sm:$0xff]
    %v1727 = vld [vmem:[%s10 + $0x128] sm:$0xff]
    %v1728 = vld [vmem:[%s10 + $0x130] sm:$0xff]
    %v1729 = vld [vmem:[%s10 + $0x138] sm:$0xff]
    %v1730 = vld [vmem:[%s10 + $0x140] sm:$0xff]
    %v1731 = vld [vmem:[%s10 + $0x148] sm:$0xff]
    %v1732 = vld [vmem:[%s10 + $0x150] sm:$0xff]
    %v1733 = vld [vmem:[%s10 + $0x158] sm:$0xff]
    %v1734 = vld [vmem:[%s10 + $0x160] sm:$0xff]
    %v1735 = vld [vmem:[%s10 + $0x168] sm:$0xff]
    %v1736 = vld [vmem:[%s10 + $0x170] sm:$0xff]
    %v1737 = vld [vmem:[%s10 + $0x178] sm:$0xff]
    %v1738 = vld [vmem:[%s10 + $0x180] sm:$0xff]
    %v1739 = vld [vmem:[%s10 + $0x188] sm:$0xff]
    %v1740 = vld [vmem:[%s10 + $0x190] sm:$0xff]
    %v1741 = vld [vmem:[%s10 + $0x198] sm:$0xff]
    %v1742 = vld [vmem:[%s10 + $0x1a0] sm:$0xff]
    %v1743 = vld [vmem:[%s10 + $0x1a8] sm:$0xff]
    %v1744 = vld [vmem:[%s10 + $0x1b0] sm:$0xff]
    %v1745 = vld [vmem:[%s10 + $0x1b8] sm:$0xff]
    %v1746 = vld [vmem:[%s10 + $0x1c0] sm:$0xff]
    %v1747 = vld [vmem:[%s10 + $0x1c8] sm:$0xff]
    %v1748 = vld [vmem:[%s10 + $0x1d0] sm:$0xff]
    %v1749 = vld [vmem:[%s10 + $0x1d8] sm:$0xff]
    %v1750 = vld [vmem:[%s10 + $0x1e0] sm:$0xff]
    %v1751 = vld [vmem:[%s10 + $0x1e8] sm:$0xff]
    %v1752 = vld [vmem:[%s10 + $0x1f0] sm:$0xff]
    %v1753 = vld [vmem:[%s10 + $0x1f8] sm:$0xff]
    %v1754 = vld [vmem:[%s11] sm:$0xf]
    %v1756 = vlaneseq
    %v1757 = vshrl.u32 %v1756, 7
    %v1758 = vsub.s32 0, %v1757
    %v1759 = vrot.slane %v1754, %v1758
    %v1760 = vlaneseq
    %v1761 = vshrl.u32 %v1760, 7
    %v1762 = vsub.s32 1, %v1761
    %v1763 = vrot.slane %v1754, %v1762
    %v1764 = vlaneseq
    %v1765 = vshrl.u32 %v1764, 7
    %v1766 = vsub.s32 2, %v1765
    %v1767 = vrot.slane %v1754, %v1766
    %v1768 = vlaneseq
    %v1769 = vshrl.u32 %v1768, 7
    %v1770 = vsub.s32 3, %v1769
    %v1771 = vrot.slane %v1754, %v1770
    %1776 = vmatprep.subr.mxu0 %v1691
    %1777 = vmatpush1.msra.mxu0 %v1690
    %1778 = vmatprep.subr.mxu0 %v1695
    %1779 = vmatpush1.msra.mxu0 %v1694
    %1780 = vmatprep.subr.mxu0 %v1699
    %1781 = vmatpush1.msra.mxu0 %v1698
    %1782 = vmatprep.subr.mxu0 %v1703
    %1783 = vmatpush1.msra.mxu0 %v1702
    %1784 = vmatprep.subr.mxu0 %v1707
    %1785 = vmatpush1.msra.mxu0 %v1706
    %1786 = vmatprep.subr.mxu0 %v1711
    %1787 = vmatpush1.msra.mxu0 %v1710
    %1788 = vmatprep.subr.mxu0 %v1715
    %1789 = vmatpush1.msra.mxu0 %v1714
    %1790 = vmatprep.subr.mxu0 %v1719
    %1791 = vmatpush1.msra.mxu0 %v1718
    %1792 = vmatprep.subr.mxu0 %v1723
    %1793 = vmatpush1.msra.mxu0 %v1722
    %1794 = vmatprep.subr.mxu0 %v1727
    %1795 = vmatpush1.msra.mxu0 %v1726
    %1796 = vmatprep.subr.mxu0 %v1731
    %1797 = vmatpush1.msra.mxu0 %v1730
    %1798 = vmatprep.subr.mxu0 %v1735
    %1799 = vmatpush1.msra.mxu0 %v1734
    %1800 = vmatprep.subr.mxu0 %v1739
    %1801 = vmatpush1.msra.mxu0 %v1738
    %1802 = vmatprep.subr.mxu0 %v1743
    %1803 = vmatpush1.msra.mxu0 %v1742
    %1804 = vmatprep.subr.mxu0 %v1747
    %1805 = vmatpush1.msra.mxu0 %v1746
    %1806 = vmatprep.subr.mxu0 %v1751
    %1807 = vmatpush1.msra.mxu0 %v1750
    %1808 = vmatprep.subr.mxu0 0.0
    %1809 = vmatpush1.msra.mxu0 0.0
    %1810 = vmatprep.subr.mxu0 0.0
    %1811 = vmatpush1.msra.mxu0 0.0
    %1812 = vmatprep.subr.mxu0 0.0
    %1813 = vmatpush1.msra.mxu0 0.0
    %1814 = vmatprep.subr.mxu0 0.0
    %1815 = vmatpush1.msra.mxu0 0.0
    %1816 = vmatprep.subr.mxu0 0.0
    %1817 = vmatpush1.msra.mxu0 0.0
    %1818 = vmatprep.subr.mxu0 0.0
    %1819 = vmatpush1.msra.mxu0 0.0
    %1820 = vmatprep.subr.mxu0 0.0
    %1821 = vmatpush1.msra.mxu0 0.0
    %1822 = vmatprep.subr.mxu0 0.0
    %1823 = vmatpush1.msra.mxu0 0.0
    %1824 = vmatprep.subr.mxu0 0.0
    %1825 = vmatpush1.msra.mxu0 0.0
    %1826 = vmatprep.subr.mxu0 0.0
    %1827 = vmatpush1.msra.mxu0 0.0
    %1828 = vmatprep.subr.mxu0 0.0
    %1829 = vmatpush1.msra.mxu0 0.0
    %1830 = vmatprep.subr.mxu0 0.0
    %1831 = vmatpush1.msra.mxu0 0.0
    %1832 = vmatprep.subr.mxu0 0.0
    %1833 = vmatpush1.msra.mxu0 0.0
    %1834 = vmatprep.subr.mxu0 0.0
    %1835 = vmatpush1.msra.mxu0 0.0
    %1836 = vmatprep.subr.mxu0 0.0
    %1837 = vmatpush1.msra.mxu0 0.0
    %1838 = vmatprep.subr.mxu0 0.0
    %1839 = vmatpush1.msra.mxu0 0.0
    %1840 = vmatprep.mubr.f32.mxu0 0.0
    %1841 = vmatmul.mubr.f32.gmra.mrb[0].mxu0 %v1484
    %v1842 = vpop.f32.mrb[0].mxu0
    %v1843 = vadd.f32 %v1759, %v1842
    %v1844 = vpop.f32.mrb[0].mxu0
    %v1845 = vadd.f32 %v1763, %v1844
    %1846 = vdwg.mxu0
    %1847 = vmatprep.subr.mxu0 %v1693
    %1848 = vmatpush1.msra.mxu0 %v1692
    %1849 = vmatprep.subr.mxu0 %v1697
    %1850 = vmatpush1.msra.mxu0 %v1696
    %1851 = vmatprep.subr.mxu0 %v1701
    %1852 = vmatpush1.msra.mxu0 %v1700
    %1853 = vmatprep.subr.mxu0 %v1705
    %1854 = vmatpush1.msra.mxu0 %v1704
    %1855 = vmatprep.subr.mxu0 %v1709
    %1856 = vmatpush1.msra.mxu0 %v1708
    %1857 = vmatprep.subr.mxu0 %v1713
    %1858 = vmatpush1.msra.mxu0 %v1712
    %1859 = vmatprep.subr.mxu0 %v1717
    %1860 = vmatpush1.msra.mxu0 %v1716
    %1861 = vmatprep.subr.mxu0 %v1721
    %1862 = vmatpush1.msra.mxu0 %v1720
    %1863 = vmatprep.subr.mxu0 %v1725
    %1864 = vmatpush1.msra.mxu0 %v1724
    %1865 = vmatprep.subr.mxu0 %v1729
    %1866 = vmatpush1.msra.mxu0 %v1728
    %1867 = vmatprep.subr.mxu0 %v1733
    %1868 = vmatpush1.msra.mxu0 %v1732
    %1869 = vmatprep.subr.mxu0 %v1737
    %1870 = vmatpush1.msra.mxu0 %v1736
    %1871 = vmatprep.subr.mxu0 %v1741
    %1872 = vmatpush1.msra.mxu0 %v1740
    %1873 = vmatprep.subr.mxu0 %v1745
    %1874 = vmatpush1.msra.mxu0 %v1744
    %1875 = vmatprep.subr.mxu0 %v1749
    %1876 = vmatpush1.msra.mxu0 %v1748
    %1877 = vmatprep.subr.mxu0 %v1753
    %1878 = vmatpush1.msra.mxu0 %v1752
    %1879 = vmatprep.subr.mxu0 0.0
    %1880 = vmatpush1.msra.mxu0 0.0
    %1881 = vmatprep.subr.mxu0 0.0
    %1882 = vmatpush1.msra.mxu0 0.0
    %1883 = vmatprep.subr.mxu0 0.0
    %1884 = vmatpush1.msra.mxu0 0.0
    %1885 = vmatprep.subr.mxu0 0.0
    %1886 = vmatpush1.msra.mxu0 0.0
    %1887 = vmatprep.subr.mxu0 0.0
    %1888 = vmatpush1.msra.mxu0 0.0
    %1889 = vmatprep.subr.mxu0 0.0
    %1890 = vmatpush1.msra.mxu0 0.0
    %1891 = vmatprep.subr.mxu0 0.0
    %1892 = vmatpush1.msra.mxu0 0.0
    %1893 = vmatprep.subr.mxu0 0.0
    %1894 = vmatpush1.msra.mxu0 0.0
    %1895 = vmatprep.subr.mxu0 0.0
    %1896 = vmatpush1.msra.mxu0 0.0
    %1897 = vmatprep.subr.mxu0 0.0
    %1898 = vmatpush1.msra.mxu0 0.0
    %1899 = vmatprep.subr.mxu0 0.0
    %1900 = vmatpush1.msra.mxu0 0.0
    %1901 = vmatprep.subr.mxu0 0.0
    %1902 = vmatpush1.msra.mxu0 0.0
    %1903 = vmatprep.subr.mxu0 0.0
    %1904 = vmatpush1.msra.mxu0 0.0
    %1905 = vmatprep.subr.mxu0 0.0
    %1906 = vmatpush1.msra.mxu0 0.0
    %1907 = vmatprep.subr.mxu0 0.0
    %1908 = vmatpush1.msra.mxu0 0.0
    %1909 = vmatprep.subr.mxu0 0.0
    %1910 = vmatpush1.msra.mxu0 0.0
    %1911 = vmatprep.mubr.f32.mxu0 0.0
    %1912 = vmatmul.mubr.f32.gmra.mrb[0].mxu0 %v1484
    %v1913 = vpop.f32.mrb[0].mxu0
    %v1914 = vadd.f32 %v1767, %v1913
    %v1915 = vpop.f32.mrb[0].mxu0
    %v1916 = vadd.f32 %v1771, %v1915
    %1917 = vdwg.mxu0
    %v1918 = vld [vmem:[#allocation2] sm:$0xff]
    %v1919 = vld [vmem:[#allocation2 + $0x8] sm:$0xff]
    %v1920 = vld [vmem:[#allocation2 + $0x10] sm:$0xff]
    %v1921 = vld [vmem:[#allocation2 + $0x18] sm:$0xff]
    %v1922 = vld [vmem:[#allocation2 + $0x20] sm:$0xff]
    %v1923 = vld [vmem:[#allocation2 + $0x28] sm:$0xff]
    %v1924 = vadd.f32 %v1918, %v1843
    %v1925 = vadd.f32 %v1919, %v1843
    %v1926 = vadd.f32 %v1920, %v1843
    %v1927 = vadd.f32 %v1921, %v1843
    %v1928 = vadd.f32 %v1922, %v1843
    %v1929 = vadd.f32 %v1923, %v1843
    %v1930 = vtanh.pop %v1924
    %v1931 = vtanh.pop %v1925
    %v1932 = vtanh.pop %v1926
    %v1933 = vtanh.pop %v1927
    %v1934 = vtanh.pop %v1928
    %v1935 = vtanh.pop %v1929
    %v1936 = vld [vmem:[%s9] sm:$0x1]
    %v1938 = vlaneseq
    %v1939 = vshrl.u32 %v1938, 7
    %v1940 = vsub.s32 0, %v1939
    %v1941 = vrot.slane %v1936, %v1940
    %v1943 = vmul.f32 %v1930, %v1941
    %v1944 = vmul.f32 %v1931, %v1941
    %v1945 = vmul.f32 %v1932, %v1941
    %v1946 = vmul.f32 %v1933, %v1941
    %v1947 = vmul.f32 %v1934, %v1941
    %v1948 = vmul.f32 %v1935, %v1941
    %1949 = vadd.xlane.f32.xlu0 %v1943
    %v1950 = vpop.xlane.xlu0 %1949
    %1951 = vadd.xlane.f32.xlu0 %v1944
    %v1952 = vpop.xlane.xlu0 %1951
    %1953 = vadd.xlane.f32.xlu0 %v1945
    %v1954 = vpop.xlane.xlu0 %1953
    %1955 = vadd.xlane.f32.xlu0 %v1946
    %v1956 = vpop.xlane.xlu0 %1955
    %1957 = vadd.xlane.f32.xlu0 %v1947
    %v1958 = vpop.xlane.xlu0 %1957
    %1959 = vadd.xlane.f32.xlu0 %v1948
    %v1960 = vpop.xlane.xlu0 %1959
    %v1961 = vmax.f32 %v1950, %v1958
    %v1962 = vmax.f32 %v1952, %v1960
    %v1963 = vmax.f32 %v1961, %v1962
    %v1964 = vmax.f32 %v1954, %v1956
    %v1965 = vmax.f32 %v1963, %v1964
    %v1966 = vsub.f32 %v1950, %v1965
    %v1967 = vsub.f32 %v1952, %v1965
    %v1968 = vsub.f32 %v1954, %v1965
    %v1969 = vsub.f32 %v1956, %v1965
    %v1970 = vsub.f32 %v1958, %v1965
    %v1971 = vsub.f32 %v1960, %v1965
    %v1972 = vmul.f32 %v1966, 1.442695
    %v1973 = vpow.pop %v1972
    %v1974 = vmul.f32 %v1967, 1.442695
    %v1975 = vpow.pop %v1974
    %v1976 = vmul.f32 %v1968, 1.442695
    %v1977 = vpow.pop %v1976
    %v1978 = vmul.f32 %v1969, 1.442695
    %v1979 = vpow.pop %v1978
    %v1980 = vmul.f32 %v1970, 1.442695
    %v1981 = vpow.pop %v1980
    %v1982 = vmul.f32 %v1971, 1.442695
    %v1983 = vpow.pop %v1982
    %v1984 = vadd.f32 %v1973, %v1975
    %v1985 = vadd.f32 %v1984, %v1977
    %v1986 = vadd.f32 %v1985, %v1979
    %v1987 = vadd.f32 %v1986, %v1981
    %v1988 = vadd.f32 %v1987, %v1983
    %v1989 = vrcp.pop %v1988
    %v1990 = vmul.f32 %v1973, %v1989
    %v1991 = vmul.f32 %v1975, %v1989
    %v1992 = vmul.f32 %v1977, %v1989
    %v1993 = vmul.f32 %v1979, %v1989
    %v1994 = vmul.f32 %v1981, %v1989
    %v1995 = vmul.f32 %v1983, %v1989
    %v1996 = vld [vmem:[%s2] sm:$0xff]
    %v1997 = vld [vmem:[%s2 + $0x8] sm:$0xff]
    %v1998 = vld [vmem:[%s2 + $0x10] sm:$0xff]
    %v1999 = vld [vmem:[%s2 + $0x18] sm:$0xff]
    %v2000 = vld [vmem:[%s2 + $0x20] sm:$0xff]
    %v2001 = vld [vmem:[%s2 + $0x28] sm:$0xff]
    %v2002 = vmul.f32 %v1990, %v1996
    %v2003 = vmul.f32 %v1991, %v1997
    %v2004 = vmul.f32 %v1992, %v1998
    %v2005 = vmul.f32 %v1993, %v1999
    %v2006 = vmul.f32 %v1994, %v2000
    %v2007 = vmul.f32 %v1995, %v2001
    %v2008 = vadd.f32 %v2002, %v2003
    %v2009 = vadd.f32 %v2008, %v2004
    %v2010 = vadd.f32 %v2009, %v2005
    %v2011 = vadd.f32 %v2010, %v2006
    %v2012 = vadd.f32 %v2011, %v2007
    %v2013 = vld [vmem:[%s3] sm:$0xff]
    %v2014 = vld [vmem:[%s3 + $0x8] sm:$0xff]
    %v2015 = vld [vmem:[%s3 + $0x10] sm:$0xff]
    %v2016 = vld [vmem:[%s3 + $0x18] sm:$0xff]
    %v2017 = vld [vmem:[%s3 + $0x20] sm:$0xff]
    %v2018 = vld [vmem:[%s3 + $0x28] sm:$0xff]
    %v2019 = vmul.f32 %v1990, %v2013
    %v2020 = vmul.f32 %v1991, %v2014
    %v2021 = vmul.f32 %v1992, %v2015
    %v2022 = vmul.f32 %v1993, %v2016
    %v2023 = vmul.f32 %v1994, %v2017
    %v2024 = vmul.f32 %v1995, %v2018
    %v2025 = vadd.f32 %v2019, %v2020
    %v2026 = vadd.f32 %v2025, %v2021
    %v2027 = vadd.f32 %v2026, %v2022
    %v2028 = vadd.f32 %v2027, %v2023
    %v2029 = vadd.f32 %v2028, %v2024
    %v2030 = vld [vmem:[%s12] sm:$0xff]
    %v2031 = vld [vmem:[%s12 + $0x8] sm:$0xff]
    %v2032 = vld [vmem:[%s12 + $0x10] sm:$0xff]
    %v2033 = vld [vmem:[%s12 + $0x18] sm:$0xff]
    %v2034 = vld [vmem:[%s12 + $0x20] sm:$0xff]
    %v2035 = vld [vmem:[%s12 + $0x28] sm:$0xff]
    %v2036 = vld [vmem:[%s12 + $0x30] sm:$0xff]
    %v2037 = vld [vmem:[%s12 + $0x38] sm:$0xff]
    %v2038 = vld [vmem:[%s12 + $0x40] sm:$0xff]
    %v2039 = vld [vmem:[%s12 + $0x48] sm:$0xff]
    %v2040 = vld [vmem:[%s12 + $0x50] sm:$0xff]
    %v2041 = vld [vmem:[%s12 + $0x58] sm:$0xff]
    %v2042 = vld [vmem:[%s12 + $0x60] sm:$0xff]
    %v2043 = vld [vmem:[%s12 + $0x68] sm:$0xff]
    %v2044 = vld [vmem:[%s12 + $0x70] sm:$0xff]
    %v2045 = vld [vmem:[%s12 + $0x78] sm:$0xff]
    %v2046 = vld [vmem:[%s12 + $0x80] sm:$0xff]
    %v2047 = vld [vmem:[%s12 + $0x88] sm:$0xff]
    %v2048 = vld [vmem:[%s12 + $0x90] sm:$0xff]
    %v2049 = vld [vmem:[%s12 + $0x98] sm:$0xff]
    %v2050 = vld [vmem:[%s12 + $0xa0] sm:$0xff]
    %v2051 = vld [vmem:[%s12 + $0xa8] sm:$0xff]
    %v2052 = vld [vmem:[%s12 + $0xb0] sm:$0xff]
    %v2053 = vld [vmem:[%s12 + $0xb8] sm:$0xff]
    %v2054 = vld [vmem:[%s12 + $0xc0] sm:$0xff]
    %v2055 = vld [vmem:[%s12 + $0xc8] sm:$0xff]
    %v2056 = vld [vmem:[%s12 + $0xd0] sm:$0xff]
    %v2057 = vld [vmem:[%s12 + $0xd8] sm:$0xff]
    %v2058 = vld [vmem:[%s12 + $0xe0] sm:$0xff]
    %v2059 = vld [vmem:[%s12 + $0xe8] sm:$0xff]
    %v2060 = vld [vmem:[%s12 + $0xf0] sm:$0xff]
    %v2061 = vld [vmem:[%s12 + $0xf8] sm:$0xff]
    %v2062 = vld [vmem:[%s12 + $0x100] sm:$0xff]
    %v2063 = vld [vmem:[%s12 + $0x108] sm:$0xff]
    %v2064 = vld [vmem:[%s12 + $0x110] sm:$0xff]
    %v2065 = vld [vmem:[%s12 + $0x118] sm:$0xff]
    %v2066 = vld [vmem:[%s12 + $0x120] sm:$0xff]
    %v2067 = vld [vmem:[%s12 + $0x128] sm:$0xff]
    %v2068 = vld [vmem:[%s12 + $0x130] sm:$0xff]
    %v2069 = vld [vmem:[%s12 + $0x138] sm:$0xff]
    %v2070 = vld [vmem:[%s12 + $0x140] sm:$0xff]
    %v2071 = vld [vmem:[%s12 + $0x148] sm:$0xff]
    %v2072 = vld [vmem:[%s12 + $0x150] sm:$0xff]
    %v2073 = vld [vmem:[%s12 + $0x158] sm:$0xff]
    %v2074 = vld [vmem:[%s12 + $0x160] sm:$0xff]
    %v2075 = vld [vmem:[%s12 + $0x168] sm:$0xff]
    %v2076 = vld [vmem:[%s12 + $0x170] sm:$0xff]
    %v2077 = vld [vmem:[%s12 + $0x178] sm:$0xff]
    %v2078 = vld [vmem:[%s12 + $0x180] sm:$0xff]
    %v2079 = vld [vmem:[%s12 + $0x188] sm:$0xff]
    %v2080 = vld [vmem:[%s12 + $0x190] sm:$0xff]
    %v2081 = vld [vmem:[%s12 + $0x198] sm:$0xff]
    %v2082 = vld [vmem:[%s12 + $0x1a0] sm:$0xff]
    %v2083 = vld [vmem:[%s12 + $0x1a8] sm:$0xff]
    %v2084 = vld [vmem:[%s12 + $0x1b0] sm:$0xff]
    %v2085 = vld [vmem:[%s12 + $0x1b8] sm:$0xff]
    %v2086 = vld [vmem:[%s12 + $0x1c0] sm:$0xff]
    %v2087 = vld [vmem:[%s12 + $0x1c8] sm:$0xff]
    %v2088 = vld [vmem:[%s12 + $0x1d0] sm:$0xff]
    %v2089 = vld [vmem:[%s12 + $0x1d8] sm:$0xff]
    %v2090 = vld [vmem:[%s12 + $0x1e0] sm:$0xff]
    %v2091 = vld [vmem:[%s12 + $0x1e8] sm:$0xff]
    %v2092 = vld [vmem:[%s12 + $0x1f0] sm:$0xff]
    %v2093 = vld [vmem:[%s12 + $0x1f8] sm:$0xff]
    %v2094 = vld [vmem:[%s13] sm:$0xff]
    %v2095 = vld [vmem:[%s13 + $0x8] sm:$0xff]
    %v2096 = vld [vmem:[%s13 + $0x10] sm:$0xff]
    %v2097 = vld [vmem:[%s13 + $0x18] sm:$0xff]
    %v2098 = vld [vmem:[%s13 + $0x20] sm:$0xff]
    %v2099 = vld [vmem:[%s13 + $0x28] sm:$0xff]
    %v2100 = vld [vmem:[%s13 + $0x30] sm:$0xff]
    %v2101 = vld [vmem:[%s13 + $0x38] sm:$0xff]
    %v2102 = vld [vmem:[%s13 + $0x40] sm:$0xff]
    %v2103 = vld [vmem:[%s13 + $0x48] sm:$0xff]
    %v2104 = vld [vmem:[%s13 + $0x50] sm:$0xff]
    %v2105 = vld [vmem:[%s13 + $0x58] sm:$0xff]
    %v2106 = vld [vmem:[%s13 + $0x60] sm:$0xff]
    %v2107 = vld [vmem:[%s13 + $0x68] sm:$0xff]
    %v2108 = vld [vmem:[%s13 + $0x70] sm:$0xff]
    %v2109 = vld [vmem:[%s13 + $0x78] sm:$0xff]
    %v2110 = vld [vmem:[%s13 + $0x80] sm:$0xff]
    %v2111 = vld [vmem:[%s13 + $0x88] sm:$0xff]
    %v2112 = vld [vmem:[%s13 + $0x90] sm:$0xff]
    %v2113 = vld [vmem:[%s13 + $0x98] sm:$0xff]
    %v2114 = vld [vmem:[%s13 + $0xa0] sm:$0xff]
    %v2115 = vld [vmem:[%s13 + $0xa8] sm:$0xff]
    %v2116 = vld [vmem:[%s13 + $0xb0] sm:$0xff]
    %v2117 = vld [vmem:[%s13 + $0xb8] sm:$0xff]
    %v2118 = vld [vmem:[%s13 + $0xc0] sm:$0xff]
    %v2119 = vld [vmem:[%s13 + $0xc8] sm:$0xff]
    %v2120 = vld [vmem:[%s13 + $0xd0] sm:$0xff]
    %v2121 = vld [vmem:[%s13 + $0xd8] sm:$0xff]
    %v2122 = vld [vmem:[%s13 + $0xe0] sm:$0xff]
    %v2123 = vld [vmem:[%s13 + $0xe8] sm:$0xff]
    %v2124 = vld [vmem:[%s13 + $0xf0] sm:$0xff]
    %v2125 = vld [vmem:[%s13 + $0xf8] sm:$0xff]
    %v2126 = vld [vmem:[%s13 + $0x100] sm:$0xff]
    %v2127 = vld [vmem:[%s13 + $0x108] sm:$0xff]
    %v2128 = vld [vmem:[%s13 + $0x110] sm:$0xff]
    %v2129 = vld [vmem:[%s13 + $0x118] sm:$0xff]
    %v2130 = vld [vmem:[%s13 + $0x120] sm:$0xff]
    %v2131 = vld [vmem:[%s13 + $0x128] sm:$0xff]
    %v2132 = vld [vmem:[%s13 + $0x130] sm:$0xff]
    %v2133 = vld [vmem:[%s13 + $0x138] sm:$0xff]
    %v2134 = vld [vmem:[%s13 + $0x140] sm:$0xff]
    %v2135 = vld [vmem:[%s13 + $0x148] sm:$0xff]
    %v2136 = vld [vmem:[%s13 + $0x150] sm:$0xff]
    %v2137 = vld [vmem:[%s13 + $0x158] sm:$0xff]
    %v2138 = vld [vmem:[%s13 + $0x160] sm:$0xff]
    %v2139 = vld [vmem:[%s13 + $0x168] sm:$0xff]
    %v2140 = vld [vmem:[%s13 + $0x170] sm:$0xff]
    %v2141 = vld [vmem:[%s13 + $0x178] sm:$0xff]
    %v2142 = vld [vmem:[%s13 + $0x180] sm:$0xff]
    %v2143 = vld [vmem:[%s13 + $0x188] sm:$0xff]
    %v2144 = vld [vmem:[%s13 + $0x190] sm:$0xff]
    %v2145 = vld [vmem:[%s13 + $0x198] sm:$0xff]
    %v2146 = vld [vmem:[%s13 + $0x1a0] sm:$0xff]
    %v2147 = vld [vmem:[%s13 + $0x1a8] sm:$0xff]
    %v2148 = vld [vmem:[%s13 + $0x1b0] sm:$0xff]
    %v2149 = vld [vmem:[%s13 + $0x1b8] sm:$0xff]
    %v2150 = vld [vmem:[%s13 + $0x1c0] sm:$0xff]
    %v2151 = vld [vmem:[%s13 + $0x1c8] sm:$0xff]
    %v2152 = vld [vmem:[%s13 + $0x1d0] sm:$0xff]
    %v2153 = vld [vmem:[%s13 + $0x1d8] sm:$0xff]
    %v2154 = vld [vmem:[%s13 + $0x1e0] sm:$0xff]
    %v2155 = vld [vmem:[%s13 + $0x1e8] sm:$0xff]
    %v2156 = vld [vmem:[%s13 + $0x1f0] sm:$0xff]
    %v2157 = vld [vmem:[%s13 + $0x1f8] sm:$0xff]
    %2158 = vmatprep.subr.mxu0 %v2095
    %2159 = vmatpush1.msra.mxu0 %v2094
    %2160 = vmatprep.subr.mxu0 %v2099
    %2161 = vmatpush1.msra.mxu0 %v2098
    %2162 = vmatprep.subr.mxu0 %v2103
    %2163 = vmatpush1.msra.mxu0 %v2102
    %2164 = vmatprep.subr.mxu0 %v2107
    %2165 = vmatpush1.msra.mxu0 %v2106
    %2166 = vmatprep.subr.mxu0 %v2111
    %2167 = vmatpush1.msra.mxu0 %v2110
    %2168 = vmatprep.subr.mxu0 %v2115
    %2169 = vmatpush1.msra.mxu0 %v2114
    %2170 = vmatprep.subr.mxu0 %v2119
    %2171 = vmatpush1.msra.mxu0 %v2118
    %2172 = vmatprep.subr.mxu0 %v2123
    %2173 = vmatpush1.msra.mxu0 %v2122
    %2174 = vmatprep.subr.mxu0 %v2127
    %2175 = vmatpush1.msra.mxu0 %v2126
    %2176 = vmatprep.subr.mxu0 %v2131
    %2177 = vmatpush1.msra.mxu0 %v2130
    %2178 = vmatprep.subr.mxu0 %v2135
    %2179 = vmatpush1.msra.mxu0 %v2134
    %2180 = vmatprep.subr.mxu0 %v2139
    %2181 = vmatpush1.msra.mxu0 %v2138
    %2182 = vmatprep.subr.mxu0 %v2143
    %2183 = vmatpush1.msra.mxu0 %v2142
    %2184 = vmatprep.subr.mxu0 %v2147
    %2185 = vmatpush1.msra.mxu0 %v2146
    %2186 = vmatprep.subr.mxu0 %v2151
    %2187 = vmatpush1.msra.mxu0 %v2150
    %2188 = vmatprep.subr.mxu0 %v2155
    %2189 = vmatpush1.msra.mxu0 %v2154
    %2190 = vmatprep.subr.mxu0 0.0
    %2191 = vmatpush1.msra.mxu0 0.0
    %2192 = vmatprep.subr.mxu0 0.0
    %2193 = vmatpush1.msra.mxu0 0.0
    %2194 = vmatprep.subr.mxu0 0.0
    %2195 = vmatpush1.msra.mxu0 0.0
    %2196 = vmatprep.subr.mxu0 0.0
    %2197 = vmatpush1.msra.mxu0 0.0
    %2198 = vmatprep.subr.mxu0 0.0
    %2199 = vmatpush1.msra.mxu0 0.0
    %2200 = vmatprep.subr.mxu0 0.0
    %2201 = vmatpush1.msra.mxu0 0.0
    %2202 = vmatprep.subr.mxu0 0.0
    %2203 = vmatpush1.msra.mxu0 0.0
    %2204 = vmatprep.subr.mxu0 0.0
    %2205 = vmatpush1.msra.mxu0 0.0
    %2206 = vmatprep.subr.mxu0 0.0
    %2207 = vmatpush1.msra.mxu0 0.0
    %2208 = vmatprep.subr.mxu0 0.0
    %2209 = vmatpush1.msra.mxu0 0.0
    %2210 = vmatprep.subr.mxu0 0.0
    %2211 = vmatpush1.msra.mxu0 0.0
    %2212 = vmatprep.subr.mxu0 0.0
    %2213 = vmatpush1.msra.mxu0 0.0
    %2214 = vmatprep.subr.mxu0 0.0
    %2215 = vmatpush1.msra.mxu0 0.0
    %2216 = vmatprep.subr.mxu0 0.0
    %2217 = vmatpush1.msra.mxu0 0.0
    %2218 = vmatprep.subr.mxu0 0.0
    %2219 = vmatpush1.msra.mxu0 0.0
    %2220 = vmatprep.subr.mxu0 0.0
    %2221 = vmatpush1.msra.mxu0 0.0
    %2222 = vmatprep.mubr.f32.mxu0 0.0
    %2223 = vmatmul.mubr.f32.gmra.mrb[0].mxu0 %v2012
    %v2224 = vpop.f32.mrb[0].mxu0
    %v2225 = vadd.f32 0.0, %v2224
    %v2226 = vpop.f32.mrb[0].mxu0
    %v2227 = vadd.f32 0.0, %v2226
    %2228 = vdwg.mxu0
    %2229 = vmatprep.subr.mxu0 %v2097
    %2230 = vmatpush1.msra.mxu0 %v2096
    %2231 = vmatprep.subr.mxu0 %v2101
    %2232 = vmatpush1.msra.mxu0 %v2100
    %2233 = vmatprep.subr.mxu0 %v2105
    %2234 = vmatpush1.msra.mxu0 %v2104
    %2235 = vmatprep.subr.mxu0 %v2109
    %2236 = vmatpush1.msra.mxu0 %v2108
    %2237 = vmatprep.subr.mxu0 %v2113
    %2238 = vmatpush1.msra.mxu0 %v2112
    %2239 = vmatprep.subr.mxu0 %v2117
    %2240 = vmatpush1.msra.mxu0 %v2116
    %2241 = vmatprep.subr.mxu0 %v2121
    %2242 = vmatpush1.msra.mxu0 %v2120
    %2243 = vmatprep.subr.mxu0 %v2125
    %2244 = vmatpush1.msra.mxu0 %v2124
    %2245 = vmatprep.subr.mxu0 %v2129
    %2246 = vmatpush1.msra.mxu0 %v2128
    %2247 = vmatprep.subr.mxu0 %v2133
    %2248 = vmatpush1.msra.mxu0 %v2132
    %2249 = vmatprep.subr.mxu0 %v2137
    %2250 = vmatpush1.msra.mxu0 %v2136
    %2251 = vmatprep.subr.mxu0 %v2141
    %2252 = vmatpush1.msra.mxu0 %v2140
    %2253 = vmatprep.subr.mxu0 %v2145
    %2254 = vmatpush1.msra.mxu0 %v2144
    %2255 = vmatprep.subr.mxu0 %v2149
    %2256 = vmatpush1.msra.mxu0 %v2148
    %2257 = vmatprep.subr.mxu0 %v2153
    %2258 = vmatpush1.msra.mxu0 %v2152
    %2259 = vmatprep.subr.mxu0 %v2157
    %2260 = vmatpush1.msra.mxu0 %v2156
    %2261 = vmatprep.subr.mxu0 0.0
    %2262 = vmatpush1.msra.mxu0 0.0
    %2263 = vmatprep.subr.mxu0 0.0
    %2264 = vmatpush1.msra.mxu0 0.0
    %2265 = vmatprep.subr.mxu0 0.0
    %2266 = vmatpush1.msra.mxu0 0.0
    %2267 = vmatprep.subr.mxu0 0.0
    %2268 = vmatpush1.msra.mxu0 0.0
    %2269 = vmatprep.subr.mxu0 0.0
    %2270 = vmatpush1.msra.mxu0 0.0
    %2271 = vmatprep.subr.mxu0 0.0
    %2272 = vmatpush1.msra.mxu0 0.0
    %2273 = vmatprep.subr.mxu0 0.0
    %2274 = vmatpush1.msra.mxu0 0.0
    %2275 = vmatprep.subr.mxu0 0.0
    %2276 = vmatpush1.msra.mxu0 0.0
    %2277 = vmatprep.subr.mxu0 0.0
    %2278 = vmatpush1.msra.mxu0 0.0
    %2279 = vmatprep.subr.mxu0 0.0
    %2280 = vmatpush1.msra.mxu0 0.0
    %2281 = vmatprep.subr.mxu0 0.0
    %2282 = vmatpush1.msra.mxu0 0.0
    %2283 = vmatprep.subr.mxu0 0.0
    %2284 = vmatpush1.msra.mxu0 0.0
    %2285 = vmatprep.subr.mxu0 0.0
    %2286 = vmatpush1.msra.mxu0 0.0
    %2287 = vmatprep.subr.mxu0 0.0
    %2288 = vmatpush1.msra.mxu0 0.0
    %2289 = vmatprep.subr.mxu0 0.0
    %2290 = vmatpush1.msra.mxu0 0.0
    %2291 = vmatprep.subr.mxu0 0.0
    %2292 = vmatpush1.msra.mxu0 0.0
    %2293 = vmatprep.mubr.f32.mxu0 0.0
    %2294 = vmatmul.mubr.f32.gmra.mrb[0].mxu0 %v2012
    %v2295 = vpop.f32.mrb[0].mxu0
    %v2296 = vadd.f32 0.0, %v2295
    %v2297 = vpop.f32.mrb[0].mxu0
    %v2298 = vadd.f32 0.0, %v2297
    %2299 = vdwg.mxu0
    %2300 = vmatprep.subr.mxu0 %v2031
    %2301 = vmatpush1.msra.mxu0 %v2030
    %2302 = vmatprep.subr.mxu0 %v2035
    %2303 = vmatpush1.msra.mxu0 %v2034
    %2304 = vmatprep.subr.mxu0 %v2039
    %2305 = vmatpush1.msra.mxu0 %v2038
    %2306 = vmatprep.subr.mxu0 %v2043
    %2307 = vmatpush1.msra.mxu0 %v2042
    %2308 = vmatprep.subr.mxu0 %v2047
    %2309 = vmatpush1.msra.mxu0 %v2046
    %2310 = vmatprep.subr.mxu0 %v2051
    %2311 = vmatpush1.msra.mxu0 %v2050
    %2312 = vmatprep.subr.mxu0 %v2055
    %2313 = vmatpush1.msra.mxu0 %v2054
    %2314 = vmatprep.subr.mxu0 %v2059
    %2315 = vmatpush1.msra.mxu0 %v2058
    %2316 = vmatprep.subr.mxu0 %v2063
    %2317 = vmatpush1.msra.mxu0 %v2062
    %2318 = vmatprep.subr.mxu0 %v2067
    %2319 = vmatpush1.msra.mxu0 %v2066
    %2320 = vmatprep.subr.mxu0 %v2071
    %2321 = vmatpush1.msra.mxu0 %v2070
    %2322 = vmatprep.subr.mxu0 %v2075
    %2323 = vmatpush1.msra.mxu0 %v2074
    %2324 = vmatprep.subr.mxu0 %v2079
    %2325 = vmatpush1.msra.mxu0 %v2078
    %2326 = vmatprep.subr.mxu0 %v2083
    %2327 = vmatpush1.msra.mxu0 %v2082
    %2328 = vmatprep.subr.mxu0 %v2087
    %2329 = vmatpush1.msra.mxu0 %v2086
    %2330 = vmatprep.subr.mxu0 %v2091
    %2331 = vmatpush1.msra.mxu0 %v2090
    %2332 = vmatprep.subr.mxu0 0.0
    %2333 = vmatpush1.msra.mxu0 0.0
    %2334 = vmatprep.subr.mxu0 0.0
    %2335 = vmatpush1.msra.mxu0 0.0
    %2336 = vmatprep.subr.mxu0 0.0
    %2337 = vmatpush1.msra.mxu0 0.0
    %2338 = vmatprep.subr.mxu0 0.0
    %2339 = vmatpush1.msra.mxu0 0.0
    %2340 = vmatprep.subr.mxu0 0.0
    %2341 = vmatpush1.msra.mxu0 0.0
    %2342 = vmatprep.subr.mxu0 0.0
    %2343 = vmatpush1.msra.mxu0 0.0
    %2344 = vmatprep.subr.mxu0 0.0
    %2345 = vmatpush1.msra.mxu0 0.0
    %2346 = vmatprep.subr.mxu0 0.0
    %2347 = vmatpush1.msra.mxu0 0.0
    %2348 = vmatprep.subr.mxu0 0.0
    %2349 = vmatpush1.msra.mxu0 0.0
    %2350 = vmatprep.subr.mxu0 0.0
    %2351 = vmatpush1.msra.mxu0 0.0
    %2352 = vmatprep.subr.mxu0 0.0
    %2353 = vmatpush1.msra.mxu0 0.0
    %2354 = vmatprep.subr.mxu0 0.0
    %2355 = vmatpush1.msra.mxu0 0.0
    %2356 = vmatprep.subr.mxu0 0.0
    %2357 = vmatpush1.msra.mxu0 0.0
    %2358 = vmatprep.subr.mxu0 0.0
    %2359 = vmatpush1.msra.mxu0 0.0
    %2360 = vmatprep.subr.mxu0 0.0
    %2361 = vmatpush1.msra.mxu0 0.0
    %2362 = vmatprep.subr.mxu0 0.0
    %2363 = vmatpush1.msra.mxu0 0.0
    %2364 = vmatprep.mubr.f32.mxu0 0.0
    %2365 = vmatmul.mubr.f32.gmra.mrb[0].mxu0 %v1687
    %v2366 = vpop.f32.mrb[0].mxu0
    %v2367 = vadd.f32 %v2225, %v2366
    %v2368 = vpop.f32.mrb[0].mxu0
    %v2369 = vadd.f32 %v2227, %v2368
    %2370 = vdwg.mxu0
    %2371 = vmatprep.subr.mxu0 %v2033
    %2372 = vmatpush1.msra.mxu0 %v2032
    %2373 = vmatprep.subr.mxu0 %v2037
    %2374 = vmatpush1.msra.mxu0 %v2036
    %2375 = vmatprep.subr.mxu0 %v2041
    %2376 = vmatpush1.msra.mxu0 %v2040
    %2377 = vmatprep.subr.mxu0 %v2045
    %2378 = vmatpush1.msra.mxu0 %v2044
    %2379 = vmatprep.subr.mxu0 %v2049
    %2380 = vmatpush1.msra.mxu0 %v2048
    %2381 = vmatprep.subr.mxu0 %v2053
    %2382 = vmatpush1.msra.mxu0 %v2052
    %2383 = vmatprep.subr.mxu0 %v2057
    %2384 = vmatpush1.msra.mxu0 %v2056
    %2385 = vmatprep.subr.mxu0 %v2061
    %2386 = vmatpush1.msra.mxu0 %v2060
    %2387 = vmatprep.subr.mxu0 %v2065
    %2388 = vmatpush1.msra.mxu0 %v2064
    %2389 = vmatprep.subr.mxu0 %v2069
    %2390 = vmatpush1.msra.mxu0 %v2068
    %2391 = vmatprep.subr.mxu0 %v2073
    %2392 = vmatpush1.msra.mxu0 %v2072
    %2393 = vmatprep.subr.mxu0 %v2077
    %2394 = vmatpush1.msra.mxu0 %v2076
    %2395 = vmatprep.subr.mxu0 %v2081
    %2396 = vmatpush1.msra.mxu0 %v2080
    %2397 = vmatprep.subr.mxu0 %v2085
    %2398 = vmatpush1.msra.mxu0 %v2084
    %2399 = vmatprep.subr.mxu0 %v2089
    %2400 = vmatpush1.msra.mxu0 %v2088
    %2401 = vmatprep.subr.mxu0 %v2093
    %2402 = vmatpush1.msra.mxu0 %v2092
    %2403 = vmatprep.subr.mxu0 0.0
    %2404 = vmatpush1.msra.mxu0 0.0
    %2405 = vmatprep.subr.mxu0 0.0
    %2406 = vmatpush1.msra.mxu0 0.0
    %2407 = vmatprep.subr.mxu0 0.0
    %2408 = vmatpush1.msra.mxu0 0.0
    %2409 = vmatprep.subr.mxu0 0.0
    %2410 = vmatpush1.msra.mxu0 0.0
    %2411 = vmatprep.subr.mxu0 0.0
    %2412 = vmatpush1.msra.mxu0 0.0
    %2413 = vmatprep.subr.mxu0 0.0
    %2414 = vmatpush1.msra.mxu0 0.0
    %2415 = vmatprep.subr.mxu0 0.0
    %2416 = vmatpush1.msra.mxu0 0.0
    %2417 = vmatprep.subr.mxu0 0.0
    %2418 = vmatpush1.msra.mxu0 0.0
    %2419 = vmatprep.subr.mxu0 0.0
    %2420 = vmatpush1.msra.mxu0 0.0
    %2421 = vmatprep.subr.mxu0 0.0
    %2422 = vmatpush1.msra.mxu0 0.0
    %2423 = vmatprep.subr.mxu0 0.0
    %2424 = vmatpush1.msra.mxu0 0.0
    %2425 = vmatprep.subr.mxu0 0.0
    %2426 = vmatpush1.msra.mxu0 0.0
    %2427 = vmatprep.subr.mxu0 0.0
    %2428 = vmatpush1.msra.mxu0 0.0
    %2429 = vmatprep.subr.mxu0 0.0
    %2430 = vmatpush1.msra.mxu0 0.0
    %2431 = vmatprep.subr.mxu0 0.0
    %2432 = vmatpush1.msra.mxu0 0.0
    %2433 = vmatprep.subr.mxu0 0.0
    %2434 = vmatpush1.msra.mxu0 0.0
    %2435 = vmatprep.mubr.f32.mxu0 0.0
    %2436 = vmatmul.mubr.f32.gmra.mrb[0].mxu0 %v1687
    %v2437 = vpop.f32.mrb[0].mxu0
    %v2438 = vadd.f32 %v2296, %v2437
    %v2439 = vpop.f32.mrb[0].mxu0
    %v2440 = vadd.f32 %v2298, %v2439
    %2441 = vdwg.mxu0
    %v2442 = vld [vmem:[%s14] sm:$0xff]
    %v2443 = vld [vmem:[%s14 + $0x8] sm:$0xff]
    %v2444 = vld [vmem:[%s14 + $0x10] sm:$0xff]
    %v2445 = vld [vmem:[%s14 + $0x18] sm:$0xff]
    %v2446 = vld [vmem:[%s14 + $0x20] sm:$0xff]
    %v2447 = vld [vmem:[%s14 + $0x28] sm:$0xff]
    %v2448 = vld [vmem:[%s14 + $0x30] sm:$0xff]
    %v2449 = vld [vmem:[%s14 + $0x38] sm:$0xff]
    %v2450 = vld [vmem:[%s14 + $0x40] sm:$0xff]
    %v2451 = vld [vmem:[%s14 + $0x48] sm:$0xff]
    %v2452 = vld [vmem:[%s14 + $0x50] sm:$0xff]
    %v2453 = vld [vmem:[%s14 + $0x58] sm:$0xff]
    %v2454 = vld [vmem:[%s14 + $0x60] sm:$0xff]
    %v2455 = vld [vmem:[%s14 + $0x68] sm:$0xff]
    %v2456 = vld [vmem:[%s14 + $0x70] sm:$0xff]
    %v2457 = vld [vmem:[%s14 + $0x78] sm:$0xff]
    %v2458 = vld [vmem:[%s14 + $0x80] sm:$0xff]
    %v2459 = vld [vmem:[%s14 + $0x88] sm:$0xff]
    %v2460 = vld [vmem:[%s14 + $0x90] sm:$0xff]
    %v2461 = vld [vmem:[%s14 + $0x98] sm:$0xff]
    %v2462 = vld [vmem:[%s14 + $0xa0] sm:$0xff]
    %v2463 = vld [vmem:[%s14 + $0xa8] sm:$0xff]
    %v2464 = vld [vmem:[%s14 + $0xb0] sm:$0xff]
    %v2465 = vld [vmem:[%s14 + $0xb8] sm:$0xff]
    %v2466 = vld [vmem:[%s14 + $0xc0] sm:$0xff]
    %v2467 = vld [vmem:[%s14 + $0xc8] sm:$0xff]
    %v2468 = vld [vmem:[%s14 + $0xd0] sm:$0xff]
    %v2469 = vld [vmem:[%s14 + $0xd8] sm:$0xff]
    %v2470 = vld [vmem:[%s14 + $0xe0] sm:$0xff]
    %v2471 = vld [vmem:[%s14 + $0xe8] sm:$0xff]
    %v2472 = vld [vmem:[%s14 + $0xf0] sm:$0xff]
    %v2473 = vld [vmem:[%s14 + $0xf8] sm:$0xff]
    %v2474 = vld [vmem:[%s14 + $0x100] sm:$0xff]
    %v2475 = vld [vmem:[%s14 + $0x108] sm:$0xff]
    %v2476 = vld [vmem:[%s14 + $0x110] sm:$0xff]
    %v2477 = vld [vmem:[%s14 + $0x118] sm:$0xff]
    %v2478 = vld [vmem:[%s14 + $0x120] sm:$0xff]
    %v2479 = vld [vmem:[%s14 + $0x128] sm:$0xff]
    %v2480 = vld [vmem:[%s14 + $0x130] sm:$0xff]
    %v2481 = vld [vmem:[%s14 + $0x138] sm:$0xff]
    %v2482 = vld [vmem:[%s14 + $0x140] sm:$0xff]
    %v2483 = vld [vmem:[%s14 + $0x148] sm:$0xff]
    %v2484 = vld [vmem:[%s14 + $0x150] sm:$0xff]
    %v2485 = vld [vmem:[%s14 + $0x158] sm:$0xff]
    %v2486 = vld [vmem:[%s14 + $0x160] sm:$0xff]
    %v2487 = vld [vmem:[%s14 + $0x168] sm:$0xff]
    %v2488 = vld [vmem:[%s14 + $0x170] sm:$0xff]
    %v2489 = vld [vmem:[%s14 + $0x178] sm:$0xff]
    %v2490 = vld [vmem:[%s14 + $0x180] sm:$0xff]
    %v2491 = vld [vmem:[%s14 + $0x188] sm:$0xff]
    %v2492 = vld [vmem:[%s14 + $0x190] sm:$0xff]
    %v2493 = vld [vmem:[%s14 + $0x198] sm:$0xff]
    %v2494 = vld [vmem:[%s14 + $0x1a0] sm:$0xff]
    %v2495 = vld [vmem:[%s14 + $0x1a8] sm:$0xff]
    %v2496 = vld [vmem:[%s14 + $0x1b0] sm:$0xff]
    %v2497 = vld [vmem:[%s14 + $0x1b8] sm:$0xff]
    %v2498 = vld [vmem:[%s14 + $0x1c0] sm:$0xff]
    %v2499 = vld [vmem:[%s14 + $0x1c8] sm:$0xff]
    %v2500 = vld [vmem:[%s14 + $0x1d0] sm:$0xff]
    %v2501 = vld [vmem:[%s14 + $0x1d8] sm:$0xff]
    %v2502 = vld [vmem:[%s14 + $0x1e0] sm:$0xff]
    %v2503 = vld [vmem:[%s14 + $0x1e8] sm:$0xff]
    %v2504 = vld [vmem:[%s14 + $0x1f0] sm:$0xff]
    %v2505 = vld [vmem:[%s14 + $0x1f8] sm:$0xff]
    %2506 = vmatprep.subr.mxu0 %v2443
    %2507 = vmatpush1.msra.mxu0 %v2442
    %2508 = vmatprep.subr.mxu0 %v2447
    %2509 = vmatpush1.msra.mxu0 %v2446
    %2510 = vmatprep.subr.mxu0 %v2451
    %2511 = vmatpush1.msra.mxu0 %v2450
    %2512 = vmatprep.subr.mxu0 %v2455
    %2513 = vmatpush1.msra.mxu0 %v2454
    %2514 = vmatprep.subr.mxu0 %v2459
    %2515 = vmatpush1.msra.mxu0 %v2458
    %2516 = vmatprep.subr.mxu0 %v2463
    %2517 = vmatpush1.msra.mxu0 %v2462
    %2518 = vmatprep.subr.mxu0 %v2467
    %2519 = vmatpush1.msra.mxu0 %v2466
    %2520 = vmatprep.subr.mxu0 %v2471
    %2521 = vmatpush1.msra.mxu0 %v2470
    %2522 = vmatprep.subr.mxu0 %v2475
    %2523 = vmatpush1.msra.mxu0 %v2474
    %2524 = vmatprep.subr.mxu0 %v2479
    %2525 = vmatpush1.msra.mxu0 %v2478
    %2526 = vmatprep.subr.mxu0 %v2483
    %2527 = vmatpush1.msra.mxu0 %v2482
    %2528 = vmatprep.subr.mxu0 %v2487
    %2529 = vmatpush1.msra.mxu0 %v2486
    %2530 = vmatprep.subr.mxu0 %v2491
    %2531 = vmatpush1.msra.mxu0 %v2490
    %2532 = vmatprep.subr.mxu0 %v2495
    %2533 = vmatpush1.msra.mxu0 %v2494
    %2534 = vmatprep.subr.mxu0 %v2499
    %2535 = vmatpush1.msra.mxu0 %v2498
    %2536 = vmatprep.subr.mxu0 %v2503
    %2537 = vmatpush1.msra.mxu0 %v2502
    %2538 = vmatprep.subr.mxu0 0.0
    %2539 = vmatpush1.msra.mxu0 0.0
    %2540 = vmatprep.subr.mxu0 0.0
    %2541 = vmatpush1.msra.mxu0 0.0
    %2542 = vmatprep.subr.mxu0 0.0
    %2543 = vmatpush1.msra.mxu0 0.0
    %2544 = vmatprep.subr.mxu0 0.0
    %2545 = vmatpush1.msra.mxu0 0.0
    %2546 = vmatprep.subr.mxu0 0.0
    %2547 = vmatpush1.msra.mxu0 0.0
    %2548 = vmatprep.subr.mxu0 0.0
    %2549 = vmatpush1.msra.mxu0 0.0
    %2550 = vmatprep.subr.mxu0 0.0
    %2551 = vmatpush1.msra.mxu0 0.0
    %2552 = vmatprep.subr.mxu0 0.0
    %2553 = vmatpush1.msra.mxu0 0.0
    %2554 = vmatprep.subr.mxu0 0.0
    %2555 = vmatpush1.msra.mxu0 0.0
    %2556 = vmatprep.subr.mxu0 0.0
    %2557 = vmatpush1.msra.mxu0 0.0
    %2558 = vmatprep.subr.mxu0 0.0
    %2559 = vmatpush1.msra.mxu0 0.0
    %2560 = vmatprep.subr.mxu0 0.0
    %2561 = vmatpush1.msra.mxu0 0.0
    %2562 = vmatprep.subr.mxu0 0.0
    %2563 = vmatpush1.msra.mxu0 0.0
    %2564 = vmatprep.subr.mxu0 0.0
    %2565 = vmatpush1.msra.mxu0 0.0
    %2566 = vmatprep.subr.mxu0 0.0
    %2567 = vmatpush1.msra.mxu0 0.0
    %2568 = vmatprep.subr.mxu0 0.0
    %2569 = vmatpush1.msra.mxu0 0.0
    %2570 = vmatprep.mubr.f32.mxu0 0.0
    %2571 = vmatmul.mubr.f32.gmra.mrb[0].mxu0 %v2029
    %v2572 = vpop.f32.mrb[0].mxu0
    %v2573 = vadd.f32 0.0, %v2572
    %v2574 = vpop.f32.mrb[0].mxu0
    %v2575 = vadd.f32 0.0, %v2574
    %2576 = vdwg.mxu0
    %2577 = vmatprep.subr.mxu0 %v2445
    %2578 = vmatpush1.msra.mxu0 %v2444
    %2579 = vmatprep.subr.mxu0 %v2449
    %2580 = vmatpush1.msra.mxu0 %v2448
    %2581 = vmatprep.subr.mxu0 %v2453
    %2582 = vmatpush1.msra.mxu0 %v2452
    %2583 = vmatprep.subr.mxu0 %v2457
    %2584 = vmatpush1.msra.mxu0 %v2456
    %2585 = vmatprep.subr.mxu0 %v2461
    %2586 = vmatpush1.msra.mxu0 %v2460
    %2587 = vmatprep.subr.mxu0 %v2465
    %2588 = vmatpush1.msra.mxu0 %v2464
    %2589 = vmatprep.subr.mxu0 %v2469
    %2590 = vmatpush1.msra.mxu0 %v2468
    %2591 = vmatprep.subr.mxu0 %v2473
    %2592 = vmatpush1.msra.mxu0 %v2472
    %2593 = vmatprep.subr.mxu0 %v2477
    %2594 = vmatpush1.msra.mxu0 %v2476
    %2595 = vmatprep.subr.mxu0 %v2481
    %2596 = vmatpush1.msra.mxu0 %v2480
    %2597 = vmatprep.subr.mxu0 %v2485
    %2598 = vmatpush1.msra.mxu0 %v2484
    %2599 = vmatprep.subr.mxu0 %v2489
    %2600 = vmatpush1.msra.mxu0 %v2488
    %2601 = vmatprep.subr.mxu0 %v2493
    %2602 = vmatpush1.msra.mxu0 %v2492
    %2603 = vmatprep.subr.mxu0 %v2497
    %2604 = vmatpush1.msra.mxu0 %v2496
    %2605 = vmatprep.subr.mxu0 %v2501
    %2606 = vmatpush1.msra.mxu0 %v2500
    %2607 = vmatprep.subr.mxu0 %v2505
    %2608 = vmatpush1.msra.mxu0 %v2504
    %2609 = vmatprep.subr.mxu0 0.0
    %2610 = vmatpush1.msra.mxu0 0.0
    %2611 = vmatprep.subr.mxu0 0.0
    %2612 = vmatpush1.msra.mxu0 0.0
    %2613 = vmatprep.subr.mxu0 0.0
    %2614 = vmatpush1.msra.mxu0 0.0
    %2615 = vmatprep.subr.mxu0 0.0
    %2616 = vmatpush1.msra.mxu0 0.0
    %2617 = vmatprep.subr.mxu0 0.0
    %2618 = vmatpush1.msra.mxu0 0.0
    %2619 = vmatprep.subr.mxu0 0.0
    %2620 = vmatpush1.msra.mxu0 0.0
    %2621 = vmatprep.subr.mxu0 0.0
    %2622 = vmatpush1.msra.mxu0 0.0
    %2623 = vmatprep.subr.mxu0 0.0
    %2624 = vmatpush1.msra.mxu0 0.0
    %2625 = vmatprep.subr.mxu0 0.0
    %2626 = vmatpush1.msra.mxu0 0.0
    %2627 = vmatprep.subr.mxu0 0.0
    %2628 = vmatpush1.msra.mxu0 0.0
    %2629 = vmatprep.subr.mxu0 0.0
    %2630 = vmatpush1.msra.mxu0 0.0
    %2631 = vmatprep.subr.mxu0 0.0
    %2632 = vmatpush1.msra.mxu0 0.0
    %2633 = vmatprep.subr.mxu0 0.0
    %2634 = vmatpush1.msra.mxu0 0.0
    %2635 = vmatprep.subr.mxu0 0.0
    %2636 = vmatpush1.msra.mxu0 0.0
    %2637 = vmatprep.subr.mxu0 0.0
    %2638 = vmatpush1.msra.mxu0 0.0
    %2639 = vmatprep.subr.mxu0 0.0
    %2640 = vmatpush1.msra.mxu0 0.0
    %2641 = vmatprep.mubr.f32.mxu0 0.0
    %2642 = vmatmul.mubr.f32.gmra.mrb[0].mxu0 %v2029
    %v2643 = vpop.f32.mrb[0].mxu0
    %v2644 = vadd.f32 0.0, %v2643
    %v2645 = vpop.f32.mrb[0].mxu0
    %v2646 = vadd.f32 0.0, %v2645
    %2647 = vdwg.mxu0
    %v2648 = vadd.f32 %v2367, %v2573
    %v2649 = vadd.f32 %v2369, %v2575
    %v2650 = vadd.f32 %v2438, %v2644
    %v2651 = vadd.f32 %v2440, %v2646
    %v2652 = vld [vmem:[%s15] sm:$0xf]
    %v2654 = vlaneseq
    %v2655 = vshrl.u32 %v2654, 7
    %v2656 = vsub.s32 0, %v2655
    %v2657 = vrot.slane %v2652, %v2656
    %v2658 = vlaneseq
    %v2659 = vshrl.u32 %v2658, 7
    %v2660 = vsub.s32 1, %v2659
    %v2661 = vrot.slane %v2652, %v2660
    %v2662 = vlaneseq
    %v2663 = vshrl.u32 %v2662, 7
    %v2664 = vsub.s32 2, %v2663
    %v2665 = vrot.slane %v2652, %v2664
    %v2666 = vlaneseq
    %v2667 = vshrl.u32 %v2666, 7
    %v2668 = vsub.s32 3, %v2667
    %v2669 = vrot.slane %v2652, %v2668
    %v2674 = vadd.f32 %v2648, %v2657
    %v2675 = vadd.f32 %v2649, %v2661
    %v2676 = vadd.f32 %v2650, %v2665
    %v2677 = vadd.f32 %v2651, %v2669
    %v2678 = vadd.f32 %v2674, %v1845
    %v2679 = vxor.u32 %v2678, 2147483648
    %v2680 = vmul.f32 %v2679, 1.442695
    %v2681 = vpow.pop %v2680
    %v2682 = vadd.f32 %v2681, 1.0
    %v2683 = vrcp.pop %v2682
    %v2684 = vmul.f32 1.0, %v2683
    %v2685 = vadd.f32 %v2675, %v1914
    %v2686 = vxor.u32 %v2685, 2147483648
    %v2687 = vmul.f32 %v2686, 1.442695
    %v2688 = vpow.pop %v2687
    %v2689 = vadd.f32 %v2688, 1.0
    %v2690 = vrcp.pop %v2689
    %v2691 = vmul.f32 1.0, %v2690
    %v2692 = vmul.f32 %v2684, %v1916
    %v2693 = vadd.f32 %v2676, %v2692
    %v2694 = vtanh.pop %v2693
    %v2695 = vsub.f32 1.0, %v2691
    %v2696 = vmul.f32 %v2695, %v2694
    %v2697 = vmul.f32 %v2691, %v1484
    %v2698 = vadd.f32 %v2696, %v2697
    %v2699 = vld [vmem:[#allocation11] sm:$0xff]
    %v2700 = vld [vmem:[#allocation11 + $0x8] sm:$0xff]
    %v2701 = vld [vmem:[#allocation11 + $0x10] sm:$0xff]
    %v2702 = vld [vmem:[#allocation11 + $0x18] sm:$0xff]
    %v2703 = vld [vmem:[#allocation11 + $0x20] sm:$0xff]
    %v2704 = vld [vmem:[#allocation11 + $0x28] sm:$0xff]
    %v2705 = vld [vmem:[#allocation11 + $0x30] sm:$0xff]
    %v2706 = vld [vmem:[#allocation11 + $0x38] sm:$0xff]
    %v2707 = vld [vmem:[#allocation11 + $0x40] sm:$0xff]
    %v2708 = vld [vmem:[#allocation11 + $0x48] sm:$0xff]
    %v2709 = vld [vmem:[#allocation11 + $0x50] sm:$0xff]
    %v2710 = vld [vmem:[#allocation11 + $0x58] sm:$0xff]
    %v2711 = vld [vmem:[#allocation11 + $0x60] sm:$0xff]
    %v2712 = vld [vmem:[#allocation11 + $0x68] sm:$0xff]
    %v2713 = vld [vmem:[#allocation11 + $0x70] sm:$0xff]
    %v2714 = vld [vmem:[#allocation11 + $0x78] sm:$0xff]
    %2715 = vmatprep.subr.mxu0 0.0
    %2716 = vmatpush1.msra.mxu0 %v2699
    %2717 = vmatprep.subr.mxu0 0.0
    %2718 = vmatpush1.msra.mxu0 %v2700
    %2719 = vmatprep.subr.mxu0 0.0
    %2720 = vmatpush1.msra.mxu0 %v2701
    %2721 = vmatprep.subr.mxu0 0.0
    %2722 = vmatpush1.msra.mxu0 %v2702
    %2723 = vmatprep.subr.mxu0 0.0
    %2724 = vmatpush1.msra.mxu0 %v2703
    %2725 = vmatprep.subr.mxu0 0.0
    %2726 = vmatpush1.msra.mxu0 %v2704
    %2727 = vmatprep.subr.mxu0 0.0
    %2728 = vmatpush1.msra.mxu0 %v2705
    %2729 = vmatprep.subr.mxu0 0.0
    %2730 = vmatpush1.msra.mxu0 %v2706
    %2731 = vmatprep.subr.mxu0 0.0
    %2732 = vmatpush1.msra.mxu0 %v2707
    %2733 = vmatprep.subr.mxu0 0.0
    %2734 = vmatpush1.msra.mxu0 %v2708
    %2735 = vmatprep.subr.mxu0 0.0
    %2736 = vmatpush1.msra.mxu0 %v2709
    %2737 = vmatprep.subr.mxu0 0.0
    %2738 = vmatpush1.msra.mxu0 %v2710
    %2739 = vmatprep.subr.mxu0 0.0
    %2740 = vmatpush1.msra.mxu0 %v2711
    %2741 = vmatprep.subr.mxu0 0.0
    %2742 = vmatpush1.msra.mxu0 %v2712
    %2743 = vmatprep.subr.mxu0 0.0
    %2744 = vmatpush1.msra.mxu0 %v2713
    %2745 = vmatprep.subr.mxu0 0.0
    %2746 = vmatpush1.msra.mxu0 %v2714
    %2747 = vmatprep.subr.mxu0 0.0
    %2748 = vmatpush1.msra.mxu0 0.0
    %2749 = vmatprep.subr.mxu0 0.0
    %2750 = vmatpush1.msra.mxu0 0.0
    %2751 = vmatprep.subr.mxu0 0.0
    %2752 = vmatpush1.msra.mxu0 0.0
    %2753 = vmatprep.subr.mxu0 0.0
    %2754 = vmatpush1.msra.mxu0 0.0
    %2755 = vmatprep.subr.mxu0 0.0
    %2756 = vmatpush1.msra.mxu0 0.0
    %2757 = vmatprep.subr.mxu0 0.0
    %2758 = vmatpush1.msra.mxu0 0.0
    %2759 = vmatprep.subr.mxu0 0.0
    %2760 = vmatpush1.msra.mxu0 0.0
    %2761 = vmatprep.subr.mxu0 0.0
    %2762 = vmatpush1.msra.mxu0 0.0
    %2763 = vmatprep.subr.mxu0 0.0
    %2764 = vmatpush1.msra.mxu0 0.0
    %2765 = vmatprep.subr.mxu0 0.0
    %2766 = vmatpush1.msra.mxu0 0.0
    %2767 = vmatprep.subr.mxu0 0.0
    %2768 = vmatpush1.msra.mxu0 0.0
    %2769 = vmatprep.subr.mxu0 0.0
    %2770 = vmatpush1.msra.mxu0 0.0
    %2771 = vmatprep.subr.mxu0 0.0
    %2772 = vmatpush1.msra.mxu0 0.0
    %2773 = vmatprep.subr.mxu0 0.0
    %2774 = vmatpush1.msra.mxu0 0.0
    %2775 = vmatprep.subr.mxu0 0.0
    %2776 = vmatpush1.msra.mxu0 0.0
    %2777 = vmatprep.subr.mxu0 0.0
    %2778 = vmatpush1.msra.mxu0 0.0
    %2779 = vmatprep.mubr.f32.mxu0 0.0
    %2780 = vmatmul.mubr.f32.gmra.mrb[0].mxu0 %v2698
    %v2781 = vpop.f32.mrb[0].mxu0
    %v2782 = vadd.f32 0.0, %v2781
    %v2783 = vpop.f32.mrb[0].mxu0
    %2784 = vdwg.mxu0
    %v2785 = vadd.f32 %v2677, %v2782
    %s2786 = scalar_lea.vmem %s17, 16
    %2787 = vst [vmem:[%s2786] sm:$0xff] %v2785
    %s2788 = sld [smem:[#allocation4 + $0x1]]
    %p2789 = scmp.ne.s32.totalorder %s2788, 0
    // Predicated region
    $region98: #{seq2seq_forward.3} parent=1 // pred_check
      %p2790 = pneg %p2789
    $region99: #{seq2seq_forward.3} parent=1 // pred_check_branch
      %2792 = sbr.rel (%p2790) target = $region101
    $region100: #{seq2seq_forward.3} parent=1 // pred_region
      %s2793 = scalar_lea.vmem %s1, 16
      %v2794 = vld [vmem:[%s2793] sm:$0xff]
      %2795 = vset.pattern.permute.xlu0 0
      %2796 = vperm.xlu0 %2795, %v2794
      %v2797 = vpop.permute.xlu0 %2796
      %vm2798 = vcmp.eq.s32.totalorder %v376, %v2797
      %v2799 = vsel %vm2798, 1, 0
      %v2800 = vcvt.s32.f32 %v2799
      %2801 = vst [vmem:[#allocation3] sm:$0xff] %v2800
    $region101: #{seq2seq_forward.3} parent=1 // pred_fallthru
      _
    %p2802 = scmp.eq.s32.totalorder %s2788, 0
    // Predicated region
    $region102: #{seq2seq_forward.3} parent=1 // pred_check
      %p2803 = pneg %p2802
    $region103: #{seq2seq_forward.3} parent=1 // pred_check_branch
      %2805 = sbr.rel (%p2803) target = $region105
    $region104: #{seq2seq_forward.3} parent=1 // pred_region
      %v2806 = vsel %vm378, %v2785, -inf
      %2807 = vmax.xlane.f32.xlu0 %v2806
      %v2808 = vpop.xlane.xlu0 %2807
      %vm2809 = vcmp.eq.f32.partialorder %v2806, %v2808
      %v2810 = vsel %vm2809, %v377, 128.0
      %2811 = vmin.xlane.f32.xlu0 %v2810
      %v2812 = vpop.xlane.xlu0 %2811
      %vm2813 = vcmp.eq.f32.partialorder %v377, %v2812
      %v2814 = vsel %vm2813, 1, 0
      %v2815 = vcvt.s32.f32 %v2814
      %2816 = vst [vmem:[#allocation3] sm:$0xff] %v2815
    $region105: #{seq2seq_forward.3} parent=1 // pred_fallthru
      _
    %v2817 = vld [vmem:[#allocation3] sm:$0xff]
    %v2818 = vld [vmem:[#allocation7] sm:$0xff]
    %v2819 = vld [vmem:[#allocation7 + $0x8] sm:$0xff]
    %v2820 = vld [vmem:[#allocation7 + $0x10] sm:$0xff]
    %v2821 = vld [vmem:[#allocation7 + $0x18] sm:$0xff]
    %v2822 = vld [vmem:[#allocation7 + $0x20] sm:$0xff]
    %v2823 = vld [vmem:[#allocation7 + $0x28] sm:$0xff]
    %v2824 = vld [vmem:[#allocation7 + $0x30] sm:$0xff]
    %v2825 = vld [vmem:[#allocation7 + $0x38] sm:$0xff]
    %v2826 = vld [vmem:[#allocation7 + $0x40] sm:$0xff]
    %v2827 = vld [vmem:[#allocation7 + $0x48] sm:$0xff]
    %v2828 = vld [vmem:[#allocation7 + $0x50] sm:$0xff]
    %v2829 = vld [vmem:[#allocation7 + $0x58] sm:$0xff]
    %v2830 = vld [vmem:[#allocation7 + $0x60] sm:$0xff]
    %v2831 = vld [vmem:[#allocation7 + $0x68] sm:$0xff]
    %v2832 = vld [vmem:[#allocation7 + $0x70] sm:$0xff]
    %v2833 = vld [vmem:[#allocation7 + $0x78] sm:$0xff]
    %2834 = vmatprep.subr.mxu0 0.0
    %2835 = vmatpush1.msra.mxu0 %v2818
    %2836 = vmatprep.subr.mxu0 0.0
    %2837 = vmatpush1.msra.mxu0 %v2819
    %2838 = vmatprep.subr.mxu0 0.0
    %2839 = vmatpush1.msra.mxu0 %v2820
    %2840 = vmatprep.subr.mxu0 0.0
    %2841 = vmatpush1.msra.mxu0 %v2821
    %2842 = vmatprep.subr.mxu0 0.0
    %2843 = vmatpush1.msra.mxu0 %v2822
    %2844 = vmatprep.subr.mxu0 0.0
    %2845 = vmatpush1.msra.mxu0 %v2823
    %2846 = vmatprep.subr.mxu0 0.0
    %2847 = vmatpush1.msra.mxu0 %v2824
    %2848 = vmatprep.subr.mxu0 0.0
    %2849 = vmatpush1.msra.mxu0 %v2825
    %2850 = vmatprep.subr.mxu0 0.0
    %2851 = vmatpush1.msra.mxu0 %v2826
    %2852 = vmatprep.subr.mxu0 0.0
    %2853 = vmatpush1.msra.mxu0 %v2827
    %2854 = vmatprep.subr.mxu0 0.0
    %2855 = vmatpush1.msra.mxu0 %v2828
    %2856 = vmatprep.subr.mxu0 0.0
    %2857 = vmatpush1.msra.mxu0 %v2829
    %2858 = vmatprep.subr.mxu0 0.0
    %2859 = vmatpush1.msra.mxu0 %v2830
    %2860 = vmatprep.subr.mxu0 0.0
    %2861 = vmatpush1.msra.mxu0 %v2831
    %2862 = vmatprep.subr.mxu0 0.0
    %2863 = vmatpush1.msra.mxu0 %v2832
    %2864 = vmatprep.subr.mxu0 0.0
    %2865 = vmatpush1.msra.mxu0 %v2833
    %2866 = vmatprep.subr.mxu0 0.0
    %2867 = vmatpush1.msra.mxu0 0.0
    %2868 = vmatprep.subr.mxu0 0.0
    %2869 = vmatpush1.msra.mxu0 0.0
    %2870 = vmatprep.subr.mxu0 0.0
    %2871 = vmatpush1.msra.mxu0 0.0
    %2872 = vmatprep.subr.mxu0 0.0
    %2873 = vmatpush1.msra.mxu0 0.0
    %2874 = vmatprep.subr.mxu0 0.0
    %2875 = vmatpush1.msra.mxu0 0.0
    %2876 = vmatprep.subr.mxu0 0.0
    %2877 = vmatpush1.msra.mxu0 0.0
    %2878 = vmatprep.subr.mxu0 0.0
    %2879 = vmatpush1.msra.mxu0 0.0
    %2880 = vmatprep.subr.mxu0 0.0
    %2881 = vmatpush1.msra.mxu0 0.0
    %2882 = vmatprep.subr.mxu0 0.0
    %2883 = vmatpush1.msra.mxu0 0.0
    %2884 = vmatprep.subr.mxu0 0.0
    %2885 = vmatpush1.msra.mxu0 0.0
    %2886 = vmatprep.subr.mxu0 0.0
    %2887 = vmatpush1.msra.mxu0 0.0
    %2888 = vmatprep.subr.mxu0 0.0
    %2889 = vmatpush1.msra.mxu0 0.0
    %2890 = vmatprep.subr.mxu0 0.0
    %2891 = vmatpush1.msra.mxu0 0.0
    %2892 = vmatprep.subr.mxu0 0.0
    %2893 = vmatpush1.msra.mxu0 0.0
    %2894 = vmatprep.subr.mxu0 0.0
    %2895 = vmatpush1.msra.mxu0 0.0
    %2896 = vmatprep.subr.mxu0 0.0
    %2897 = vmatpush1.msra.mxu0 0.0
    %2898 = vmatprep.mubr.f32.mxu0 0.0
    %2899 = vmatmul.mubr.f32.gmra.mrb[0].mxu0 %v2817
    %v2900 = vpop.f32.mrb[0].mxu0
    %v2901 = vadd.f32 0.0, %v2900
    %v2902 = vpop.f32.mrb[0].mxu0
    %2903 = vdwg.mxu0
    %v2904 = vld [vmem:[%s10] sm:$0xff]
    %v2905 = vld [vmem:[%s10 + $0x8] sm:$0xff]
    %v2906 = vld [vmem:[%s10 + $0x10] sm:$0xff]
    %v2907 = vld [vmem:[%s10 + $0x18] sm:$0xff]
    %v2908 = vld [vmem:[%s10 + $0x20] sm:$0xff]
    %v2909 = vld [vmem:[%s10 + $0x28] sm:$0xff]
    %v2910 = vld [vmem:[%s10 + $0x30] sm:$0xff]
    %v2911 = vld [vmem:[%s10 + $0x38] sm:$0xff]
    %v2912 = vld [vmem:[%s10 + $0x40] sm:$0xff]
    %v2913 = vld [vmem:[%s10 + $0x48] sm:$0xff]
    %v2914 = vld [vmem:[%s10 + $0x50] sm:$0xff]
    %v2915 = vld [vmem:[%s10 + $0x58] sm:$0xff]
    %v2916 = vld [vmem:[%s10 + $0x60] sm:$0xff]
    %v2917 = vld [vmem:[%s10 + $0x68] sm:$0xff]
    %v2918 = vld [vmem:[%s10 + $0x70] sm:$0xff]
    %v2919 = vld [vmem:[%s10 + $0x78] sm:$0xff]
    %v2920 = vld [vmem:[%s10 + $0x80] sm:$0xff]
    %v2921 = vld [vmem:[%s10 + $0x88] sm:$0xff]
    %v2922 = vld [vmem:[%s10 + $0x90] sm:$0xff]
    %v2923 = vld [vmem:[%s10 + $0x98] sm:$0xff]
    %v2924 = vld [vmem:[%s10 + $0xa0] sm:$0xff]
    %v2925 = vld [vmem:[%s10 + $0xa8] sm:$0xff]
    %v2926 = vld [vmem:[%s10 + $0xb0] sm:$0xff]
    %v2927 = vld [vmem:[%s10 + $0xb8] sm:$0xff]
    %v2928 = vld [vmem:[%s10 + $0xc0] sm:$0xff]
    %v2929 = vld [vmem:[%s10 + $0xc8] sm:$0xff]
    %v2930 = vld [vmem:[%s10 + $0xd0] sm:$0xff]
    %v2931 = vld [vmem:[%s10 + $0xd8] sm:$0xff]
    %v2932 = vld [vmem:[%s10 + $0xe0] sm:$0xff]
    %v2933 = vld [vmem:[%s10 + $0xe8] sm:$0xff]
    %v2934 = vld [vmem:[%s10 + $0xf0] sm:$0xff]
    %v2935 = vld [vmem:[%s10 + $0xf8] sm:$0xff]
    %v2936 = vld [vmem:[%s10 + $0x100] sm:$0xff]
    %v2937 = vld [vmem:[%s10 + $0x108] sm:$0xff]
    %v2938 = vld [vmem:[%s10 + $0x110] sm:$0xff]
    %v2939 = vld [vmem:[%s10 + $0x118] sm:$0xff]
    %v2940 = vld [vmem:[%s10 + $0x120] sm:$0xff]
    %v2941 = vld [vmem:[%s10 + $0x128] sm:$0xff]
    %v2942 = vld [vmem:[%s10 + $0x130] sm:$0xff]
    %v2943 = vld [vmem:[%s10 + $0x138] sm:$0xff]
    %v2944 = vld [vmem:[%s10 + $0x140] sm:$0xff]
    %v2945 = vld [vmem:[%s10 + $0x148] sm:$0xff]
    %v2946 = vld [vmem:[%s10 + $0x150] sm:$0xff]
    %v2947 = vld [vmem:[%s10 + $0x158] sm:$0xff]
    %v2948 = vld [vmem:[%s10 + $0x160] sm:$0xff]
    %v2949 = vld [vmem:[%s10 + $0x168] sm:$0xff]
    %v2950 = vld [vmem:[%s10 + $0x170] sm:$0xff]
    %v2951 = vld [vmem:[%s10 + $0x178] sm:$0xff]
    %v2952 = vld [vmem:[%s10 + $0x180] sm:$0xff]
    %v2953 = vld [vmem:[%s10 + $0x188] sm:$0xff]
    %v2954 = vld [vmem:[%s10 + $0x190] sm:$0xff]
    %v2955 = vld [vmem:[%s10 + $0x198] sm:$0xff]
    %v2956 = vld [vmem:[%s10 + $0x1a0] sm:$0xff]
    %v2957 = vld [vmem:[%s10 + $0x1a8] sm:$0xff]
    %v2958 = vld [vmem:[%s10 + $0x1b0] sm:$0xff]
    %v2959 = vld [vmem:[%s10 + $0x1b8] sm:$0xff]
    %v2960 = vld [vmem:[%s10 + $0x1c0] sm:$0xff]
    %v2961 = vld [vmem:[%s10 + $0x1c8] sm:$0xff]
    %v2962 = vld [vmem:[%s10 + $0x1d0] sm:$0xff]
    %v2963 = vld [vmem:[%s10 + $0x1d8] sm:$0xff]
    %v2964 = vld [vmem:[%s10 + $0x1e0] sm:$0xff]
    %v2965 = vld [vmem:[%s10 + $0x1e8] sm:$0xff]
    %v2966 = vld [vmem:[%s10 + $0x1f0] sm:$0xff]
    %v2967 = vld [vmem:[%s10 + $0x1f8] sm:$0xff]
    %v2968 = vld [vmem:[%s11] sm:$0xf]
    %v2970 = vlaneseq
    %v2971 = vshrl.u32 %v2970, 7
    %v2972 = vsub.s32 0, %v2971
    %v2973 = vrot.slane %v2968, %v2972
    %v2974 = vlaneseq
    %v2975 = vshrl.u32 %v2974, 7
    %v2976 = vsub.s32 1, %v2975
    %v2977 = vrot.slane %v2968, %v2976
    %v2978 = vlaneseq
    %v2979 = vshrl.u32 %v2978, 7
    %v2980 = vsub.s32 2, %v2979
    %v2981 = vrot.slane %v2968, %v2980
    %v2982 = vlaneseq
    %v2983 = vshrl.u32 %v2982, 7
    %v2984 = vsub.s32 3, %v2983
    %v2985 = vrot.slane %v2968, %v2984
    %2990 = vmatprep.subr.mxu0 %v2905
    %2991 = vmatpush1.msra.mxu0 %v2904
    %2992 = vmatprep.subr.mxu0 %v2909
    %2993 = vmatpush1.msra.mxu0 %v2908
    %2994 = vmatprep.subr.mxu0 %v2913
    %2995 = vmatpush1.msra.mxu0 %v2912
    %2996 = vmatprep.subr.mxu0 %v2917
    %2997 = vmatpush1.msra.mxu0 %v2916
    %2998 = vmatprep.subr.mxu0 %v2921
    %2999 = vmatpush1.msra.mxu0 %v2920
    %3000 = vmatprep.subr.mxu0 %v2925
    %3001 = vmatpush1.msra.mxu0 %v2924
    %3002 = vmatprep.subr.mxu0 %v2929
    %3003 = vmatpush1.msra.mxu0 %v2928
    %3004 = vmatprep.subr.mxu0 %v2933
    %3005 = vmatpush1.msra.mxu0 %v2932
    %3006 = vmatprep.subr.mxu0 %v2937
    %3007 = vmatpush1.msra.mxu0 %v2936
    %3008 = vmatprep.subr.mxu0 %v2941
    %3009 = vmatpush1.msra.mxu0 %v2940
    %3010 = vmatprep.subr.mxu0 %v2945
    %3011 = vmatpush1.msra.mxu0 %v2944
    %3012 = vmatprep.subr.mxu0 %v2949
    %3013 = vmatpush1.msra.mxu0 %v2948
    %3014 = vmatprep.subr.mxu0 %v2953
    %3015 = vmatpush1.msra.mxu0 %v2952
    %3016 = vmatprep.subr.mxu0 %v2957
    %3017 = vmatpush1.msra.mxu0 %v2956
    %3018 = vmatprep.subr.mxu0 %v2961
    %3019 = vmatpush1.msra.mxu0 %v2960
    %3020 = vmatprep.subr.mxu0 %v2965
    %3021 = vmatpush1.msra.mxu0 %v2964
    %3022 = vmatprep.subr.mxu0 0.0
    %3023 = vmatpush1.msra.mxu0 0.0
    %3024 = vmatprep.subr.mxu0 0.0
    %3025 = vmatpush1.msra.mxu0 0.0
    %3026 = vmatprep.subr.mxu0 0.0
    %3027 = vmatpush1.msra.mxu0 0.0
    %3028 = vmatprep.subr.mxu0 0.0
    %3029 = vmatpush1.msra.mxu0 0.0
    %3030 = vmatprep.subr.mxu0 0.0
    %3031 = vmatpush1.msra.mxu0 0.0
    %3032 = vmatprep.subr.mxu0 0.0
    %3033 = vmatpush1.msra.mxu0 0.0
    %3034 = vmatprep.subr.mxu0 0.0
    %3035 = vmatpush1.msra.mxu0 0.0
    %3036 = vmatprep.subr.mxu0 0.0
    %3037 = vmatpush1.msra.mxu0 0.0
    %3038 = vmatprep.subr.mxu0 0.0
    %3039 = vmatpush1.msra.mxu0 0.0
    %3040 = vmatprep.subr.mxu0 0.0
    %3041 = vmatpush1.msra.mxu0 0.0
    %3042 = vmatprep.subr.mxu0 0.0
    %3043 = vmatpush1.msra.mxu0 0.0
    %3044 = vmatprep.subr.mxu0 0.0
    %3045 = vmatpush1.msra.mxu0 0.0
    %3046 = vmatprep.subr.mxu0 0.0
    %3047 = vmatpush1.msra.mxu0 0.0
    %3048 = vmatprep.subr.mxu0 0.0
    %3049 = vmatpush1.msra.mxu0 0.0
    %3050 = vmatprep.subr.mxu0 0.0
    %3051 = vmatpush1.msra.mxu0 0.0
    %3052 = vmatprep.subr.mxu0 0.0
    %3053 = vmatpush1.msra.mxu0 0.0
    %3054 = vmatprep.mubr.f32.mxu0 0.0
    %3055 = vmatmul.mubr.f32.gmra.mrb[0].mxu0 %v2698
    %v3056 = vpop.f32.mrb[0].mxu0
    %v3057 = vadd.f32 %v2973, %v3056
    %v3058 = vpop.f32.mrb[0].mxu0
    %v3059 = vadd.f32 %v2977, %v3058
    %3060 = vdwg.mxu0
    %3061 = vmatprep.subr.mxu0 %v2907
    %3062 = vmatpush1.msra.mxu0 %v2906
    %3063 = vmatprep.subr.mxu0 %v2911
    %3064 = vmatpush1.msra.mxu0 %v2910
    %3065 = vmatprep.subr.mxu0 %v2915
    %3066 = vmatpush1.msra.mxu0 %v2914
    %3067 = vmatprep.subr.mxu0 %v2919
    %3068 = vmatpush1.msra.mxu0 %v2918
    %3069 = vmatprep.subr.mxu0 %v2923
    %3070 = vmatpush1.msra.mxu0 %v2922
    %3071 = vmatprep.subr.mxu0 %v2927
    %3072 = vmatpush1.msra.mxu0 %v2926
    %3073 = vmatprep.subr.mxu0 %v2931
    %3074 = vmatpush1.msra.mxu0 %v2930
    %3075 = vmatprep.subr.mxu0 %v2935
    %3076 = vmatpush1.msra.mxu0 %v2934
    %3077 = vmatprep.subr.mxu0 %v2939
    %3078 = vmatpush1.msra.mxu0 %v2938
    %3079 = vmatprep.subr.mxu0 %v2943
    %3080 = vmatpush1.msra.mxu0 %v2942
    %3081 = vmatprep.subr.mxu0 %v2947
    %3082 = vmatpush1.msra.mxu0 %v2946
    %3083 = vmatprep.subr.mxu0 %v2951
    %3084 = vmatpush1.msra.mxu0 %v2950
    %3085 = vmatprep.subr.mxu0 %v2955
    %3086 = vmatpush1.msra.mxu0 %v2954
    %3087 = vmatprep.subr.mxu0 %v2959
    %3088 = vmatpush1.msra.mxu0 %v2958
    %3089 = vmatprep.subr.mxu0 %v2963
    %3090 = vmatpush1.msra.mxu0 %v2962
    %3091 = vmatprep.subr.mxu0 %v2967
    %3092 = vmatpush1.msra.mxu0 %v2966
    %3093 = vmatprep.subr.mxu0 0.0
    %3094 = vmatpush1.msra.mxu0 0.0
    %3095 = vmatprep.subr.mxu0 0.0
    %3096 = vmatpush1.msra.mxu0 0.0
    %3097 = vmatprep.subr.mxu0 0.0
    %3098 = vmatpush1.msra.mxu0 0.0
    %3099 = vmatprep.subr.mxu0 0.0
    %3100 = vmatpush1.msra.mxu0 0.0
    %3101 = vmatprep.subr.mxu0 0.0
    %3102 = vmatpush1.msra.mxu0 0.0
    %3103 = vmatprep.subr.mxu0 0.0
    %3104 = vmatpush1.msra.mxu0 0.0
    %3105 = vmatprep.subr.mxu0 0.0
    %3106 = vmatpush1.msra.mxu0 0.0
    %3107 = vmatprep.subr.mxu0 0.0
    %3108 = vmatpush1.msra.mxu0 0.0
    %3109 = vmatprep.subr.mxu0 0.0
    %3110 = vmatpush1.msra.mxu0 0.0
    %3111 = vmatprep.subr.mxu0 0.0
    %3112 = vmatpush1.msra.mxu0 0.0
    %3113 = vmatprep.subr.mxu0 0.0
    %3114 = vmatpush1.msra.mxu0 0.0
    %3115 = vmatprep.subr.mxu0 0.0
    %3116 = vmatpush1.msra.mxu0 0.0
    %3117 = vmatprep.subr.mxu0 0.0
    %3118 = vmatpush1.msra.mxu0 0.0
    %3119 = vmatprep.subr.mxu0 0.0
    %3120 = vmatpush1.msra.mxu0 0.0
    %3121 = vmatprep.subr.mxu0 0.0
    %3122 = vmatpush1.msra.mxu0 0.0
    %3123 = vmatprep.subr.mxu0 0.0
    %3124 = vmatpush1.msra.mxu0 0.0
    %3125 = vmatprep.mubr.f32.mxu0 0.0
    %3126 = vmatmul.mubr.f32.gmra.mrb[0].mxu0 %v2698
    %v3127 = vpop.f32.mrb[0].mxu0
    %v3128 = vadd.f32 %v2981, %v3127
    %v3129 = vpop.f32.mrb[0].mxu0
    %v3130 = vadd.f32 %v2985, %v3129
    %3131 = vdwg.mxu0
    %v3132 = vld [vmem:[#allocation2] sm:$0xff]
    %v3133 = vld [vmem:[#allocation2 + $0x8] sm:$0xff]
    %v3134 = vld [vmem:[#allocation2 + $0x10] sm:$0xff]
    %v3135 = vld [vmem:[#allocation2 + $0x18] sm:$0xff]
    %v3136 = vld [vmem:[#allocation2 + $0x20] sm:$0xff]
    %v3137 = vld [vmem:[#allocation2 + $0x28] sm:$0xff]
    %v3138 = vadd.f32 %v3132, %v3057
    %v3139 = vadd.f32 %v3133, %v3057
    %v3140 = vadd.f32 %v3134, %v3057
    %v3141 = vadd.f32 %v3135, %v3057
    %v3142 = vadd.f32 %v3136, %v3057
    %v3143 = vadd.f32 %v3137, %v3057
    %v3144 = vtanh.pop %v3138
    %v3145 = vtanh.pop %v3139
    %v3146 = vtanh.pop %v3140
    %v3147 = vtanh.pop %v3141
    %v3148 = vtanh.pop %v3142
    %v3149 = vtanh.pop %v3143
    %v3150 = vld [vmem:[%s9] sm:$0x1]
    %v3152 = vlaneseq
    %v3153 = vshrl.u32 %v3152, 7
    %v3154 = vsub.s32 0, %v3153
    %v3155 = vrot.slane %v3150, %v3154
    %v3157 = vmul.f32 %v3144, %v3155
    %v3158 = vmul.f32 %v3145, %v3155
    %v3159 = vmul.f32 %v3146, %v3155
    %v3160 = vmul.f32 %v3147, %v3155
    %v3161 = vmul.f32 %v3148, %v3155
    %v3162 = vmul.f32 %v3149, %v3155
    %3163 = vadd.xlane.f32.xlu0 %v3157
    %v3164 = vpop.xlane.xlu0 %3163
    %3165 = vadd.xlane.f32.xlu0 %v3158
    %v3166 = vpop.xlane.xlu0 %3165
    %3167 = vadd.xlane.f32.xlu0 %v3159
    %v3168 = vpop.xlane.xlu0 %3167
    %3169 = vadd.xlane.f32.xlu0 %v3160
    %v3170 = vpop.xlane.xlu0 %3169
    %3171 = vadd.xlane.f32.xlu0 %v3161
    %v3172 = vpop.xlane.xlu0 %3171
    %3173 = vadd.xlane.f32.xlu0 %v3162
    %v3174 = vpop.xlane.xlu0 %3173
    %v3175 = vmax.f32 %v3164, %v3172
    %v3176 = vmax.f32 %v3166, %v3174
    %v3177 = vmax.f32 %v3175, %v3176
    %v3178 = vmax.f32 %v3168, %v3170
    %v3179 = vmax.f32 %v3177, %v3178
    %v3180 = vsub.f32 %v3164, %v3179
    %v3181 = vsub.f32 %v3166, %v3179
    %v3182 = vsub.f32 %v3168, %v3179
    %v3183 = vsub.f32 %v3170, %v3179
    %v3184 = vsub.f32 %v3172, %v3179
    %v3185 = vsub.f32 %v3174, %v3179
    %v3186 = vmul.f32 %v3180, 1.442695
    %v3187 = vpow.pop %v3186
    %v3188 = vmul.f32 %v3181, 1.442695
    %v3189 = vpow.pop %v3188
    %v3190 = vmul.f32 %v3182, 1.442695
    %v3191 = vpow.pop %v3190
    %v3192 = vmul.f32 %v3183, 1.442695
    %v3193 = vpow.pop %v3192
    %v3194 = vmul.f32 %v3184, 1.442695
    %v3195 = vpow.pop %v3194
    %v3196 = vmul.f32 %v3185, 1.442695
    %v3197 = vpow.pop %v3196
    %v3198 = vadd.f32 %v3187, %v3189
    %v3199 = vadd.f32 %v3198, %v3191
    %v3200 = vadd.f32 %v3199, %v3193
    %v3201 = vadd.f32 %v3200, %v3195
    %v3202 = vadd.f32 %v3201, %v3197
    %v3203 = vrcp.pop %v3202
    %v3204 = vmul.f32 %v3187, %v3203
    %v3205 = vmul.f32 %v3189, %v3203
    %v3206 = vmul.f32 %v3191, %v3203
    %v3207 = vmul.f32 %v3193, %v3203
    %v3208 = vmul.f32 %v3195, %v3203
    %v3209 = vmul.f32 %v3197, %v3203
    %v3210 = vld [vmem:[%s2] sm:$0xff]
    %v3211 = vld [vmem:[%s2 + $0x8] sm:$0xff]
    %v3212 = vld [vmem:[%s2 + $0x10] sm:$0xff]
    %v3213 = vld [vmem:[%s2 + $0x18] sm:$0xff]
    %v3214 = vld [vmem:[%s2 + $0x20] sm:$0xff]
    %v3215 = vld [vmem:[%s2 + $0x28] sm:$0xff]
    %v3216 = vmul.f32 %v3204, %v3210
    %v3217 = vmul.f32 %v3205, %v3211
    %v3218 = vmul.f32 %v3206, %v3212
    %v3219 = vmul.f32 %v3207, %v3213
    %v3220 = vmul.f32 %v3208, %v3214
    %v3221 = vmul.f32 %v3209, %v3215
    %v3222 = vadd.f32 %v3216, %v3217
    %v3223 = vadd.f32 %v3222, %v3218
    %v3224 = vadd.f32 %v3223, %v3219
    %v3225 = vadd.f32 %v3224, %v3220
    %v3226 = vadd.f32 %v3225, %v3221
    %v3227 = vld [vmem:[%s3] sm:$0xff]
    %v3228 = vld [vmem:[%s3 + $0x8] sm:$0xff]
    %v3229 = vld [vmem:[%s3 + $0x10] sm:$0xff]
    %v3230 = vld [vmem:[%s3 + $0x18] sm:$0xff]
    %v3231 = vld [vmem:[%s3 + $0x20] sm:$0xff]
    %v3232 = vld [vmem:[%s3 + $0x28] sm:$0xff]
    %v3233 = vmul.f32 %v3204, %v3227
    %v3234 = vmul.f32 %v3205, %v3228
    %v3235 = vmul.f32 %v3206, %v3229
    %v3236 = vmul.f32 %v3207, %v3230
    %v3237 = vmul.f32 %v3208, %v3231
    %v3238 = vmul.f32 %v3209, %v3232
    %v3239 = vadd.f32 %v3233, %v3234
    %v3240 = vadd.f32 %v3239, %v3235
    %v3241 = vadd.f32 %v3240, %v3236
    %v3242 = vadd.f32 %v3241, %v3237
    %v3243 = vadd.f32 %v3242, %v3238
    %v3244 = vld [vmem:[%s12] sm:$0xff]
    %v3245 = vld [vmem:[%s12 + $0x8] sm:$0xff]
    %v3246 = vld [vmem:[%s12 + $0x10] sm:$0xff]
    %v3247 = vld [vmem:[%s12 + $0x18] sm:$0xff]
    %v3248 = vld [vmem:[%s12 + $0x20] sm:$0xff]
    %v3249 = vld [vmem:[%s12 + $0x28] sm:$0xff]
    %v3250 = vld [vmem:[%s12 + $0x30] sm:$0xff]
    %v3251 = vld [vmem:[%s12 + $0x38] sm:$0xff]
    %v3252 = vld [vmem:[%s12 + $0x40] sm:$0xff]
    %v3253 = vld [vmem:[%s12 + $0x48] sm:$0xff]
    %v3254 = vld [vmem:[%s12 + $0x50] sm:$0xff]
    %v3255 = vld [vmem:[%s12 + $0x58] sm:$0xff]
    %v3256 = vld [vmem:[%s12 + $0x60] sm:$0xff]
    %v3257 = vld [vmem:[%s12 + $0x68] sm:$0xff]
    %v3258 = vld [vmem:[%s12 + $0x70] sm:$0xff]
    %v3259 = vld [vmem:[%s12 + $0x78] sm:$0xff]
    %v3260 = vld [vmem:[%s12 + $0x80] sm:$0xff]
    %v3261 = vld [vmem:[%s12 + $0x88] sm:$0xff]
    %v3262 = vld [vmem:[%s12 + $0x90] sm:$0xff]
    %v3263 = vld [vmem:[%s12 + $0x98] sm:$0xff]
    %v3264 = vld [vmem:[%s12 + $0xa0] sm:$0xff]
    %v3265 = vld [vmem:[%s12 + $0xa8] sm:$0xff]
    %v3266 = vld [vmem:[%s12 + $0xb0] sm:$0xff]
    %v3267 = vld [vmem:[%s12 + $0xb8] sm:$0xff]
    %v3268 = vld [vmem:[%s12 + $0xc0] sm:$0xff]
    %v3269 = vld [vmem:[%s12 + $0xc8] sm:$0xff]
    %v3270 = vld [vmem:[%s12 + $0xd0] sm:$0xff]
    %v3271 = vld [vmem:[%s12 + $0xd8] sm:$0xff]
    %v3272 = vld [vmem:[%s12 + $0xe0] sm:$0xff]
    %v3273 = vld [vmem:[%s12 + $0xe8] sm:$0xff]
    %v3274 = vld [vmem:[%s12 + $0xf0] sm:$0xff]
    %v3275 = vld [vmem:[%s12 + $0xf8] sm:$0xff]
    %v3276 = vld [vmem:[%s12 + $0x100] sm:$0xff]
    %v3277 = vld [vmem:[%s12 + $0x108] sm:$0xff]
    %v3278 = vld [vmem:[%s12 + $0x110] sm:$0xff]
    %v3279 = vld [vmem:[%s12 + $0x118] sm:$0xff]
    %v3280 = vld [vmem:[%s12 + $0x120] sm:$0xff]
    %v3281 = vld [vmem:[%s12 + $0x128] sm:$0xff]
    %v3282 = vld [vmem:[%s12 + $0x130] sm:$0xff]
    %v3283 = vld [vmem:[%s12 + $0x138] sm:$0xff]
    %v3284 = vld [vmem:[%s12 + $0x140] sm:$0xff]
    %v3285 = vld [vmem:[%s12 + $0x148] sm:$0xff]
    %v3286 = vld [vmem:[%s12 + $0x150] sm:$0xff]
    %v3287 = vld [vmem:[%s12 + $0x158] sm:$0xff]
    %v3288 = vld [vmem:[%s12 + $0x160] sm:$0xff]
    %v3289 = vld [vmem:[%s12 + $0x168] sm:$0xff]
    %v3290 = vld [vmem:[%s12 + $0x170] sm:$0xff]
    %v3291 = vld [vmem:[%s12 + $0x178] sm:$0xff]
    %v3292 = vld [vmem:[%s12 + $0x180] sm:$0xff]
    %v3293 = vld [vmem:[%s12 + $0x188] sm:$0xff]
    %v3294 = vld [vmem:[%s12 + $0x190] sm:$0xff]
    %v3295 = vld [vmem:[%s12 + $0x198] sm:$0xff]
    %v3296 = vld [vmem:[%s12 + $0x1a0] sm:$0xff]
    %v3297 = vld [vmem:[%s12 + $0x1a8] sm:$0xff]
    %v3298 = vld [vmem:[%s12 + $0x1b0] sm:$0xff]
    %v3299 = vld [vmem:[%s12 + $0x1b8] sm:$0xff]
    %v3300 = vld [vmem:[%s12 + $0x1c0] sm:$0xff]
    %v3301 = vld [vmem:[%s12 + $0x1c8] sm:$0xff]
    %v3302 = vld [vmem:[%s12 + $0x1d0] sm:$0xff]
    %v3303 = vld [vmem:[%s12 + $0x1d8] sm:$0xff]
    %v3304 = vld [vmem:[%s12 + $0x1e0] sm:$0xff]
    %v3305 = vld [vmem:[%s12 + $0x1e8] sm:$0xff]
    %v3306 = vld [vmem:[%s12 + $0x1f0] sm:$0xff]
    %v3307 = vld [vmem:[%s12 + $0x1f8] sm:$0xff]
    %v3308 = vld [vmem:[%s13] sm:$0xff]
    %v3309 = vld [vmem:[%s13 + $0x8] sm:$0xff]
    %v3310 = vld [vmem:[%s13 + $0x10] sm:$0xff]
    %v3311 = vld [vmem:[%s13 + $0x18] sm:$0xff]
    %v3312 = vld [vmem:[%s13 + $0x20] sm:$0xff]
    %v3313 = vld [vmem:[%s13 + $0x28] sm:$0xff]
    %v3314 = vld [vmem:[%s13 + $0x30] sm:$0xff]
    %v3315 = vld [vmem:[%s13 + $0x38] sm:$0xff]
    %v3316 = vld [vmem:[%s13 + $0x40] sm:$0xff]
    %v3317 = vld [vmem:[%s13 + $0x48] sm:$0xff]
    %v3318 = vld [vmem:[%s13 + $0x50] sm:$0xff]
    %v3319 = vld [vmem:[%s13 + $0x58] sm:$0xff]
    %v3320 = vld [vmem:[%s13 + $0x60] sm:$0xff]
    %v3321 = vld [vmem:[%s13 + $0x68] sm:$0xff]
    %v3322 = vld [vmem:[%s13 + $0x70] sm:$0xff]
    %v3323 = vld [vmem:[%s13 + $0x78] sm:$0xff]
    %v3324 = vld [vmem:[%s13 + $0x80] sm:$0xff]
    %v3325 = vld [vmem:[%s13 + $0x88] sm:$0xff]
    %v3326 = vld [vmem:[%s13 + $0x90] sm:$0xff]
    %v3327 = vld [vmem:[%s13 + $0x98] sm:$0xff]
    %v3328 = vld [vmem:[%s13 + $0xa0] sm:$0xff]
    %v3329 = vld [vmem:[%s13 + $0xa8] sm:$0xff]
    %v3330 = vld [vmem:[%s13 + $0xb0] sm:$0xff]
    %v3331 = vld [vmem:[%s13 + $0xb8] sm:$0xff]
    %v3332 = vld [vmem:[%s13 + $0xc0] sm:$0xff]
    %v3333 = vld [vmem:[%s13 + $0xc8] sm:$0xff]
    %v3334 = vld [vmem:[%s13 + $0xd0] sm:$0xff]
    %v3335 = vld [vmem:[%s13 + $0xd8] sm:$0xff]
    %v3336 = vld [vmem:[%s13 + $0xe0] sm:$0xff]
    %v3337 = vld [vmem:[%s13 + $0xe8] sm:$0xff]
    %v3338 = vld [vmem:[%s13 + $0xf0] sm:$0xff]
    %v3339 = vld [vmem:[%s13 + $0xf8] sm:$0xff]
    %v3340 = vld [vmem:[%s13 + $0x100] sm:$0xff]
    %v3341 = vld [vmem:[%s13 + $0x108] sm:$0xff]
    %v3342 = vld [vmem:[%s13 + $0x110] sm:$0xff]
    %v3343 = vld [vmem:[%s13 + $0x118] sm:$0xff]
    %v3344 = vld [vmem:[%s13 + $0x120] sm:$0xff]
    %v3345 = vld [vmem:[%s13 + $0x128] sm:$0xff]
    %v3346 = vld [vmem:[%s13 + $0x130] sm:$0xff]
    %v3347 = vld [vmem:[%s13 + $0x138] sm:$0xff]
    %v3348 = vld [vmem:[%s13 + $0x140] sm:$0xff]
    %v3349 = vld [vmem:[%s13 + $0x148] sm:$0xff]
    %v3350 = vld [vmem:[%s13 + $0x150] sm:$0xff]
    %v3351 = vld [vmem:[%s13 + $0x158] sm:$0xff]
    %v3352 = vld [vmem:[%s13 + $0x160] sm:$0xff]
    %v3353 = vld [vmem:[%s13 + $0x168] sm:$0xff]
    %v3354 = vld [vmem:[%s13 + $0x170] sm:$0xff]
    %v3355 = vld [vmem:[%s13 + $0x178] sm:$0xff]
    %v3356 = vld [vmem:[%s13 + $0x180] sm:$0xff]
    %v3357 = vld [vmem:[%s13 + $0x188] sm:$0xff]
    %v3358 = vld [vmem:[%s13 + $0x190] sm:$0xff]
    %v3359 = vld [vmem:[%s13 + $0x198] sm:$0xff]
    %v3360 = vld [vmem:[%s13 + $0x1a0] sm:$0xff]
    %v3361 = vld [vmem:[%s13 + $0x1a8] sm:$0xff]
    %v3362 = vld [vmem:[%s13 + $0x1b0] sm:$0xff]
    %v3363 = vld [vmem:[%s13 + $0x1b8] sm:$0xff]
    %v3364 = vld [vmem:[%s13 + $0x1c0] sm:$0xff]
    %v3365 = vld [vmem:[%s13 + $0x1c8] sm:$0xff]
    %v3366 = vld [vmem:[%s13 + $0x1d0] sm:$0xff]
    %v3367 = vld [vmem:[%s13 + $0x1d8] sm:$0xff]
    %v3368 = vld [vmem:[%s13 + $0x1e0] sm:$0xff]
    %v3369 = vld [vmem:[%s13 + $0x1e8] sm:$0xff]
    %v3370 = vld [vmem:[%s13 + $0x1f0] sm:$0xff]
    %v3371 = vld [vmem:[%s13 + $0x1f8] sm:$0xff]
    %3372 = vmatprep.subr.mxu0 %v3309
    %3373 = vmatpush1.msra.mxu0 %v3308
    %3374 = vmatprep.subr.mxu0 %v3313
    %3375 = vmatpush1.msra.mxu0 %v3312
    %3376 = vmatprep.subr.mxu0 %v3317
    %3377 = vmatpush1.msra.mxu0 %v3316
    %3378 = vmatprep.subr.mxu0 %v3321
    %3379 = vmatpush1.msra.mxu0 %v3320
    %3380 = vmatprep.subr.mxu0 %v3325
    %3381 = vmatpush1.msra.mxu0 %v3324
    %3382 = vmatprep.subr.mxu0 %v3329
    %3383 = vmatpush1.msra.mxu0 %v3328
    %3384 = vmatprep.subr.mxu0 %v3333
    %3385 = vmatpush1.msra.mxu0 %v3332
    %3386 = vmatprep.subr.mxu0 %v3337
    %3387 = vmatpush1.msra.mxu0 %v3336
    %3388 = vmatprep.subr.mxu0 %v3341
    %3389 = vmatpush1.msra.mxu0 %v3340
    %3390 = vmatprep.subr.mxu0 %v3345
    %3391 = vmatpush1.msra.mxu0 %v3344
    %3392 = vmatprep.subr.mxu0 %v3349
    %3393 = vmatpush1.msra.mxu0 %v3348
    %3394 = vmatprep.subr.mxu0 %v3353
    %3395 = vmatpush1.msra.mxu0 %v3352
    %3396 = vmatprep.subr.mxu0 %v3357
    %3397 = vmatpush1.msra.mxu0 %v3356
    %3398 = vmatprep.subr.mxu0 %v3361
    %3399 = vmatpush1.msra.mxu0 %v3360
    %3400 = vmatprep.subr.mxu0 %v3365
    %3401 = vmatpush1.msra.mxu0 %v3364
    %3402 = vmatprep.subr.mxu0 %v3369
    %3403 = vmatpush1.msra.mxu0 %v3368
    %3404 = vmatprep.subr.mxu0 0.0
    %3405 = vmatpush1.msra.mxu0 0.0
    %3406 = vmatprep.subr.mxu0 0.0
    %3407 = vmatpush1.msra.mxu0 0.0
    %3408 = vmatprep.subr.mxu0 0.0
    %3409 = vmatpush1.msra.mxu0 0.0
    %3410 = vmatprep.subr.mxu0 0.0
    %3411 = vmatpush1.msra.mxu0 0.0
    %3412 = vmatprep.subr.mxu0 0.0
    %3413 = vmatpush1.msra.mxu0 0.0
    %3414 = vmatprep.subr.mxu0 0.0
    %3415 = vmatpush1.msra.mxu0 0.0
    %3416 = vmatprep.subr.mxu0 0.0
    %3417 = vmatpush1.msra.mxu0 0.0
    %3418 = vmatprep.subr.mxu0 0.0
    %3419 = vmatpush1.msra.mxu0 0.0
    %3420 = vmatprep.subr.mxu0 0.0
    %3421 = vmatpush1.msra.mxu0 0.0
    %3422 = vmatprep.subr.mxu0 0.0
    %3423 = vmatpush1.msra.mxu0 0.0
    %3424 = vmatprep.subr.mxu0 0.0
    %3425 = vmatpush1.msra.mxu0 0.0
    %3426 = vmatprep.subr.mxu0 0.0
    %3427 = vmatpush1.msra.mxu0 0.0
    %3428 = vmatprep.subr.mxu0 0.0
    %3429 = vmatpush1.msra.mxu0 0.0
    %3430 = vmatprep.subr.mxu0 0.0
    %3431 = vmatpush1.msra.mxu0 0.0
    %3432 = vmatprep.subr.mxu0 0.0
    %3433 = vmatpush1.msra.mxu0 0.0
    %3434 = vmatprep.subr.mxu0 0.0
    %3435 = vmatpush1.msra.mxu0 0.0
    %3436 = vmatprep.mubr.f32.mxu0 0.0
    %3437 = vmatmul.mubr.f32.gmra.mrb[0].mxu0 %v3226
    %v3438 = vpop.f32.mrb[0].mxu0
    %v3439 = vadd.f32 0.0, %v3438
    %v3440 = vpop.f32.mrb[0].mxu0
    %v3441 = vadd.f32 0.0, %v3440
    %3442 = vdwg.mxu0
    %3443 = vmatprep.subr.mxu0 %v3311
    %3444 = vmatpush1.msra.mxu0 %v3310
    %3445 = vmatprep.subr.mxu0 %v3315
    %3446 = vmatpush1.msra.mxu0 %v3314
    %3447 = vmatprep.subr.mxu0 %v3319
    %3448 = vmatpush1.msra.mxu0 %v3318
    %3449 = vmatprep.subr.mxu0 %v3323
    %3450 = vmatpush1.msra.mxu0 %v3322
    %3451 = vmatprep.subr.mxu0 %v3327
    %3452 = vmatpush1.msra.mxu0 %v3326
    %3453 = vmatprep.subr.mxu0 %v3331
    %3454 = vmatpush1.msra.mxu0 %v3330
    %3455 = vmatprep.subr.mxu0 %v3335
    %3456 = vmatpush1.msra.mxu0 %v3334
    %3457 = vmatprep.subr.mxu0 %v3339
    %3458 = vmatpush1.msra.mxu0 %v3338
    %3459 = vmatprep.subr.mxu0 %v3343
    %3460 = vmatpush1.msra.mxu0 %v3342
    %3461 = vmatprep.subr.mxu0 %v3347
    %3462 = vmatpush1.msra.mxu0 %v3346
    %3463 = vmatprep.subr.mxu0 %v3351
    %3464 = vmatpush1.msra.mxu0 %v3350
    %3465 = vmatprep.subr.mxu0 %v3355
    %3466 = vmatpush1.msra.mxu0 %v3354
    %3467 = vmatprep.subr.mxu0 %v3359
    %3468 = vmatpush1.msra.mxu0 %v3358
    %3469 = vmatprep.subr.mxu0 %v3363
    %3470 = vmatpush1.msra.mxu0 %v3362
    %3471 = vmatprep.subr.mxu0 %v3367
    %3472 = vmatpush1.msra.mxu0 %v3366
    %3473 = vmatprep.subr.mxu0 %v3371
    %3474 = vmatpush1.msra.mxu0 %v3370
    %3475 = vmatprep.subr.mxu0 0.0
    %3476 = vmatpush1.msra.mxu0 0.0
    %3477 = vmatprep.subr.mxu0 0.0
    %3478 = vmatpush1.msra.mxu0 0.0
    %3479 = vmatprep.subr.mxu0 0.0
    %3480 = vmatpush1.msra.mxu0 0.0
    %3481 = vmatprep.subr.mxu0 0.0
    %3482 = vmatpush1.msra.mxu0 0.0
    %3483 = vmatprep.subr.mxu0 0.0
    %3484 = vmatpush1.msra.mxu0 0.0
    %3485 = vmatprep.subr.mxu0 0.0
    %3486 = vmatpush1.msra.mxu0 0.0
    %3487 = vmatprep.subr.mxu0 0.0
    %3488 = vmatpush1.msra.mxu0 0.0
    %3489 = vmatprep.subr.mxu0 0.0
    %3490 = vmatpush1.msra.mxu0 0.0
    %3491 = vmatprep.subr.mxu0 0.0
    %3492 = vmatpush1.msra.mxu0 0.0
    %3493 = vmatprep.subr.mxu0 0.0
    %3494 = vmatpush1.msra.mxu0 0.0
    %3495 = vmatprep.subr.mxu0 0.0
    %3496 = vmatpush1.msra.mxu0 0.0
    %3497 = vmatprep.subr.mxu0 0.0
    %3498 = vmatpush1.msra.mxu0 0.0
    %3499 = vmatprep.subr.mxu0 0.0
    %3500 = vmatpush1.msra.mxu0 0.0
    %3501 = vmatprep.subr.mxu0 0.0
    %3502 = vmatpush1.msra.mxu0 0.0
    %3503 = vmatprep.subr.mxu0 0.0
    %3504 = vmatpush1.msra.mxu0 0.0
    %3505 = vmatprep.subr.mxu0 0.0
    %3506 = vmatpush1.msra.mxu0 0.0
    %3507 = vmatprep.mubr.f32.mxu0 0.0
    %3508 = vmatmul.mubr.f32.gmra.mrb[0].mxu0 %v3226
    %v3509 = vpop.f32.mrb[0].mxu0
    %v3510 = vadd.f32 0.0, %v3509
    %v3511 = vpop.f32.mrb[0].mxu0
    %v3512 = vadd.f32 0.0, %v3511
    %3513 = vdwg.mxu0
    %3514 = vmatprep.subr.mxu0 %v3245
    %3515 = vmatpush1.msra.mxu0 %v3244
    %3516 = vmatprep.subr.mxu0 %v3249
    %3517 = vmatpush1.msra.mxu0 %v3248
    %3518 = vmatprep.subr.mxu0 %v3253
    %3519 = vmatpush1.msra.mxu0 %v3252
    %3520 = vmatprep.subr.mxu0 %v3257
    %3521 = vmatpush1.msra.mxu0 %v3256
    %3522 = vmatprep.subr.mxu0 %v3261
    %3523 = vmatpush1.msra.mxu0 %v3260
    %3524 = vmatprep.subr.mxu0 %v3265
    %3525 = vmatpush1.msra.mxu0 %v3264
    %3526 = vmatprep.subr.mxu0 %v3269
    %3527 = vmatpush1.msra.mxu0 %v3268
    %3528 = vmatprep.subr.mxu0 %v3273
    %3529 = vmatpush1.msra.mxu0 %v3272
    %3530 = vmatprep.subr.mxu0 %v3277
    %3531 = vmatpush1.msra.mxu0 %v3276
    %3532 = vmatprep.subr.mxu0 %v3281
    %3533 = vmatpush1.msra.mxu0 %v3280
    %3534 = vmatprep.subr.mxu0 %v3285
    %3535 = vmatpush1.msra.mxu0 %v3284
    %3536 = vmatprep.subr.mxu0 %v3289
    %3537 = vmatpush1.msra.mxu0 %v3288
    %3538 = vmatprep.subr.mxu0 %v3293
    %3539 = vmatpush1.msra.mxu0 %v3292
    %3540 = vmatprep.subr.mxu0 %v3297
    %3541 = vmatpush1.msra.mxu0 %v3296
    %3542 = vmatprep.subr.mxu0 %v3301
    %3543 = vmatpush1.msra.mxu0 %v3300
    %3544 = vmatprep.subr.mxu0 %v3305
    %3545 = vmatpush1.msra.mxu0 %v3304
    %3546 = vmatprep.subr.mxu0 0.0
    %3547 = vmatpush1.msra.mxu0 0.0
    %3548 = vmatprep.subr.mxu0 0.0
    %3549 = vmatpush1.msra.mxu0 0.0
    %3550 = vmatprep.subr.mxu0 0.0
    %3551 = vmatpush1.msra.mxu0 0.0
    %3552 = vmatprep.subr.mxu0 0.0
    %3553 = vmatpush1.msra.mxu0 0.0
    %3554 = vmatprep.subr.mxu0 0.0
    %3555 = vmatpush1.msra.mxu0 0.0
    %3556 = vmatprep.subr.mxu0 0.0
    %3557 = vmatpush1.msra.mxu0 0.0
    %3558 = vmatprep.subr.mxu0 0.0
    %3559 = vmatpush1.msra.mxu0 0.0
    %3560 = vmatprep.subr.mxu0 0.0
    %3561 = vmatpush1.msra.mxu0 0.0
    %3562 = vmatprep.subr.mxu0 0.0
    %3563 = vmatpush1.msra.mxu0 0.0
    %3564 = vmatprep.subr.mxu0 0.0
    %3565 = vmatpush1.msra.mxu0 0.0
    %3566 = vmatprep.subr.mxu0 0.0
    %3567 = vmatpush1.msra.mxu0 0.0
    %3568 = vmatprep.subr.mxu0 0.0
    %3569 = vmatpush1.msra.mxu0 0.0
    %3570 = vmatprep.subr.mxu0 0.0
    %3571 = vmatpush1.msra.mxu0 0.0
    %3572 = vmatprep.subr.mxu0 0.0
    %3573 = vmatpush1.msra.mxu0 0.0
    %3574 = vmatprep.subr.mxu0 0.0
    %3575 = vmatpush1.msra.mxu0 0.0
    %3576 = vmatprep.subr.mxu0 0.0
    %3577 = vmatpush1.msra.mxu0 0.0
    %3578 = vmatprep.mubr.f32.mxu0 0.0
    %3579 = vmatmul.mubr.f32.gmra.mrb[0].mxu0 %v2901
    %v3580 = vpop.f32.mrb[0].mxu0
    %v3581 = vadd.f32 %v3439, %v3580
    %v3582 = vpop.f32.mrb[0].mxu0
    %v3583 = vadd.f32 %v3441, %v3582
    %3584 = vdwg.mxu0
    %3585 = vmatprep.subr.mxu0 %v3247
    %3586 = vmatpush1.msra.mxu0 %v3246
    %3587 = vmatprep.subr.mxu0 %v3251
    %3588 = vmatpush1.msra.mxu0 %v3250
    %3589 = vmatprep.subr.mxu0 %v3255
    %3590 = vmatpush1.msra.mxu0 %v3254
    %3591 = vmatprep.subr.mxu0 %v3259
    %3592 = vmatpush1.msra.mxu0 %v3258
    %3593 = vmatprep.subr.mxu0 %v3263
    %3594 = vmatpush1.msra.mxu0 %v3262
    %3595 = vmatprep.subr.mxu0 %v3267
    %3596 = vmatpush1.msra.mxu0 %v3266
    %3597 = vmatprep.subr.mxu0 %v3271
    %3598 = vmatpush1.msra.mxu0 %v3270
    %3599 = vmatprep.subr.mxu0 %v3275
    %3600 = vmatpush1.msra.mxu0 %v3274
    %3601 = vmatprep.subr.mxu0 %v3279
    %3602 = vmatpush1.msra.mxu0 %v3278
    %3603 = vmatprep.subr.mxu0 %v3283
    %3604 = vmatpush1.msra.mxu0 %v3282
    %3605 = vmatprep.subr.mxu0 %v3287
    %3606 = vmatpush1.msra.mxu0 %v3286
    %3607 = vmatprep.subr.mxu0 %v3291
    %3608 = vmatpush1.msra.mxu0 %v3290
    %3609 = vmatprep.subr.mxu0 %v3295
    %3610 = vmatpush1.msra.mxu0 %v3294
    %3611 = vmatprep.subr.mxu0 %v3299
    %3612 = vmatpush1.msra.mxu0 %v3298
    %3613 = vmatprep.subr.mxu0 %v3303
    %3614 = vmatpush1.msra.mxu0 %v3302
    %3615 = vmatprep.subr.mxu0 %v3307
    %3616 = vmatpush1.msra.mxu0 %v3306
    %3617 = vmatprep.subr.mxu0 0.0
    %3618 = vmatpush1.msra.mxu0 0.0
    %3619 = vmatprep.subr.mxu0 0.0
    %3620 = vmatpush1.msra.mxu0 0.0
    %3621 = vmatprep.subr.mxu0 0.0
    %3622 = vmatpush1.msra.mxu0 0.0
    %3623 = vmatprep.subr.mxu0 0.0
    %3624 = vmatpush1.msra.mxu0 0.0
    %3625 = vmatprep.subr.mxu0 0.0
    %3626 = vmatpush1.msra.mxu0 0.0
    %3627 = vmatprep.subr.mxu0 0.0
    %3628 = vmatpush1.msra.mxu0 0.0
    %3629 = vmatprep.subr.mxu0 0.0
    %3630 = vmatpush1.msra.mxu0 0.0
    %3631 = vmatprep.subr.mxu0 0.0
    %3632 = vmatpush1.msra.mxu0 0.0
    %3633 = vmatprep.subr.mxu0 0.0
    %3634 = vmatpush1.msra.mxu0 0.0
    %3635 = vmatprep.subr.mxu0 0.0
    %3636 = vmatpush1.msra.mxu0 0.0
    %3637 = vmatprep.subr.mxu0 0.0
    %3638 = vmatpush1.msra.mxu0 0.0
    %3639 = vmatprep.subr.mxu0 0.0
    %3640 = vmatpush1.msra.mxu0 0.0
    %3641 = vmatprep.subr.mxu0 0.0
    %3642 = vmatpush1.msra.mxu0 0.0
    %3643 = vmatprep.subr.mxu0 0.0
    %3644 = vmatpush1.msra.mxu0 0.0
    %3645 = vmatprep.subr.mxu0 0.0
    %3646 = vmatpush1.msra.mxu0 0.0
    %3647 = vmatprep.subr.mxu0 0.0
    %3648 = vmatpush1.msra.mxu0 0.0
    %3649 = vmatprep.mubr.f32.mxu0 0.0
    %3650 = vmatmul.mubr.f32.gmra.mrb[0].mxu0 %v2901
    %v3651 = vpop.f32.mrb[0].mxu0
    %v3652 = vadd.f32 %v3510, %v3651
    %v3653 = vpop.f32.mrb[0].mxu0
    %v3654 = vadd.f32 %v3512, %v3653
    %3655 = vdwg.mxu0
    %v3656 = vld [vmem:[%s14] sm:$0xff]
    %v3657 = vld [vmem:[%s14 + $0x8] sm:$0xff]
    %v3658 = vld [vmem:[%s14 + $0x10] sm:$0xff]
    %v3659 = vld [vmem:[%s14 + $0x18] sm:$0xff]
    %v3660 = vld [vmem:[%s14 + $0x20] sm:$0xff]
    %v3661 = vld [vmem:[%s14 + $0x28] sm:$0xff]
    %v3662 = vld [vmem:[%s14 + $0x30] sm:$0xff]
    %v3663 = vld [vmem:[%s14 + $0x38] sm:$0xff]
    %v3664 = vld [vmem:[%s14 + $0x40] sm:$0xff]
    %v3665 = vld [vmem:[%s14 + $0x48] sm:$0xff]
    %v3666 = vld [vmem:[%s14 + $0x50] sm:$0xff]
    %v3667 = vld [vmem:[%s14 + $0x58] sm:$0xff]
    %v3668 = vld [vmem:[%s14 + $0x60] sm:$0xff]
    %v3669 = vld [vmem:[%s14 + $0x68] sm:$0xff]
    %v3670 = vld [vmem:[%s14 + $0x70] sm:$0xff]
    %v3671 = vld [vmem:[%s14 + $0x78] sm:$0xff]
    %v3672 = vld [vmem:[%s14 + $0x80] sm:$0xff]
    %v3673 = vld [vmem:[%s14 + $0x88] sm:$0xff]
    %v3674 = vld [vmem:[%s14 + $0x90] sm:$0xff]
    %v3675 = vld [vmem:[%s14 + $0x98] sm:$0xff]
    %v3676 = vld [vmem:[%s14 + $0xa0] sm:$0xff]
    %v3677 = vld [vmem:[%s14 + $0xa8] sm:$0xff]
    %v3678 = vld [vmem:[%s14 + $0xb0] sm:$0xff]
    %v3679 = vld [vmem:[%s14 + $0xb8] sm:$0xff]
    %v3680 = vld [vmem:[%s14 + $0xc0] sm:$0xff]
    %v3681 = vld [vmem:[%s14 + $0xc8] sm:$0xff]
    %v3682 = vld [vmem:[%s14 + $0xd0] sm:$0xff]
    %v3683 = vld [vmem:[%s14 + $0xd8] sm:$0xff]
    %v3684 = vld [vmem:[%s14 + $0xe0] sm:$0xff]
    %v3685 = vld [vmem:[%s14 + $0xe8] sm:$0xff]
    %v3686 = vld [vmem:[%s14 + $0xf0] sm:$0xff]
    %v3687 = vld [vmem:[%s14 + $0xf8] sm:$0xff]
    %v3688 = vld [vmem:[%s14 + $0x100] sm:$0xff]
    %v3689 = vld [vmem:[%s14 + $0x108] sm:$0xff]
    %v3690 = vld [vmem:[%s14 + $0x110] sm:$0xff]
    %v3691 = vld [vmem:[%s14 + $0x118] sm:$0xff]
    %v3692 = vld [vmem:[%s14 + $0x120] sm:$0xff]
    %v3693 = vld [vmem:[%s14 + $0x128] sm:$0xff]
    %v3694 = vld [vmem:[%s14 + $0x130] sm:$0xff]
    %v3695 = vld [vmem:[%s14 + $0x138] sm:$0xff]
    %v3696 = vld [vmem:[%s14 + $0x140] sm:$0xff]
    %v3697 = vld [vmem:[%s14 + $0x148] sm:$0xff]
    %v3698 = vld [vmem:[%s14 + $0x150] sm:$0xff]
    %v3699 = vld [vmem:[%s14 + $0x158] sm:$0xff]
    %v3700 = vld [vmem:[%s14 + $0x160] sm:$0xff]
    %v3701 = vld [vmem:[%s14 + $0x168] sm:$0xff]
    %v3702 = vld [vmem:[%s14 + $0x170] sm:$0xff]
    %v3703 = vld [vmem:[%s14 + $0x178] sm:$0xff]
    %v3704 = vld [vmem:[%s14 + $0x180] sm:$0xff]
    %v3705 = vld [vmem:[%s14 + $0x188] sm:$0xff]
    %v3706 = vld [vmem:[%s14 + $0x190] sm:$0xff]
    %v3707 = vld [vmem:[%s14 + $0x198] sm:$0xff]
    %v3708 = vld [vmem:[%s14 + $0x1a0] sm:$0xff]
    %v3709 = vld [vmem:[%s14 + $0x1a8] sm:$0xff]
    %v3710 = vld [vmem:[%s14 + $0x1b0] sm:$0xff]
    %v3711 = vld [vmem:[%s14 + $0x1b8] sm:$0xff]
    %v3712 = vld [vmem:[%s14 + $0x1c0] sm:$0xff]
    %v3713 = vld [vmem:[%s14 + $0x1c8] sm:$0xff]
    %v3714 = vld [vmem:[%s14 + $0x1d0] sm:$0xff]
    %v3715 = vld [vmem:[%s14 + $0x1d8] sm:$0xff]
    %v3716 = vld [vmem:[%s14 + $0x1e0] sm:$0xff]
    %v3717 = vld [vmem:[%s14 + $0x1e8] sm:$0xff]
    %v3718 = vld [vmem:[%s14 + $0x1f0] sm:$0xff]
    %v3719 = vld [vmem:[%s14 + $0x1f8] sm:$0xff]
    %3720 = vmatprep.subr.mxu0 %v3657
    %3721 = vmatpush1.msra.mxu0 %v3656
    %3722 = vmatprep.subr.mxu0 %v3661
    %3723 = vmatpush1.msra.mxu0 %v3660
    %3724 = vmatprep.subr.mxu0 %v3665
    %3725 = vmatpush1.msra.mxu0 %v3664
    %3726 = vmatprep.subr.mxu0 %v3669
    %3727 = vmatpush1.msra.mxu0 %v3668
    %3728 = vmatprep.subr.mxu0 %v3673
    %3729 = vmatpush1.msra.mxu0 %v3672
    %3730 = vmatprep.subr.mxu0 %v3677
    %3731 = vmatpush1.msra.mxu0 %v3676
    %3732 = vmatprep.subr.mxu0 %v3681
    %3733 = vmatpush1.msra.mxu0 %v3680
    %3734 = vmatprep.subr.mxu0 %v3685
    %3735 = vmatpush1.msra.mxu0 %v3684
    %3736 = vmatprep.subr.mxu0 %v3689
    %3737 = vmatpush1.msra.mxu0 %v3688
    %3738 = vmatprep.subr.mxu0 %v3693
    %3739 = vmatpush1.msra.mxu0 %v3692
    %3740 = vmatprep.subr.mxu0 %v3697
    %3741 = vmatpush1.msra.mxu0 %v3696
    %3742 = vmatprep.subr.mxu0 %v3701
    %3743 = vmatpush1.msra.mxu0 %v3700
    %3744 = vmatprep.subr.mxu0 %v3705
    %3745 = vmatpush1.msra.mxu0 %v3704
    %3746 = vmatprep.subr.mxu0 %v3709
    %3747 = vmatpush1.msra.mxu0 %v3708
    %3748 = vmatprep.subr.mxu0 %v3713
    %3749 = vmatpush1.msra.mxu0 %v3712
    %3750 = vmatprep.subr.mxu0 %v3717
    %3751 = vmatpush1.msra.mxu0 %v3716
    %3752 = vmatprep.subr.mxu0 0.0
    %3753 = vmatpush1.msra.mxu0 0.0
    %3754 = vmatprep.subr.mxu0 0.0
    %3755 = vmatpush1.msra.mxu0 0.0
    %3756 = vmatprep.subr.mxu0 0.0
    %3757 = vmatpush1.msra.mxu0 0.0
    %3758 = vmatprep.subr.mxu0 0.0
    %3759 = vmatpush1.msra.mxu0 0.0
    %3760 = vmatprep.subr.mxu0 0.0
    %3761 = vmatpush1.msra.mxu0 0.0
    %3762 = vmatprep.subr.mxu0 0.0
    %3763 = vmatpush1.msra.mxu0 0.0
    %3764 = vmatprep.subr.mxu0 0.0
    %3765 = vmatpush1.msra.mxu0 0.0
    %3766 = vmatprep.subr.mxu0 0.0
    %3767 = vmatpush1.msra.mxu0 0.0
    %3768 = vmatprep.subr.mxu0 0.0
    %3769 = vmatpush1.msra.mxu0 0.0
    %3770 = vmatprep.subr.mxu0 0.0
    %3771 = vmatpush1.msra.mxu0 0.0
    %3772 = vmatprep.subr.mxu0 0.0
    %3773 = vmatpush1.msra.mxu0 0.0
    %3774 = vmatprep.subr.mxu0 0.0
    %3775 = vmatpush1.msra.mxu0 0.0
    %3776 = vmatprep.subr.mxu0 0.0
    %3777 = vmatpush1.msra.mxu0 0.0
    %3778 = vmatprep.subr.mxu0 0.0
    %3779 = vmatpush1.msra.mxu0 0.0
    %3780 = vmatprep.subr.mxu0 0.0
    %3781 = vmatpush1.msra.mxu0 0.0
    %3782 = vmatprep.subr.mxu0 0.0
    %3783 = vmatpush1.msra.mxu0 0.0
    %3784 = vmatprep.mubr.f32.mxu0 0.0
    %3785 = vmatmul.mubr.f32.gmra.mrb[0].mxu0 %v3243
    %v3786 = vpop.f32.mrb[0].mxu0
    %v3787 = vadd.f32 0.0, %v3786
    %v3788 = vpop.f32.mrb[0].mxu0
    %v3789 = vadd.f32 0.0, %v3788
    %3790 = vdwg.mxu0
    %3791 = vmatprep.subr.mxu0 %v3659
    %3792 = vmatpush1.msra.mxu0 %v3658
    %3793 = vmatprep.subr.mxu0 %v3663
    %3794 = vmatpush1.msra.mxu0 %v3662
    %3795 = vmatprep.subr.mxu0 %v3667
    %3796 = vmatpush1.msra.mxu0 %v3666
    %3797 = vmatprep.subr.mxu0 %v3671
    %3798 = vmatpush1.msra.mxu0 %v3670
    %3799 = vmatprep.subr.mxu0 %v3675
    %3800 = vmatpush1.msra.mxu0 %v3674
    %3801 = vmatprep.subr.mxu0 %v3679
    %3802 = vmatpush1.msra.mxu0 %v3678
    %3803 = vmatprep.subr.mxu0 %v3683
    %3804 = vmatpush1.msra.mxu0 %v3682
    %3805 = vmatprep.subr.mxu0 %v3687
    %3806 = vmatpush1.msra.mxu0 %v3686
    %3807 = vmatprep.subr.mxu0 %v3691
    %3808 = vmatpush1.msra.mxu0 %v3690
    %3809 = vmatprep.subr.mxu0 %v3695
    %3810 = vmatpush1.msra.mxu0 %v3694
    %3811 = vmatprep.subr.mxu0 %v3699
    %3812 = vmatpush1.msra.mxu0 %v3698
    %3813 = vmatprep.subr.mxu0 %v3703
    %3814 = vmatpush1.msra.mxu0 %v3702
    %3815 = vmatprep.subr.mxu0 %v3707
    %3816 = vmatpush1.msra.mxu0 %v3706
    %3817 = vmatprep.subr.mxu0 %v3711
    %3818 = vmatpush1.msra.mxu0 %v3710
    %3819 = vmatprep.subr.mxu0 %v3715
    %3820 = vmatpush1.msra.mxu0 %v3714
    %3821 = vmatprep.subr.mxu0 %v3719
    %3822 = vmatpush1.msra.mxu0 %v3718
    %3823 = vmatprep.subr.mxu0 0.0
    %3824 = vmatpush1.msra.mxu0 0.0
    %3825 = vmatprep.subr.mxu0 0.0
    %3826 = vmatpush1.msra.mxu0 0.0
    %3827 = vmatprep.subr.mxu0 0.0
    %3828 = vmatpush1.msra.mxu0 0.0
    %3829 = vmatprep.subr.mxu0 0.0
    %3830 = vmatpush1.msra.mxu0 0.0
    %3831 = vmatprep.subr.mxu0 0.0
    %3832 = vmatpush1.msra.mxu0 0.0
    %3833 = vmatprep.subr.mxu0 0.0
    %3834 = vmatpush1.msra.mxu0 0.0
    %3835 = vmatprep.subr.mxu0 0.0
    %3836 = vmatpush1.msra.mxu0 0.0
    %3837 = vmatprep.subr.mxu0 0.0
    %3838 = vmatpush1.msra.mxu0 0.0
    %3839 = vmatprep.subr.mxu0 0.0
    %3840 = vmatpush1.msra.mxu0 0.0
    %3841 = vmatprep.subr.mxu0 0.0
    %3842 = vmatpush1.msra.mxu0 0.0
    %3843 = vmatprep.subr.mxu0 0.0
    %3844 = vmatpush1.msra.mxu0 0.0
    %3845 = vmatprep.subr.mxu0 0.0
    %3846 = vmatpush1.msra.mxu0 0.0
    %3847 = vmatprep.subr.mxu0 0.0
    %3848 = vmatpush1.msra.mxu0 0.0
    %3849 = vmatprep.subr.mxu0 0.0
    %3850 = vmatpush1.msra.mxu0 0.0
    %3851 = vmatprep.subr.mxu0 0.0
    %3852 = vmatpush1.msra.mxu0 0.0
    %3853 = vmatprep.subr.mxu0 0.0
    %3854 = vmatpush1.msra.mxu0 0.0
    %3855 = vmatprep.mubr.f32.mxu0 0.0
    %3856 = vmatmul.mubr.f32.gmra.mrb[0].mxu0 %v3243
    %v3857 = vpop.f32.mrb[0].mxu0
    %v3858 = vadd.f32 0.0, %v3857
    %v3859 = vpop.f32.mrb[0].mxu0
    %v3860 = vadd.f32 0.0, %v3859
    %3861 = vdwg.mxu0
    %v3862 = vadd.f32 %v3581, %v3787
    %v3863 = vadd.f32 %v3583, %v3789
    %v3864 = vadd.f32 %v3652, %v3858
    %v3865 = vadd.f32 %v3654, %v3860
    %v3866 = vld [vmem:[%s15] sm:$0xf]
    %v3868 = vlaneseq
    %v3869 = vshrl.u32 %v3868, 7
    %v3870 = vsub.s32 0, %v3869
    %v3871 = vrot.slane %v3866, %v3870
    %v3872 = vlaneseq
    %v3873 = vshrl.u32 %v3872, 7
    %v3874 = vsub.s32 1, %v3873
    %v3875 = vrot.slane %v3866, %v3874
    %v3876 = vlaneseq
    %v3877 = vshrl.u32 %v3876, 7
    %v3878 = vsub.s32 2, %v3877
    %v3879 = vrot.slane %v3866, %v3878
    %v3880 = vlaneseq
    %v3881 = vshrl.u32 %v3880, 7
    %v3882 = vsub.s32 3, %v3881
    %v3883 = vrot.slane %v3866, %v3882
    %v3888 = vadd.f32 %v3862, %v3871
    %v3889 = vadd.f32 %v3863, %v3875
    %v3890 = vadd.f32 %v3864, %v3879
    %v3891 = vadd.f32 %v3865, %v3883
    %v3892 = vadd.f32 %v3888, %v3059
    %v3893 = vxor.u32 %v3892, 2147483648
    %v3894 = vmul.f32 %v3893, 1.442695
    %v3895 = vpow.pop %v3894
    %v3896 = vadd.f32 %v3895, 1.0
    %v3897 = vrcp.pop %v3896
    %v3898 = vmul.f32 1.0, %v3897
    %v3899 = vadd.f32 %v3889, %v3128
    %v3900 = vxor.u32 %v3899, 2147483648
    %v3901 = vmul.f32 %v3900, 1.442695
    %v3902 = vpow.pop %v3901
    %v3903 = vadd.f32 %v3902, 1.0
    %v3904 = vrcp.pop %v3903
    %v3905 = vmul.f32 1.0, %v3904
    %v3906 = vmul.f32 %v3898, %v3130
    %v3907 = vadd.f32 %v3890, %v3906
    %v3908 = vtanh.pop %v3907
    %v3909 = vsub.f32 1.0, %v3905
    %v3910 = vmul.f32 %v3909, %v3908
    %v3911 = vmul.f32 %v3905, %v2698
    %v3912 = vadd.f32 %v3910, %v3911
    %v3913 = vld [vmem:[#allocation11] sm:$0xff]
    %v3914 = vld [vmem:[#allocation11 + $0x8] sm:$0xff]
    %v3915 = vld [vmem:[#allocation11 + $0x10] sm:$0xff]
    %v3916 = vld [vmem:[#allocation11 + $0x18] sm:$0xff]
    %v3917 = vld [vmem:[#allocation11 + $0x20] sm:$0xff]
    %v3918 = vld [vmem:[#allocation11 + $0x28] sm:$0xff]
    %v3919 = vld [vmem:[#allocation11 + $0x30] sm:$0xff]
    %v3920 = vld [vmem:[#allocation11 + $0x38] sm:$0xff]
    %v3921 = vld [vmem:[#allocation11 + $0x40] sm:$0xff]
    %v3922 = vld [vmem:[#allocation11 + $0x48] sm:$0xff]
    %v3923 = vld [vmem:[#allocation11 + $0x50] sm:$0xff]
    %v3924 = vld [vmem:[#allocation11 + $0x58] sm:$0xff]
    %v3925 = vld [vmem:[#allocation11 + $0x60] sm:$0xff]
    %v3926 = vld [vmem:[#allocation11 + $0x68] sm:$0xff]
    %v3927 = vld [vmem:[#allocation11 + $0x70] sm:$0xff]
    %v3928 = vld [vmem:[#allocation11 + $0x78] sm:$0xff]
    %3929 = vmatprep.subr.mxu0 0.0
    %3930 = vmatpush1.msra.mxu0 %v3913
    %3931 = vmatprep.subr.mxu0 0.0
    %3932 = vmatpush1.msra.mxu0 %v3914
    %3933 = vmatprep.subr.mxu0 0.0
    %3934 = vmatpush1.msra.mxu0 %v3915
    %3935 = vmatprep.subr.mxu0 0.0
    %3936 = vmatpush1.msra.mxu0 %v3916
    %3937 = vmatprep.subr.mxu0 0.0
    %3938 = vmatpush1.msra.mxu0 %v3917
    %3939 = vmatprep.subr.mxu0 0.0
    %3940 = vmatpush1.msra.mxu0 %v3918
    %3941 = vmatprep.subr.mxu0 0.0
    %3942 = vmatpush1.msra.mxu0 %v3919
    %3943 = vmatprep.subr.mxu0 0.0
    %3944 = vmatpush1.msra.mxu0 %v3920
    %3945 = vmatprep.subr.mxu0 0.0
    %3946 = vmatpush1.msra.mxu0 %v3921
    %3947 = vmatprep.subr.mxu0 0.0
    %3948 = vmatpush1.msra.mxu0 %v3922
    %3949 = vmatprep.subr.mxu0 0.0
    %3950 = vmatpush1.msra.mxu0 %v3923
    %3951 = vmatprep.subr.mxu0 0.0
    %3952 = vmatpush1.msra.mxu0 %v3924
    %3953 = vmatprep.subr.mxu0 0.0
    %3954 = vmatpush1.msra.mxu0 %v3925
    %3955 = vmatprep.subr.mxu0 0.0
    %3956 = vmatpush1.msra.mxu0 %v3926
    %3957 = vmatprep.subr.mxu0 0.0
    %3958 = vmatpush1.msra.mxu0 %v3927
    %3959 = vmatprep.subr.mxu0 0.0
    %3960 = vmatpush1.msra.mxu0 %v3928
    %3961 = vmatprep.subr.mxu0 0.0
    %3962 = vmatpush1.msra.mxu0 0.0
    %3963 = vmatprep.subr.mxu0 0.0
    %3964 = vmatpush1.msra.mxu0 0.0
    %3965 = vmatprep.subr.mxu0 0.0
    %3966 = vmatpush1.msra.mxu0 0.0
    %3967 = vmatprep.subr.mxu0 0.0
    %3968 = vmatpush1.msra.mxu0 0.0
    %3969 = vmatprep.subr.mxu0 0.0
    %3970 = vmatpush1.msra.mxu0 0.0
    %3971 = vmatprep.subr.mxu0 0.0
    %3972 = vmatpush1.msra.mxu0 0.0
    %3973 = vmatprep.subr.mxu0 0.0
    %3974 = vmatpush1.msra.mxu0 0.0
    %3975 = vmatprep.subr.mxu0 0.0
    %3976 = vmatpush1.msra.mxu0 0.0
    %3977 = vmatprep.subr.mxu0 0.0
    %3978 = vmatpush1.msra.mxu0 0.0
    %3979 = vmatprep.subr.mxu0 0.0
    %3980 = vmatpush1.msra.mxu0 0.0
    %3981 = vmatprep.subr.mxu0 0.0
    %3982 = vmatpush1.msra.mxu0 0.0
    %3983 = vmatprep.subr.mxu0 0.0
    %3984 = vmatpush1.msra.mxu0 0.0
    %3985 = vmatprep.subr.mxu0 0.0
    %3986 = vmatpush1.msra.mxu0 0.0
    %3987 = vmatprep.subr.mxu0 0.0
    %3988 = vmatpush1.msra.mxu0 0.0
    %3989 = vmatprep.subr.mxu0 0.0
    %3990 = vmatpush1.msra.mxu0 0.0
    %3991 = vmatprep.subr.mxu0 0.0
    %3992 = vmatpush1.msra.mxu0 0.0
    %3993 = vmatprep.mubr.f32.mxu0 0.0
    %3994 = vmatmul.mubr.f32.gmra.mrb[0].mxu0 %v3912
    %v3995 = vpop.f32.mrb[0].mxu0
    %v3996 = vadd.f32 0.0, %v3995
    %v3997 = vpop.f32.mrb[0].mxu0
    %3998 = vdwg.mxu0
    %v3999 = vadd.f32 %v3891, %v3996
    %s4000 = scalar_lea.vmem %s17, 24
    %4001 = vst [vmem:[%s4000] sm:$0xff] %v3999
    %s4002 = sld [smem:[#allocation4 + $0x2]]
    %p4003 = scmp.ne.s32.totalorder %s4002, 0
    // Predicated region
    $region106: #{seq2seq_forward.3} parent=1 // pred_check
      %p4004 = pneg %p4003
    $region107: #{seq2seq_forward.3} parent=1 // pred_check_branch
      %4006 = sbr.rel (%p4004) target = $region109
    $region108: #{seq2seq_forward.3} parent=1 // pred_region
      %s4007 = scalar_lea.vmem %s1, 24
      %v4008 = vld [vmem:[%s4007] sm:$0xff]
      %4009 = vset.pattern.permute.xlu0 0
      %4010 = vperm.xlu0 %4009, %v4008
      %v4011 = vpop.permute.xlu0 %4010
      %vm4012 = vcmp.eq.s32.totalorder %v376, %v4011
      %v4013 = vsel %vm4012, 1, 0
      %v4014 = vcvt.s32.f32 %v4013
      %4015 = vst [vmem:[#allocation3] sm:$0xff] %v4014
    $region109: #{seq2seq_forward.3} parent=1 // pred_fallthru
      _
    %p4016 = scmp.eq.s32.totalorder %s4002, 0
    // Predicated region
    $region110: #{seq2seq_forward.3} parent=1 // pred_check
      %p4017 = pneg %p4016
    $region111: #{seq2seq_forward.3} parent=1 // pred_check_branch
      %4019 = sbr.rel (%p4017) target = $region113
    $region112: #{seq2seq_forward.3} parent=1 // pred_region
      %v4020 = vsel %vm378, %v3999, -inf
      %4021 = vmax.xlane.f32.xlu0 %v4020
      %v4022 = vpop.xlane.xlu0 %4021
      %vm4023 = vcmp.eq.f32.partialorder %v4020, %v4022
      %v4024 = vsel %vm4023, %v377, 128.0
      %4025 = vmin.xlane.f32.xlu0 %v4024
      %v4026 = vpop.xlane.xlu0 %4025
      %vm4027 = vcmp.eq.f32.partialorder %v377, %v4026
      %v4028 = vsel %vm4027, 1, 0
      %v4029 = vcvt.s32.f32 %v4028
      %4030 = vst [vmem:[#allocation3] sm:$0xff] %v4029
    $region113: #{seq2seq_forward.3} parent=1 // pred_fallthru
      _
    %v4031 = vld [vmem:[#allocation3] sm:$0xff]
    %v4032 = vld [vmem:[#allocation7] sm:$0xff]
    %v4033 = vld [vmem:[#allocation7 + $0x8] sm:$0xff]
    %v4034 = vld [vmem:[#allocation7 + $0x10] sm:$0xff]
    %v4035 = vld [vmem:[#allocation7 + $0x18] sm:$0xff]
    %v4036 = vld [vmem:[#allocation7 + $0x20] sm:$0xff]
    %v4037 = vld [vmem:[#allocation7 + $0x28] sm:$0xff]
    %v4038 = vld [vmem:[#allocation7 + $0x30] sm:$0xff]
    %v4039 = vld [vmem:[#allocation7 + $0x38] sm:$0xff]
    %v4040 = vld [vmem:[#allocation7 + $0x40] sm:$0xff]
    %v4041 = vld [vmem:[#allocation7 + $0x48] sm:$0xff]
    %v4042 = vld [vmem:[#allocation7 + $0x50] sm:$0xff]
    %v4043 = vld [vmem:[#allocation7 + $0x58] sm:$0xff]
    %v4044 = vld [vmem:[#allocation7 + $0x60] sm:$0xff]
    %v4045 = vld [vmem:[#allocation7 + $0x68] sm:$0xff]
    %v4046 = vld [vmem:[#allocation7 + $0x70] sm:$0xff]
    %v4047 = vld [vmem:[#allocation7 + $0x78] sm:$0xff]
    %4048 = vmatprep.subr.mxu0 0.0
    %4049 = vmatpush1.msra.mxu0 %v4032
    %4050 = vmatprep.subr.mxu0 0.0
    %4051 = vmatpush1.msra.mxu0 %v4033
    %4052 = vmatprep.subr.mxu0 0.0
    %4053 = vmatpush1.msra.mxu0 %v4034
    %4054 = vmatprep.subr.mxu0 0.0
    %4055 = vmatpush1.msra.mxu0 %v4035
    %4056 = vmatprep.subr.mxu0 0.0
    %4057 = vmatpush1.msra.mxu0 %v4036
    %4058 = vmatprep.subr.mxu0 0.0
    %4059 = vmatpush1.msra.mxu0 %v4037
    %4060 = vmatprep.subr.mxu0 0.0
    %4061 = vmatpush1.msra.mxu0 %v4038
    %4062 = vmatprep.subr.mxu0 0.0
    %4063 = vmatpush1.msra.mxu0 %v4039
    %4064 = vmatprep.subr.mxu0 0.0
    %4065 = vmatpush1.msra.mxu0 %v4040
    %4066 = vmatprep.subr.mxu0 0.0
    %4067 = vmatpush1.msra.mxu0 %v4041
    %4068 = vmatprep.subr.mxu0 0.0
    %4069 = vmatpush1.msra.mxu0 %v4042
    %4070 = vmatprep.subr.mxu0 0.0
    %4071 = vmatpush1.msra.mxu0 %v4043
    %4072 = vmatprep.subr.mxu0 0.0
    %4073 = vmatpush1.msra.mxu0 %v4044
    %4074 = vmatprep.subr.mxu0 0.0
    %4075 = vmatpush1.msra.mxu0 %v4045
    %4076 = vmatprep.subr.mxu0 0.0
    %4077 = vmatpush1.msra.mxu0 %v4046
    %4078 = vmatprep.subr.mxu0 0.0
    %4079 = vmatpush1.msra.mxu0 %v4047
    %4080 = vmatprep.subr.mxu0 0.0
    %4081 = vmatpush1.msra.mxu0 0.0
    %4082 = vmatprep.subr.mxu0 0.0
    %4083 = vmatpush1.msra.mxu0 0.0
    %4084 = vmatprep.subr.mxu0 0.0
    %4085 = vmatpush1.msra.mxu0 0.0
    %4086 = vmatprep.subr.mxu0 0.0
    %4087 = vmatpush1.msra.mxu0 0.0
    %4088 = vmatprep.subr.mxu0 0.0
    %4089 = vmatpush1.msra.mxu0 0.0
    %4090 = vmatprep.subr.mxu0 0.0
    %4091 = vmatpush1.msra.mxu0 0.0
    %4092 = vmatprep.subr.mxu0 0.0
    %4093 = vmatpush1.msra.mxu0 0.0
    %4094 = vmatprep.subr.mxu0 0.0
    %4095 = vmatpush1.msra.mxu0 0.0
    %4096 = vmatprep.subr.mxu0 0.0
    %4097 = vmatpush1.msra.mxu0 0.0
    %4098 = vmatprep.subr.mxu0 0.0
    %4099 = vmatpush1.msra.mxu0 0.0
    %4100 = vmatprep.subr.mxu0 0.0
    %4101 = vmatpush1.msra.mxu0 0.0
    %4102 = vmatprep.subr.mxu0 0.0
    %4103 = vmatpush1.msra.mxu0 0.0
    %4104 = vmatprep.subr.mxu0 0.0
    %4105 = vmatpush1.msra.mxu0 0.0
    %4106 = vmatprep.subr.mxu0 0.0
    %4107 = vmatpush1.msra.mxu0 0.0
    %4108 = vmatprep.subr.mxu0 0.0
    %4109 = vmatpush1.msra.mxu0 0.0
    %4110 = vmatprep.subr.mxu0 0.0
    %4111 = vmatpush1.msra.mxu0 0.0
    %4112 = vmatprep.mubr.f32.mxu0 0.0
    %4113 = vmatmul.mubr.f32.gmra.mrb[0].mxu0 %v4031
    %v4114 = vpop.f32.mrb[0].mxu0
    %v4115 = vadd.f32 0.0, %v4114
    %v4116 = vpop.f32.mrb[0].mxu0
    %4117 = vdwg.mxu0
    %v4118 = vld [vmem:[%s10] sm:$0xff]
    %v4119 = vld [vmem:[%s10 + $0x8] sm:$0xff]
    %v4120 = vld [vmem:[%s10 + $0x10] sm:$0xff]
    %v4121 = vld [vmem:[%s10 + $0x18] sm:$0xff]
    %v4122 = vld [vmem:[%s10 + $0x20] sm:$0xff]
    %v4123 = vld [vmem:[%s10 + $0x28] sm:$0xff]
    %v4124 = vld [vmem:[%s10 + $0x30] sm:$0xff]
    %v4125 = vld [vmem:[%s10 + $0x38] sm:$0xff]
    %v4126 = vld [vmem:[%s10 + $0x40] sm:$0xff]
    %v4127 = vld [vmem:[%s10 + $0x48] sm:$0xff]
    %v4128 = vld [vmem:[%s10 + $0x50] sm:$0xff]
    %v4129 = vld [vmem:[%s10 + $0x58] sm:$0xff]
    %v4130 = vld [vmem:[%s10 + $0x60] sm:$0xff]
    %v4131 = vld [vmem:[%s10 + $0x68] sm:$0xff]
    %v4132 = vld [vmem:[%s10 + $0x70] sm:$0xff]
    %v4133 = vld [vmem:[%s10 + $0x78] sm:$0xff]
    %v4134 = vld [vmem:[%s10 + $0x80] sm:$0xff]
    %v4135 = vld [vmem:[%s10 + $0x88] sm:$0xff]
    %v4136 = vld [vmem:[%s10 + $0x90] sm:$0xff]
    %v4137 = vld [vmem:[%s10 + $0x98] sm:$0xff]
    %v4138 = vld [vmem:[%s10 + $0xa0] sm:$0xff]
    %v4139 = vld [vmem:[%s10 + $0xa8] sm:$0xff]
    %v4140 = vld [vmem:[%s10 + $0xb0] sm:$0xff]
    %v4141 = vld [vmem:[%s10 + $0xb8] sm:$0xff]
    %v4142 = vld [vmem:[%s10 + $0xc0] sm:$0xff]
    %v4143 = vld [vmem:[%s10 + $0xc8] sm:$0xff]
    %v4144 = vld [vmem:[%s10 + $0xd0] sm:$0xff]
    %v4145 = vld [vmem:[%s10 + $0xd8] sm:$0xff]
    %v4146 = vld [vmem:[%s10 + $0xe0] sm:$0xff]
    %v4147 = vld [vmem:[%s10 + $0xe8] sm:$0xff]
    %v4148 = vld [vmem:[%s10 + $0xf0] sm:$0xff]
    %v4149 = vld [vmem:[%s10 + $0xf8] sm:$0xff]
    %v4150 = vld [vmem:[%s10 + $0x100] sm:$0xff]
    %v4151 = vld [vmem:[%s10 + $0x108] sm:$0xff]
    %v4152 = vld [vmem:[%s10 + $0x110] sm:$0xff]
    %v4153 = vld [vmem:[%s10 + $0x118] sm:$0xff]
    %v4154 = vld [vmem:[%s10 + $0x120] sm:$0xff]
    %v4155 = vld [vmem:[%s10 + $0x128] sm:$0xff]
    %v4156 = vld [vmem:[%s10 + $0x130] sm:$0xff]
    %v4157 = vld [vmem:[%s10 + $0x138] sm:$0xff]
    %v4158 = vld [vmem:[%s10 + $0x140] sm:$0xff]
    %v4159 = vld [vmem:[%s10 + $0x148] sm:$0xff]
    %v4160 = vld [vmem:[%s10 + $0x150] sm:$0xff]
    %v4161 = vld [vmem:[%s10 + $0x158] sm:$0xff]
    %v4162 = vld [vmem:[%s10 + $0x160] sm:$0xff]
    %v4163 = vld [vmem:[%s10 + $0x168] sm:$0xff]
    %v4164 = vld [vmem:[%s10 + $0x170] sm:$0xff]
    %v4165 = vld [vmem:[%s10 + $0x178] sm:$0xff]
    %v4166 = vld [vmem:[%s10 + $0x180] sm:$0xff]
    %v4167 = vld [vmem:[%s10 + $0x188] sm:$0xff]
    %v4168 = vld [vmem:[%s10 + $0x190] sm:$0xff]
    %v4169 = vld [vmem:[%s10 + $0x198] sm:$0xff]
    %v4170 = vld [vmem:[%s10 + $0x1a0] sm:$0xff]
    %v4171 = vld [vmem:[%s10 + $0x1a8] sm:$0xff]
    %v4172 = vld [vmem:[%s10 + $0x1b0] sm:$0xff]
    %v4173 = vld [vmem:[%s10 + $0x1b8] sm:$0xff]
    %v4174 = vld [vmem:[%s10 + $0x1c0] sm:$0xff]
    %v4175 = vld [vmem:[%s10 + $0x1c8] sm:$0xff]
    %v4176 = vld [vmem:[%s10 + $0x1d0] sm:$0xff]
    %v4177 = vld [vmem:[%s10 + $0x1d8] sm:$0xff]
    %v4178 = vld [vmem:[%s10 + $0x1e0] sm:$0xff]
    %v4179 = vld [vmem:[%s10 + $0x1e8] sm:$0xff]
    %v4180 = vld [vmem:[%s10 + $0x1f0] sm:$0xff]
    %v4181 = vld [vmem:[%s10 + $0x1f8] sm:$0xff]
    %v4182 = vld [vmem:[%s11] sm:$0xf]
    %v4184 = vlaneseq
    %v4185 = vshrl.u32 %v4184, 7
    %v4186 = vsub.s32 0, %v4185
    %v4187 = vrot.slane %v4182, %v4186
    %v4188 = vlaneseq
    %v4189 = vshrl.u32 %v4188, 7
    %v4190 = vsub.s32 1, %v4189
    %v4191 = vrot.slane %v4182, %v4190
    %v4192 = vlaneseq
    %v4193 = vshrl.u32 %v4192, 7
    %v4194 = vsub.s32 2, %v4193
    %v4195 = vrot.slane %v4182, %v4194
    %v4196 = vlaneseq
    %v4197 = vshrl.u32 %v4196, 7
    %v4198 = vsub.s32 3, %v4197
    %v4199 = vrot.slane %v4182, %v4198
    %4204 = vmatprep.subr.mxu0 %v4119
    %4205 = vmatpush1.msra.mxu0 %v4118
    %4206 = vmatprep.subr.mxu0 %v4123
    %4207 = vmatpush1.msra.mxu0 %v4122
    %4208 = vmatprep.subr.mxu0 %v4127
    %4209 = vmatpush1.msra.mxu0 %v4126
    %4210 = vmatprep.subr.mxu0 %v4131
    %4211 = vmatpush1.msra.mxu0 %v4130
    %4212 = vmatprep.subr.mxu0 %v4135
    %4213 = vmatpush1.msra.mxu0 %v4134
    %4214 = vmatprep.subr.mxu0 %v4139
    %4215 = vmatpush1.msra.mxu0 %v4138
    %4216 = vmatprep.subr.mxu0 %v4143
    %4217 = vmatpush1.msra.mxu0 %v4142
    %4218 = vmatprep.subr.mxu0 %v4147
    %4219 = vmatpush1.msra.mxu0 %v4146
    %4220 = vmatprep.subr.mxu0 %v4151
    %4221 = vmatpush1.msra.mxu0 %v4150
    %4222 = vmatprep.subr.mxu0 %v4155
    %4223 = vmatpush1.msra.mxu0 %v4154
    %4224 = vmatprep.subr.mxu0 %v4159
    %4225 = vmatpush1.msra.mxu0 %v4158
    %4226 = vmatprep.subr.mxu0 %v4163
    %4227 = vmatpush1.msra.mxu0 %v4162
    %4228 = vmatprep.subr.mxu0 %v4167
    %4229 = vmatpush1.msra.mxu0 %v4166
    %4230 = vmatprep.subr.mxu0 %v4171
    %4231 = vmatpush1.msra.mxu0 %v4170
    %4232 = vmatprep.subr.mxu0 %v4175
    %4233 = vmatpush1.msra.mxu0 %v4174
    %4234 = vmatprep.subr.mxu0 %v4179
    %4235 = vmatpush1.msra.mxu0 %v4178
    %4236 = vmatprep.subr.mxu0 0.0
    %4237 = vmatpush1.msra.mxu0 0.0
    %4238 = vmatprep.subr.mxu0 0.0
    %4239 = vmatpush1.msra.mxu0 0.0
    %4240 = vmatprep.subr.mxu0 0.0
    %4241 = vmatpush1.msra.mxu0 0.0
    %4242 = vmatprep.subr.mxu0 0.0
    %4243 = vmatpush1.msra.mxu0 0.0
    %4244 = vmatprep.subr.mxu0 0.0
    %4245 = vmatpush1.msra.mxu0 0.0
    %4246 = vmatprep.subr.mxu0 0.0
    %4247 = vmatpush1.msra.mxu0 0.0
    %4248 = vmatprep.subr.mxu0 0.0
    %4249 = vmatpush1.msra.mxu0 0.0
    %4250 = vmatprep.subr.mxu0 0.0
    %4251 = vmatpush1.msra.mxu0 0.0
    %4252 = vmatprep.subr.mxu0 0.0
    %4253 = vmatpush1.msra.mxu0 0.0
    %4254 = vmatprep.subr.mxu0 0.0
    %4255 = vmatpush1.msra.mxu0 0.0
    %4256 = vmatprep.subr.mxu0 0.0
    %4257 = vmatpush1.msra.mxu0 0.0
    %4258 = vmatprep.subr.mxu0 0.0
    %4259 = vmatpush1.msra.mxu0 0.0
    %4260 = vmatprep.subr.mxu0 0.0
    %4261 = vmatpush1.msra.mxu0 0.0
    %4262 = vmatprep.subr.mxu0 0.0
    %4263 = vmatpush1.msra.mxu0 0.0
    %4264 = vmatprep.subr.mxu0 0.0
    %4265 = vmatpush1.msra.mxu0 0.0
    %4266 = vmatprep.subr.mxu0 0.0
    %4267 = vmatpush1.msra.mxu0 0.0
    %4268 = vmatprep.mubr.f32.mxu0 0.0
    %4269 = vmatmul.mubr.f32.gmra.mrb[0].mxu0 %v3912
    %v4270 = vpop.f32.mrb[0].mxu0
    %v4271 = vadd.f32 %v4187, %v4270
    %v4272 = vpop.f32.mrb[0].mxu0
    %v4273 = vadd.f32 %v4191, %v4272
    %4274 = vdwg.mxu0
    %4275 = vmatprep.subr.mxu0 %v4121
    %4276 = vmatpush1.msra.mxu0 %v4120
    %4277 = vmatprep.subr.mxu0 %v4125
    %4278 = vmatpush1.msra.mxu0 %v4124
    %4279 = vmatprep.subr.mxu0 %v4129
    %4280 = vmatpush1.msra.mxu0 %v4128
    %4281 = vmatprep.subr.mxu0 %v4133
    %4282 = vmatpush1.msra.mxu0 %v4132
    %4283 = vmatprep.subr.mxu0 %v4137
    %4284 = vmatpush1.msra.mxu0 %v4136
    %4285 = vmatprep.subr.mxu0 %v4141
    %4286 = vmatpush1.msra.mxu0 %v4140
    %4287 = vmatprep.subr.mxu0 %v4145
    %4288 = vmatpush1.msra.mxu0 %v4144
    %4289 = vmatprep.subr.mxu0 %v4149
    %4290 = vmatpush1.msra.mxu0 %v4148
    %4291 = vmatprep.subr.mxu0 %v4153
    %4292 = vmatpush1.msra.mxu0 %v4152
    %4293 = vmatprep.subr.mxu0 %v4157
    %4294 = vmatpush1.msra.mxu0 %v4156
    %4295 = vmatprep.subr.mxu0 %v4161
    %4296 = vmatpush1.msra.mxu0 %v4160
    %4297 = vmatprep.subr.mxu0 %v4165
    %4298 = vmatpush1.msra.mxu0 %v4164
    %4299 = vmatprep.subr.mxu0 %v4169
    %4300 = vmatpush1.msra.mxu0 %v4168
    %4301 = vmatprep.subr.mxu0 %v4173
    %4302 = vmatpush1.msra.mxu0 %v4172
    %4303 = vmatprep.subr.mxu0 %v4177
    %4304 = vmatpush1.msra.mxu0 %v4176
    %4305 = vmatprep.subr.mxu0 %v4181
    %4306 = vmatpush1.msra.mxu0 %v4180
    %4307 = vmatprep.subr.mxu0 0.0
    %4308 = vmatpush1.msra.mxu0 0.0
    %4309 = vmatprep.subr.mxu0 0.0
    %4310 = vmatpush1.msra.mxu0 0.0
    %4311 = vmatprep.subr.mxu0 0.0
    %4312 = vmatpush1.msra.mxu0 0.0
    %4313 = vmatprep.subr.mxu0 0.0
    %4314 = vmatpush1.msra.mxu0 0.0
    %4315 = vmatprep.subr.mxu0 0.0
    %4316 = vmatpush1.msra.mxu0 0.0
    %4317 = vmatprep.subr.mxu0 0.0
    %4318 = vmatpush1.msra.mxu0 0.0
    %4319 = vmatprep.subr.mxu0 0.0
    %4320 = vmatpush1.msra.mxu0 0.0
    %4321 = vmatprep.subr.mxu0 0.0
    %4322 = vmatpush1.msra.mxu0 0.0
    %4323 = vmatprep.subr.mxu0 0.0
    %4324 = vmatpush1.msra.mxu0 0.0
    %4325 = vmatprep.subr.mxu0 0.0
    %4326 = vmatpush1.msra.mxu0 0.0
    %4327 = vmatprep.subr.mxu0 0.0
    %4328 = vmatpush1.msra.mxu0 0.0
    %4329 = vmatprep.subr.mxu0 0.0
    %4330 = vmatpush1.msra.mxu0 0.0
    %4331 = vmatprep.subr.mxu0 0.0
    %4332 = vmatpush1.msra.mxu0 0.0
    %4333 = vmatprep.subr.mxu0 0.0
    %4334 = vmatpush1.msra.mxu0 0.0
    %4335 = vmatprep.subr.mxu0 0.0
    %4336 = vmatpush1.msra.mxu0 0.0
    %4337 = vmatprep.subr.mxu0 0.0
    %4338 = vmatpush1.msra.mxu0 0.0
    %4339 = vmatprep.mubr.f32.mxu0 0.0
    %4340 = vmatmul.mubr.f32.gmra.mrb[0].mxu0 %v3912
    %v4341 = vpop.f32.mrb[0].mxu0
    %v4342 = vadd.f32 %v4195, %v4341
    %v4343 = vpop.f32.mrb[0].mxu0
    %v4344 = vadd.f32 %v4199, %v4343
    %4345 = vdwg.mxu0
    %v4346 = vld [vmem:[#allocation2] sm:$0xff]
    %v4347 = vld [vmem:[#allocation2 + $0x8] sm:$0xff]
    %v4348 = vld [vmem:[#allocation2 + $0x10] sm:$0xff]
    %v4349 = vld [vmem:[#allocation2 + $0x18] sm:$0xff]
    %v4350 = vld [vmem:[#allocation2 + $0x20] sm:$0xff]
    %v4351 = vld [vmem:[#allocation2 + $0x28] sm:$0xff]
    %v4352 = vadd.f32 %v4346, %v4271
    %v4353 = vadd.f32 %v4347, %v4271
    %v4354 = vadd.f32 %v4348, %v4271
    %v4355 = vadd.f32 %v4349, %v4271
    %v4356 = vadd.f32 %v4350, %v4271
    %v4357 = vadd.f32 %v4351, %v4271
    %v4358 = vtanh.pop %v4352
    %v4359 = vtanh.pop %v4353
    %v4360 = vtanh.pop %v4354
    %v4361 = vtanh.pop %v4355
    %v4362 = vtanh.pop %v4356
    %v4363 = vtanh.pop %v4357
    %v4364 = vld [vmem:[%s9] sm:$0x1]
    %v4366 = vlaneseq
    %v4367 = vshrl.u32 %v4366, 7
    %v4368 = vsub.s32 0, %v4367
    %v4369 = vrot.slane %v4364, %v4368
    %v4371 = vmul.f32 %v4358, %v4369
    %v4372 = vmul.f32 %v4359, %v4369
    %v4373 = vmul.f32 %v4360, %v4369
    %v4374 = vmul.f32 %v4361, %v4369
    %v4375 = vmul.f32 %v4362, %v4369
    %v4376 = vmul.f32 %v4363, %v4369
    %4377 = vadd.xlane.f32.xlu0 %v4371
    %v4378 = vpop.xlane.xlu0 %4377
    %4379 = vadd.xlane.f32.xlu0 %v4372
    %v4380 = vpop.xlane.xlu0 %4379
    %4381 = vadd.xlane.f32.xlu0 %v4373
    %v4382 = vpop.xlane.xlu0 %4381
    %4383 = vadd.xlane.f32.xlu0 %v4374
    %v4384 = vpop.xlane.xlu0 %4383
    %4385 = vadd.xlane.f32.xlu0 %v4375
    %v4386 = vpop.xlane.xlu0 %4385
    %4387 = vadd.xlane.f32.xlu0 %v4376
    %v4388 = vpop.xlane.xlu0 %4387
    %v4389 = vmax.f32 %v4378, %v4386
    %v4390 = vmax.f32 %v4380, %v4388
    %v4391 = vmax.f32 %v4389, %v4390
    %v4392 = vmax.f32 %v4382, %v4384
    %v4393 = vmax.f32 %v4391, %v4392
    %v4394 = vsub.f32 %v4378, %v4393
    %v4395 = vsub.f32 %v4380, %v4393
    %v4396 = vsub.f32 %v4382, %v4393
    %v4397 = vsub.f32 %v4384, %v4393
    %v4398 = vsub.f32 %v4386, %v4393
    %v4399 = vsub.f32 %v4388, %v4393
    %v4400 = vmul.f32 %v4394, 1.442695
    %v4401 = vpow.pop %v4400
    %v4402 = vmul.f32 %v4395, 1.442695
    %v4403 = vpow.pop %v4402
    %v4404 = vmul.f32 %v4396, 1.442695
    %v4405 = vpow.pop %v4404
    %v4406 = vmul.f32 %v4397, 1.442695
    %v4407 = vpow.pop %v4406
    %v4408 = vmul.f32 %v4398, 1.442695
    %v4409 = vpow.pop %v4408
    %v4410 = vmul.f32 %v4399, 1.442695
    %v4411 = vpow.pop %v4410
    %v4412 = vadd.f32 %v4401, %v4403
    %v4413 = vadd.f32 %v4412, %v4405
    %v4414 = vadd.f32 %v4413, %v4407
    %v4415 = vadd.f32 %v4414, %v4409
    %v4416 = vadd.f32 %v4415, %v4411
    %v4417 = vrcp.pop %v4416
    %v4418 = vmul.f32 %v4401, %v4417
    %v4419 = vmul.f32 %v4403, %v4417
    %v4420 = vmul.f32 %v4405, %v4417
    %v4421 = vmul.f32 %v4407, %v4417
    %v4422 = vmul.f32 %v4409, %v4417
    %v4423 = vmul.f32 %v4411, %v4417
    %v4424 = vld [vmem:[%s2] sm:$0xff]
    %v4425 = vld [vmem:[%s2 + $0x8] sm:$0xff]
    %v4426 = vld [vmem:[%s2 + $0x10] sm:$0xff]
    %v4427 = vld [vmem:[%s2 + $0x18] sm:$0xff]
    %v4428 = vld [vmem:[%s2 + $0x20] sm:$0xff]
    %v4429 = vld [vmem:[%s2 + $0x28] sm:$0xff]
    %v4430 = vmul.f32 %v4418, %v4424
    %v4431 = vmul.f32 %v4419, %v4425
    %v4432 = vmul.f32 %v4420, %v4426
    %v4433 = vmul.f32 %v4421, %v4427
    %v4434 = vmul.f32 %v4422, %v4428
    %v4435 = vmul.f32 %v4423, %v4429
    %v4436 = vadd.f32 %v4430, %v4431
    %v4437 = vadd.f32 %v4436, %v4432
    %v4438 = vadd.f32 %v4437, %v4433
    %v4439 = vadd.f32 %v4438, %v4434
    %v4440 = vadd.f32 %v4439, %v4435
    %v4441 = vld [vmem:[%s3] sm:$0xff]
    %v4442 = vld [vmem:[%s3 + $0x8] sm:$0xff]
    %v4443 = vld [vmem:[%s3 + $0x10] sm:$0xff]
    %v4444 = vld [vmem:[%s3 + $0x18] sm:$0xff]
    %v4445 = vld [vmem:[%s3 + $0x20] sm:$0xff]
    %v4446 = vld [vmem:[%s3 + $0x28] sm:$0xff]
    %v4447 = vmul.f32 %v4418, %v4441
    %v4448 = vmul.f32 %v4419, %v4442
    %v4449 = vmul.f32 %v4420, %v4443
    %v4450 = vmul.f32 %v4421, %v4444
    %v4451 = vmul.f32 %v4422, %v4445
    %v4452 = vmul.f32 %v4423, %v4446
    %v4453 = vadd.f32 %v4447, %v4448
    %v4454 = vadd.f32 %v4453, %v4449
    %v4455 = vadd.f32 %v4454, %v4450
    %v4456 = vadd.f32 %v4455, %v4451
    %v4457 = vadd.f32 %v4456, %v4452
    %v4458 = vld [vmem:[%s12] sm:$0xff]
    %v4459 = vld [vmem:[%s12 + $0x8] sm:$0xff]
    %v4460 = vld [vmem:[%s12 + $0x10] sm:$0xff]
    %v4461 = vld [vmem:[%s12 + $0x18] sm:$0xff]
    %v4462 = vld [vmem:[%s12 + $0x20] sm:$0xff]
    %v4463 = vld [vmem:[%s12 + $0x28] sm:$0xff]
    %v4464 = vld [vmem:[%s12 + $0x30] sm:$0xff]
    %v4465 = vld [vmem:[%s12 + $0x38] sm:$0xff]
    %v4466 = vld [vmem:[%s12 + $0x40] sm:$0xff]
    %v4467 = vld [vmem:[%s12 + $0x48] sm:$0xff]
    %v4468 = vld [vmem:[%s12 + $0x50] sm:$0xff]
    %v4469 = vld [vmem:[%s12 + $0x58] sm:$0xff]
    %v4470 = vld [vmem:[%s12 + $0x60] sm:$0xff]
    %v4471 = vld [vmem:[%s12 + $0x68] sm:$0xff]
    %v4472 = vld [vmem:[%s12 + $0x70] sm:$0xff]
    %v4473 = vld [vmem:[%s12 + $0x78] sm:$0xff]
    %v4474 = vld [vmem:[%s12 + $0x80] sm:$0xff]
    %v4475 = vld [vmem:[%s12 + $0x88] sm:$0xff]
    %v4476 = vld [vmem:[%s12 + $0x90] sm:$0xff]
    %v4477 = vld [vmem:[%s12 + $0x98] sm:$0xff]
    %v4478 = vld [vmem:[%s12 + $0xa0] sm:$0xff]
    %v4479 = vld [vmem:[%s12 + $0xa8] sm:$0xff]
    %v4480 = vld [vmem:[%s12 + $0xb0] sm:$0xff]
    %v4481 = vld [vmem:[%s12 + $0xb8] sm:$0xff]
    %v4482 = vld [vmem:[%s12 + $0xc0] sm:$0xff]
    %v4483 = vld [vmem:[%s12 + $0xc8] sm:$0xff]
    %v4484 = vld [vmem:[%s12 + $0xd0] sm:$0xff]
    %v4485 = vld [vmem:[%s12 + $0xd8] sm:$0xff]
    %v4486 = vld [vmem:[%s12 + $0xe0] sm:$0xff]
    %v4487 = vld [vmem:[%s12 + $0xe8] sm:$0xff]
    %v4488 = vld [vmem:[%s12 + $0xf0] sm:$0xff]
    %v4489 = vld [vmem:[%s12 + $0xf8] sm:$0xff]
    %v4490 = vld [vmem:[%s12 + $0x100] sm:$0xff]
    %v4491 = vld [vmem:[%s12 + $0x108] sm:$0xff]
    %v4492 = vld [vmem:[%s12 + $0x110] sm:$0xff]
    %v4493 = vld [vmem:[%s12 + $0x118] sm:$0xff]
    %v4494 = vld [vmem:[%s12 + $0x120] sm:$0xff]
    %v4495 = vld [vmem:[%s12 + $0x128] sm:$0xff]
    %v4496 = vld [vmem:[%s12 + $0x130] sm:$0xff]
    %v4497 = vld [vmem:[%s12 + $0x138] sm:$0xff]
    %v4498 = vld [vmem:[%s12 + $0x140] sm:$0xff]
    %v4499 = vld [vmem:[%s12 + $0x148] sm:$0xff]
    %v4500 = vld [vmem:[%s12 + $0x150] sm:$0xff]
    %v4501 = vld [vmem:[%s12 + $0x158] sm:$0xff]
    %v4502 = vld [vmem:[%s12 + $0x160] sm:$0xff]
    %v4503 = vld [vmem:[%s12 + $0x168] sm:$0xff]
    %v4504 = vld [vmem:[%s12 + $0x170] sm:$0xff]
    %v4505 = vld [vmem:[%s12 + $0x178] sm:$0xff]
    %v4506 = vld [vmem:[%s12 + $0x180] sm:$0xff]
    %v4507 = vld [vmem:[%s12 + $0x188] sm:$0xff]
    %v4508 = vld [vmem:[%s12 + $0x190] sm:$0xff]
    %v4509 = vld [vmem:[%s12 + $0x198] sm:$0xff]
    %v4510 = vld [vmem:[%s12 + $0x1a0] sm:$0xff]
    %v4511 = vld [vmem:[%s12 + $0x1a8] sm:$0xff]
    %v4512 = vld [vmem:[%s12 + $0x1b0] sm:$0xff]
    %v4513 = vld [vmem:[%s12 + $0x1b8] sm:$0xff]
    %v4514 = vld [vmem:[%s12 + $0x1c0] sm:$0xff]
    %v4515 = vld [vmem:[%s12 + $0x1c8] sm:$0xff]
    %v4516 = vld [vmem:[%s12 + $0x1d0] sm:$0xff]
    %v4517 = vld [vmem:[%s12 + $0x1d8] sm:$0xff]
    %v4518 = vld [vmem:[%s12 + $0x1e0] sm:$0xff]
    %v4519 = vld [vmem:[%s12 + $0x1e8] sm:$0xff]
    %v4520 = vld [vmem:[%s12 + $0x1f0] sm:$0xff]
    %v4521 = vld [vmem:[%s12 + $0x1f8] sm:$0xff]
    %v4522 = vld [vmem:[%s13] sm:$0xff]
    %v4523 = vld [vmem:[%s13 + $0x8] sm:$0xff]
    %v4524 = vld [vmem:[%s13 + $0x10] sm:$0xff]
    %v4525 = vld [vmem:[%s13 + $0x18] sm:$0xff]
    %v4526 = vld [vmem:[%s13 + $0x20] sm:$0xff]
    %v4527 = vld [vmem:[%s13 + $0x28] sm:$0xff]
    %v4528 = vld [vmem:[%s13 + $0x30] sm:$0xff]
    %v4529 = vld [vmem:[%s13 + $0x38] sm:$0xff]
    %v4530 = vld [vmem:[%s13 + $0x40] sm:$0xff]
    %v4531 = vld [vmem:[%s13 + $0x48] sm:$0xff]
    %v4532 = vld [vmem:[%s13 + $0x50] sm:$0xff]
    %v4533 = vld [vmem:[%s13 + $0x58] sm:$0xff]
    %v4534 = vld [vmem:[%s13 + $0x60] sm:$0xff]
    %v4535 = vld [vmem:[%s13 + $0x68] sm:$0xff]
    %v4536 = vld [vmem:[%s13 + $0x70] sm:$0xff]
    %v4537 = vld [vmem:[%s13 + $0x78] sm:$0xff]
    %v4538 = vld [vmem:[%s13 + $0x80] sm:$0xff]
    %v4539 = vld [vmem:[%s13 + $0x88] sm:$0xff]
    %v4540 = vld [vmem:[%s13 + $0x90] sm:$0xff]
    %v4541 = vld [vmem:[%s13 + $0x98] sm:$0xff]
    %v4542 = vld [vmem:[%s13 + $0xa0] sm:$0xff]
    %v4543 = vld [vmem:[%s13 + $0xa8] sm:$0xff]
    %v4544 = vld [vmem:[%s13 + $0xb0] sm:$0xff]
    %v4545 = vld [vmem:[%s13 + $0xb8] sm:$0xff]
    %v4546 = vld [vmem:[%s13 + $0xc0] sm:$0xff]
    %v4547 = vld [vmem:[%s13 + $0xc8] sm:$0xff]
    %v4548 = vld [vmem:[%s13 + $0xd0] sm:$0xff]
    %v4549 = vld [vmem:[%s13 + $0xd8] sm:$0xff]
    %v4550 = vld [vmem:[%s13 + $0xe0] sm:$0xff]
    %v4551 = vld [vmem:[%s13 + $0xe8] sm:$0xff]
    %v4552 = vld [vmem:[%s13 + $0xf0] sm:$0xff]
    %v4553 = vld [vmem:[%s13 + $0xf8] sm:$0xff]
    %v4554 = vld [vmem:[%s13 + $0x100] sm:$0xff]
    %v4555 = vld [vmem:[%s13 + $0x108] sm:$0xff]
    %v4556 = vld [vmem:[%s13 + $0x110] sm:$0xff]
    %v4557 = vld [vmem:[%s13 + $0x118] sm:$0xff]
    %v4558 = vld [vmem:[%s13 + $0x120] sm:$0xff]
    %v4559 = vld [vmem:[%s13 + $0x128] sm:$0xff]
    %v4560 = vld [vmem:[%s13 + $0x130] sm:$0xff]
    %v4561 = vld [vmem:[%s13 + $0x138] sm:$0xff]
    %v4562 = vld [vmem:[%s13 + $0x140] sm:$0xff]
    %v4563 = vld [vmem:[%s13 + $0x148] sm:$0xff]
    %v4564 = vld [vmem:[%s13 + $0x150] sm:$0xff]
    %v4565 = vld [vmem:[%s13 + $0x158] sm:$0xff]
    %v4566 = vld [vmem:[%s13 + $0x160] sm:$0xff]
    %v4567 = vld [vmem:[%s13 + $0x168] sm:$0xff]
    %v4568 = vld [vmem:[%s13 + $0x170] sm:$0xff]
    %v4569 = vld [vmem:[%s13 + $0x178] sm:$0xff]
    %v4570 = vld [vmem:[%s13 + $0x180] sm:$0xff]
    %v4571 = vld [vmem:[%s13 + $0x188] sm:$0xff]
    %v4572 = vld [vmem:[%s13 + $0x190] sm:$0xff]
    %v4573 = vld [vmem:[%s13 + $0x198] sm:$0xff]
    %v4574 = vld [vmem:[%s13 + $0x1a0] sm:$0xff]
    %v4575 = vld [vmem:[%s13 + $0x1a8] sm:$0xff]
    %v4576 = vld [vmem:[%s13 + $0x1b0] sm:$0xff]
    %v4577 = vld [vmem:[%s13 + $0x1b8] sm:$0xff]
    %v4578 = vld [vmem:[%s13 + $0x1c0] sm:$0xff]
    %v4579 = vld [vmem:[%s13 + $0x1c8] sm:$0xff]
    %v4580 = vld [vmem:[%s13 + $0x1d0] sm:$0xff]
    %v4581 = vld [vmem:[%s13 + $0x1d8] sm:$0xff]
    %v4582 = vld [vmem:[%s13 + $0x1e0] sm:$0xff]
    %v4583 = vld [vmem:[%s13 + $0x1e8] sm:$0xff]
    %v4584 = vld [vmem:[%s13 + $0x1f0] sm:$0xff]
    %v4585 = vld [vmem:[%s13 + $0x1f8] sm:$0xff]
    %4586 = vmatprep.subr.mxu0 %v4523
    %4587 = vmatpush1.msra.mxu0 %v4522
    %4588 = vmatprep.subr.mxu0 %v4527
    %4589 = vmatpush1.msra.mxu0 %v4526
    %4590 = vmatprep.subr.mxu0 %v4531
    %4591 = vmatpush1.msra.mxu0 %v4530
    %4592 = vmatprep.subr.mxu0 %v4535
    %4593 = vmatpush1.msra.mxu0 %v4534
    %4594 = vmatprep.subr.mxu0 %v4539
    %4595 = vmatpush1.msra.mxu0 %v4538
    %4596 = vmatprep.subr.mxu0 %v4543
    %4597 = vmatpush1.msra.mxu0 %v4542
    %4598 = vmatprep.subr.mxu0 %v4547
    %4599 = vmatpush1.msra.mxu0 %v4546
    %4600 = vmatprep.subr.mxu0 %v4551
    %4601 = vmatpush1.msra.mxu0 %v4550
    %4602 = vmatprep.subr.mxu0 %v4555
    %4603 = vmatpush1.msra.mxu0 %v4554
    %4604 = vmatprep.subr.mxu0 %v4559
    %4605 = vmatpush1.msra.mxu0 %v4558
    %4606 = vmatprep.subr.mxu0 %v4563
    %4607 = vmatpush1.msra.mxu0 %v4562
    %4608 = vmatprep.subr.mxu0 %v4567
    %4609 = vmatpush1.msra.mxu0 %v4566
    %4610 = vmatprep.subr.mxu0 %v4571
    %4611 = vmatpush1.msra.mxu0 %v4570
    %4612 = vmatprep.subr.mxu0 %v4575
    %4613 = vmatpush1.msra.mxu0 %v4574
    %4614 = vmatprep.subr.mxu0 %v4579
    %4615 = vmatpush1.msra.mxu0 %v4578
    %4616 = vmatprep.subr.mxu0 %v4583
    %4617 = vmatpush1.msra.mxu0 %v4582
    %4618 = vmatprep.subr.mxu0 0.0
    %4619 = vmatpush1.msra.mxu0 0.0
    %4620 = vmatprep.subr.mxu0 0.0
    %4621 = vmatpush1.msra.mxu0 0.0
    %4622 = vmatprep.subr.mxu0 0.0
    %4623 = vmatpush1.msra.mxu0 0.0
    %4624 = vmatprep.subr.mxu0 0.0
    %4625 = vmatpush1.msra.mxu0 0.0
    %4626 = vmatprep.subr.mxu0 0.0
    %4627 = vmatpush1.msra.mxu0 0.0
    %4628 = vmatprep.subr.mxu0 0.0
    %4629 = vmatpush1.msra.mxu0 0.0
    %4630 = vmatprep.subr.mxu0 0.0
    %4631 = vmatpush1.msra.mxu0 0.0
    %4632 = vmatprep.subr.mxu0 0.0
    %4633 = vmatpush1.msra.mxu0 0.0
    %4634 = vmatprep.subr.mxu0 0.0
    %4635 = vmatpush1.msra.mxu0 0.0
    %4636 = vmatprep.subr.mxu0 0.0
    %4637 = vmatpush1.msra.mxu0 0.0
    %4638 = vmatprep.subr.mxu0 0.0
    %4639 = vmatpush1.msra.mxu0 0.0
    %4640 = vmatprep.subr.mxu0 0.0
    %4641 = vmatpush1.msra.mxu0 0.0
    %4642 = vmatprep.subr.mxu0 0.0
    %4643 = vmatpush1.msra.mxu0 0.0
    %4644 = vmatprep.subr.mxu0 0.0
    %4645 = vmatpush1.msra.mxu0 0.0
    %4646 = vmatprep.subr.mxu0 0.0
    %4647 = vmatpush1.msra.mxu0 0.0
    %4648 = vmatprep.subr.mxu0 0.0
    %4649 = vmatpush1.msra.mxu0 0.0
    %4650 = vmatprep.mubr.f32.mxu0 0.0
    %4651 = vmatmul.mubr.f32.gmra.mrb[0].mxu0 %v4440
    %v4652 = vpop.f32.mrb[0].mxu0
    %v4653 = vadd.f32 0.0, %v4652
    %v4654 = vpop.f32.mrb[0].mxu0
    %v4655 = vadd.f32 0.0, %v4654
    %4656 = vdwg.mxu0
    %4657 = vmatprep.subr.mxu0 %v4525
    %4658 = vmatpush1.msra.mxu0 %v4524
    %4659 = vmatprep.subr.mxu0 %v4529
    %4660 = vmatpush1.msra.mxu0 %v4528
    %4661 = vmatprep.subr.mxu0 %v4533
    %4662 = vmatpush1.msra.mxu0 %v4532
    %4663 = vmatprep.subr.mxu0 %v4537
    %4664 = vmatpush1.msra.mxu0 %v4536
    %4665 = vmatprep.subr.mxu0 %v4541
    %4666 = vmatpush1.msra.mxu0 %v4540
    %4667 = vmatprep.subr.mxu0 %v4545
    %4668 = vmatpush1.msra.mxu0 %v4544
    %4669 = vmatprep.subr.mxu0 %v4549
    %4670 = vmatpush1.msra.mxu0 %v4548
    %4671 = vmatprep.subr.mxu0 %v4553
    %4672 = vmatpush1.msra.mxu0 %v4552
    %4673 = vmatprep.subr.mxu0 %v4557
    %4674 = vmatpush1.msra.mxu0 %v4556
    %4675 = vmatprep.subr.mxu0 %v4561
    %4676 = vmatpush1.msra.mxu0 %v4560
    %4677 = vmatprep.subr.mxu0 %v4565
    %4678 = vmatpush1.msra.mxu0 %v4564
    %4679 = vmatprep.subr.mxu0 %v4569
    %4680 = vmatpush1.msra.mxu0 %v4568
    %4681 = vmatprep.subr.mxu0 %v4573
    %4682 = vmatpush1.msra.mxu0 %v4572
    %4683 = vmatprep.subr.mxu0 %v4577
    %4684 = vmatpush1.msra.mxu0 %v4576
    %4685 = vmatprep.subr.mxu0 %v4581
    %4686 = vmatpush1.msra.mxu0 %v4580
    %4687 = vmatprep.subr.mxu0 %v4585
    %4688 = vmatpush1.msra.mxu0 %v4584
    %4689 = vmatprep.subr.mxu0 0.0
    %4690 = vmatpush1.msra.mxu0 0.0
    %4691 = vmatprep.subr.mxu0 0.0
    %4692 = vmatpush1.msra.mxu0 0.0
    %4693 = vmatprep.subr.mxu0 0.0
    %4694 = vmatpush1.msra.mxu0 0.0
    %4695 = vmatprep.subr.mxu0 0.0
    %4696 = vmatpush1.msra.mxu0 0.0
    %4697 = vmatprep.subr.mxu0 0.0
    %4698 = vmatpush1.msra.mxu0 0.0
    %4699 = vmatprep.subr.mxu0 0.0
    %4700 = vmatpush1.msra.mxu0 0.0
    %4701 = vmatprep.subr.mxu0 0.0
    %4702 = vmatpush1.msra.mxu0 0.0
    %4703 = vmatprep.subr.mxu0 0.0
    %4704 = vmatpush1.msra.mxu0 0.0
    %4705 = vmatprep.subr.mxu0 0.0
    %4706 = vmatpush1.msra.mxu0 0.0
    %4707 = vmatprep.subr.mxu0 0.0
    %4708 = vmatpush1.msra.mxu0 0.0
    %4709 = vmatprep.subr.mxu0 0.0
    %4710 = vmatpush1.msra.mxu0 0.0
    %4711 = vmatprep.subr.mxu0 0.0
    %4712 = vmatpush1.msra.mxu0 0.0
    %4713 = vmatprep.subr.mxu0 0.0
    %4714 = vmatpush1.msra.mxu0 0.0
    %4715 = vmatprep.subr.mxu0 0.0
    %4716 = vmatpush1.msra.mxu0 0.0
    %4717 = vmatprep.subr.mxu0 0.0
    %4718 = vmatpush1.msra.mxu0 0.0
    %4719 = vmatprep.subr.mxu0 0.0
    %4720 = vmatpush1.msra.mxu0 0.0
    %4721 = vmatprep.mubr.f32.mxu0 0.0
    %4722 = vmatmul.mubr.f32.gmra.mrb[0].mxu0 %v4440
    %v4723 = vpop.f32.mrb[0].mxu0
    %v4724 = vadd.f32 0.0, %v4723
    %v4725 = vpop.f32.mrb[0].mxu0
    %v4726 = vadd.f32 0.0, %v4725
    %4727 = vdwg.mxu0
    %4728 = vmatprep.subr.mxu0 %v4459
    %4729 = vmatpush1.msra.mxu0 %v4458
    %4730 = vmatprep.subr.mxu0 %v4463
    %4731 = vmatpush1.msra.mxu0 %v4462
    %4732 = vmatprep.subr.mxu0 %v4467
    %4733 = vmatpush1.msra.mxu0 %v4466
    %4734 = vmatprep.subr.mxu0 %v4471
    %4735 = vmatpush1.msra.mxu0 %v4470
    %4736 = vmatprep.subr.mxu0 %v4475
    %4737 = vmatpush1.msra.mxu0 %v4474
    %4738 = vmatprep.subr.mxu0 %v4479
    %4739 = vmatpush1.msra.mxu0 %v4478
    %4740 = vmatprep.subr.mxu0 %v4483
    %4741 = vmatpush1.msra.mxu0 %v4482
    %4742 = vmatprep.subr.mxu0 %v4487
    %4743 = vmatpush1.msra.mxu0 %v4486
    %4744 = vmatprep.subr.mxu0 %v4491
    %4745 = vmatpush1.msra.mxu0 %v4490
    %4746 = vmatprep.subr.mxu0 %v4495
    %4747 = vmatpush1.msra.mxu0 %v4494
    %4748 = vmatprep.subr.mxu0 %v4499
    %4749 = vmatpush1.msra.mxu0 %v4498
    %4750 = vmatprep.subr.mxu0 %v4503
    %4751 = vmatpush1.msra.mxu0 %v4502
    %4752 = vmatprep.subr.mxu0 %v4507
    %4753 = vmatpush1.msra.mxu0 %v4506
    %4754 = vmatprep.subr.mxu0 %v4511
    %4755 = vmatpush1.msra.mxu0 %v4510
    %4756 = vmatprep.subr.mxu0 %v4515
    %4757 = vmatpush1.msra.mxu0 %v4514
    %4758 = vmatprep.subr.mxu0 %v4519
    %4759 = vmatpush1.msra.mxu0 %v4518
    %4760 = vmatprep.subr.mxu0 0.0
    %4761 = vmatpush1.msra.mxu0 0.0
    %4762 = vmatprep.subr.mxu0 0.0
    %4763 = vmatpush1.msra.mxu0 0.0
    %4764 = vmatprep.subr.mxu0 0.0
    %4765 = vmatpush1.msra.mxu0 0.0
    %4766 = vmatprep.subr.mxu0 0.0
    %4767 = vmatpush1.msra.mxu0 0.0
    %4768 = vmatprep.subr.mxu0 0.0
    %4769 = vmatpush1.msra.mxu0 0.0
    %4770 = vmatprep.subr.mxu0 0.0
    %4771 = vmatpush1.msra.mxu0 0.0
    %4772 = vmatprep.subr.mxu0 0.0
    %4773 = vmatpush1.msra.mxu0 0.0
    %4774 = vmatprep.subr.mxu0 0.0
    %4775 = vmatpush1.msra.mxu0 0.0
    %4776 = vmatprep.subr.mxu0 0.0
    %4777 = vmatpush1.msra.mxu0 0.0
    %4778 = vmatprep.subr.mxu0 0.0
    %4779 = vmatpush1.msra.mxu0 0.0
    %4780 = vmatprep.subr.mxu0 0.0
    %4781 = vmatpush1.msra.mxu0 0.0
    %4782 = vmatprep.subr.mxu0 0.0
    %4783 = vmatpush1.msra.mxu0 0.0
    %4784 = vmatprep.subr.mxu0 0.0
    %4785 = vmatpush1.msra.mxu0 0.0
    %4786 = vmatprep.subr.mxu0 0.0
    %4787 = vmatpush1.msra.mxu0 0.0
    %4788 = vmatprep.subr.mxu0 0.0
    %4789 = vmatpush1.msra.mxu0 0.0
    %4790 = vmatprep.subr.mxu0 0.0
    %4791 = vmatpush1.msra.mxu0 0.0
    %4792 = vmatprep.mubr.f32.mxu0 0.0
    %4793 = vmatmul.mubr.f32.gmra.mrb[0].mxu0 %v4115
    %v4794 = vpop.f32.mrb[0].mxu0
    %v4795 = vadd.f32 %v4653, %v4794
    %v4796 = vpop.f32.mrb[0].mxu0
    %v4797 = vadd.f32 %v4655, %v4796
    %4798 = vdwg.mxu0
    %4799 = vmatprep.subr.mxu0 %v4461
    %4800 = vmatpush1.msra.mxu0 %v4460
    %4801 = vmatprep.subr.mxu0 %v4465
    %4802 = vmatpush1.msra.mxu0 %v4464
    %4803 = vmatprep.subr.mxu0 %v4469
    %4804 = vmatpush1.msra.mxu0 %v4468
    %4805 = vmatprep.subr.mxu0 %v4473
    %4806 = vmatpush1.msra.mxu0 %v4472
    %4807 = vmatprep.subr.mxu0 %v4477
    %4808 = vmatpush1.msra.mxu0 %v4476
    %4809 = vmatprep.subr.mxu0 %v4481
    %4810 = vmatpush1.msra.mxu0 %v4480
    %4811 = vmatprep.subr.mxu0 %v4485
    %4812 = vmatpush1.msra.mxu0 %v4484
    %4813 = vmatprep.subr.mxu0 %v4489
    %4814 = vmatpush1.msra.mxu0 %v4488
    %4815 = vmatprep.subr.mxu0 %v4493
    %4816 = vmatpush1.msra.mxu0 %v4492
    %4817 = vmatprep.subr.mxu0 %v4497
    %4818 = vmatpush1.msra.mxu0 %v4496
    %4819 = vmatprep.subr.mxu0 %v4501
    %4820 = vmatpush1.msra.mxu0 %v4500
    %4821 = vmatprep.subr.mxu0 %v4505
    %4822 = vmatpush1.msra.mxu0 %v4504
    %4823 = vmatprep.subr.mxu0 %v4509
    %4824 = vmatpush1.msra.mxu0 %v4508
    %4825 = vmatprep.subr.mxu0 %v4513
    %4826 = vmatpush1.msra.mxu0 %v4512
    %4827 = vmatprep.subr.mxu0 %v4517
    %4828 = vmatpush1.msra.mxu0 %v4516
    %4829 = vmatprep.subr.mxu0 %v4521
    %4830 = vmatpush1.msra.mxu0 %v4520
    %4831 = vmatprep.subr.mxu0 0.0
    %4832 = vmatpush1.msra.mxu0 0.0
    %4833 = vmatprep.subr.mxu0 0.0
    %4834 = vmatpush1.msra.mxu0 0.0
    %4835 = vmatprep.subr.mxu0 0.0
    %4836 = vmatpush1.msra.mxu0 0.0
    %4837 = vmatprep.subr.mxu0 0.0
    %4838 = vmatpush1.msra.mxu0 0.0
    %4839 = vmatprep.subr.mxu0 0.0
    %4840 = vmatpush1.msra.mxu0 0.0
    %4841 = vmatprep.subr.mxu0 0.0
    %4842 = vmatpush1.msra.mxu0 0.0
    %4843 = vmatprep.subr.mxu0 0.0
    %4844 = vmatpush1.msra.mxu0 0.0
    %4845 = vmatprep.subr.mxu0 0.0
    %4846 = vmatpush1.msra.mxu0 0.0
    %4847 = vmatprep.subr.mxu0 0.0
    %4848 = vmatpush1.msra.mxu0 0.0
    %4849 = vmatprep.subr.mxu0 0.0
    %4850 = vmatpush1.msra.mxu0 0.0
    %4851 = vmatprep.subr.mxu0 0.0
    %4852 = vmatpush1.msra.mxu0 0.0
    %4853 = vmatprep.subr.mxu0 0.0
    %4854 = vmatpush1.msra.mxu0 0.0
    %4855 = vmatprep.subr.mxu0 0.0
    %4856 = vmatpush1.msra.mxu0 0.0
    %4857 = vmatprep.subr.mxu0 0.0
    %4858 = vmatpush1.msra.mxu0 0.0
    %4859 = vmatprep.subr.mxu0 0.0
    %4860 = vmatpush1.msra.mxu0 0.0
    %4861 = vmatprep.subr.mxu0 0.0
    %4862 = vmatpush1.msra.mxu0 0.0
    %4863 = vmatprep.mubr.f32.mxu0 0.0
    %4864 = vmatmul.mubr.f32.gmra.mrb[0].mxu0 %v4115
    %v4865 = vpop.f32.mrb[0].mxu0
    %v4866 = vadd.f32 %v4724, %v4865
    %v4867 = vpop.f32.mrb[0].mxu0
    %v4868 = vadd.f32 %v4726, %v4867
    %4869 = vdwg.mxu0
    %v4870 = vld [vmem:[%s14] sm:$0xff]
    %v4871 = vld [vmem:[%s14 + $0x8] sm:$0xff]
    %v4872 = vld [vmem:[%s14 + $0x10] sm:$0xff]
    %v4873 = vld [vmem:[%s14 + $0x18] sm:$0xff]
    %v4874 = vld [vmem:[%s14 + $0x20] sm:$0xff]
    %v4875 = vld [vmem:[%s14 + $0x28] sm:$0xff]
    %v4876 = vld [vmem:[%s14 + $0x30] sm:$0xff]
    %v4877 = vld [vmem:[%s14 + $0x38] sm:$0xff]
    %v4878 = vld [vmem:[%s14 + $0x40] sm:$0xff]
    %v4879 = vld [vmem:[%s14 + $0x48] sm:$0xff]
    %v4880 = vld [vmem:[%s14 + $0x50] sm:$0xff]
    %v4881 = vld [vmem:[%s14 + $0x58] sm:$0xff]
    %v4882 = vld [vmem:[%s14 + $0x60] sm:$0xff]
    %v4883 = vld [vmem:[%s14 + $0x68] sm:$0xff]
    %v4884 = vld [vmem:[%s14 + $0x70] sm:$0xff]
    %v4885 = vld [vmem:[%s14 + $0x78] sm:$0xff]
    %v4886 = vld [vmem:[%s14 + $0x80] sm:$0xff]
    %v4887 = vld [vmem:[%s14 + $0x88] sm:$0xff]
    %v4888 = vld [vmem:[%s14 + $0x90] sm:$0xff]
    %v4889 = vld [vmem:[%s14 + $0x98] sm:$0xff]
    %v4890 = vld [vmem:[%s14 + $0xa0] sm:$0xff]
    %v4891 = vld [vmem:[%s14 + $0xa8] sm:$0xff]
    %v4892 = vld [vmem:[%s14 + $0xb0] sm:$0xff]
    %v4893 = vld [vmem:[%s14 + $0xb8] sm:$0xff]
    %v4894 = vld [vmem:[%s14 + $0xc0] sm:$0xff]
    %v4895 = vld [vmem:[%s14 + $0xc8] sm:$0xff]
    %v4896 = vld [vmem:[%s14 + $0xd0] sm:$0xff]
    %v4897 = vld [vmem:[%s14 + $0xd8] sm:$0xff]
    %v4898 = vld [vmem:[%s14 + $0xe0] sm:$0xff]
    %v4899 = vld [vmem:[%s14 + $0xe8] sm:$0xff]
    %v4900 = vld [vmem:[%s14 + $0xf0] sm:$0xff]
    %v4901 = vld [vmem:[%s14 + $0xf8] sm:$0xff]
    %v4902 = vld [vmem:[%s14 + $0x100] sm:$0xff]
    %v4903 = vld [vmem:[%s14 + $0x108] sm:$0xff]
    %v4904 = vld [vmem:[%s14 + $0x110] sm:$0xff]
    %v4905 = vld [vmem:[%s14 + $0x118] sm:$0xff]
    %v4906 = vld [vmem:[%s14 + $0x120] sm:$0xff]
    %v4907 = vld [vmem:[%s14 + $0x128] sm:$0xff]
    %v4908 = vld [vmem:[%s14 + $0x130] sm:$0xff]
    %v4909 = vld [vmem:[%s14 + $0x138] sm:$0xff]
    %v4910 = vld [vmem:[%s14 + $0x140] sm:$0xff]
    %v4911 = vld [vmem:[%s14 + $0x148] sm:$0xff]
    %v4912 = vld [vmem:[%s14 + $0x150] sm:$0xff]
    %v4913 = vld [vmem:[%s14 + $0x158] sm:$0xff]
    %v4914 = vld [vmem:[%s14 + $0x160] sm:$0xff]
    %v4915 = vld [vmem:[%s14 + $0x168] sm:$0xff]
    %v4916 = vld [vmem:[%s14 + $0x170] sm:$0xff]
    %v4917 = vld [vmem:[%s14 + $0x178] sm:$0xff]
    %v4918 = vld [vmem:[%s14 + $0x180] sm:$0xff]
    %v4919 = vld [vmem:[%s14 + $0x188] sm:$0xff]
    %v4920 = vld [vmem:[%s14 + $0x190] sm:$0xff]
    %v4921 = vld [vmem:[%s14 + $0x198] sm:$0xff]
    %v4922 = vld [vmem:[%s14 + $0x1a0] sm:$0xff]
    %v4923 = vld [vmem:[%s14 + $0x1a8] sm:$0xff]
    %v4924 = vld [vmem:[%s14 + $0x1b0] sm:$0xff]
    %v4925 = vld [vmem:[%s14 + $0x1b8] sm:$0xff]
    %v4926 = vld [vmem:[%s14 + $0x1c0] sm:$0xff]
    %v4927 = vld [vmem:[%s14 + $0x1c8] sm:$0xff]
    %v4928 = vld [vmem:[%s14 + $0x1d0] sm:$0xff]
    %v4929 = vld [vmem:[%s14 + $0x1d8] sm:$0xff]
    %v4930 = vld [vmem:[%s14 + $0x1e0] sm:$0xff]
    %v4931 = vld [vmem:[%s14 + $0x1e8] sm:$0xff]
    %v4932 = vld [vmem:[%s14 + $0x1f0] sm:$0xff]
    %v4933 = vld [vmem:[%s14 + $0x1f8] sm:$0xff]
    %4934 = vmatprep.subr.mxu0 %v4871
    %4935 = vmatpush1.msra.mxu0 %v4870
    %4936 = vmatprep.subr.mxu0 %v4875
    %4937 = vmatpush1.msra.mxu0 %v4874
    %4938 = vmatprep.subr.mxu0 %v4879
    %4939 = vmatpush1.msra.mxu0 %v4878
    %4940 = vmatprep.subr.mxu0 %v4883
    %4941 = vmatpush1.msra.mxu0 %v4882
    %4942 = vmatprep.subr.mxu0 %v4887
    %4943 = vmatpush1.msra.mxu0 %v4886
    %4944 = vmatprep.subr.mxu0 %v4891
    %4945 = vmatpush1.msra.mxu0 %v4890
    %4946 = vmatprep.subr.mxu0 %v4895
    %4947 = vmatpush1.msra.mxu0 %v4894
    %4948 = vmatprep.subr.mxu0 %v4899
    %4949 = vmatpush1.msra.mxu0 %v4898
    %4950 = vmatprep.subr.mxu0 %v4903
    %4951 = vmatpush1.msra.mxu0 %v4902
    %4952 = vmatprep.subr.mxu0 %v4907
    %4953 = vmatpush1.msra.mxu0 %v4906
    %4954 = vmatprep.subr.mxu0 %v4911
    %4955 = vmatpush1.msra.mxu0 %v4910
    %4956 = vmatprep.subr.mxu0 %v4915
    %4957 = vmatpush1.msra.mxu0 %v4914
    %4958 = vmatprep.subr.mxu0 %v4919
    %4959 = vmatpush1.msra.mxu0 %v4918
    %4960 = vmatprep.subr.mxu0 %v4923
    %4961 = vmatpush1.msra.mxu0 %v4922
    %4962 = vmatprep.subr.mxu0 %v4927
    %4963 = vmatpush1.msra.mxu0 %v4926
    %4964 = vmatprep.subr.mxu0 %v4931
    %4965 = vmatpush1.msra.mxu0 %v4930
    %4966 = vmatprep.subr.mxu0 0.0
    %4967 = vmatpush1.msra.mxu0 0.0
    %4968 = vmatprep.subr.mxu0 0.0
    %4969 = vmatpush1.msra.mxu0 0.0
    %4970 = vmatprep.subr.mxu0 0.0
    %4971 = vmatpush1.msra.mxu0 0.0
    %4972 = vmatprep.subr.mxu0 0.0
    %4973 = vmatpush1.msra.mxu0 0.0
    %4974 = vmatprep.subr.mxu0 0.0
    %4975 = vmatpush1.msra.mxu0 0.0
    %4976 = vmatprep.subr.mxu0 0.0
    %4977 = vmatpush1.msra.mxu0 0.0
    %4978 = vmatprep.subr.mxu0 0.0
    %4979 = vmatpush1.msra.mxu0 0.0
    %4980 = vmatprep.subr.mxu0 0.0
    %4981 = vmatpush1.msra.mxu0 0.0
    %4982 = vmatprep.subr.mxu0 0.0
    %4983 = vmatpush1.msra.mxu0 0.0
    %4984 = vmatprep.subr.mxu0 0.0
    %4985 = vmatpush1.msra.mxu0 0.0
    %4986 = vmatprep.subr.mxu0 0.0
    %4987 = vmatpush1.msra.mxu0 0.0
    %4988 = vmatprep.subr.mxu0 0.0
    %4989 = vmatpush1.msra.mxu0 0.0
    %4990 = vmatprep.subr.mxu0 0.0
    %4991 = vmatpush1.msra.mxu0 0.0
    %4992 = vmatprep.subr.mxu0 0.0
    %4993 = vmatpush1.msra.mxu0 0.0
    %4994 = vmatprep.subr.mxu0 0.0
    %4995 = vmatpush1.msra.mxu0 0.0
    %4996 = vmatprep.subr.mxu0 0.0
    %4997 = vmatpush1.msra.mxu0 0.0
    %4998 = vmatprep.mubr.f32.mxu0 0.0
    %4999 = vmatmul.mubr.f32.gmra.mrb[0].mxu0 %v4457
    %v5000 = vpop.f32.mrb[0].mxu0
    %v5001 = vadd.f32 0.0, %v5000
    %v5002 = vpop.f32.mrb[0].mxu0
    %v5003 = vadd.f32 0.0, %v5002
    %5004 = vdwg.mxu0
    %5005 = vmatprep.subr.mxu0 %v4873
    %5006 = vmatpush1.msra.mxu0 %v4872
    %5007 = vmatprep.subr.mxu0 %v4877
    %5008 = vmatpush1.msra.mxu0 %v4876
    %5009 = vmatprep.subr.mxu0 %v4881
    %5010 = vmatpush1.msra.mxu0 %v4880
    %5011 = vmatprep.subr.mxu0 %v4885
    %5012 = vmatpush1.msra.mxu0 %v4884
    %5013 = vmatprep.subr.mxu0 %v4889
    %5014 = vmatpush1.msra.mxu0 %v4888
    %5015 = vmatprep.subr.mxu0 %v4893
    %5016 = vmatpush1.msra.mxu0 %v4892
    %5017 = vmatprep.subr.mxu0 %v4897
    %5018 = vmatpush1.msra.mxu0 %v4896
    %5019 = vmatprep.subr.mxu0 %v4901
    %5020 = vmatpush1.msra.mxu0 %v4900
    %5021 = vmatprep.subr.mxu0 %v4905
    %5022 = vmatpush1.msra.mxu0 %v4904
    %5023 = vmatprep.subr.mxu0 %v4909
    %5024 = vmatpush1.msra.mxu0 %v4908
    %5025 = vmatprep.subr.mxu0 %v4913
    %5026 = vmatpush1.msra.mxu0 %v4912
    %5027 = vmatprep.subr.mxu0 %v4917
    %5028 = vmatpush1.msra.mxu0 %v4916
    %5029 = vmatprep.subr.mxu0 %v4921
    %5030 = vmatpush1.msra.mxu0 %v4920
    %5031 = vmatprep.subr.mxu0 %v4925
    %5032 = vmatpush1.msra.mxu0 %v4924
    %5033 = vmatprep.subr.mxu0 %v4929
    %5034 = vmatpush1.msra.mxu0 %v4928
    %5035 = vmatprep.subr.mxu0 %v4933
    %5036 = vmatpush1.msra.mxu0 %v4932
    %5037 = vmatprep.subr.mxu0 0.0
    %5038 = vmatpush1.msra.mxu0 0.0
    %5039 = vmatprep.subr.mxu0 0.0
    %5040 = vmatpush1.msra.mxu0 0.0
    %5041 = vmatprep.subr.mxu0 0.0
    %5042 = vmatpush1.msra.mxu0 0.0
    %5043 = vmatprep.subr.mxu0 0.0
    %5044 = vmatpush1.msra.mxu0 0.0
    %5045 = vmatprep.subr.mxu0 0.0
    %5046 = vmatpush1.msra.mxu0 0.0
    %5047 = vmatprep.subr.mxu0 0.0
    %5048 = vmatpush1.msra.mxu0 0.0
    %5049 = vmatprep.subr.mxu0 0.0
    %5050 = vmatpush1.msra.mxu0 0.0
    %5051 = vmatprep.subr.mxu0 0.0
    %5052 = vmatpush1.msra.mxu0 0.0
    %5053 = vmatprep.subr.mxu0 0.0
    %5054 = vmatpush1.msra.mxu0 0.0
    %5055 = vmatprep.subr.mxu0 0.0
    %5056 = vmatpush1.msra.mxu0 0.0
    %5057 = vmatprep.subr.mxu0 0.0
    %5058 = vmatpush1.msra.mxu0 0.0
    %5059 = vmatprep.subr.mxu0 0.0
    %5060 = vmatpush1.msra.mxu0 0.0
    %5061 = vmatprep.subr.mxu0 0.0
    %5062 = vmatpush1.msra.mxu0 0.0
    %5063 = vmatprep.subr.mxu0 0.0
    %5064 = vmatpush1.msra.mxu0 0.0
    %5065 = vmatprep.subr.mxu0 0.0
    %5066 = vmatpush1.msra.mxu0 0.0
    %5067 = vmatprep.subr.mxu0 0.0
    %5068 = vmatpush1.msra.mxu0 0.0
    %5069 = vmatprep.mubr.f32.mxu0 0.0
    %5070 = vmatmul.mubr.f32.gmra.mrb[0].mxu0 %v4457
    %v5071 = vpop.f32.mrb[0].mxu0
    %v5072 = vadd.f32 0.0, %v5071
    %v5073 = vpop.f32.mrb[0].mxu0
    %v5074 = vadd.f32 0.0, %v5073
    %5075 = vdwg.mxu0
    %v5076 = vadd.f32 %v4795, %v5001
    %v5077 = vadd.f32 %v4797, %v5003
    %v5078 = vadd.f32 %v4866, %v5072
    %v5079 = vadd.f32 %v4868, %v5074
    %v5080 = vld [vmem:[%s15] sm:$0xf]
    %v5082 = vlaneseq
    %v5083 = vshrl.u32 %v5082, 7
    %v5084 = vsub.s32 0, %v5083
    %v5085 = vrot.slane %v5080, %v5084
    %v5086 = vlaneseq
    %v5087 = vshrl.u32 %v5086, 7
    %v5088 = vsub.s32 1, %v5087
    %v5089 = vrot.slane %v5080, %v5088
    %v5090 = vlaneseq
    %v5091 = vshrl.u32 %v5090, 7
    %v5092 = vsub.s32 2, %v5091
    %v5093 = vrot.slane %v5080, %v5092
    %v5094 = vlaneseq
    %v5095 = vshrl.u32 %v5094, 7
    %v5096 = vsub.s32 3, %v5095
    %v5097 = vrot.slane %v5080, %v5096
    %v5102 = vadd.f32 %v5076, %v5085
    %v5103 = vadd.f32 %v5077, %v5089
    %v5104 = vadd.f32 %v5078, %v5093
    %v5105 = vadd.f32 %v5079, %v5097
    %v5106 = vadd.f32 %v5102, %v4273
    %v5107 = vxor.u32 %v5106, 2147483648
    %v5108 = vmul.f32 %v5107, 1.442695
    %v5109 = vpow.pop %v5108
    %v5110 = vadd.f32 %v5109, 1.0
    %v5111 = vrcp.pop %v5110
    %v5112 = vmul.f32 1.0, %v5111
    %v5113 = vadd.f32 %v5103, %v4342
    %v5114 = vxor.u32 %v5113, 2147483648
    %v5115 = vmul.f32 %v5114, 1.442695
    %v5116 = vpow.pop %v5115
    %v5117 = vadd.f32 %v5116, 1.0
    %v5118 = vrcp.pop %v5117
    %v5119 = vmul.f32 1.0, %v5118
    %v5120 = vmul.f32 %v5112, %v4344
    %v5121 = vadd.f32 %v5104, %v5120
    %v5122 = vtanh.pop %v5121
    %v5123 = vsub.f32 1.0, %v5119
    %v5124 = vmul.f32 %v5123, %v5122
    %v5125 = vmul.f32 %v5119, %v3912
    %v5126 = vadd.f32 %v5124, %v5125
    %v5127 = vld [vmem:[#allocation11] sm:$0xff]
    %v5128 = vld [vmem:[#allocation11 + $0x8] sm:$0xff]
    %v5129 = vld [vmem:[#allocation11 + $0x10] sm:$0xff]
    %v5130 = vld [vmem:[#allocation11 + $0x18] sm:$0xff]
    %v5131 = vld [vmem:[#allocation11 + $0x20] sm:$0xff]
    %v5132 = vld [vmem:[#allocation11 + $0x28] sm:$0xff]
    %v5133 = vld [vmem:[#allocation11 + $0x30] sm:$0xff]
    %v5134 = vld [vmem:[#allocation11 + $0x38] sm:$0xff]
    %v5135 = vld [vmem:[#allocation11 + $0x40] sm:$0xff]
    %v5136 = vld [vmem:[#allocation11 + $0x48] sm:$0xff]
    %v5137 = vld [vmem:[#allocation11 + $0x50] sm:$0xff]
    %v5138 = vld [vmem:[#allocation11 + $0x58] sm:$0xff]
    %v5139 = vld [vmem:[#allocation11 + $0x60] sm:$0xff]
    %v5140 = vld [vmem:[#allocation11 + $0x68] sm:$0xff]
    %v5141 = vld [vmem:[#allocation11 + $0x70] sm:$0xff]
    %v5142 = vld [vmem:[#allocation11 + $0x78] sm:$0xff]
    %5143 = vmatprep.subr.mxu0 0.0
    %5144 = vmatpush1.msra.mxu0 %v5127
    %5145 = vmatprep.subr.mxu0 0.0
    %5146 = vmatpush1.msra.mxu0 %v5128
    %5147 = vmatprep.subr.mxu0 0.0
    %5148 = vmatpush1.msra.mxu0 %v5129
    %5149 = vmatprep.subr.mxu0 0.0
    %5150 = vmatpush1.msra.mxu0 %v5130
    %5151 = vmatprep.subr.mxu0 0.0
    %5152 = vmatpush1.msra.mxu0 %v5131
    %5153 = vmatprep.subr.mxu0 0.0
    %5154 = vmatpush1.msra.mxu0 %v5132
    %5155 = vmatprep.subr.mxu0 0.0
    %5156 = vmatpush1.msra.mxu0 %v5133
    %5157 = vmatprep.subr.mxu0 0.0
    %5158 = vmatpush1.msra.mxu0 %v5134
    %5159 = vmatprep.subr.mxu0 0.0
    %5160 = vmatpush1.msra.mxu0 %v5135
    %5161 = vmatprep.subr.mxu0 0.0
    %5162 = vmatpush1.msra.mxu0 %v5136
    %5163 = vmatprep.subr.mxu0 0.0
    %5164 = vmatpush1.msra.mxu0 %v5137
    %5165 = vmatprep.subr.mxu0 0.0
    %5166 = vmatpush1.msra.mxu0 %v5138
    %5167 = vmatprep.subr.mxu0 0.0
    %5168 = vmatpush1.msra.mxu0 %v5139
    %5169 = vmatprep.subr.mxu0 0.0
    %5170 = vmatpush1.msra.mxu0 %v5140
    %5171 = vmatprep.subr.mxu0 0.0
    %5172 = vmatpush1.msra.mxu0 %v5141
    %5173 = vmatprep.subr.mxu0 0.0
    %5174 = vmatpush1.msra.mxu0 %v5142
    %5175 = vmatprep.subr.mxu0 0.0
    %5176 = vmatpush1.msra.mxu0 0.0
    %5177 = vmatprep.subr.mxu0 0.0
    %5178 = vmatpush1.msra.mxu0 0.0
    %5179 = vmatprep.subr.mxu0 0.0
    %5180 = vmatpush1.msra.mxu0 0.0
    %5181 = vmatprep.subr.mxu0 0.0
    %5182 = vmatpush1.msra.mxu0 0.0
    %5183 = vmatprep.subr.mxu0 0.0
    %5184 = vmatpush1.msra.mxu0 0.0
    %5185 = vmatprep.subr.mxu0 0.0
    %5186 = vmatpush1.msra.mxu0 0.0
    %5187 = vmatprep.subr.mxu0 0.0
    %5188 = vmatpush1.msra.mxu0 0.0
    %5189 = vmatprep.subr.mxu0 0.0
    %5190 = vmatpush1.msra.mxu0 0.0
    %5191 = vmatprep.subr.mxu0 0.0
    %5192 = vmatpush1.msra.mxu0 0.0
    %5193 = vmatprep.subr.mxu0 0.0
    %5194 = vmatpush1.msra.mxu0 0.0
    %5195 = vmatprep.subr.mxu0 0.0
    %5196 = vmatpush1.msra.mxu0 0.0
    %5197 = vmatprep.subr.mxu0 0.0
    %5198 = vmatpush1.msra.mxu0 0.0
    %5199 = vmatprep.subr.mxu0 0.0
    %5200 = vmatpush1.msra.mxu0 0.0
    %5201 = vmatprep.subr.mxu0 0.0
    %5202 = vmatpush1.msra.mxu0 0.0
    %5203 = vmatprep.subr.mxu0 0.0
    %5204 = vmatpush1.msra.mxu0 0.0
    %5205 = vmatprep.subr.mxu0 0.0
    %5206 = vmatpush1.msra.mxu0 0.0
    %5207 = vmatprep.mubr.f32.mxu0 0.0
    %5208 = vmatmul.mubr.f32.gmra.mrb[0].mxu0 %v5126
    %v5209 = vpop.f32.mrb[0].mxu0
    %v5210 = vadd.f32 0.0, %v5209
    %v5211 = vpop.f32.mrb[0].mxu0
    %5212 = vdwg.mxu0
    %v5213 = vadd.f32 %v5105, %v5210
    %s5214 = scalar_lea.vmem %s17, 32
    %5215 = vst [vmem:[%s5214] sm:$0xff] %v5213
    // Predicated region
    $region114: #{seq2seq_forward.3} parent=1 // pred_check
      _
    $region115: #{seq2seq_forward.3} parent=1 // pred_check_branch
      %5217 = sbr.rel (0) target = $region117
    $region116: #{seq2seq_forward.3} parent=1 // pred_region
      _
    $region117: #{seq2seq_forward.3} parent=1 // pred_fallthru
      _
    // Predicated region
    $region118: #{seq2seq_forward.3} parent=1 // pred_check
      _
    $region119: #{seq2seq_forward.3} parent=1 // pred_check_branch
      %5219 = sbr.rel (0) target = $region121
    $region120: #{seq2seq_forward.3} parent=1 // pred_region
      _
    $region121: #{seq2seq_forward.3} parent=1 // pred_fallthru
      _
    %5220 = vsyncpa [#allocation5], 1
    %5221 = vsyncpa [#allocation9], 1
    %5222 = vsyncpa [#allocation12], 1
    %5223 = vsyncpa [#allocation6], 1

</llo_original>
